<compile_context>
chip_gen: v7x
topology: tpu7x:2x2x1
jax: 0.10.0
libtpu: 0.0.40
codegen_flags: <defaults>
</compile_context>

<pallas_src>
import math

import jax
import jax.numpy as jnp
from jax.experimental import pallas as pl
from jax.experimental.pallas import tpu as pltpu

# ----------------------------- configuration --------------------------------
NUM_LEVELS = 16                      # HashDecoder default num_levels
FEATURES_PER_LEVEL = 2               # nerfstudio HashEncoding default
MIN_RES = 16                         # nerfstudio HashEncoding default
MAX_RES = 1024                       # HashDecoder default max_res
LOG2_HASHMAP_SIZE = 14               # nerfstudio default is 19; kept small for the demo
HASH_TABLE_SIZE = 2 ** LOG2_HASHMAP_SIZE
ENC_DIM = NUM_LEVELS * FEATURES_PER_LEVEL   # == embed_fn.get_out_dim() == 32
INTERNAL_DIMS = 32
OUTPUT_DIMS = 4

NUM_CORNERS = 8
CORNER_DIM = NUM_CORNERS * ENC_DIM          # 256 = 8 corners x 32 feats (feature-blocked)
OFFSET_DIM = 3 * NUM_LEVELS                 # 48  = 3 axes x 16 levels (un-repeated)
SLAB_DIM = CORNER_DIM + OFFSET_DIM          # 304
SLAB_DTYPE = jnp.bfloat16                   # streamed in bf16, computed in f32

TILE_N = 1024                               # points per grid step (was 512)


# ------------------------------ Pallas kernel --------------------------------
def _hash_decoder_kernel(slab_ref, w1_ref, w2_ref, w3_ref, out_ref):
    """Trilinear interp of 8 corner features + 3-layer bias-free MLP (f32 math)."""
    x = slab_ref[...].astype(jnp.float32)            # [TILE_N, 304]

    def corner(k):                                   # static 32-lane channel slice
        return x[:, k * ENC_DIM:(k + 1) * ENC_DIM]   # feature-blocked: [f0 L0..15, f1 L0..15]

    f0, f1, f2, f3, f4, f5, f6, f7 = (corner(k) for k in range(NUM_CORNERS))

    def off(a):                                      # 16-lane per-level offset for axis a
        o = x[:, CORNER_DIM + a * NUM_LEVELS:CORNER_DIM + (a + 1) * NUM_LEVELS]
        # Feature-blocked expansion: cheap lane concat (no interleaving repeat needed
        # because W1's rows were permuted to match this layout in the wrapper).
        return jnp.concatenate([o] * FEATURES_PER_LEVEL, axis=-1)   # [TILE_N, 32]

    ox, oy, oz = off(0), off(1), off(2)
    one = jnp.float32(1.0)

    # Same interpolation order as nerfstudio HashEncoding.pytorch_fwd
    f03 = f0 * ox + f3 * (one - ox)
    f12 = f1 * ox + f2 * (one - ox)
    f56 = f5 * ox + f6 * (one - ox)
    f47 = f4 * ox + f7 * (one - ox)
    f0312 = f03 * oy + f12 * (one - oy)
    f4756 = f47 * oy + f56 * (one - oy)
    enc = f0312 * oz + f4756 * (one - oz)            # [TILE_N, ENC_DIM] (feature-blocked)

    # net: Linear(32,32,no bias) -> ReLU -> Linear(32,32,no bias) -> ReLU -> Linear(32,4,no bias)
    h = jnp.maximum(jnp.dot(enc, w1_ref[...], preferred_element_type=jnp.float32), 0.0)
    h = jnp.maximum(jnp.dot(h, w2_ref[...], preferred_element_type=jnp.float32), 0.0)
    out_ref[...] = jnp.dot(h, w3_ref[...], preferred_element_type=jnp.float32)


def hash_decoder_mlp(slab, w1, w2, w3):
    n = slab.shape[0]
    assert n % TILE_N == 0, "caller pads the point count to a multiple of TILE_N"
    grid = (n // TILE_N,)

    return pl.pallas_call(
        _hash_decoder_kernel,
        out_shape=jax.ShapeDtypeStruct((n, OUTPUT_DIMS), jnp.float32),
        grid=grid,
        in_specs=[
            pl.BlockSpec((TILE_N, SLAB_DIM), lambda i: (i, 0)),          # lane-dense slab
            pl.BlockSpec((ENC_DIM, INTERNAL_DIMS), lambda i: (0, 0)),    # w1 (resident)
            pl.BlockSpec((INTERNAL_DIMS, INTERNAL_DIMS), lambda i: (0, 0)),
            pl.BlockSpec((INTERNAL_DIMS, OUTPUT_DIMS), lambda i: (0, 0)),
        ],
        out_specs=pl.BlockSpec((TILE_N, OUTPUT_DIMS), lambda i: (i, 0)),
        compiler_params=pltpu.CompilerParams(
            dimension_semantics=("parallel",),        # megacore / v7x 2-TC sharding
            vmem_limit_bytes=32 * 1024 * 1024,        # usage ~10 MB worst case; safe on v5e/v6e/v7x
        ),
    )(slab, w1, w2, w3)


# --------------------------- hash encoding (glue) -----------------------------
def _hash_corner_indices(p, scalings, hash_offset):
    """Replicates nerfstudio HashEncoding.pytorch_fwd index math."""
    scaled = p[:, None, :] * scalings[None, :, None]        # [N, L, 3]
    scaled_f = jnp.floor(scaled)
    offset = (scaled - scaled_f).astype(jnp.float32)        # [N, L, 3]
    ic = jnp.ceil(scaled).astype(jnp.int32)
    fl = scaled_f.astype(jnp.int32)

    def hash_fn(x, y, z):
        # torch does int64 multiply/xor then mod 2^k; identical low bits in uint32.
        h = (x.astype(jnp.uint32)
             ^ (y.astype(jnp.uint32) * jnp.uint32(2654435761))
             ^ (z.astype(jnp.uint32) * jnp.uint32(805459861)))
        h = h & jnp.uint32(HASH_TABLE_SIZE - 1)
        return h.astype(jnp.int32) + hash_offset[None, :]    # [N, L]

    cx, cy, cz = ic[..., 0], ic[..., 1], ic[..., 2]
    fx, fy, fz = fl[..., 0], fl[..., 1], fl[..., 2]

    hashed = jnp.stack([
        hash_fn(cx, cy, cz),   # hashed_0
        hash_fn(cx, fy, cz),   # hashed_1
        hash_fn(fx, fy, cz),   # hashed_2
        hash_fn(fx, cy, cz),   # hashed_3
        hash_fn(cx, cy, fz),   # hashed_4
        hash_fn(cx, fy, fz),   # hashed_5
        hash_fn(fx, fy, fz),   # hashed_6
        hash_fn(fx, cy, fz),   # hashed_7
    ], axis=1)                                              # [N, 8, L]
    return hashed, offset


def hash_encode_slab(p, hash_table, scalings, hash_offset):
    """One lane-dense bf16 slab [N, 304]: 8x32 feature-blocked corner feats + 3x16 offsets."""
    n = p.shape[0]
    hashed, offset = _hash_corner_indices(p, scalings, hash_offset)
    # TODO(synk): the data-dependent hash-table gather stays in plain JAX; fusing it
    # into the kernel needs a manual DMA gather (no clean BlockSpec form).
    feats = hash_table[hashed]                               # [N, 8, L, F]
    # Feature-blocked per corner: [f0 over levels, f1 over levels].  W1's rows are
    # permuted to match in the wrapper, so the kernel expands the 16-lane per-level
    # offsets with a cheap lane concat instead of an interleaving repeat.
    corners = jnp.swapaxes(feats, -1, -2).reshape(n, CORNER_DIM)      # [N, 256]
    offs = offset.transpose(0, 2, 1).reshape(n, OFFSET_DIM)           # [N, 48] (x16,y16,z16)
    return jnp.concatenate([corners, offs], axis=-1).astype(SLAB_DTYPE)


def _permute_w1(w1):
    """Permute W1 rows from interleaved (l*F+f) to feature-blocked (f*L+l) order."""
    return jnp.swapaxes(
        w1.reshape(NUM_LEVELS, FEATURES_PER_LEVEL, INTERNAL_DIMS), 0, 1
    ).reshape(ENC_DIM, INTERNAL_DIMS)


# ------------------------------ full forward ---------------------------------
def hash_decoder_forward(p, params, input_bounds=None):
    if input_bounds is not None:
        p = (p - input_bounds[0]) / (input_bounds[1] - input_bounds[0])
    n = p.shape[0]
    n_pad = int(pl.cdiv(n, TILE_N)) * TILE_N
    if n_pad != n:
        p = jnp.pad(p, ((0, n_pad - n), (0, 0)))     # pad points (cheap), not the slab
    slab = hash_encode_slab(p, params["hash_table"], params["scalings"],
                            params["hash_offset"])
    out = hash_decoder_mlp(slab, _permute_w1(params["w1"]), params["w2"], params["w3"])
    return out[:n]


def reference_forward(p, params, input_bounds=None):
    """Pure-JAX, all-f32 reference of the full module forward (sanity check)."""
    if input_bounds is not None:
        p = (p - input_bounds[0]) / (input_bounds[1] - input_bounds[0])
    hashed, offset = _hash_corner_indices(p, params["scalings"], params["hash_offset"])
    f = params["hash_table"][hashed]                 # [N, 8, L, F]
    f0, f1, f2, f3, f4, f5, f6, f7 = [f[:, k] for k in range(NUM_CORNERS)]
    ox = offset[..., 0:1]
    oy = offset[..., 1:2]
    oz = offset[..., 2:3]
    f03 = f0 * ox + f3 * (1 - ox)
    f12 = f1 * ox + f2 * (1 - ox)
    f56 = f5 * ox + f6 * (1 - ox)
    f47 = f4 * ox + f7 * (1 - ox)
    f0312 = f03 * oy + f12 * (1 - oy)
    f4756 = f47 * oy + f56 * (1 - oy)
    enc = (f0312 * oz + f4756 * (1 - oz)).reshape(p.shape[0], ENC_DIM)
    h = jnp.maximum(enc @ params["w1"], 0.0)
    h = jnp.maximum(h @ params["w2"], 0.0)
    return h @ params["w3"]


# ------------------------------- parameters -----------------------------------
def init_params(key):
    k_table, k1, k2, k3 = jax.random.split(key, 4)

    # hash table: rand * 2 - 1 scaled by 0.001 (nerfstudio hash_init_scale)
    hash_table = (jax.random.uniform(
        k_table, (NUM_LEVELS * HASH_TABLE_SIZE, FEATURES_PER_LEVEL),
        dtype=jnp.float32) * 2.0 - 1.0) * 0.001

    levels = jnp.arange(NUM_LEVELS, dtype=jnp.float32)
    growth = math.exp((math.log(MAX_RES) - math.log(MIN_RES)) / (NUM_LEVELS - 1))
    scalings = jnp.floor(MIN_RES * (growth ** levels)).astype(jnp.float32)
    hash_offset = (jnp.arange(NUM_LEVELS, dtype=jnp.int32) * HASH_TABLE_SIZE)

    def linear(k, fan_in, fan_out):
        bound = 1.0 / math.sqrt(fan_in)
        return jax.random.uniform(k, (fan_in, fan_out), dtype=jnp.float32,
                                  minval=-bound, maxval=bound)

    return dict(
        hash_table=hash_table,
        scalings=scalings,
        hash_offset=hash_offset,
        w1=linear(k1, ENC_DIM, INTERNAL_DIMS),
        w2=linear(k2, INTERNAL_DIMS, INTERNAL_DIMS),
        w3=linear(k3, INTERNAL_DIMS, OUTPUT_DIMS),
    )


# ---------------------------------- main --------------------------------------
if __name__ == "__main__":
    key = jax.random.PRNGKey(0)
    k_params, k_pts = jax.random.split(key)

    params = init_params(k_params)

    N = 1000   # deliberately NOT a multiple of TILE_N to exercise remainder padding
    p = jax.random.uniform(k_pts, (N, 3), dtype=jnp.float32)   # points in [0, 1]^3

    out = jax.block_until_ready(jax.jit(hash_decoder_forward)(p, params))
    assert out.shape == (N, OUTPUT_DIMS) and out.dtype == jnp.float32

    ref = jax.block_until_ready(reference_forward(p, params))
    # Features/offsets are streamed in bf16 with f32 compute; observed deviation vs
    # the all-f32 reference is ~1e-6, far inside the 2e-4 tolerance.
    assert jnp.allclose(out, ref, atol=2e-4, rtol=2e-4), "mismatch vs JAX reference"

    print("KERNEL_OK")
</pallas_src>

<mosaic_0001>
module attributes {stable_mosaic.version = 11 : i64} {
  func.func @_hash_decoder_kernel(%arg0: i32, %arg1: memref<1024x304xbf16, #tpu.memory_space<vmem>>, %arg2: memref<32x32xf32, #tpu.memory_space<vmem>>, %arg3: memref<32x32xf32, #tpu.memory_space<vmem>>, %arg4: memref<32x4xf32, #tpu.memory_space<vmem>>, %arg5: memref<1024x4xf32, #tpu.memory_space<vmem>>) attributes {dimension_semantics = [#tpu.dimension_semantics<parallel>], iteration_bounds = array<i64: 1>, scalar_prefetch = 0 : i64, scratch_operands = 0 : i64, tpu.core_type = #tpu.core_type<tc>, window_params = [{transform_indices = @transform_0, window_bounds = array<i64: 1024, 304>}, {pipeline_mode = #tpu.pipeline_mode<synchronous>, transform_indices = @transform_1, window_bounds = array<i64: 32, 32>}, {pipeline_mode = #tpu.pipeline_mode<synchronous>, transform_indices = @transform_2, window_bounds = array<i64: 32, 32>}, {pipeline_mode = #tpu.pipeline_mode<synchronous>, transform_indices = @transform_3, window_bounds = array<i64: 32, 4>}, {transform_indices = @transform_4, window_bounds = array<i64: 1024, 4>}]} {
    %c0 = arith.constant 0 : index
    %c0_0 = arith.constant 0 : index
    %0 = vector.load %arg1[%c0, %c0_0] : memref<1024x304xbf16, #tpu.memory_space<vmem>>, vector<1024x304xbf16>
    %1 = arith.extf %0 : vector<1024x304xbf16> to vector<1024x304xf32>
    %2 = vector.extract_strided_slice %1 {offsets = [0, 0], sizes = [1024, 32], strides = [1, 1]} : vector<1024x304xf32> to vector<1024x32xf32>
    %3 = vector.extract_strided_slice %1 {offsets = [0, 32], sizes = [1024, 32], strides = [1, 1]} : vector<1024x304xf32> to vector<1024x32xf32>
    %4 = vector.extract_strided_slice %1 {offsets = [0, 64], sizes = [1024, 32], strides = [1, 1]} : vector<1024x304xf32> to vector<1024x32xf32>
    %5 = vector.extract_strided_slice %1 {offsets = [0, 96], sizes = [1024, 32], strides = [1, 1]} : vector<1024x304xf32> to vector<1024x32xf32>
    %6 = vector.extract_strided_slice %1 {offsets = [0, 128], sizes = [1024, 32], strides = [1, 1]} : vector<1024x304xf32> to vector<1024x32xf32>
    %7 = vector.extract_strided_slice %1 {offsets = [0, 160], sizes = [1024, 32], strides = [1, 1]} : vector<1024x304xf32> to vector<1024x32xf32>
    %8 = vector.extract_strided_slice %1 {offsets = [0, 192], sizes = [1024, 32], strides = [1, 1]} : vector<1024x304xf32> to vector<1024x32xf32>
    %9 = vector.extract_strided_slice %1 {offsets = [0, 224], sizes = [1024, 32], strides = [1, 1]} : vector<1024x304xf32> to vector<1024x32xf32>
    %10 = vector.extract_strided_slice %1 {offsets = [0, 256], sizes = [1024, 16], strides = [1, 1]} : vector<1024x304xf32> to vector<1024x16xf32>
    %11 = tpu.concatenate %10, %10 in 1 : vector<1024x16xf32>, vector<1024x16xf32> -> vector<1024x32xf32>
    %12 = vector.extract_strided_slice %1 {offsets = [0, 272], sizes = [1024, 16], strides = [1, 1]} : vector<1024x304xf32> to vector<1024x16xf32>
    %13 = tpu.concatenate %12, %12 in 1 : vector<1024x16xf32>, vector<1024x16xf32> -> vector<1024x32xf32>
    %14 = vector.extract_strided_slice %1 {offsets = [0, 288], sizes = [1024, 16], strides = [1, 1]} : vector<1024x304xf32> to vector<1024x16xf32>
    %15 = tpu.concatenate %14, %14 in 1 : vector<1024x16xf32>, vector<1024x16xf32> -> vector<1024x32xf32>
    %16 = arith.mulf %2, %11 : vector<1024x32xf32>
    %cst = arith.constant 1.000000e+00 : f32
    %17 = vector.broadcast %cst : f32 to vector<1024x32xf32>
    %18 = arith.subf %17, %11 : vector<1024x32xf32>
    %19 = arith.mulf %5, %18 : vector<1024x32xf32>
    %20 = arith.addf %16, %19 : vector<1024x32xf32>
    %21 = arith.mulf %3, %11 : vector<1024x32xf32>
    %cst_1 = arith.constant 1.000000e+00 : f32
    %22 = vector.broadcast %cst_1 : f32 to vector<1024x32xf32>
    %23 = arith.subf %22, %11 : vector<1024x32xf32>
    %24 = arith.mulf %4, %23 : vector<1024x32xf32>
    %25 = arith.addf %21, %24 : vector<1024x32xf32>
    %26 = arith.mulf %7, %11 : vector<1024x32xf32>
    %cst_2 = arith.constant 1.000000e+00 : f32
    %27 = vector.broadcast %cst_2 : f32 to vector<1024x32xf32>
    %28 = arith.subf %27, %11 : vector<1024x32xf32>
    %29 = arith.mulf %8, %28 : vector<1024x32xf32>
    %30 = arith.addf %26, %29 : vector<1024x32xf32>
    %31 = arith.mulf %6, %11 : vector<1024x32xf32>
    %cst_3 = arith.constant 1.000000e+00 : f32
    %32 = vector.broadcast %cst_3 : f32 to vector<1024x32xf32>
    %33 = arith.subf %32, %11 : vector<1024x32xf32>
    %34 = arith.mulf %9, %33 : vector<1024x32xf32>
    %35 = arith.addf %31, %34 : vector<1024x32xf32>
    %36 = arith.mulf %20, %13 : vector<1024x32xf32>
    %cst_4 = arith.constant 1.000000e+00 : f32
    %37 = vector.broadcast %cst_4 : f32 to vector<1024x32xf32>
    %38 = arith.subf %37, %13 : vector<1024x32xf32>
    %39 = arith.mulf %25, %38 : vector<1024x32xf32>
    %40 = arith.addf %36, %39 : vector<1024x32xf32>
    %41 = arith.mulf %35, %13 : vector<1024x32xf32>
    %cst_5 = arith.constant 1.000000e+00 : f32
    %42 = vector.broadcast %cst_5 : f32 to vector<1024x32xf32>
    %43 = arith.subf %42, %13 : vector<1024x32xf32>
    %44 = arith.mulf %30, %43 : vector<1024x32xf32>
    %45 = arith.addf %41, %44 : vector<1024x32xf32>
    %46 = arith.mulf %40, %15 : vector<1024x32xf32>
    %cst_6 = arith.constant 1.000000e+00 : f32
    %47 = vector.broadcast %cst_6 : f32 to vector<1024x32xf32>
    %48 = arith.subf %47, %15 : vector<1024x32xf32>
    %49 = arith.mulf %45, %48 : vector<1024x32xf32>
    %50 = arith.addf %46, %49 : vector<1024x32xf32>
    %c0_7 = arith.constant 0 : index
    %c0_8 = arith.constant 0 : index
    %51 = vector.load %arg2[%c0_7, %c0_8] : memref<32x32xf32, #tpu.memory_space<vmem>>, vector<32x32xf32>
    %cst_9 = arith.constant dense<0.000000e+00> : vector<1024x32xf32>
    %52 = tpu.matmul %50, %51, %cst_9 {dimension_numbers = #tpu.dot_dimension_numbers<[1], [0], [0], [1], [0, 0, 1, 1], [], []>} : vector<1024x32xf32>, vector<32x32xf32>, vector<1024x32xf32> -> vector<1024x32xf32>
    %cst_10 = arith.constant 0.000000e+00 : f32
    %53 = vector.broadcast %cst_10 : f32 to vector<1024x32xf32>
    %54 = arith.maximumf %52, %53 : vector<1024x32xf32>
    %c0_11 = arith.constant 0 : index
    %c0_12 = arith.constant 0 : index
    %55 = vector.load %arg3[%c0_11, %c0_12] : memref<32x32xf32, #tpu.memory_space<vmem>>, vector<32x32xf32>
    %cst_13 = arith.constant dense<0.000000e+00> : vector<1024x32xf32>
    %56 = tpu.matmul %54, %55, %cst_13 {dimension_numbers = #tpu.dot_dimension_numbers<[1], [0], [0], [1], [0, 0, 1, 1], [], []>} : vector<1024x32xf32>, vector<32x32xf32>, vector<1024x32xf32> -> vector<1024x32xf32>
    %cst_14 = arith.constant 0.000000e+00 : f32
    %57 = vector.broadcast %cst_14 : f32 to vector<1024x32xf32>
    %58 = arith.maximumf %56, %57 : vector<1024x32xf32>
    %c0_15 = arith.constant 0 : index
    %c0_16 = arith.constant 0 : index
    %59 = vector.load %arg4[%c0_15, %c0_16] : memref<32x4xf32, #tpu.memory_space<vmem>>, vector<32x4xf32>
    %cst_17 = arith.constant dense<0.000000e+00> : vector<1024x4xf32>
    %60 = tpu.matmul %58, %59, %cst_17 {dimension_numbers = #tpu.dot_dimension_numbers<[1], [0], [0], [1], [0, 0, 1, 1], [], []>} : vector<1024x32xf32>, vector<32x4xf32>, vector<1024x4xf32> -> vector<1024x4xf32>
    %c0_18 = arith.constant 0 : index
    %c0_19 = arith.constant 0 : index
    %61 = vector.load %arg5[%c0_18, %c0_19] : memref<1024x4xf32, #tpu.memory_space<vmem>>, vector<1024x4xf32>
    tpu.vector_store %arg5[%c0_18, %c0_19], %60 {strides = array<i32>} : memref<1024x4xf32, #tpu.memory_space<vmem>>, vector<1024x4xf32>,
    return
  }
  func.func @transform_0(%arg0: i32) -> (i32, i32) {
    %c0_i32 = arith.constant 0 : i32
    %c0_i32_0 = arith.constant 0 : i32
    return %arg0, %c0_i32 : i32, i32
  }
  func.func @transform_1(%arg0: i32) -> (i32, i32) {
    %c0_i32 = arith.constant 0 : i32
    %c0_i32_0 = arith.constant 0 : i32
    %c0_i32_1 = arith.constant 0 : i32
    return %c0_i32, %c0_i32_0 : i32, i32
  }
  func.func @transform_2(%arg0: i32) -> (i32, i32) {
    %c0_i32 = arith.constant 0 : i32
    %c0_i32_0 = arith.constant 0 : i32
    %c0_i32_1 = arith.constant 0 : i32
    return %c0_i32, %c0_i32_0 : i32, i32
  }
  func.func @transform_3(%arg0: i32) -> (i32, i32) {
    %c0_i32 = arith.constant 0 : i32
    %c0_i32_0 = arith.constant 0 : i32
    %c0_i32_1 = arith.constant 0 : i32
    return %c0_i32, %c0_i32_0 : i32, i32
  }
  func.func @transform_4(%arg0: i32) -> (i32, i32) {
    %c0_i32 = arith.constant 0 : i32
    %c0_i32_0 = arith.constant 0 : i32
    return %arg0, %c0_i32 : i32, i32
  }
}

</mosaic_0001>

<llo_original>
// kernel: hash_decoder_forward.1
$region0: #{hash_decoder_forward.1}
  #allocation0 [shape = 'u32[]', space=smem, size = 0x4, offset = 0x4, fixed_abs, tag = 'smem constant byte address 0x4 - core index']
  #allocation1 [shape = 'u32[144,128]{1,0:T(1,128)}', space=vmem, size = 0x12000, scoped, tag = 'internal scratch']
  %s0 = inlined_call_operand.vmem [shape: bf16[1024,304], index: 0, kind: input, shape index: {}]
  %s1 = inlined_call_operand.vmem [shape: f32[32,32], index: 1, kind: input, shape index: {}]
  %s2 = inlined_call_operand.hbm [shape: f32[32,32], index: 2, kind: input, shape index: {}]
  %s3 = inlined_call_operand.vmem [shape: f32[32,4], index: 3, kind: input, shape index: {}]
  %s4 = inlined_call_operand.vmem [shape: f32[1024,4], index: 4, kind: output, shape index: {}]
  %s5 = sld [smem:[#allocation0]]
  $region30: #{hash_decoder_forward.1} parent=0
    _
  %s7 = ssub.s32 1, %s5
  %s8 = scalar_select 0, %s7, %s5
  $region1: #{hash_decoder_forward.1} parent=0
    #allocation2 [shape = 'u8[16384]{0}', space=vmem, size = 0x4000, scoped, tag = 'input window, operand 2, single buffered']
    #allocation3 [shape = 's32[1]{0}', space=sflag, size = 0x4, scoped, tag = 'scoped memory for hash_decoder_forward.1']
    %9 = vsyncpa [#allocation3], 0
    // Predicated region
    $region2: #{hash_decoder_forward.1} parent=1 // pred_check
      _
    $region3: #{hash_decoder_forward.1} parent=1 // pred_check_branch
      %11 = sbr.rel (0) target = $region5
    $region4: #{hash_decoder_forward.1} parent=1 // pred_region
      _
    $region5: #{hash_decoder_forward.1} parent=1 // pred_fallthru
      _
    // Predicated region
    $region6: #{hash_decoder_forward.1} parent=1 // pred_check
      _
    $region7: #{hash_decoder_forward.1} parent=1 // pred_check_branch
      %13 = sbr.rel (0) target = $region9
    $region8: #{hash_decoder_forward.1} parent=1 // pred_region
      _
    $region9: #{hash_decoder_forward.1} parent=1 // pred_fallthru
      _
    // Predicated region
    $region10: #{hash_decoder_forward.1} parent=1 // pred_check
      _
    $region11: #{hash_decoder_forward.1} parent=1 // pred_check_branch
      %15 = sbr.rel (0) target = $region13
    $region12: #{hash_decoder_forward.1} parent=1 // pred_region
      %s17 = ssub.s32 512, 512
      %18 = vsyncadd [#allocation3], %s17
      %s19 = sshll.u32 [#allocation2], 4
      %s20 = int_to_ptr.vmem [resolvable:$true] %s19
      %25 = dma.hbm_to_vmem [thread:$0]  %s2, 512, %s20, [#allocation3], 128, 128, 8
    $region13: #{hash_decoder_forward.1} parent=1 // pred_fallthru
      _
    // Predicated region
    $region14: #{hash_decoder_forward.1} parent=1 // pred_check
      _
    $region15: #{hash_decoder_forward.1} parent=1 // pred_check_branch
      %27 = sbr.rel (0) target = $region17
    $region16: #{hash_decoder_forward.1} parent=1 // pred_region
      _
    $region17: #{hash_decoder_forward.1} parent=1 // pred_fallthru
      _
    // Predicated region
    $region18: #{hash_decoder_forward.1} parent=1 // pred_check
      _
    $region19: #{hash_decoder_forward.1} parent=1 // pred_check_branch
      %29 = sbr.rel (0) target = $region21
    $region20: #{hash_decoder_forward.1} parent=1 // pred_region
      %30 = dma.done [#allocation3], 512
    $region21: #{hash_decoder_forward.1} parent=1 // pred_fallthru
      _
    %v31 = vld [vmem:[%s0] sm:$0xff]
    %v32 = vld [vmem:[%s0 + $0x8] sm:$0xf]
    %v33 = vld [vmem:[%s0 + $0xc] sm:$0xff]
    %v34 = vld [vmem:[%s0 + $0x14] sm:$0xf]
    %v35 = vld [vmem:[%s0 + $0x18] sm:$0xff]
    %v36 = vld [vmem:[%s0 + $0x20] sm:$0xf]
    %v37 = vld [vmem:[%s0 + $0x24] sm:$0xff]
    %v38 = vld [vmem:[%s0 + $0x2c] sm:$0xf]
    %v39 = vld [vmem:[%s0 + $0x30] sm:$0xff]
    %v40 = vld [vmem:[%s0 + $0x38] sm:$0xf]
    %v41 = vld [vmem:[%s0 + $0x3c] sm:$0xff]
    %v42 = vld [vmem:[%s0 + $0x44] sm:$0xf]
    %v43 = vld [vmem:[%s0 + $0x48] sm:$0xff]
    %v44 = vld [vmem:[%s0 + $0x50] sm:$0xf]
    %v45 = vld [vmem:[%s0 + $0x54] sm:$0xff]
    %v46 = vld [vmem:[%s0 + $0x5c] sm:$0xf]
    %v47 = vld [vmem:[%s0 + $0x60] sm:$0xff]
    %v48 = vld [vmem:[%s0 + $0x68] sm:$0xf]
    %v49 = vld [vmem:[%s0 + $0x6c] sm:$0xff]
    %v50 = vld [vmem:[%s0 + $0x74] sm:$0xf]
    %v51 = vld [vmem:[%s0 + $0x78] sm:$0xff]
    %v52 = vld [vmem:[%s0 + $0x80] sm:$0xf]
    %v53 = vld [vmem:[%s0 + $0x84] sm:$0xff]
    %v54 = vld [vmem:[%s0 + $0x8c] sm:$0xf]
    %v55 = vld [vmem:[%s0 + $0x90] sm:$0xff]
    %v56 = vld [vmem:[%s0 + $0x98] sm:$0xf]
    %v57 = vld [vmem:[%s0 + $0x9c] sm:$0xff]
    %v58 = vld [vmem:[%s0 + $0xa4] sm:$0xf]
    %v59 = vld [vmem:[%s0 + $0xa8] sm:$0xff]
    %v60 = vld [vmem:[%s0 + $0xb0] sm:$0xf]
    %v61 = vld [vmem:[%s0 + $0xb4] sm:$0xff]
    %v62 = vld [vmem:[%s0 + $0xbc] sm:$0xf]
    %v63 = vld [vmem:[%s0 + $0xc0] sm:$0xff]
    %v64 = vld [vmem:[%s0 + $0xc8] sm:$0xf]
    %v65 = vld [vmem:[%s0 + $0xcc] sm:$0xff]
    %v66 = vld [vmem:[%s0 + $0xd4] sm:$0xf]
    %v67 = vld [vmem:[%s0 + $0xd8] sm:$0xff]
    %v68 = vld [vmem:[%s0 + $0xe0] sm:$0xf]
    %v69 = vld [vmem:[%s0 + $0xe4] sm:$0xff]
    %v70 = vld [vmem:[%s0 + $0xec] sm:$0xf]
    %v71 = vld [vmem:[%s0 + $0xf0] sm:$0xff]
    %v72 = vld [vmem:[%s0 + $0xf8] sm:$0xf]
    %v73 = vld [vmem:[%s0 + $0xfc] sm:$0xff]
    %v74 = vld [vmem:[%s0 + $0x104] sm:$0xf]
    %v75 = vld [vmem:[%s0 + $0x108] sm:$0xff]
    %v76 = vld [vmem:[%s0 + $0x110] sm:$0xf]
    %v77 = vld [vmem:[%s0 + $0x114] sm:$0xff]
    %v78 = vld [vmem:[%s0 + $0x11c] sm:$0xf]
    %v79 = vld [vmem:[%s0 + $0x120] sm:$0xff]
    %v80 = vld [vmem:[%s0 + $0x128] sm:$0xf]
    %v81 = vld [vmem:[%s0 + $0x12c] sm:$0xff]
    %v82 = vld [vmem:[%s0 + $0x134] sm:$0xf]
    %v83 = vld [vmem:[%s0 + $0x138] sm:$0xff]
    %v84 = vld [vmem:[%s0 + $0x140] sm:$0xf]
    %v85 = vld [vmem:[%s0 + $0x144] sm:$0xff]
    %v86 = vld [vmem:[%s0 + $0x14c] sm:$0xf]
    %v87 = vld [vmem:[%s0 + $0x150] sm:$0xff]
    %v88 = vld [vmem:[%s0 + $0x158] sm:$0xf]
    %v89 = vld [vmem:[%s0 + $0x15c] sm:$0xff]
    %v90 = vld [vmem:[%s0 + $0x164] sm:$0xf]
    %v91 = vld [vmem:[%s0 + $0x168] sm:$0xff]
    %v92 = vld [vmem:[%s0 + $0x170] sm:$0xf]
    %v93 = vld [vmem:[%s0 + $0x174] sm:$0xff]
    %v94 = vld [vmem:[%s0 + $0x17c] sm:$0xf]
    %v95 = vld [vmem:[%s0 + $0x180] sm:$0xff]
    %v96 = vld [vmem:[%s0 + $0x188] sm:$0xf]
    %v97 = vld [vmem:[%s0 + $0x18c] sm:$0xff]
    %v98 = vld [vmem:[%s0 + $0x194] sm:$0xf]
    %v99 = vld [vmem:[%s0 + $0x198] sm:$0xff]
    %v100 = vld [vmem:[%s0 + $0x1a0] sm:$0xf]
    %v101 = vld [vmem:[%s0 + $0x1a4] sm:$0xff]
    %v102 = vld [vmem:[%s0 + $0x1ac] sm:$0xf]
    %v103 = vld [vmem:[%s0 + $0x1b0] sm:$0xff]
    %v104 = vld [vmem:[%s0 + $0x1b8] sm:$0xf]
    %v105 = vld [vmem:[%s0 + $0x1bc] sm:$0xff]
    %v106 = vld [vmem:[%s0 + $0x1c4] sm:$0xf]
    %v107 = vld [vmem:[%s0 + $0x1c8] sm:$0xff]
    %v108 = vld [vmem:[%s0 + $0x1d0] sm:$0xf]
    %v109 = vld [vmem:[%s0 + $0x1d4] sm:$0xff]
    %v110 = vld [vmem:[%s0 + $0x1dc] sm:$0xf]
    %v111 = vld [vmem:[%s0 + $0x1e0] sm:$0xff]
    %v112 = vld [vmem:[%s0 + $0x1e8] sm:$0xf]
    %v113 = vld [vmem:[%s0 + $0x1ec] sm:$0xff]
    %v114 = vld [vmem:[%s0 + $0x1f4] sm:$0xf]
    %v115 = vld [vmem:[%s0 + $0x1f8] sm:$0xff]
    %v116 = vld [vmem:[%s0 + $0x200] sm:$0xf]
    %v117 = vld [vmem:[%s0 + $0x204] sm:$0xff]
    %v118 = vld [vmem:[%s0 + $0x20c] sm:$0xf]
    %v119 = vld [vmem:[%s0 + $0x210] sm:$0xff]
    %v120 = vld [vmem:[%s0 + $0x218] sm:$0xf]
    %v121 = vld [vmem:[%s0 + $0x21c] sm:$0xff]
    %v122 = vld [vmem:[%s0 + $0x224] sm:$0xf]
    %v123 = vld [vmem:[%s0 + $0x228] sm:$0xff]
    %v124 = vld [vmem:[%s0 + $0x230] sm:$0xf]
    %v125 = vld [vmem:[%s0 + $0x234] sm:$0xff]
    %v126 = vld [vmem:[%s0 + $0x23c] sm:$0xf]
    %v127 = vld [vmem:[%s0 + $0x240] sm:$0xff]
    %v128 = vld [vmem:[%s0 + $0x248] sm:$0xf]
    %v129 = vld [vmem:[%s0 + $0x24c] sm:$0xff]
    %v130 = vld [vmem:[%s0 + $0x254] sm:$0xf]
    %v131 = vld [vmem:[%s0 + $0x258] sm:$0xff]
    %v132 = vld [vmem:[%s0 + $0x260] sm:$0xf]
    %v133 = vld [vmem:[%s0 + $0x264] sm:$0xff]
    %v134 = vld [vmem:[%s0 + $0x26c] sm:$0xf]
    %v135 = vld [vmem:[%s0 + $0x270] sm:$0xff]
    %v136 = vld [vmem:[%s0 + $0x278] sm:$0xf]
    %v137 = vld [vmem:[%s0 + $0x27c] sm:$0xff]
    %v138 = vld [vmem:[%s0 + $0x284] sm:$0xf]
    %v139 = vld [vmem:[%s0 + $0x288] sm:$0xff]
    %v140 = vld [vmem:[%s0 + $0x290] sm:$0xf]
    %v141 = vld [vmem:[%s0 + $0x294] sm:$0xff]
    %v142 = vld [vmem:[%s0 + $0x29c] sm:$0xf]
    %v143 = vld [vmem:[%s0 + $0x2a0] sm:$0xff]
    %v144 = vld [vmem:[%s0 + $0x2a8] sm:$0xf]
    %v145 = vld [vmem:[%s0 + $0x2ac] sm:$0xff]
    %v146 = vld [vmem:[%s0 + $0x2b4] sm:$0xf]
    %v147 = vld [vmem:[%s0 + $0x2b8] sm:$0xff]
    %v148 = vld [vmem:[%s0 + $0x2c0] sm:$0xf]
    %v149 = vld [vmem:[%s0 + $0x2c4] sm:$0xff]
    %v150 = vld [vmem:[%s0 + $0x2cc] sm:$0xf]
    %v151 = vld [vmem:[%s0 + $0x2d0] sm:$0xff]
    %v152 = vld [vmem:[%s0 + $0x2d8] sm:$0xf]
    %v153 = vld [vmem:[%s0 + $0x2dc] sm:$0xff]
    %v154 = vld [vmem:[%s0 + $0x2e4] sm:$0xf]
    %v155 = vld [vmem:[%s0 + $0x2e8] sm:$0xff]
    %v156 = vld [vmem:[%s0 + $0x2f0] sm:$0xf]
    %v157 = vld [vmem:[%s0 + $0x2f4] sm:$0xff]
    %v158 = vld [vmem:[%s0 + $0x2fc] sm:$0xf]
    %v159 = vld [vmem:[%s0 + $0x300] sm:$0xff]
    %v160 = vld [vmem:[%s0 + $0x308] sm:$0xf]
    %v161 = vld [vmem:[%s0 + $0x30c] sm:$0xff]
    %v162 = vld [vmem:[%s0 + $0x314] sm:$0xf]
    %v163 = vld [vmem:[%s0 + $0x318] sm:$0xff]
    %v164 = vld [vmem:[%s0 + $0x320] sm:$0xf]
    %v165 = vld [vmem:[%s0 + $0x324] sm:$0xff]
    %v166 = vld [vmem:[%s0 + $0x32c] sm:$0xf]
    %v167 = vld [vmem:[%s0 + $0x330] sm:$0xff]
    %v168 = vld [vmem:[%s0 + $0x338] sm:$0xf]
    %v169 = vld [vmem:[%s0 + $0x33c] sm:$0xff]
    %v170 = vld [vmem:[%s0 + $0x344] sm:$0xf]
    %v171 = vld [vmem:[%s0 + $0x348] sm:$0xff]
    %v172 = vld [vmem:[%s0 + $0x350] sm:$0xf]
    %v173 = vld [vmem:[%s0 + $0x354] sm:$0xff]
    %v174 = vld [vmem:[%s0 + $0x35c] sm:$0xf]
    %v175 = vld [vmem:[%s0 + $0x360] sm:$0xff]
    %v176 = vld [vmem:[%s0 + $0x368] sm:$0xf]
    %v177 = vld [vmem:[%s0 + $0x36c] sm:$0xff]
    %v178 = vld [vmem:[%s0 + $0x374] sm:$0xf]
    %v179 = vld [vmem:[%s0 + $0x378] sm:$0xff]
    %v180 = vld [vmem:[%s0 + $0x380] sm:$0xf]
    %v181 = vld [vmem:[%s0 + $0x384] sm:$0xff]
    %v182 = vld [vmem:[%s0 + $0x38c] sm:$0xf]
    %v183 = vld [vmem:[%s0 + $0x390] sm:$0xff]
    %v184 = vld [vmem:[%s0 + $0x398] sm:$0xf]
    %v185 = vld [vmem:[%s0 + $0x39c] sm:$0xff]
    %v186 = vld [vmem:[%s0 + $0x3a4] sm:$0xf]
    %v187 = vld [vmem:[%s0 + $0x3a8] sm:$0xff]
    %v188 = vld [vmem:[%s0 + $0x3b0] sm:$0xf]
    %v189 = vld [vmem:[%s0 + $0x3b4] sm:$0xff]
    %v190 = vld [vmem:[%s0 + $0x3bc] sm:$0xf]
    %v191 = vld [vmem:[%s0 + $0x3c0] sm:$0xff]
    %v192 = vld [vmem:[%s0 + $0x3c8] sm:$0xf]
    %v193 = vld [vmem:[%s0 + $0x3cc] sm:$0xff]
    %v194 = vld [vmem:[%s0 + $0x3d4] sm:$0xf]
    %v195 = vld [vmem:[%s0 + $0x3d8] sm:$0xff]
    %v196 = vld [vmem:[%s0 + $0x3e0] sm:$0xf]
    %v197 = vld [vmem:[%s0 + $0x3e4] sm:$0xff]
    %v198 = vld [vmem:[%s0 + $0x3ec] sm:$0xf]
    %v199 = vld [vmem:[%s0 + $0x3f0] sm:$0xff]
    %v200 = vld [vmem:[%s0 + $0x3f8] sm:$0xf]
    %v201 = vld [vmem:[%s0 + $0x3fc] sm:$0xff]
    %v202 = vld [vmem:[%s0 + $0x404] sm:$0xf]
    %v203 = vld [vmem:[%s0 + $0x408] sm:$0xff]
    %v204 = vld [vmem:[%s0 + $0x410] sm:$0xf]
    %v205 = vld [vmem:[%s0 + $0x414] sm:$0xff]
    %v206 = vld [vmem:[%s0 + $0x41c] sm:$0xf]
    %v207 = vld [vmem:[%s0 + $0x420] sm:$0xff]
    %v208 = vld [vmem:[%s0 + $0x428] sm:$0xf]
    %v209 = vld [vmem:[%s0 + $0x42c] sm:$0xff]
    %v210 = vld [vmem:[%s0 + $0x434] sm:$0xf]
    %v211 = vld [vmem:[%s0 + $0x438] sm:$0xff]
    %v212 = vld [vmem:[%s0 + $0x440] sm:$0xf]
    %v213 = vld [vmem:[%s0 + $0x444] sm:$0xff]
    %v214 = vld [vmem:[%s0 + $0x44c] sm:$0xf]
    %v215 = vld [vmem:[%s0 + $0x450] sm:$0xff]
    %v216 = vld [vmem:[%s0 + $0x458] sm:$0xf]
    %v217 = vld [vmem:[%s0 + $0x45c] sm:$0xff]
    %v218 = vld [vmem:[%s0 + $0x464] sm:$0xf]
    %v219 = vld [vmem:[%s0 + $0x468] sm:$0xff]
    %v220 = vld [vmem:[%s0 + $0x470] sm:$0xf]
    %v221 = vld [vmem:[%s0 + $0x474] sm:$0xff]
    %v222 = vld [vmem:[%s0 + $0x47c] sm:$0xf]
    %v223 = vld [vmem:[%s0 + $0x480] sm:$0xff]
    %v224 = vld [vmem:[%s0 + $0x488] sm:$0xf]
    %v225 = vld [vmem:[%s0 + $0x48c] sm:$0xff]
    %v226 = vld [vmem:[%s0 + $0x494] sm:$0xf]
    %v227 = vld [vmem:[%s0 + $0x498] sm:$0xff]
    %v228 = vld [vmem:[%s0 + $0x4a0] sm:$0xf]
    %v229 = vld [vmem:[%s0 + $0x4a4] sm:$0xff]
    %v230 = vld [vmem:[%s0 + $0x4ac] sm:$0xf]
    %v231 = vld [vmem:[%s0 + $0x4b0] sm:$0xff]
    %v232 = vld [vmem:[%s0 + $0x4b8] sm:$0xf]
    %v233 = vld [vmem:[%s0 + $0x4bc] sm:$0xff]
    %v234 = vld [vmem:[%s0 + $0x4c4] sm:$0xf]
    %v235 = vld [vmem:[%s0 + $0x4c8] sm:$0xff]
    %v236 = vld [vmem:[%s0 + $0x4d0] sm:$0xf]
    %v237 = vld [vmem:[%s0 + $0x4d4] sm:$0xff]
    %v238 = vld [vmem:[%s0 + $0x4dc] sm:$0xf]
    %v239 = vld [vmem:[%s0 + $0x4e0] sm:$0xff]
    %v240 = vld [vmem:[%s0 + $0x4e8] sm:$0xf]
    %v241 = vld [vmem:[%s0 + $0x4ec] sm:$0xff]
    %v242 = vld [vmem:[%s0 + $0x4f4] sm:$0xf]
    %v243 = vld [vmem:[%s0 + $0x4f8] sm:$0xff]
    %v244 = vld [vmem:[%s0 + $0x500] sm:$0xf]
    %v245 = vld [vmem:[%s0 + $0x504] sm:$0xff]
    %v246 = vld [vmem:[%s0 + $0x50c] sm:$0xf]
    %v247 = vld [vmem:[%s0 + $0x510] sm:$0xff]
    %v248 = vld [vmem:[%s0 + $0x518] sm:$0xf]
    %v249 = vld [vmem:[%s0 + $0x51c] sm:$0xff]
    %v250 = vld [vmem:[%s0 + $0x524] sm:$0xf]
    %v251 = vld [vmem:[%s0 + $0x528] sm:$0xff]
    %v252 = vld [vmem:[%s0 + $0x530] sm:$0xf]
    %v253 = vld [vmem:[%s0 + $0x534] sm:$0xff]
    %v254 = vld [vmem:[%s0 + $0x53c] sm:$0xf]
    %v255 = vld [vmem:[%s0 + $0x540] sm:$0xff]
    %v256 = vld [vmem:[%s0 + $0x548] sm:$0xf]
    %v257 = vld [vmem:[%s0 + $0x54c] sm:$0xff]
    %v258 = vld [vmem:[%s0 + $0x554] sm:$0xf]
    %v259 = vld [vmem:[%s0 + $0x558] sm:$0xff]
    %v260 = vld [vmem:[%s0 + $0x560] sm:$0xf]
    %v261 = vld [vmem:[%s0 + $0x564] sm:$0xff]
    %v262 = vld [vmem:[%s0 + $0x56c] sm:$0xf]
    %v263 = vld [vmem:[%s0 + $0x570] sm:$0xff]
    %v264 = vld [vmem:[%s0 + $0x578] sm:$0xf]
    %v265 = vld [vmem:[%s0 + $0x57c] sm:$0xff]
    %v266 = vld [vmem:[%s0 + $0x584] sm:$0xf]
    %v267 = vld [vmem:[%s0 + $0x588] sm:$0xff]
    %v268 = vld [vmem:[%s0 + $0x590] sm:$0xf]
    %v269 = vld [vmem:[%s0 + $0x594] sm:$0xff]
    %v270 = vld [vmem:[%s0 + $0x59c] sm:$0xf]
    %v271 = vld [vmem:[%s0 + $0x5a0] sm:$0xff]
    %v272 = vld [vmem:[%s0 + $0x5a8] sm:$0xf]
    %v273 = vld [vmem:[%s0 + $0x5ac] sm:$0xff]
    %v274 = vld [vmem:[%s0 + $0x5b4] sm:$0xf]
    %v275 = vld [vmem:[%s0 + $0x5b8] sm:$0xff]
    %v276 = vld [vmem:[%s0 + $0x5c0] sm:$0xf]
    %v277 = vld [vmem:[%s0 + $0x5c4] sm:$0xff]
    %v278 = vld [vmem:[%s0 + $0x5cc] sm:$0xf]
    %v279 = vld [vmem:[%s0 + $0x5d0] sm:$0xff]
    %v280 = vld [vmem:[%s0 + $0x5d8] sm:$0xf]
    %v281 = vld [vmem:[%s0 + $0x5dc] sm:$0xff]
    %v282 = vld [vmem:[%s0 + $0x5e4] sm:$0xf]
    %v283 = vld [vmem:[%s0 + $0x5e8] sm:$0xff]
    %v284 = vld [vmem:[%s0 + $0x5f0] sm:$0xf]
    %v285 = vld [vmem:[%s0 + $0x5f4] sm:$0xff]
    %v286 = vld [vmem:[%s0 + $0x5fc] sm:$0xf]
    %v287 = vunpack.c.l.bf16 %v31
    %v288 = vunpack.c.h.bf16 %v31
    %v289 = vunpack.c.l.bf16 %v32
    %v290 = vunpack.c.l.bf16 %v33
    %v291 = vunpack.c.h.bf16 %v33
    %v292 = vunpack.c.l.bf16 %v34
    %v293 = vunpack.c.l.bf16 %v35
    %v294 = vunpack.c.h.bf16 %v35
    %v295 = vunpack.c.l.bf16 %v36
    %v296 = vunpack.c.l.bf16 %v37
    %v297 = vunpack.c.h.bf16 %v37
    %v298 = vunpack.c.l.bf16 %v38
    %v299 = vunpack.c.l.bf16 %v39
    %v300 = vunpack.c.h.bf16 %v39
    %v301 = vunpack.c.l.bf16 %v40
    %v302 = vunpack.c.l.bf16 %v41
    %v303 = vunpack.c.h.bf16 %v41
    %v304 = vunpack.c.l.bf16 %v42
    %v305 = vunpack.c.l.bf16 %v43
    %v306 = vunpack.c.h.bf16 %v43
    %v307 = vunpack.c.l.bf16 %v44
    %v308 = vunpack.c.l.bf16 %v45
    %v309 = vunpack.c.h.bf16 %v45
    %v310 = vunpack.c.l.bf16 %v46
    %v311 = vunpack.c.l.bf16 %v47
    %v312 = vunpack.c.h.bf16 %v47
    %v313 = vunpack.c.l.bf16 %v48
    %v314 = vunpack.c.l.bf16 %v49
    %v315 = vunpack.c.h.bf16 %v49
    %v316 = vunpack.c.l.bf16 %v50
    %v317 = vunpack.c.l.bf16 %v51
    %v318 = vunpack.c.h.bf16 %v51
    %v319 = vunpack.c.l.bf16 %v52
    %v320 = vunpack.c.l.bf16 %v53
    %v321 = vunpack.c.h.bf16 %v53
    %v322 = vunpack.c.l.bf16 %v54
    %v323 = vunpack.c.l.bf16 %v55
    %v324 = vunpack.c.h.bf16 %v55
    %v325 = vunpack.c.l.bf16 %v56
    %v326 = vunpack.c.l.bf16 %v57
    %v327 = vunpack.c.h.bf16 %v57
    %v328 = vunpack.c.l.bf16 %v58
    %v329 = vunpack.c.l.bf16 %v59
    %v330 = vunpack.c.h.bf16 %v59
    %v331 = vunpack.c.l.bf16 %v60
    %v332 = vunpack.c.l.bf16 %v61
    %v333 = vunpack.c.h.bf16 %v61
    %v334 = vunpack.c.l.bf16 %v62
    %v335 = vunpack.c.l.bf16 %v63
    %v336 = vunpack.c.h.bf16 %v63
    %v337 = vunpack.c.l.bf16 %v64
    %v338 = vunpack.c.l.bf16 %v65
    %v339 = vunpack.c.h.bf16 %v65
    %v340 = vunpack.c.l.bf16 %v66
    %v341 = vunpack.c.l.bf16 %v67
    %v342 = vunpack.c.h.bf16 %v67
    %v343 = vunpack.c.l.bf16 %v68
    %v344 = vunpack.c.l.bf16 %v69
    %v345 = vunpack.c.h.bf16 %v69
    %v346 = vunpack.c.l.bf16 %v70
    %v347 = vunpack.c.l.bf16 %v71
    %v348 = vunpack.c.h.bf16 %v71
    %v349 = vunpack.c.l.bf16 %v72
    %v350 = vunpack.c.l.bf16 %v73
    %v351 = vunpack.c.h.bf16 %v73
    %v352 = vunpack.c.l.bf16 %v74
    %v353 = vunpack.c.l.bf16 %v75
    %v354 = vunpack.c.h.bf16 %v75
    %v355 = vunpack.c.l.bf16 %v76
    %v356 = vunpack.c.l.bf16 %v77
    %v357 = vunpack.c.h.bf16 %v77
    %v358 = vunpack.c.l.bf16 %v78
    %v359 = vunpack.c.l.bf16 %v79
    %v360 = vunpack.c.h.bf16 %v79
    %v361 = vunpack.c.l.bf16 %v80
    %v362 = vunpack.c.l.bf16 %v81
    %v363 = vunpack.c.h.bf16 %v81
    %v364 = vunpack.c.l.bf16 %v82
    %v365 = vunpack.c.l.bf16 %v83
    %v366 = vunpack.c.h.bf16 %v83
    %v367 = vunpack.c.l.bf16 %v84
    %v368 = vunpack.c.l.bf16 %v85
    %v369 = vunpack.c.h.bf16 %v85
    %v370 = vunpack.c.l.bf16 %v86
    %v371 = vunpack.c.l.bf16 %v87
    %v372 = vunpack.c.h.bf16 %v87
    %v373 = vunpack.c.l.bf16 %v88
    %v374 = vunpack.c.l.bf16 %v89
    %v375 = vunpack.c.h.bf16 %v89
    %v376 = vunpack.c.l.bf16 %v90
    %v377 = vunpack.c.l.bf16 %v91
    %v378 = vunpack.c.h.bf16 %v91
    %v379 = vunpack.c.l.bf16 %v92
    %v380 = vunpack.c.l.bf16 %v93
    %v381 = vunpack.c.h.bf16 %v93
    %v382 = vunpack.c.l.bf16 %v94
    %v383 = vunpack.c.l.bf16 %v95
    %v384 = vunpack.c.h.bf16 %v95
    %v385 = vunpack.c.l.bf16 %v96
    %v386 = vunpack.c.l.bf16 %v97
    %v387 = vunpack.c.h.bf16 %v97
    %v388 = vunpack.c.l.bf16 %v98
    %v389 = vunpack.c.l.bf16 %v99
    %v390 = vunpack.c.h.bf16 %v99
    %v391 = vunpack.c.l.bf16 %v100
    %v392 = vunpack.c.l.bf16 %v101
    %v393 = vunpack.c.h.bf16 %v101
    %v394 = vunpack.c.l.bf16 %v102
    %v395 = vunpack.c.l.bf16 %v103
    %v396 = vunpack.c.h.bf16 %v103
    %v397 = vunpack.c.l.bf16 %v104
    %v398 = vunpack.c.l.bf16 %v105
    %v399 = vunpack.c.h.bf16 %v105
    %v400 = vunpack.c.l.bf16 %v106
    %v401 = vunpack.c.l.bf16 %v107
    %v402 = vunpack.c.h.bf16 %v107
    %v403 = vunpack.c.l.bf16 %v108
    %v404 = vunpack.c.l.bf16 %v109
    %v405 = vunpack.c.h.bf16 %v109
    %v406 = vunpack.c.l.bf16 %v110
    %v407 = vunpack.c.l.bf16 %v111
    %v408 = vunpack.c.h.bf16 %v111
    %v409 = vunpack.c.l.bf16 %v112
    %v410 = vunpack.c.l.bf16 %v113
    %v411 = vunpack.c.h.bf16 %v113
    %v412 = vunpack.c.l.bf16 %v114
    %v413 = vunpack.c.l.bf16 %v115
    %v414 = vunpack.c.h.bf16 %v115
    %v415 = vunpack.c.l.bf16 %v116
    %v416 = vunpack.c.l.bf16 %v117
    %v417 = vunpack.c.h.bf16 %v117
    %v418 = vunpack.c.l.bf16 %v118
    %v419 = vunpack.c.l.bf16 %v119
    %v420 = vunpack.c.h.bf16 %v119
    %v421 = vunpack.c.l.bf16 %v120
    %v422 = vunpack.c.l.bf16 %v121
    %v423 = vunpack.c.h.bf16 %v121
    %v424 = vunpack.c.l.bf16 %v122
    %v425 = vunpack.c.l.bf16 %v123
    %v426 = vunpack.c.h.bf16 %v123
    %v427 = vunpack.c.l.bf16 %v124
    %v428 = vunpack.c.l.bf16 %v125
    %v429 = vunpack.c.h.bf16 %v125
    %v430 = vunpack.c.l.bf16 %v126
    %v431 = vunpack.c.l.bf16 %v127
    %v432 = vunpack.c.h.bf16 %v127
    %v433 = vunpack.c.l.bf16 %v128
    %v434 = vunpack.c.l.bf16 %v129
    %v435 = vunpack.c.h.bf16 %v129
    %v436 = vunpack.c.l.bf16 %v130
    %v437 = vunpack.c.l.bf16 %v131
    %v438 = vunpack.c.h.bf16 %v131
    %v439 = vunpack.c.l.bf16 %v132
    %v440 = vunpack.c.l.bf16 %v133
    %v441 = vunpack.c.h.bf16 %v133
    %v442 = vunpack.c.l.bf16 %v134
    %v443 = vunpack.c.l.bf16 %v135
    %v444 = vunpack.c.h.bf16 %v135
    %v445 = vunpack.c.l.bf16 %v136
    %v446 = vunpack.c.l.bf16 %v137
    %v447 = vunpack.c.h.bf16 %v137
    %v448 = vunpack.c.l.bf16 %v138
    %v449 = vunpack.c.l.bf16 %v139
    %v450 = vunpack.c.h.bf16 %v139
    %v451 = vunpack.c.l.bf16 %v140
    %v452 = vunpack.c.l.bf16 %v141
    %v453 = vunpack.c.h.bf16 %v141
    %v454 = vunpack.c.l.bf16 %v142
    %v455 = vunpack.c.l.bf16 %v143
    %v456 = vunpack.c.h.bf16 %v143
    %v457 = vunpack.c.l.bf16 %v144
    %v458 = vunpack.c.l.bf16 %v145
    %v459 = vunpack.c.h.bf16 %v145
    %v460 = vunpack.c.l.bf16 %v146
    %v461 = vunpack.c.l.bf16 %v147
    %v462 = vunpack.c.h.bf16 %v147
    %v463 = vunpack.c.l.bf16 %v148
    %v464 = vunpack.c.l.bf16 %v149
    %v465 = vunpack.c.h.bf16 %v149
    %v466 = vunpack.c.l.bf16 %v150
    %v467 = vunpack.c.l.bf16 %v151
    %v468 = vunpack.c.h.bf16 %v151
    %v469 = vunpack.c.l.bf16 %v152
    %v470 = vunpack.c.l.bf16 %v153
    %v471 = vunpack.c.h.bf16 %v153
    %v472 = vunpack.c.l.bf16 %v154
    %v473 = vunpack.c.l.bf16 %v155
    %v474 = vunpack.c.h.bf16 %v155
    %v475 = vunpack.c.l.bf16 %v156
    %v476 = vunpack.c.l.bf16 %v157
    %v477 = vunpack.c.h.bf16 %v157
    %v478 = vunpack.c.l.bf16 %v158
    %v479 = vunpack.c.l.bf16 %v159
    %v480 = vunpack.c.h.bf16 %v159
    %v481 = vunpack.c.l.bf16 %v160
    %v482 = vunpack.c.l.bf16 %v161
    %v483 = vunpack.c.h.bf16 %v161
    %v484 = vunpack.c.l.bf16 %v162
    %v485 = vunpack.c.l.bf16 %v163
    %v486 = vunpack.c.h.bf16 %v163
    %v487 = vunpack.c.l.bf16 %v164
    %v488 = vunpack.c.l.bf16 %v165
    %v489 = vunpack.c.h.bf16 %v165
    %v490 = vunpack.c.l.bf16 %v166
    %v491 = vunpack.c.l.bf16 %v167
    %v492 = vunpack.c.h.bf16 %v167
    %v493 = vunpack.c.l.bf16 %v168
    %v494 = vunpack.c.l.bf16 %v169
    %v495 = vunpack.c.h.bf16 %v169
    %v496 = vunpack.c.l.bf16 %v170
    %v497 = vunpack.c.l.bf16 %v171
    %v498 = vunpack.c.h.bf16 %v171
    %v499 = vunpack.c.l.bf16 %v172
    %v500 = vunpack.c.l.bf16 %v173
    %v501 = vunpack.c.h.bf16 %v173
    %v502 = vunpack.c.l.bf16 %v174
    %v503 = vunpack.c.l.bf16 %v175
    %v504 = vunpack.c.h.bf16 %v175
    %v505 = vunpack.c.l.bf16 %v176
    %v506 = vunpack.c.l.bf16 %v177
    %v507 = vunpack.c.h.bf16 %v177
    %v508 = vunpack.c.l.bf16 %v178
    %v509 = vunpack.c.l.bf16 %v179
    %v510 = vunpack.c.h.bf16 %v179
    %v511 = vunpack.c.l.bf16 %v180
    %v512 = vunpack.c.l.bf16 %v181
    %v513 = vunpack.c.h.bf16 %v181
    %v514 = vunpack.c.l.bf16 %v182
    %v515 = vunpack.c.l.bf16 %v183
    %v516 = vunpack.c.h.bf16 %v183
    %v517 = vunpack.c.l.bf16 %v184
    %v518 = vunpack.c.l.bf16 %v185
    %v519 = vunpack.c.h.bf16 %v185
    %v520 = vunpack.c.l.bf16 %v186
    %v521 = vunpack.c.l.bf16 %v187
    %v522 = vunpack.c.h.bf16 %v187
    %v523 = vunpack.c.l.bf16 %v188
    %v524 = vunpack.c.l.bf16 %v189
    %v525 = vunpack.c.h.bf16 %v189
    %v526 = vunpack.c.l.bf16 %v190
    %v527 = vunpack.c.l.bf16 %v191
    %v528 = vunpack.c.h.bf16 %v191
    %v529 = vunpack.c.l.bf16 %v192
    %v530 = vunpack.c.l.bf16 %v193
    %v531 = vunpack.c.h.bf16 %v193
    %v532 = vunpack.c.l.bf16 %v194
    %v533 = vunpack.c.l.bf16 %v195
    %v534 = vunpack.c.h.bf16 %v195
    %v535 = vunpack.c.l.bf16 %v196
    %v536 = vunpack.c.l.bf16 %v197
    %v537 = vunpack.c.h.bf16 %v197
    %v538 = vunpack.c.l.bf16 %v198
    %v539 = vunpack.c.l.bf16 %v199
    %v540 = vunpack.c.h.bf16 %v199
    %v541 = vunpack.c.l.bf16 %v200
    %v542 = vunpack.c.l.bf16 %v201
    %v543 = vunpack.c.h.bf16 %v201
    %v544 = vunpack.c.l.bf16 %v202
    %v545 = vunpack.c.l.bf16 %v203
    %v546 = vunpack.c.h.bf16 %v203
    %v547 = vunpack.c.l.bf16 %v204
    %v548 = vunpack.c.l.bf16 %v205
    %v549 = vunpack.c.h.bf16 %v205
    %v550 = vunpack.c.l.bf16 %v206
    %v551 = vunpack.c.l.bf16 %v207
    %v552 = vunpack.c.h.bf16 %v207
    %v553 = vunpack.c.l.bf16 %v208
    %v554 = vunpack.c.l.bf16 %v209
    %v555 = vunpack.c.h.bf16 %v209
    %v556 = vunpack.c.l.bf16 %v210
    %v557 = vunpack.c.l.bf16 %v211
    %v558 = vunpack.c.h.bf16 %v211
    %v559 = vunpack.c.l.bf16 %v212
    %v560 = vunpack.c.l.bf16 %v213
    %v561 = vunpack.c.h.bf16 %v213
    %v562 = vunpack.c.l.bf16 %v214
    %v563 = vunpack.c.l.bf16 %v215
    %v564 = vunpack.c.h.bf16 %v215
    %v565 = vunpack.c.l.bf16 %v216
    %v566 = vunpack.c.l.bf16 %v217
    %v567 = vunpack.c.h.bf16 %v217
    %v568 = vunpack.c.l.bf16 %v218
    %v569 = vunpack.c.l.bf16 %v219
    %v570 = vunpack.c.h.bf16 %v219
    %v571 = vunpack.c.l.bf16 %v220
    %v572 = vunpack.c.l.bf16 %v221
    %v573 = vunpack.c.h.bf16 %v221
    %v574 = vunpack.c.l.bf16 %v222
    %v575 = vunpack.c.l.bf16 %v223
    %v576 = vunpack.c.h.bf16 %v223
    %v577 = vunpack.c.l.bf16 %v224
    %v578 = vunpack.c.l.bf16 %v225
    %v579 = vunpack.c.h.bf16 %v225
    %v580 = vunpack.c.l.bf16 %v226
    %v581 = vunpack.c.l.bf16 %v227
    %v582 = vunpack.c.h.bf16 %v227
    %v583 = vunpack.c.l.bf16 %v228
    %v584 = vunpack.c.l.bf16 %v229
    %v585 = vunpack.c.h.bf16 %v229
    %v586 = vunpack.c.l.bf16 %v230
    %v587 = vunpack.c.l.bf16 %v231
    %v588 = vunpack.c.h.bf16 %v231
    %v589 = vunpack.c.l.bf16 %v232
    %v590 = vunpack.c.l.bf16 %v233
    %v591 = vunpack.c.h.bf16 %v233
    %v592 = vunpack.c.l.bf16 %v234
    %v593 = vunpack.c.l.bf16 %v235
    %v594 = vunpack.c.h.bf16 %v235
    %v595 = vunpack.c.l.bf16 %v236
    %v596 = vunpack.c.l.bf16 %v237
    %v597 = vunpack.c.h.bf16 %v237
    %v598 = vunpack.c.l.bf16 %v238
    %v599 = vunpack.c.l.bf16 %v239
    %v600 = vunpack.c.h.bf16 %v239
    %v601 = vunpack.c.l.bf16 %v240
    %v602 = vunpack.c.l.bf16 %v241
    %v603 = vunpack.c.h.bf16 %v241
    %v604 = vunpack.c.l.bf16 %v242
    %v605 = vunpack.c.l.bf16 %v243
    %v606 = vunpack.c.h.bf16 %v243
    %v607 = vunpack.c.l.bf16 %v244
    %v608 = vunpack.c.l.bf16 %v245
    %v609 = vunpack.c.h.bf16 %v245
    %v610 = vunpack.c.l.bf16 %v246
    %v611 = vunpack.c.l.bf16 %v247
    %v612 = vunpack.c.h.bf16 %v247
    %v613 = vunpack.c.l.bf16 %v248
    %v614 = vunpack.c.l.bf16 %v249
    %v615 = vunpack.c.h.bf16 %v249
    %v616 = vunpack.c.l.bf16 %v250
    %v617 = vunpack.c.l.bf16 %v251
    %v618 = vunpack.c.h.bf16 %v251
    %v619 = vunpack.c.l.bf16 %v252
    %v620 = vunpack.c.l.bf16 %v253
    %v621 = vunpack.c.h.bf16 %v253
    %v622 = vunpack.c.l.bf16 %v254
    %v623 = vunpack.c.l.bf16 %v255
    %v624 = vunpack.c.h.bf16 %v255
    %v625 = vunpack.c.l.bf16 %v256
    %v626 = vunpack.c.l.bf16 %v257
    %v627 = vunpack.c.h.bf16 %v257
    %v628 = vunpack.c.l.bf16 %v258
    %v629 = vunpack.c.l.bf16 %v259
    %v630 = vunpack.c.h.bf16 %v259
    %v631 = vunpack.c.l.bf16 %v260
    %v632 = vunpack.c.l.bf16 %v261
    %v633 = vunpack.c.h.bf16 %v261
    %v634 = vunpack.c.l.bf16 %v262
    %v635 = vunpack.c.l.bf16 %v263
    %v636 = vunpack.c.h.bf16 %v263
    %v637 = vunpack.c.l.bf16 %v264
    %v638 = vunpack.c.l.bf16 %v265
    %v639 = vunpack.c.h.bf16 %v265
    %v640 = vunpack.c.l.bf16 %v266
    %v641 = vunpack.c.l.bf16 %v267
    %v642 = vunpack.c.h.bf16 %v267
    %v643 = vunpack.c.l.bf16 %v268
    %v644 = vunpack.c.l.bf16 %v269
    %v645 = vunpack.c.h.bf16 %v269
    %v646 = vunpack.c.l.bf16 %v270
    %v647 = vunpack.c.l.bf16 %v271
    %v648 = vunpack.c.h.bf16 %v271
    %v649 = vunpack.c.l.bf16 %v272
    %v650 = vunpack.c.l.bf16 %v273
    %v651 = vunpack.c.h.bf16 %v273
    %v652 = vunpack.c.l.bf16 %v274
    %v653 = vunpack.c.l.bf16 %v275
    %v654 = vunpack.c.h.bf16 %v275
    %v655 = vunpack.c.l.bf16 %v276
    %v656 = vunpack.c.l.bf16 %v277
    %v657 = vunpack.c.h.bf16 %v277
    %v658 = vunpack.c.l.bf16 %v278
    %v659 = vunpack.c.l.bf16 %v279
    %v660 = vunpack.c.h.bf16 %v279
    %v661 = vunpack.c.l.bf16 %v280
    %v662 = vunpack.c.l.bf16 %v281
    %v663 = vunpack.c.h.bf16 %v281
    %v664 = vunpack.c.l.bf16 %v282
    %v665 = vunpack.c.l.bf16 %v283
    %v666 = vunpack.c.h.bf16 %v283
    %v667 = vunpack.c.l.bf16 %v284
    %v668 = vunpack.c.l.bf16 %v285
    %v669 = vunpack.c.h.bf16 %v285
    %v670 = vunpack.c.l.bf16 %v286
    %799 = vrot.lane.b32.xlu0 %v289, 16
    %v800 = vpop.permute.xlu0 %799
    %801 = vrot.lane.b32.xlu0 %v292, 16
    %v802 = vpop.permute.xlu0 %801
    %803 = vrot.lane.b32.xlu0 %v295, 16
    %v804 = vpop.permute.xlu0 %803
    %805 = vrot.lane.b32.xlu0 %v298, 16
    %v806 = vpop.permute.xlu0 %805
    %807 = vrot.lane.b32.xlu0 %v301, 16
    %v808 = vpop.permute.xlu0 %807
    %809 = vrot.lane.b32.xlu0 %v304, 16
    %v810 = vpop.permute.xlu0 %809
    %811 = vrot.lane.b32.xlu0 %v307, 16
    %v812 = vpop.permute.xlu0 %811
    %813 = vrot.lane.b32.xlu0 %v310, 16
    %v814 = vpop.permute.xlu0 %813
    %815 = vrot.lane.b32.xlu0 %v313, 16
    %v816 = vpop.permute.xlu0 %815
    %817 = vrot.lane.b32.xlu0 %v316, 16
    %v818 = vpop.permute.xlu0 %817
    %819 = vrot.lane.b32.xlu0 %v319, 16
    %v820 = vpop.permute.xlu0 %819
    %821 = vrot.lane.b32.xlu0 %v322, 16
    %v822 = vpop.permute.xlu0 %821
    %823 = vrot.lane.b32.xlu0 %v325, 16
    %v824 = vpop.permute.xlu0 %823
    %825 = vrot.lane.b32.xlu0 %v328, 16
    %v826 = vpop.permute.xlu0 %825
    %827 = vrot.lane.b32.xlu0 %v331, 16
    %v828 = vpop.permute.xlu0 %827
    %829 = vrot.lane.b32.xlu0 %v334, 16
    %v830 = vpop.permute.xlu0 %829
    %831 = vrot.lane.b32.xlu0 %v337, 16
    %v832 = vpop.permute.xlu0 %831
    %833 = vrot.lane.b32.xlu0 %v340, 16
    %v834 = vpop.permute.xlu0 %833
    %835 = vrot.lane.b32.xlu0 %v343, 16
    %v836 = vpop.permute.xlu0 %835
    %837 = vrot.lane.b32.xlu0 %v346, 16
    %v838 = vpop.permute.xlu0 %837
    %839 = vrot.lane.b32.xlu0 %v349, 16
    %v840 = vpop.permute.xlu0 %839
    %841 = vrot.lane.b32.xlu0 %v352, 16
    %v842 = vpop.permute.xlu0 %841
    %843 = vrot.lane.b32.xlu0 %v355, 16
    %v844 = vpop.permute.xlu0 %843
    %845 = vrot.lane.b32.xlu0 %v358, 16
    %v846 = vpop.permute.xlu0 %845
    %847 = vrot.lane.b32.xlu0 %v361, 16
    %v848 = vpop.permute.xlu0 %847
    %849 = vrot.lane.b32.xlu0 %v364, 16
    %v850 = vpop.permute.xlu0 %849
    %851 = vrot.lane.b32.xlu0 %v367, 16
    %v852 = vpop.permute.xlu0 %851
    %853 = vrot.lane.b32.xlu0 %v370, 16
    %v854 = vpop.permute.xlu0 %853
    %855 = vrot.lane.b32.xlu0 %v373, 16
    %v856 = vpop.permute.xlu0 %855
    %857 = vrot.lane.b32.xlu0 %v376, 16
    %v858 = vpop.permute.xlu0 %857
    %859 = vrot.lane.b32.xlu0 %v379, 16
    %v860 = vpop.permute.xlu0 %859
    %861 = vrot.lane.b32.xlu0 %v382, 16
    %v862 = vpop.permute.xlu0 %861
    %863 = vrot.lane.b32.xlu0 %v385, 16
    %v864 = vpop.permute.xlu0 %863
    %865 = vrot.lane.b32.xlu0 %v388, 16
    %v866 = vpop.permute.xlu0 %865
    %867 = vrot.lane.b32.xlu0 %v391, 16
    %v868 = vpop.permute.xlu0 %867
    %869 = vrot.lane.b32.xlu0 %v394, 16
    %v870 = vpop.permute.xlu0 %869
    %871 = vrot.lane.b32.xlu0 %v397, 16
    %v872 = vpop.permute.xlu0 %871
    %873 = vrot.lane.b32.xlu0 %v400, 16
    %v874 = vpop.permute.xlu0 %873
    %875 = vrot.lane.b32.xlu0 %v403, 16
    %v876 = vpop.permute.xlu0 %875
    %877 = vrot.lane.b32.xlu0 %v406, 16
    %v878 = vpop.permute.xlu0 %877
    %879 = vrot.lane.b32.xlu0 %v409, 16
    %v880 = vpop.permute.xlu0 %879
    %881 = vrot.lane.b32.xlu0 %v412, 16
    %v882 = vpop.permute.xlu0 %881
    %883 = vrot.lane.b32.xlu0 %v415, 16
    %v884 = vpop.permute.xlu0 %883
    %885 = vrot.lane.b32.xlu0 %v418, 16
    %v886 = vpop.permute.xlu0 %885
    %887 = vrot.lane.b32.xlu0 %v421, 16
    %v888 = vpop.permute.xlu0 %887
    %889 = vrot.lane.b32.xlu0 %v424, 16
    %v890 = vpop.permute.xlu0 %889
    %891 = vrot.lane.b32.xlu0 %v427, 16
    %v892 = vpop.permute.xlu0 %891
    %893 = vrot.lane.b32.xlu0 %v430, 16
    %v894 = vpop.permute.xlu0 %893
    %895 = vrot.lane.b32.xlu0 %v433, 16
    %v896 = vpop.permute.xlu0 %895
    %897 = vrot.lane.b32.xlu0 %v436, 16
    %v898 = vpop.permute.xlu0 %897
    %899 = vrot.lane.b32.xlu0 %v439, 16
    %v900 = vpop.permute.xlu0 %899
    %901 = vrot.lane.b32.xlu0 %v442, 16
    %v902 = vpop.permute.xlu0 %901
    %903 = vrot.lane.b32.xlu0 %v445, 16
    %v904 = vpop.permute.xlu0 %903
    %905 = vrot.lane.b32.xlu0 %v448, 16
    %v906 = vpop.permute.xlu0 %905
    %907 = vrot.lane.b32.xlu0 %v451, 16
    %v908 = vpop.permute.xlu0 %907
    %909 = vrot.lane.b32.xlu0 %v454, 16
    %v910 = vpop.permute.xlu0 %909
    %911 = vrot.lane.b32.xlu0 %v457, 16
    %v912 = vpop.permute.xlu0 %911
    %913 = vrot.lane.b32.xlu0 %v460, 16
    %v914 = vpop.permute.xlu0 %913
    %915 = vrot.lane.b32.xlu0 %v463, 16
    %v916 = vpop.permute.xlu0 %915
    %917 = vrot.lane.b32.xlu0 %v466, 16
    %v918 = vpop.permute.xlu0 %917
    %919 = vrot.lane.b32.xlu0 %v469, 16
    %v920 = vpop.permute.xlu0 %919
    %921 = vrot.lane.b32.xlu0 %v472, 16
    %v922 = vpop.permute.xlu0 %921
    %923 = vrot.lane.b32.xlu0 %v475, 16
    %v924 = vpop.permute.xlu0 %923
    %925 = vrot.lane.b32.xlu0 %v478, 16
    %v926 = vpop.permute.xlu0 %925
    %927 = vrot.lane.b32.xlu0 %v481, 16
    %v928 = vpop.permute.xlu0 %927
    %929 = vrot.lane.b32.xlu0 %v484, 16
    %v930 = vpop.permute.xlu0 %929
    %931 = vrot.lane.b32.xlu0 %v487, 16
    %v932 = vpop.permute.xlu0 %931
    %933 = vrot.lane.b32.xlu0 %v490, 16
    %v934 = vpop.permute.xlu0 %933
    %935 = vrot.lane.b32.xlu0 %v493, 16
    %v936 = vpop.permute.xlu0 %935
    %937 = vrot.lane.b32.xlu0 %v496, 16
    %v938 = vpop.permute.xlu0 %937
    %939 = vrot.lane.b32.xlu0 %v499, 16
    %v940 = vpop.permute.xlu0 %939
    %941 = vrot.lane.b32.xlu0 %v502, 16
    %v942 = vpop.permute.xlu0 %941
    %943 = vrot.lane.b32.xlu0 %v505, 16
    %v944 = vpop.permute.xlu0 %943
    %945 = vrot.lane.b32.xlu0 %v508, 16
    %v946 = vpop.permute.xlu0 %945
    %947 = vrot.lane.b32.xlu0 %v511, 16
    %v948 = vpop.permute.xlu0 %947
    %949 = vrot.lane.b32.xlu0 %v514, 16
    %v950 = vpop.permute.xlu0 %949
    %951 = vrot.lane.b32.xlu0 %v517, 16
    %v952 = vpop.permute.xlu0 %951
    %953 = vrot.lane.b32.xlu0 %v520, 16
    %v954 = vpop.permute.xlu0 %953
    %955 = vrot.lane.b32.xlu0 %v523, 16
    %v956 = vpop.permute.xlu0 %955
    %957 = vrot.lane.b32.xlu0 %v526, 16
    %v958 = vpop.permute.xlu0 %957
    %959 = vrot.lane.b32.xlu0 %v529, 16
    %v960 = vpop.permute.xlu0 %959
    %961 = vrot.lane.b32.xlu0 %v532, 16
    %v962 = vpop.permute.xlu0 %961
    %963 = vrot.lane.b32.xlu0 %v535, 16
    %v964 = vpop.permute.xlu0 %963
    %965 = vrot.lane.b32.xlu0 %v538, 16
    %v966 = vpop.permute.xlu0 %965
    %967 = vrot.lane.b32.xlu0 %v541, 16
    %v968 = vpop.permute.xlu0 %967
    %969 = vrot.lane.b32.xlu0 %v544, 16
    %v970 = vpop.permute.xlu0 %969
    %971 = vrot.lane.b32.xlu0 %v547, 16
    %v972 = vpop.permute.xlu0 %971
    %973 = vrot.lane.b32.xlu0 %v550, 16
    %v974 = vpop.permute.xlu0 %973
    %975 = vrot.lane.b32.xlu0 %v553, 16
    %v976 = vpop.permute.xlu0 %975
    %977 = vrot.lane.b32.xlu0 %v556, 16
    %v978 = vpop.permute.xlu0 %977
    %979 = vrot.lane.b32.xlu0 %v559, 16
    %v980 = vpop.permute.xlu0 %979
    %981 = vrot.lane.b32.xlu0 %v562, 16
    %v982 = vpop.permute.xlu0 %981
    %983 = vrot.lane.b32.xlu0 %v565, 16
    %v984 = vpop.permute.xlu0 %983
    %985 = vrot.lane.b32.xlu0 %v568, 16
    %v986 = vpop.permute.xlu0 %985
    %987 = vrot.lane.b32.xlu0 %v571, 16
    %v988 = vpop.permute.xlu0 %987
    %989 = vrot.lane.b32.xlu0 %v574, 16
    %v990 = vpop.permute.xlu0 %989
    %991 = vrot.lane.b32.xlu0 %v577, 16
    %v992 = vpop.permute.xlu0 %991
    %993 = vrot.lane.b32.xlu0 %v580, 16
    %v994 = vpop.permute.xlu0 %993
    %995 = vrot.lane.b32.xlu0 %v583, 16
    %v996 = vpop.permute.xlu0 %995
    %997 = vrot.lane.b32.xlu0 %v586, 16
    %v998 = vpop.permute.xlu0 %997
    %999 = vrot.lane.b32.xlu0 %v589, 16
    %v1000 = vpop.permute.xlu0 %999
    %1001 = vrot.lane.b32.xlu0 %v592, 16
    %v1002 = vpop.permute.xlu0 %1001
    %1003 = vrot.lane.b32.xlu0 %v595, 16
    %v1004 = vpop.permute.xlu0 %1003
    %1005 = vrot.lane.b32.xlu0 %v598, 16
    %v1006 = vpop.permute.xlu0 %1005
    %1007 = vrot.lane.b32.xlu0 %v601, 16
    %v1008 = vpop.permute.xlu0 %1007
    %1009 = vrot.lane.b32.xlu0 %v604, 16
    %v1010 = vpop.permute.xlu0 %1009
    %1011 = vrot.lane.b32.xlu0 %v607, 16
    %v1012 = vpop.permute.xlu0 %1011
    %1013 = vrot.lane.b32.xlu0 %v610, 16
    %v1014 = vpop.permute.xlu0 %1013
    %1015 = vrot.lane.b32.xlu0 %v613, 16
    %v1016 = vpop.permute.xlu0 %1015
    %1017 = vrot.lane.b32.xlu0 %v616, 16
    %v1018 = vpop.permute.xlu0 %1017
    %1019 = vrot.lane.b32.xlu0 %v619, 16
    %v1020 = vpop.permute.xlu0 %1019
    %1021 = vrot.lane.b32.xlu0 %v622, 16
    %v1022 = vpop.permute.xlu0 %1021
    %1023 = vrot.lane.b32.xlu0 %v625, 16
    %v1024 = vpop.permute.xlu0 %1023
    %1025 = vrot.lane.b32.xlu0 %v628, 16
    %v1026 = vpop.permute.xlu0 %1025
    %1027 = vrot.lane.b32.xlu0 %v631, 16
    %v1028 = vpop.permute.xlu0 %1027
    %1029 = vrot.lane.b32.xlu0 %v634, 16
    %v1030 = vpop.permute.xlu0 %1029
    %1031 = vrot.lane.b32.xlu0 %v637, 16
    %v1032 = vpop.permute.xlu0 %1031
    %1033 = vrot.lane.b32.xlu0 %v640, 16
    %v1034 = vpop.permute.xlu0 %1033
    %1035 = vrot.lane.b32.xlu0 %v643, 16
    %v1036 = vpop.permute.xlu0 %1035
    %1037 = vrot.lane.b32.xlu0 %v646, 16
    %v1038 = vpop.permute.xlu0 %1037
    %1039 = vrot.lane.b32.xlu0 %v649, 16
    %v1040 = vpop.permute.xlu0 %1039
    %1041 = vrot.lane.b32.xlu0 %v652, 16
    %v1042 = vpop.permute.xlu0 %1041
    %1043 = vrot.lane.b32.xlu0 %v655, 16
    %v1044 = vpop.permute.xlu0 %1043
    %1045 = vrot.lane.b32.xlu0 %v658, 16
    %v1046 = vpop.permute.xlu0 %1045
    %1047 = vrot.lane.b32.xlu0 %v661, 16
    %v1048 = vpop.permute.xlu0 %1047
    %1049 = vrot.lane.b32.xlu0 %v664, 16
    %v1050 = vpop.permute.xlu0 %1049
    %1051 = vrot.lane.b32.xlu0 %v667, 16
    %v1052 = vpop.permute.xlu0 %1051
    %1053 = vrot.lane.b32.xlu0 %v670, 16
    %v1054 = vpop.permute.xlu0 %1053
    %vm1183 = vcmask 130048
    %v1184 = vsel %vm1183, %v289, %v800
    %v1185 = vsel %vm1183, %v292, %v802
    %v1186 = vsel %vm1183, %v295, %v804
    %v1187 = vsel %vm1183, %v298, %v806
    %v1188 = vsel %vm1183, %v301, %v808
    %v1189 = vsel %vm1183, %v304, %v810
    %v1190 = vsel %vm1183, %v307, %v812
    %v1191 = vsel %vm1183, %v310, %v814
    %v1192 = vsel %vm1183, %v313, %v816
    %v1193 = vsel %vm1183, %v316, %v818
    %v1194 = vsel %vm1183, %v319, %v820
    %v1195 = vsel %vm1183, %v322, %v822
    %v1196 = vsel %vm1183, %v325, %v824
    %v1197 = vsel %vm1183, %v328, %v826
    %v1198 = vsel %vm1183, %v331, %v828
    %v1199 = vsel %vm1183, %v334, %v830
    %v1200 = vsel %vm1183, %v337, %v832
    %v1201 = vsel %vm1183, %v340, %v834
    %v1202 = vsel %vm1183, %v343, %v836
    %v1203 = vsel %vm1183, %v346, %v838
    %v1204 = vsel %vm1183, %v349, %v840
    %v1205 = vsel %vm1183, %v352, %v842
    %v1206 = vsel %vm1183, %v355, %v844
    %v1207 = vsel %vm1183, %v358, %v846
    %v1208 = vsel %vm1183, %v361, %v848
    %v1209 = vsel %vm1183, %v364, %v850
    %v1210 = vsel %vm1183, %v367, %v852
    %v1211 = vsel %vm1183, %v370, %v854
    %v1212 = vsel %vm1183, %v373, %v856
    %v1213 = vsel %vm1183, %v376, %v858
    %v1214 = vsel %vm1183, %v379, %v860
    %v1215 = vsel %vm1183, %v382, %v862
    %v1216 = vsel %vm1183, %v385, %v864
    %v1217 = vsel %vm1183, %v388, %v866
    %v1218 = vsel %vm1183, %v391, %v868
    %v1219 = vsel %vm1183, %v394, %v870
    %v1220 = vsel %vm1183, %v397, %v872
    %v1221 = vsel %vm1183, %v400, %v874
    %v1222 = vsel %vm1183, %v403, %v876
    %v1223 = vsel %vm1183, %v406, %v878
    %v1224 = vsel %vm1183, %v409, %v880
    %v1225 = vsel %vm1183, %v412, %v882
    %v1226 = vsel %vm1183, %v415, %v884
    %v1227 = vsel %vm1183, %v418, %v886
    %v1228 = vsel %vm1183, %v421, %v888
    %v1229 = vsel %vm1183, %v424, %v890
    %v1230 = vsel %vm1183, %v427, %v892
    %v1231 = vsel %vm1183, %v430, %v894
    %v1232 = vsel %vm1183, %v433, %v896
    %v1233 = vsel %vm1183, %v436, %v898
    %v1234 = vsel %vm1183, %v439, %v900
    %v1235 = vsel %vm1183, %v442, %v902
    %v1236 = vsel %vm1183, %v445, %v904
    %v1237 = vsel %vm1183, %v448, %v906
    %v1238 = vsel %vm1183, %v451, %v908
    %v1239 = vsel %vm1183, %v454, %v910
    %v1240 = vsel %vm1183, %v457, %v912
    %v1241 = vsel %vm1183, %v460, %v914
    %v1242 = vsel %vm1183, %v463, %v916
    %v1243 = vsel %vm1183, %v466, %v918
    %v1244 = vsel %vm1183, %v469, %v920
    %v1245 = vsel %vm1183, %v472, %v922
    %v1246 = vsel %vm1183, %v475, %v924
    %v1247 = vsel %vm1183, %v478, %v926
    %v1248 = vsel %vm1183, %v481, %v928
    %v1249 = vsel %vm1183, %v484, %v930
    %v1250 = vsel %vm1183, %v487, %v932
    %v1251 = vsel %vm1183, %v490, %v934
    %v1252 = vsel %vm1183, %v493, %v936
    %v1253 = vsel %vm1183, %v496, %v938
    %v1254 = vsel %vm1183, %v499, %v940
    %v1255 = vsel %vm1183, %v502, %v942
    %v1256 = vsel %vm1183, %v505, %v944
    %v1257 = vsel %vm1183, %v508, %v946
    %v1258 = vsel %vm1183, %v511, %v948
    %v1259 = vsel %vm1183, %v514, %v950
    %v1260 = vsel %vm1183, %v517, %v952
    %v1261 = vsel %vm1183, %v520, %v954
    %v1262 = vsel %vm1183, %v523, %v956
    %v1263 = vsel %vm1183, %v526, %v958
    %v1264 = vsel %vm1183, %v529, %v960
    %v1265 = vsel %vm1183, %v532, %v962
    %v1266 = vsel %vm1183, %v535, %v964
    %v1267 = vsel %vm1183, %v538, %v966
    %v1268 = vsel %vm1183, %v541, %v968
    %v1269 = vsel %vm1183, %v544, %v970
    %v1270 = vsel %vm1183, %v547, %v972
    %v1271 = vsel %vm1183, %v550, %v974
    %v1272 = vsel %vm1183, %v553, %v976
    %v1273 = vsel %vm1183, %v556, %v978
    %v1274 = vsel %vm1183, %v559, %v980
    %v1275 = vsel %vm1183, %v562, %v982
    %v1276 = vsel %vm1183, %v565, %v984
    %v1277 = vsel %vm1183, %v568, %v986
    %v1278 = vsel %vm1183, %v571, %v988
    %v1279 = vsel %vm1183, %v574, %v990
    %v1280 = vsel %vm1183, %v577, %v992
    %v1281 = vsel %vm1183, %v580, %v994
    %v1282 = vsel %vm1183, %v583, %v996
    %v1283 = vsel %vm1183, %v586, %v998
    %v1284 = vsel %vm1183, %v589, %v1000
    %v1285 = vsel %vm1183, %v592, %v1002
    %v1286 = vsel %vm1183, %v595, %v1004
    %v1287 = vsel %vm1183, %v598, %v1006
    %v1288 = vsel %vm1183, %v601, %v1008
    %v1289 = vsel %vm1183, %v604, %v1010
    %v1290 = vsel %vm1183, %v607, %v1012
    %v1291 = vsel %vm1183, %v610, %v1014
    %v1292 = vsel %vm1183, %v613, %v1016
    %v1293 = vsel %vm1183, %v616, %v1018
    %v1294 = vsel %vm1183, %v619, %v1020
    %v1295 = vsel %vm1183, %v622, %v1022
    %v1296 = vsel %vm1183, %v625, %v1024
    %v1297 = vsel %vm1183, %v628, %v1026
    %v1298 = vsel %vm1183, %v631, %v1028
    %v1299 = vsel %vm1183, %v634, %v1030
    %v1300 = vsel %vm1183, %v637, %v1032
    %v1301 = vsel %vm1183, %v640, %v1034
    %v1302 = vsel %vm1183, %v643, %v1036
    %v1303 = vsel %vm1183, %v646, %v1038
    %v1304 = vsel %vm1183, %v649, %v1040
    %v1305 = vsel %vm1183, %v652, %v1042
    %v1306 = vsel %vm1183, %v655, %v1044
    %v1307 = vsel %vm1183, %v658, %v1046
    %v1308 = vsel %vm1183, %v661, %v1048
    %v1309 = vsel %vm1183, %v664, %v1050
    %v1310 = vsel %vm1183, %v667, %v1052
    %v1311 = vsel %vm1183, %v670, %v1054
    %1312 = vrot.lane.b32.xlu0 %v289, 112
    %v1313 = vpop.permute.xlu0 %1312
    %1314 = vrot.lane.b32.xlu0 %v292, 112
    %v1315 = vpop.permute.xlu0 %1314
    %1316 = vrot.lane.b32.xlu0 %v295, 112
    %v1317 = vpop.permute.xlu0 %1316
    %1318 = vrot.lane.b32.xlu0 %v298, 112
    %v1319 = vpop.permute.xlu0 %1318
    %1320 = vrot.lane.b32.xlu0 %v301, 112
    %v1321 = vpop.permute.xlu0 %1320
    %1322 = vrot.lane.b32.xlu0 %v304, 112
    %v1323 = vpop.permute.xlu0 %1322
    %1324 = vrot.lane.b32.xlu0 %v307, 112
    %v1325 = vpop.permute.xlu0 %1324
    %1326 = vrot.lane.b32.xlu0 %v310, 112
    %v1327 = vpop.permute.xlu0 %1326
    %1328 = vrot.lane.b32.xlu0 %v313, 112
    %v1329 = vpop.permute.xlu0 %1328
    %1330 = vrot.lane.b32.xlu0 %v316, 112
    %v1331 = vpop.permute.xlu0 %1330
    %1332 = vrot.lane.b32.xlu0 %v319, 112
    %v1333 = vpop.permute.xlu0 %1332
    %1334 = vrot.lane.b32.xlu0 %v322, 112
    %v1335 = vpop.permute.xlu0 %1334
    %1336 = vrot.lane.b32.xlu0 %v325, 112
    %v1337 = vpop.permute.xlu0 %1336
    %1338 = vrot.lane.b32.xlu0 %v328, 112
    %v1339 = vpop.permute.xlu0 %1338
    %1340 = vrot.lane.b32.xlu0 %v331, 112
    %v1341 = vpop.permute.xlu0 %1340
    %1342 = vrot.lane.b32.xlu0 %v334, 112
    %v1343 = vpop.permute.xlu0 %1342
    %1344 = vrot.lane.b32.xlu0 %v337, 112
    %v1345 = vpop.permute.xlu0 %1344
    %1346 = vrot.lane.b32.xlu0 %v340, 112
    %v1347 = vpop.permute.xlu0 %1346
    %1348 = vrot.lane.b32.xlu0 %v343, 112
    %v1349 = vpop.permute.xlu0 %1348
    %1350 = vrot.lane.b32.xlu0 %v346, 112
    %v1351 = vpop.permute.xlu0 %1350
    %1352 = vrot.lane.b32.xlu0 %v349, 112
    %v1353 = vpop.permute.xlu0 %1352
    %1354 = vrot.lane.b32.xlu0 %v352, 112
    %v1355 = vpop.permute.xlu0 %1354
    %1356 = vrot.lane.b32.xlu0 %v355, 112
    %v1357 = vpop.permute.xlu0 %1356
    %1358 = vrot.lane.b32.xlu0 %v358, 112
    %v1359 = vpop.permute.xlu0 %1358
    %1360 = vrot.lane.b32.xlu0 %v361, 112
    %v1361 = vpop.permute.xlu0 %1360
    %1362 = vrot.lane.b32.xlu0 %v364, 112
    %v1363 = vpop.permute.xlu0 %1362
    %1364 = vrot.lane.b32.xlu0 %v367, 112
    %v1365 = vpop.permute.xlu0 %1364
    %1366 = vrot.lane.b32.xlu0 %v370, 112
    %v1367 = vpop.permute.xlu0 %1366
    %1368 = vrot.lane.b32.xlu0 %v373, 112
    %v1369 = vpop.permute.xlu0 %1368
    %1370 = vrot.lane.b32.xlu0 %v376, 112
    %v1371 = vpop.permute.xlu0 %1370
    %1372 = vrot.lane.b32.xlu0 %v379, 112
    %v1373 = vpop.permute.xlu0 %1372
    %1374 = vrot.lane.b32.xlu0 %v382, 112
    %v1375 = vpop.permute.xlu0 %1374
    %1376 = vrot.lane.b32.xlu0 %v385, 112
    %v1377 = vpop.permute.xlu0 %1376
    %1378 = vrot.lane.b32.xlu0 %v388, 112
    %v1379 = vpop.permute.xlu0 %1378
    %1380 = vrot.lane.b32.xlu0 %v391, 112
    %v1381 = vpop.permute.xlu0 %1380
    %1382 = vrot.lane.b32.xlu0 %v394, 112
    %v1383 = vpop.permute.xlu0 %1382
    %1384 = vrot.lane.b32.xlu0 %v397, 112
    %v1385 = vpop.permute.xlu0 %1384
    %1386 = vrot.lane.b32.xlu0 %v400, 112
    %v1387 = vpop.permute.xlu0 %1386
    %1388 = vrot.lane.b32.xlu0 %v403, 112
    %v1389 = vpop.permute.xlu0 %1388
    %1390 = vrot.lane.b32.xlu0 %v406, 112
    %v1391 = vpop.permute.xlu0 %1390
    %1392 = vrot.lane.b32.xlu0 %v409, 112
    %v1393 = vpop.permute.xlu0 %1392
    %1394 = vrot.lane.b32.xlu0 %v412, 112
    %v1395 = vpop.permute.xlu0 %1394
    %1396 = vrot.lane.b32.xlu0 %v415, 112
    %v1397 = vpop.permute.xlu0 %1396
    %1398 = vrot.lane.b32.xlu0 %v418, 112
    %v1399 = vpop.permute.xlu0 %1398
    %1400 = vrot.lane.b32.xlu0 %v421, 112
    %v1401 = vpop.permute.xlu0 %1400
    %1402 = vrot.lane.b32.xlu0 %v424, 112
    %v1403 = vpop.permute.xlu0 %1402
    %1404 = vrot.lane.b32.xlu0 %v427, 112
    %v1405 = vpop.permute.xlu0 %1404
    %1406 = vrot.lane.b32.xlu0 %v430, 112
    %v1407 = vpop.permute.xlu0 %1406
    %1408 = vrot.lane.b32.xlu0 %v433, 112
    %v1409 = vpop.permute.xlu0 %1408
    %1410 = vrot.lane.b32.xlu0 %v436, 112
    %v1411 = vpop.permute.xlu0 %1410
    %1412 = vrot.lane.b32.xlu0 %v439, 112
    %v1413 = vpop.permute.xlu0 %1412
    %1414 = vrot.lane.b32.xlu0 %v442, 112
    %v1415 = vpop.permute.xlu0 %1414
    %1416 = vrot.lane.b32.xlu0 %v445, 112
    %v1417 = vpop.permute.xlu0 %1416
    %1418 = vrot.lane.b32.xlu0 %v448, 112
    %v1419 = vpop.permute.xlu0 %1418
    %1420 = vrot.lane.b32.xlu0 %v451, 112
    %v1421 = vpop.permute.xlu0 %1420
    %1422 = vrot.lane.b32.xlu0 %v454, 112
    %v1423 = vpop.permute.xlu0 %1422
    %1424 = vrot.lane.b32.xlu0 %v457, 112
    %v1425 = vpop.permute.xlu0 %1424
    %1426 = vrot.lane.b32.xlu0 %v460, 112
    %v1427 = vpop.permute.xlu0 %1426
    %1428 = vrot.lane.b32.xlu0 %v463, 112
    %v1429 = vpop.permute.xlu0 %1428
    %1430 = vrot.lane.b32.xlu0 %v466, 112
    %v1431 = vpop.permute.xlu0 %1430
    %1432 = vrot.lane.b32.xlu0 %v469, 112
    %v1433 = vpop.permute.xlu0 %1432
    %1434 = vrot.lane.b32.xlu0 %v472, 112
    %v1435 = vpop.permute.xlu0 %1434
    %1436 = vrot.lane.b32.xlu0 %v475, 112
    %v1437 = vpop.permute.xlu0 %1436
    %1438 = vrot.lane.b32.xlu0 %v478, 112
    %v1439 = vpop.permute.xlu0 %1438
    %1440 = vrot.lane.b32.xlu0 %v481, 112
    %v1441 = vpop.permute.xlu0 %1440
    %1442 = vrot.lane.b32.xlu0 %v484, 112
    %v1443 = vpop.permute.xlu0 %1442
    %1444 = vrot.lane.b32.xlu0 %v487, 112
    %v1445 = vpop.permute.xlu0 %1444
    %1446 = vrot.lane.b32.xlu0 %v490, 112
    %v1447 = vpop.permute.xlu0 %1446
    %1448 = vrot.lane.b32.xlu0 %v493, 112
    %v1449 = vpop.permute.xlu0 %1448
    %1450 = vrot.lane.b32.xlu0 %v496, 112
    %v1451 = vpop.permute.xlu0 %1450
    %1452 = vrot.lane.b32.xlu0 %v499, 112
    %v1453 = vpop.permute.xlu0 %1452
    %1454 = vrot.lane.b32.xlu0 %v502, 112
    %v1455 = vpop.permute.xlu0 %1454
    %1456 = vrot.lane.b32.xlu0 %v505, 112
    %v1457 = vpop.permute.xlu0 %1456
    %1458 = vrot.lane.b32.xlu0 %v508, 112
    %v1459 = vpop.permute.xlu0 %1458
    %1460 = vrot.lane.b32.xlu0 %v511, 112
    %v1461 = vpop.permute.xlu0 %1460
    %1462 = vrot.lane.b32.xlu0 %v514, 112
    %v1463 = vpop.permute.xlu0 %1462
    %1464 = vrot.lane.b32.xlu0 %v517, 112
    %v1465 = vpop.permute.xlu0 %1464
    %1466 = vrot.lane.b32.xlu0 %v520, 112
    %v1467 = vpop.permute.xlu0 %1466
    %1468 = vrot.lane.b32.xlu0 %v523, 112
    %v1469 = vpop.permute.xlu0 %1468
    %1470 = vrot.lane.b32.xlu0 %v526, 112
    %v1471 = vpop.permute.xlu0 %1470
    %1472 = vrot.lane.b32.xlu0 %v529, 112
    %v1473 = vpop.permute.xlu0 %1472
    %1474 = vrot.lane.b32.xlu0 %v532, 112
    %v1475 = vpop.permute.xlu0 %1474
    %1476 = vrot.lane.b32.xlu0 %v535, 112
    %v1477 = vpop.permute.xlu0 %1476
    %1478 = vrot.lane.b32.xlu0 %v538, 112
    %v1479 = vpop.permute.xlu0 %1478
    %1480 = vrot.lane.b32.xlu0 %v541, 112
    %v1481 = vpop.permute.xlu0 %1480
    %1482 = vrot.lane.b32.xlu0 %v544, 112
    %v1483 = vpop.permute.xlu0 %1482
    %1484 = vrot.lane.b32.xlu0 %v547, 112
    %v1485 = vpop.permute.xlu0 %1484
    %1486 = vrot.lane.b32.xlu0 %v550, 112
    %v1487 = vpop.permute.xlu0 %1486
    %1488 = vrot.lane.b32.xlu0 %v553, 112
    %v1489 = vpop.permute.xlu0 %1488
    %1490 = vrot.lane.b32.xlu0 %v556, 112
    %v1491 = vpop.permute.xlu0 %1490
    %1492 = vrot.lane.b32.xlu0 %v559, 112
    %v1493 = vpop.permute.xlu0 %1492
    %1494 = vrot.lane.b32.xlu0 %v562, 112
    %v1495 = vpop.permute.xlu0 %1494
    %1496 = vrot.lane.b32.xlu0 %v565, 112
    %v1497 = vpop.permute.xlu0 %1496
    %1498 = vrot.lane.b32.xlu0 %v568, 112
    %v1499 = vpop.permute.xlu0 %1498
    %1500 = vrot.lane.b32.xlu0 %v571, 112
    %v1501 = vpop.permute.xlu0 %1500
    %1502 = vrot.lane.b32.xlu0 %v574, 112
    %v1503 = vpop.permute.xlu0 %1502
    %1504 = vrot.lane.b32.xlu0 %v577, 112
    %v1505 = vpop.permute.xlu0 %1504
    %1506 = vrot.lane.b32.xlu0 %v580, 112
    %v1507 = vpop.permute.xlu0 %1506
    %1508 = vrot.lane.b32.xlu0 %v583, 112
    %v1509 = vpop.permute.xlu0 %1508
    %1510 = vrot.lane.b32.xlu0 %v586, 112
    %v1511 = vpop.permute.xlu0 %1510
    %1512 = vrot.lane.b32.xlu0 %v589, 112
    %v1513 = vpop.permute.xlu0 %1512
    %1514 = vrot.lane.b32.xlu0 %v592, 112
    %v1515 = vpop.permute.xlu0 %1514
    %1516 = vrot.lane.b32.xlu0 %v595, 112
    %v1517 = vpop.permute.xlu0 %1516
    %1518 = vrot.lane.b32.xlu0 %v598, 112
    %v1519 = vpop.permute.xlu0 %1518
    %1520 = vrot.lane.b32.xlu0 %v601, 112
    %v1521 = vpop.permute.xlu0 %1520
    %1522 = vrot.lane.b32.xlu0 %v604, 112
    %v1523 = vpop.permute.xlu0 %1522
    %1524 = vrot.lane.b32.xlu0 %v607, 112
    %v1525 = vpop.permute.xlu0 %1524
    %1526 = vrot.lane.b32.xlu0 %v610, 112
    %v1527 = vpop.permute.xlu0 %1526
    %1528 = vrot.lane.b32.xlu0 %v613, 112
    %v1529 = vpop.permute.xlu0 %1528
    %1530 = vrot.lane.b32.xlu0 %v616, 112
    %v1531 = vpop.permute.xlu0 %1530
    %1532 = vrot.lane.b32.xlu0 %v619, 112
    %v1533 = vpop.permute.xlu0 %1532
    %1534 = vrot.lane.b32.xlu0 %v622, 112
    %v1535 = vpop.permute.xlu0 %1534
    %1536 = vrot.lane.b32.xlu0 %v625, 112
    %v1537 = vpop.permute.xlu0 %1536
    %1538 = vrot.lane.b32.xlu0 %v628, 112
    %v1539 = vpop.permute.xlu0 %1538
    %1540 = vrot.lane.b32.xlu0 %v631, 112
    %v1541 = vpop.permute.xlu0 %1540
    %1542 = vrot.lane.b32.xlu0 %v634, 112
    %v1543 = vpop.permute.xlu0 %1542
    %1544 = vrot.lane.b32.xlu0 %v637, 112
    %v1545 = vpop.permute.xlu0 %1544
    %1546 = vrot.lane.b32.xlu0 %v640, 112
    %v1547 = vpop.permute.xlu0 %1546
    %1548 = vrot.lane.b32.xlu0 %v643, 112
    %v1549 = vpop.permute.xlu0 %1548
    %1550 = vrot.lane.b32.xlu0 %v646, 112
    %v1551 = vpop.permute.xlu0 %1550
    %1552 = vrot.lane.b32.xlu0 %v649, 112
    %v1553 = vpop.permute.xlu0 %1552
    %1554 = vrot.lane.b32.xlu0 %v652, 112
    %v1555 = vpop.permute.xlu0 %1554
    %1556 = vrot.lane.b32.xlu0 %v655, 112
    %v1557 = vpop.permute.xlu0 %1556
    %1558 = vrot.lane.b32.xlu0 %v658, 112
    %v1559 = vpop.permute.xlu0 %1558
    %1560 = vrot.lane.b32.xlu0 %v661, 112
    %v1561 = vpop.permute.xlu0 %1560
    %1562 = vrot.lane.b32.xlu0 %v664, 112
    %v1563 = vpop.permute.xlu0 %1562
    %1564 = vrot.lane.b32.xlu0 %v667, 112
    %v1565 = vpop.permute.xlu0 %1564
    %1566 = vrot.lane.b32.xlu0 %v670, 112
    %v1567 = vpop.permute.xlu0 %1566
    %v1696 = vsel %vm1183, %v1313, %v289
    %v1697 = vsel %vm1183, %v1315, %v292
    %v1698 = vsel %vm1183, %v1317, %v295
    %v1699 = vsel %vm1183, %v1319, %v298
    %v1700 = vsel %vm1183, %v1321, %v301
    %v1701 = vsel %vm1183, %v1323, %v304
    %v1702 = vsel %vm1183, %v1325, %v307
    %v1703 = vsel %vm1183, %v1327, %v310
    %v1704 = vsel %vm1183, %v1329, %v313
    %v1705 = vsel %vm1183, %v1331, %v316
    %v1706 = vsel %vm1183, %v1333, %v319
    %v1707 = vsel %vm1183, %v1335, %v322
    %v1708 = vsel %vm1183, %v1337, %v325
    %v1709 = vsel %vm1183, %v1339, %v328
    %v1710 = vsel %vm1183, %v1341, %v331
    %v1711 = vsel %vm1183, %v1343, %v334
    %v1712 = vsel %vm1183, %v1345, %v337
    %v1713 = vsel %vm1183, %v1347, %v340
    %v1714 = vsel %vm1183, %v1349, %v343
    %v1715 = vsel %vm1183, %v1351, %v346
    %v1716 = vsel %vm1183, %v1353, %v349
    %v1717 = vsel %vm1183, %v1355, %v352
    %v1718 = vsel %vm1183, %v1357, %v355
    %v1719 = vsel %vm1183, %v1359, %v358
    %v1720 = vsel %vm1183, %v1361, %v361
    %v1721 = vsel %vm1183, %v1363, %v364
    %v1722 = vsel %vm1183, %v1365, %v367
    %v1723 = vsel %vm1183, %v1367, %v370
    %v1724 = vsel %vm1183, %v1369, %v373
    %v1725 = vsel %vm1183, %v1371, %v376
    %v1726 = vsel %vm1183, %v1373, %v379
    %v1727 = vsel %vm1183, %v1375, %v382
    %v1728 = vsel %vm1183, %v1377, %v385
    %v1729 = vsel %vm1183, %v1379, %v388
    %v1730 = vsel %vm1183, %v1381, %v391
    %v1731 = vsel %vm1183, %v1383, %v394
    %v1732 = vsel %vm1183, %v1385, %v397
    %v1733 = vsel %vm1183, %v1387, %v400
    %v1734 = vsel %vm1183, %v1389, %v403
    %v1735 = vsel %vm1183, %v1391, %v406
    %v1736 = vsel %vm1183, %v1393, %v409
    %v1737 = vsel %vm1183, %v1395, %v412
    %v1738 = vsel %vm1183, %v1397, %v415
    %v1739 = vsel %vm1183, %v1399, %v418
    %v1740 = vsel %vm1183, %v1401, %v421
    %v1741 = vsel %vm1183, %v1403, %v424
    %v1742 = vsel %vm1183, %v1405, %v427
    %v1743 = vsel %vm1183, %v1407, %v430
    %v1744 = vsel %vm1183, %v1409, %v433
    %v1745 = vsel %vm1183, %v1411, %v436
    %v1746 = vsel %vm1183, %v1413, %v439
    %v1747 = vsel %vm1183, %v1415, %v442
    %v1748 = vsel %vm1183, %v1417, %v445
    %v1749 = vsel %vm1183, %v1419, %v448
    %v1750 = vsel %vm1183, %v1421, %v451
    %v1751 = vsel %vm1183, %v1423, %v454
    %v1752 = vsel %vm1183, %v1425, %v457
    %v1753 = vsel %vm1183, %v1427, %v460
    %v1754 = vsel %vm1183, %v1429, %v463
    %v1755 = vsel %vm1183, %v1431, %v466
    %v1756 = vsel %vm1183, %v1433, %v469
    %v1757 = vsel %vm1183, %v1435, %v472
    %v1758 = vsel %vm1183, %v1437, %v475
    %v1759 = vsel %vm1183, %v1439, %v478
    %v1760 = vsel %vm1183, %v1441, %v481
    %v1761 = vsel %vm1183, %v1443, %v484
    %v1762 = vsel %vm1183, %v1445, %v487
    %v1763 = vsel %vm1183, %v1447, %v490
    %v1764 = vsel %vm1183, %v1449, %v493
    %v1765 = vsel %vm1183, %v1451, %v496
    %v1766 = vsel %vm1183, %v1453, %v499
    %v1767 = vsel %vm1183, %v1455, %v502
    %v1768 = vsel %vm1183, %v1457, %v505
    %v1769 = vsel %vm1183, %v1459, %v508
    %v1770 = vsel %vm1183, %v1461, %v511
    %v1771 = vsel %vm1183, %v1463, %v514
    %v1772 = vsel %vm1183, %v1465, %v517
    %v1773 = vsel %vm1183, %v1467, %v520
    %v1774 = vsel %vm1183, %v1469, %v523
    %v1775 = vsel %vm1183, %v1471, %v526
    %v1776 = vsel %vm1183, %v1473, %v529
    %v1777 = vsel %vm1183, %v1475, %v532
    %v1778 = vsel %vm1183, %v1477, %v535
    %v1779 = vsel %vm1183, %v1479, %v538
    %v1780 = vsel %vm1183, %v1481, %v541
    %v1781 = vsel %vm1183, %v1483, %v544
    %v1782 = vsel %vm1183, %v1485, %v547
    %v1783 = vsel %vm1183, %v1487, %v550
    %v1784 = vsel %vm1183, %v1489, %v553
    %v1785 = vsel %vm1183, %v1491, %v556
    %v1786 = vsel %vm1183, %v1493, %v559
    %v1787 = vsel %vm1183, %v1495, %v562
    %v1788 = vsel %vm1183, %v1497, %v565
    %v1789 = vsel %vm1183, %v1499, %v568
    %v1790 = vsel %vm1183, %v1501, %v571
    %v1791 = vsel %vm1183, %v1503, %v574
    %v1792 = vsel %vm1183, %v1505, %v577
    %v1793 = vsel %vm1183, %v1507, %v580
    %v1794 = vsel %vm1183, %v1509, %v583
    %v1795 = vsel %vm1183, %v1511, %v586
    %v1796 = vsel %vm1183, %v1513, %v589
    %v1797 = vsel %vm1183, %v1515, %v592
    %v1798 = vsel %vm1183, %v1517, %v595
    %v1799 = vsel %vm1183, %v1519, %v598
    %v1800 = vsel %vm1183, %v1521, %v601
    %v1801 = vsel %vm1183, %v1523, %v604
    %v1802 = vsel %vm1183, %v1525, %v607
    %v1803 = vsel %vm1183, %v1527, %v610
    %v1804 = vsel %vm1183, %v1529, %v613
    %v1805 = vsel %vm1183, %v1531, %v616
    %v1806 = vsel %vm1183, %v1533, %v619
    %v1807 = vsel %vm1183, %v1535, %v622
    %v1808 = vsel %vm1183, %v1537, %v625
    %v1809 = vsel %vm1183, %v1539, %v628
    %v1810 = vsel %vm1183, %v1541, %v631
    %v1811 = vsel %vm1183, %v1543, %v634
    %v1812 = vsel %vm1183, %v1545, %v637
    %v1813 = vsel %vm1183, %v1547, %v640
    %v1814 = vsel %vm1183, %v1549, %v643
    %v1815 = vsel %vm1183, %v1551, %v646
    %v1816 = vsel %vm1183, %v1553, %v649
    %v1817 = vsel %vm1183, %v1555, %v652
    %v1818 = vsel %vm1183, %v1557, %v655
    %v1819 = vsel %vm1183, %v1559, %v658
    %v1820 = vsel %vm1183, %v1561, %v661
    %v1821 = vsel %vm1183, %v1563, %v664
    %v1822 = vsel %vm1183, %v1565, %v667
    %v1823 = vsel %vm1183, %v1567, %v670
    %1824 = vrot.lane.b32.xlu0 %v289, 96
    %v1825 = vpop.permute.xlu0 %1824
    %1826 = vrot.lane.b32.xlu0 %v292, 96
    %v1827 = vpop.permute.xlu0 %1826
    %1828 = vrot.lane.b32.xlu0 %v295, 96
    %v1829 = vpop.permute.xlu0 %1828
    %1830 = vrot.lane.b32.xlu0 %v298, 96
    %v1831 = vpop.permute.xlu0 %1830
    %1832 = vrot.lane.b32.xlu0 %v301, 96
    %v1833 = vpop.permute.xlu0 %1832
    %1834 = vrot.lane.b32.xlu0 %v304, 96
    %v1835 = vpop.permute.xlu0 %1834
    %1836 = vrot.lane.b32.xlu0 %v307, 96
    %v1837 = vpop.permute.xlu0 %1836
    %1838 = vrot.lane.b32.xlu0 %v310, 96
    %v1839 = vpop.permute.xlu0 %1838
    %1840 = vrot.lane.b32.xlu0 %v313, 96
    %v1841 = vpop.permute.xlu0 %1840
    %1842 = vrot.lane.b32.xlu0 %v316, 96
    %v1843 = vpop.permute.xlu0 %1842
    %1844 = vrot.lane.b32.xlu0 %v319, 96
    %v1845 = vpop.permute.xlu0 %1844
    %1846 = vrot.lane.b32.xlu0 %v322, 96
    %v1847 = vpop.permute.xlu0 %1846
    %1848 = vrot.lane.b32.xlu0 %v325, 96
    %v1849 = vpop.permute.xlu0 %1848
    %1850 = vrot.lane.b32.xlu0 %v328, 96
    %v1851 = vpop.permute.xlu0 %1850
    %1852 = vrot.lane.b32.xlu0 %v331, 96
    %v1853 = vpop.permute.xlu0 %1852
    %1854 = vrot.lane.b32.xlu0 %v334, 96
    %v1855 = vpop.permute.xlu0 %1854
    %1856 = vrot.lane.b32.xlu0 %v337, 96
    %v1857 = vpop.permute.xlu0 %1856
    %1858 = vrot.lane.b32.xlu0 %v340, 96
    %v1859 = vpop.permute.xlu0 %1858
    %1860 = vrot.lane.b32.xlu0 %v343, 96
    %v1861 = vpop.permute.xlu0 %1860
    %1862 = vrot.lane.b32.xlu0 %v346, 96
    %v1863 = vpop.permute.xlu0 %1862
    %1864 = vrot.lane.b32.xlu0 %v349, 96
    %v1865 = vpop.permute.xlu0 %1864
    %1866 = vrot.lane.b32.xlu0 %v352, 96
    %v1867 = vpop.permute.xlu0 %1866
    %1868 = vrot.lane.b32.xlu0 %v355, 96
    %v1869 = vpop.permute.xlu0 %1868
    %1870 = vrot.lane.b32.xlu0 %v358, 96
    %v1871 = vpop.permute.xlu0 %1870
    %1872 = vrot.lane.b32.xlu0 %v361, 96
    %v1873 = vpop.permute.xlu0 %1872
    %1874 = vrot.lane.b32.xlu0 %v364, 96
    %v1875 = vpop.permute.xlu0 %1874
    %1876 = vrot.lane.b32.xlu0 %v367, 96
    %v1877 = vpop.permute.xlu0 %1876
    %1878 = vrot.lane.b32.xlu0 %v370, 96
    %v1879 = vpop.permute.xlu0 %1878
    %1880 = vrot.lane.b32.xlu0 %v373, 96
    %v1881 = vpop.permute.xlu0 %1880
    %1882 = vrot.lane.b32.xlu0 %v376, 96
    %v1883 = vpop.permute.xlu0 %1882
    %1884 = vrot.lane.b32.xlu0 %v379, 96
    %v1885 = vpop.permute.xlu0 %1884
    %1886 = vrot.lane.b32.xlu0 %v382, 96
    %v1887 = vpop.permute.xlu0 %1886
    %1888 = vrot.lane.b32.xlu0 %v385, 96
    %v1889 = vpop.permute.xlu0 %1888
    %1890 = vrot.lane.b32.xlu0 %v388, 96
    %v1891 = vpop.permute.xlu0 %1890
    %1892 = vrot.lane.b32.xlu0 %v391, 96
    %v1893 = vpop.permute.xlu0 %1892
    %1894 = vrot.lane.b32.xlu0 %v394, 96
    %v1895 = vpop.permute.xlu0 %1894
    %1896 = vrot.lane.b32.xlu0 %v397, 96
    %v1897 = vpop.permute.xlu0 %1896
    %1898 = vrot.lane.b32.xlu0 %v400, 96
    %v1899 = vpop.permute.xlu0 %1898
    %1900 = vrot.lane.b32.xlu0 %v403, 96
    %v1901 = vpop.permute.xlu0 %1900
    %1902 = vrot.lane.b32.xlu0 %v406, 96
    %v1903 = vpop.permute.xlu0 %1902
    %1904 = vrot.lane.b32.xlu0 %v409, 96
    %v1905 = vpop.permute.xlu0 %1904
    %1906 = vrot.lane.b32.xlu0 %v412, 96
    %v1907 = vpop.permute.xlu0 %1906
    %1908 = vrot.lane.b32.xlu0 %v415, 96
    %v1909 = vpop.permute.xlu0 %1908
    %1910 = vrot.lane.b32.xlu0 %v418, 96
    %v1911 = vpop.permute.xlu0 %1910
    %1912 = vrot.lane.b32.xlu0 %v421, 96
    %v1913 = vpop.permute.xlu0 %1912
    %1914 = vrot.lane.b32.xlu0 %v424, 96
    %v1915 = vpop.permute.xlu0 %1914
    %1916 = vrot.lane.b32.xlu0 %v427, 96
    %v1917 = vpop.permute.xlu0 %1916
    %1918 = vrot.lane.b32.xlu0 %v430, 96
    %v1919 = vpop.permute.xlu0 %1918
    %1920 = vrot.lane.b32.xlu0 %v433, 96
    %v1921 = vpop.permute.xlu0 %1920
    %1922 = vrot.lane.b32.xlu0 %v436, 96
    %v1923 = vpop.permute.xlu0 %1922
    %1924 = vrot.lane.b32.xlu0 %v439, 96
    %v1925 = vpop.permute.xlu0 %1924
    %1926 = vrot.lane.b32.xlu0 %v442, 96
    %v1927 = vpop.permute.xlu0 %1926
    %1928 = vrot.lane.b32.xlu0 %v445, 96
    %v1929 = vpop.permute.xlu0 %1928
    %1930 = vrot.lane.b32.xlu0 %v448, 96
    %v1931 = vpop.permute.xlu0 %1930
    %1932 = vrot.lane.b32.xlu0 %v451, 96
    %v1933 = vpop.permute.xlu0 %1932
    %1934 = vrot.lane.b32.xlu0 %v454, 96
    %v1935 = vpop.permute.xlu0 %1934
    %1936 = vrot.lane.b32.xlu0 %v457, 96
    %v1937 = vpop.permute.xlu0 %1936
    %1938 = vrot.lane.b32.xlu0 %v460, 96
    %v1939 = vpop.permute.xlu0 %1938
    %1940 = vrot.lane.b32.xlu0 %v463, 96
    %v1941 = vpop.permute.xlu0 %1940
    %1942 = vrot.lane.b32.xlu0 %v466, 96
    %v1943 = vpop.permute.xlu0 %1942
    %1944 = vrot.lane.b32.xlu0 %v469, 96
    %v1945 = vpop.permute.xlu0 %1944
    %1946 = vrot.lane.b32.xlu0 %v472, 96
    %v1947 = vpop.permute.xlu0 %1946
    %1948 = vrot.lane.b32.xlu0 %v475, 96
    %v1949 = vpop.permute.xlu0 %1948
    %1950 = vrot.lane.b32.xlu0 %v478, 96
    %v1951 = vpop.permute.xlu0 %1950
    %1952 = vrot.lane.b32.xlu0 %v481, 96
    %v1953 = vpop.permute.xlu0 %1952
    %1954 = vrot.lane.b32.xlu0 %v484, 96
    %v1955 = vpop.permute.xlu0 %1954
    %1956 = vrot.lane.b32.xlu0 %v487, 96
    %v1957 = vpop.permute.xlu0 %1956
    %1958 = vrot.lane.b32.xlu0 %v490, 96
    %v1959 = vpop.permute.xlu0 %1958
    %1960 = vrot.lane.b32.xlu0 %v493, 96
    %v1961 = vpop.permute.xlu0 %1960
    %1962 = vrot.lane.b32.xlu0 %v496, 96
    %v1963 = vpop.permute.xlu0 %1962
    %1964 = vrot.lane.b32.xlu0 %v499, 96
    %v1965 = vpop.permute.xlu0 %1964
    %1966 = vrot.lane.b32.xlu0 %v502, 96
    %v1967 = vpop.permute.xlu0 %1966
    %1968 = vrot.lane.b32.xlu0 %v505, 96
    %v1969 = vpop.permute.xlu0 %1968
    %1970 = vrot.lane.b32.xlu0 %v508, 96
    %v1971 = vpop.permute.xlu0 %1970
    %1972 = vrot.lane.b32.xlu0 %v511, 96
    %v1973 = vpop.permute.xlu0 %1972
    %1974 = vrot.lane.b32.xlu0 %v514, 96
    %v1975 = vpop.permute.xlu0 %1974
    %1976 = vrot.lane.b32.xlu0 %v517, 96
    %v1977 = vpop.permute.xlu0 %1976
    %1978 = vrot.lane.b32.xlu0 %v520, 96
    %v1979 = vpop.permute.xlu0 %1978
    %1980 = vrot.lane.b32.xlu0 %v523, 96
    %v1981 = vpop.permute.xlu0 %1980
    %1982 = vrot.lane.b32.xlu0 %v526, 96
    %v1983 = vpop.permute.xlu0 %1982
    %1984 = vrot.lane.b32.xlu0 %v529, 96
    %v1985 = vpop.permute.xlu0 %1984
    %1986 = vrot.lane.b32.xlu0 %v532, 96
    %v1987 = vpop.permute.xlu0 %1986
    %1988 = vrot.lane.b32.xlu0 %v535, 96
    %v1989 = vpop.permute.xlu0 %1988
    %1990 = vrot.lane.b32.xlu0 %v538, 96
    %v1991 = vpop.permute.xlu0 %1990
    %1992 = vrot.lane.b32.xlu0 %v541, 96
    %v1993 = vpop.permute.xlu0 %1992
    %1994 = vrot.lane.b32.xlu0 %v544, 96
    %v1995 = vpop.permute.xlu0 %1994
    %1996 = vrot.lane.b32.xlu0 %v547, 96
    %v1997 = vpop.permute.xlu0 %1996
    %1998 = vrot.lane.b32.xlu0 %v550, 96
    %v1999 = vpop.permute.xlu0 %1998
    %2000 = vrot.lane.b32.xlu0 %v553, 96
    %v2001 = vpop.permute.xlu0 %2000
    %2002 = vrot.lane.b32.xlu0 %v556, 96
    %v2003 = vpop.permute.xlu0 %2002
    %2004 = vrot.lane.b32.xlu0 %v559, 96
    %v2005 = vpop.permute.xlu0 %2004
    %2006 = vrot.lane.b32.xlu0 %v562, 96
    %v2007 = vpop.permute.xlu0 %2006
    %2008 = vrot.lane.b32.xlu0 %v565, 96
    %v2009 = vpop.permute.xlu0 %2008
    %2010 = vrot.lane.b32.xlu0 %v568, 96
    %v2011 = vpop.permute.xlu0 %2010
    %2012 = vrot.lane.b32.xlu0 %v571, 96
    %v2013 = vpop.permute.xlu0 %2012
    %2014 = vrot.lane.b32.xlu0 %v574, 96
    %v2015 = vpop.permute.xlu0 %2014
    %2016 = vrot.lane.b32.xlu0 %v577, 96
    %v2017 = vpop.permute.xlu0 %2016
    %2018 = vrot.lane.b32.xlu0 %v580, 96
    %v2019 = vpop.permute.xlu0 %2018
    %2020 = vrot.lane.b32.xlu0 %v583, 96
    %v2021 = vpop.permute.xlu0 %2020
    %2022 = vrot.lane.b32.xlu0 %v586, 96
    %v2023 = vpop.permute.xlu0 %2022
    %2024 = vrot.lane.b32.xlu0 %v589, 96
    %v2025 = vpop.permute.xlu0 %2024
    %2026 = vrot.lane.b32.xlu0 %v592, 96
    %v2027 = vpop.permute.xlu0 %2026
    %2028 = vrot.lane.b32.xlu0 %v595, 96
    %v2029 = vpop.permute.xlu0 %2028
    %2030 = vrot.lane.b32.xlu0 %v598, 96
    %v2031 = vpop.permute.xlu0 %2030
    %2032 = vrot.lane.b32.xlu0 %v601, 96
    %v2033 = vpop.permute.xlu0 %2032
    %2034 = vrot.lane.b32.xlu0 %v604, 96
    %v2035 = vpop.permute.xlu0 %2034
    %2036 = vrot.lane.b32.xlu0 %v607, 96
    %v2037 = vpop.permute.xlu0 %2036
    %2038 = vrot.lane.b32.xlu0 %v610, 96
    %v2039 = vpop.permute.xlu0 %2038
    %2040 = vrot.lane.b32.xlu0 %v613, 96
    %v2041 = vpop.permute.xlu0 %2040
    %2042 = vrot.lane.b32.xlu0 %v616, 96
    %v2043 = vpop.permute.xlu0 %2042
    %2044 = vrot.lane.b32.xlu0 %v619, 96
    %v2045 = vpop.permute.xlu0 %2044
    %2046 = vrot.lane.b32.xlu0 %v622, 96
    %v2047 = vpop.permute.xlu0 %2046
    %2048 = vrot.lane.b32.xlu0 %v625, 96
    %v2049 = vpop.permute.xlu0 %2048
    %2050 = vrot.lane.b32.xlu0 %v628, 96
    %v2051 = vpop.permute.xlu0 %2050
    %2052 = vrot.lane.b32.xlu0 %v631, 96
    %v2053 = vpop.permute.xlu0 %2052
    %2054 = vrot.lane.b32.xlu0 %v634, 96
    %v2055 = vpop.permute.xlu0 %2054
    %2056 = vrot.lane.b32.xlu0 %v637, 96
    %v2057 = vpop.permute.xlu0 %2056
    %2058 = vrot.lane.b32.xlu0 %v640, 96
    %v2059 = vpop.permute.xlu0 %2058
    %2060 = vrot.lane.b32.xlu0 %v643, 96
    %v2061 = vpop.permute.xlu0 %2060
    %2062 = vrot.lane.b32.xlu0 %v646, 96
    %v2063 = vpop.permute.xlu0 %2062
    %2064 = vrot.lane.b32.xlu0 %v649, 96
    %v2065 = vpop.permute.xlu0 %2064
    %2066 = vrot.lane.b32.xlu0 %v652, 96
    %v2067 = vpop.permute.xlu0 %2066
    %2068 = vrot.lane.b32.xlu0 %v655, 96
    %v2069 = vpop.permute.xlu0 %2068
    %2070 = vrot.lane.b32.xlu0 %v658, 96
    %v2071 = vpop.permute.xlu0 %2070
    %2072 = vrot.lane.b32.xlu0 %v661, 96
    %v2073 = vpop.permute.xlu0 %2072
    %2074 = vrot.lane.b32.xlu0 %v664, 96
    %v2075 = vpop.permute.xlu0 %2074
    %2076 = vrot.lane.b32.xlu0 %v667, 96
    %v2077 = vpop.permute.xlu0 %2076
    %2078 = vrot.lane.b32.xlu0 %v670, 96
    %v2079 = vpop.permute.xlu0 %2078
    %v2208 = vsel %vm1183, %v1825, %v1313
    %v2209 = vsel %vm1183, %v1827, %v1315
    %v2210 = vsel %vm1183, %v1829, %v1317
    %v2211 = vsel %vm1183, %v1831, %v1319
    %v2212 = vsel %vm1183, %v1833, %v1321
    %v2213 = vsel %vm1183, %v1835, %v1323
    %v2214 = vsel %vm1183, %v1837, %v1325
    %v2215 = vsel %vm1183, %v1839, %v1327
    %v2216 = vsel %vm1183, %v1841, %v1329
    %v2217 = vsel %vm1183, %v1843, %v1331
    %v2218 = vsel %vm1183, %v1845, %v1333
    %v2219 = vsel %vm1183, %v1847, %v1335
    %v2220 = vsel %vm1183, %v1849, %v1337
    %v2221 = vsel %vm1183, %v1851, %v1339
    %v2222 = vsel %vm1183, %v1853, %v1341
    %v2223 = vsel %vm1183, %v1855, %v1343
    %v2224 = vsel %vm1183, %v1857, %v1345
    %v2225 = vsel %vm1183, %v1859, %v1347
    %v2226 = vsel %vm1183, %v1861, %v1349
    %v2227 = vsel %vm1183, %v1863, %v1351
    %v2228 = vsel %vm1183, %v1865, %v1353
    %v2229 = vsel %vm1183, %v1867, %v1355
    %v2230 = vsel %vm1183, %v1869, %v1357
    %v2231 = vsel %vm1183, %v1871, %v1359
    %v2232 = vsel %vm1183, %v1873, %v1361
    %v2233 = vsel %vm1183, %v1875, %v1363
    %v2234 = vsel %vm1183, %v1877, %v1365
    %v2235 = vsel %vm1183, %v1879, %v1367
    %v2236 = vsel %vm1183, %v1881, %v1369
    %v2237 = vsel %vm1183, %v1883, %v1371
    %v2238 = vsel %vm1183, %v1885, %v1373
    %v2239 = vsel %vm1183, %v1887, %v1375
    %v2240 = vsel %vm1183, %v1889, %v1377
    %v2241 = vsel %vm1183, %v1891, %v1379
    %v2242 = vsel %vm1183, %v1893, %v1381
    %v2243 = vsel %vm1183, %v1895, %v1383
    %v2244 = vsel %vm1183, %v1897, %v1385
    %v2245 = vsel %vm1183, %v1899, %v1387
    %v2246 = vsel %vm1183, %v1901, %v1389
    %v2247 = vsel %vm1183, %v1903, %v1391
    %v2248 = vsel %vm1183, %v1905, %v1393
    %v2249 = vsel %vm1183, %v1907, %v1395
    %v2250 = vsel %vm1183, %v1909, %v1397
    %v2251 = vsel %vm1183, %v1911, %v1399
    %v2252 = vsel %vm1183, %v1913, %v1401
    %v2253 = vsel %vm1183, %v1915, %v1403
    %v2254 = vsel %vm1183, %v1917, %v1405
    %v2255 = vsel %vm1183, %v1919, %v1407
    %v2256 = vsel %vm1183, %v1921, %v1409
    %v2257 = vsel %vm1183, %v1923, %v1411
    %v2258 = vsel %vm1183, %v1925, %v1413
    %v2259 = vsel %vm1183, %v1927, %v1415
    %v2260 = vsel %vm1183, %v1929, %v1417
    %v2261 = vsel %vm1183, %v1931, %v1419
    %v2262 = vsel %vm1183, %v1933, %v1421
    %v2263 = vsel %vm1183, %v1935, %v1423
    %v2264 = vsel %vm1183, %v1937, %v1425
    %v2265 = vsel %vm1183, %v1939, %v1427
    %v2266 = vsel %vm1183, %v1941, %v1429
    %v2267 = vsel %vm1183, %v1943, %v1431
    %v2268 = vsel %vm1183, %v1945, %v1433
    %v2269 = vsel %vm1183, %v1947, %v1435
    %v2270 = vsel %vm1183, %v1949, %v1437
    %v2271 = vsel %vm1183, %v1951, %v1439
    %v2272 = vsel %vm1183, %v1953, %v1441
    %v2273 = vsel %vm1183, %v1955, %v1443
    %v2274 = vsel %vm1183, %v1957, %v1445
    %v2275 = vsel %vm1183, %v1959, %v1447
    %v2276 = vsel %vm1183, %v1961, %v1449
    %v2277 = vsel %vm1183, %v1963, %v1451
    %v2278 = vsel %vm1183, %v1965, %v1453
    %v2279 = vsel %vm1183, %v1967, %v1455
    %v2280 = vsel %vm1183, %v1969, %v1457
    %v2281 = vsel %vm1183, %v1971, %v1459
    %v2282 = vsel %vm1183, %v1973, %v1461
    %v2283 = vsel %vm1183, %v1975, %v1463
    %v2284 = vsel %vm1183, %v1977, %v1465
    %v2285 = vsel %vm1183, %v1979, %v1467
    %v2286 = vsel %vm1183, %v1981, %v1469
    %v2287 = vsel %vm1183, %v1983, %v1471
    %v2288 = vsel %vm1183, %v1985, %v1473
    %v2289 = vsel %vm1183, %v1987, %v1475
    %v2290 = vsel %vm1183, %v1989, %v1477
    %v2291 = vsel %vm1183, %v1991, %v1479
    %v2292 = vsel %vm1183, %v1993, %v1481
    %v2293 = vsel %vm1183, %v1995, %v1483
    %v2294 = vsel %vm1183, %v1997, %v1485
    %v2295 = vsel %vm1183, %v1999, %v1487
    %v2296 = vsel %vm1183, %v2001, %v1489
    %v2297 = vsel %vm1183, %v2003, %v1491
    %v2298 = vsel %vm1183, %v2005, %v1493
    %v2299 = vsel %vm1183, %v2007, %v1495
    %v2300 = vsel %vm1183, %v2009, %v1497
    %v2301 = vsel %vm1183, %v2011, %v1499
    %v2302 = vsel %vm1183, %v2013, %v1501
    %v2303 = vsel %vm1183, %v2015, %v1503
    %v2304 = vsel %vm1183, %v2017, %v1505
    %v2305 = vsel %vm1183, %v2019, %v1507
    %v2306 = vsel %vm1183, %v2021, %v1509
    %v2307 = vsel %vm1183, %v2023, %v1511
    %v2308 = vsel %vm1183, %v2025, %v1513
    %v2309 = vsel %vm1183, %v2027, %v1515
    %v2310 = vsel %vm1183, %v2029, %v1517
    %v2311 = vsel %vm1183, %v2031, %v1519
    %v2312 = vsel %vm1183, %v2033, %v1521
    %v2313 = vsel %vm1183, %v2035, %v1523
    %v2314 = vsel %vm1183, %v2037, %v1525
    %v2315 = vsel %vm1183, %v2039, %v1527
    %v2316 = vsel %vm1183, %v2041, %v1529
    %v2317 = vsel %vm1183, %v2043, %v1531
    %v2318 = vsel %vm1183, %v2045, %v1533
    %v2319 = vsel %vm1183, %v2047, %v1535
    %v2320 = vsel %vm1183, %v2049, %v1537
    %v2321 = vsel %vm1183, %v2051, %v1539
    %v2322 = vsel %vm1183, %v2053, %v1541
    %v2323 = vsel %vm1183, %v2055, %v1543
    %v2324 = vsel %vm1183, %v2057, %v1545
    %v2325 = vsel %vm1183, %v2059, %v1547
    %v2326 = vsel %vm1183, %v2061, %v1549
    %v2327 = vsel %vm1183, %v2063, %v1551
    %v2328 = vsel %vm1183, %v2065, %v1553
    %v2329 = vsel %vm1183, %v2067, %v1555
    %v2330 = vsel %vm1183, %v2069, %v1557
    %v2331 = vsel %vm1183, %v2071, %v1559
    %v2332 = vsel %vm1183, %v2073, %v1561
    %v2333 = vsel %vm1183, %v2075, %v1563
    %v2334 = vsel %vm1183, %v2077, %v1565
    %v2335 = vsel %vm1183, %v2079, %v1567
    %v2336 = vmul.f32 %v287, %v1184
    %v2337 = vmul.f32 %v290, %v1185
    %v2338 = vmul.f32 %v293, %v1186
    %v2339 = vmul.f32 %v296, %v1187
    %v2340 = vmul.f32 %v299, %v1188
    %v2341 = vmul.f32 %v302, %v1189
    %v2342 = vmul.f32 %v305, %v1190
    %v2343 = vmul.f32 %v308, %v1191
    %v2344 = vmul.f32 %v311, %v1192
    %v2345 = vmul.f32 %v314, %v1193
    %v2346 = vmul.f32 %v317, %v1194
    %v2347 = vmul.f32 %v320, %v1195
    %v2348 = vmul.f32 %v323, %v1196
    %v2349 = vmul.f32 %v326, %v1197
    %v2350 = vmul.f32 %v329, %v1198
    %v2351 = vmul.f32 %v332, %v1199
    %v2352 = vmul.f32 %v335, %v1200
    %v2353 = vmul.f32 %v338, %v1201
    %v2354 = vmul.f32 %v341, %v1202
    %v2355 = vmul.f32 %v344, %v1203
    %v2356 = vmul.f32 %v347, %v1204
    %v2357 = vmul.f32 %v350, %v1205
    %v2358 = vmul.f32 %v353, %v1206
    %v2359 = vmul.f32 %v356, %v1207
    %v2360 = vmul.f32 %v359, %v1208
    %v2361 = vmul.f32 %v362, %v1209
    %v2362 = vmul.f32 %v365, %v1210
    %v2363 = vmul.f32 %v368, %v1211
    %v2364 = vmul.f32 %v371, %v1212
    %v2365 = vmul.f32 %v374, %v1213
    %v2366 = vmul.f32 %v377, %v1214
    %v2367 = vmul.f32 %v380, %v1215
    %v2368 = vmul.f32 %v383, %v1216
    %v2369 = vmul.f32 %v386, %v1217
    %v2370 = vmul.f32 %v389, %v1218
    %v2371 = vmul.f32 %v392, %v1219
    %v2372 = vmul.f32 %v395, %v1220
    %v2373 = vmul.f32 %v398, %v1221
    %v2374 = vmul.f32 %v401, %v1222
    %v2375 = vmul.f32 %v404, %v1223
    %v2376 = vmul.f32 %v407, %v1224
    %v2377 = vmul.f32 %v410, %v1225
    %v2378 = vmul.f32 %v413, %v1226
    %v2379 = vmul.f32 %v416, %v1227
    %v2380 = vmul.f32 %v419, %v1228
    %v2381 = vmul.f32 %v422, %v1229
    %v2382 = vmul.f32 %v425, %v1230
    %v2383 = vmul.f32 %v428, %v1231
    %v2384 = vmul.f32 %v431, %v1232
    %v2385 = vmul.f32 %v434, %v1233
    %v2386 = vmul.f32 %v437, %v1234
    %v2387 = vmul.f32 %v440, %v1235
    %v2388 = vmul.f32 %v443, %v1236
    %v2389 = vmul.f32 %v446, %v1237
    %v2390 = vmul.f32 %v449, %v1238
    %v2391 = vmul.f32 %v452, %v1239
    %v2392 = vmul.f32 %v455, %v1240
    %v2393 = vmul.f32 %v458, %v1241
    %v2394 = vmul.f32 %v461, %v1242
    %v2395 = vmul.f32 %v464, %v1243
    %v2396 = vmul.f32 %v467, %v1244
    %v2397 = vmul.f32 %v470, %v1245
    %v2398 = vmul.f32 %v473, %v1246
    %v2399 = vmul.f32 %v476, %v1247
    %v2400 = vmul.f32 %v479, %v1248
    %v2401 = vmul.f32 %v482, %v1249
    %v2402 = vmul.f32 %v485, %v1250
    %v2403 = vmul.f32 %v488, %v1251
    %v2404 = vmul.f32 %v491, %v1252
    %v2405 = vmul.f32 %v494, %v1253
    %v2406 = vmul.f32 %v497, %v1254
    %v2407 = vmul.f32 %v500, %v1255
    %v2408 = vmul.f32 %v503, %v1256
    %v2409 = vmul.f32 %v506, %v1257
    %v2410 = vmul.f32 %v509, %v1258
    %v2411 = vmul.f32 %v512, %v1259
    %v2412 = vmul.f32 %v515, %v1260
    %v2413 = vmul.f32 %v518, %v1261
    %v2414 = vmul.f32 %v521, %v1262
    %v2415 = vmul.f32 %v524, %v1263
    %v2416 = vmul.f32 %v527, %v1264
    %v2417 = vmul.f32 %v530, %v1265
    %v2418 = vmul.f32 %v533, %v1266
    %v2419 = vmul.f32 %v536, %v1267
    %v2420 = vmul.f32 %v539, %v1268
    %v2421 = vmul.f32 %v542, %v1269
    %v2422 = vmul.f32 %v545, %v1270
    %v2423 = vmul.f32 %v548, %v1271
    %v2424 = vmul.f32 %v551, %v1272
    %v2425 = vmul.f32 %v554, %v1273
    %v2426 = vmul.f32 %v557, %v1274
    %v2427 = vmul.f32 %v560, %v1275
    %v2428 = vmul.f32 %v563, %v1276
    %v2429 = vmul.f32 %v566, %v1277
    %v2430 = vmul.f32 %v569, %v1278
    %v2431 = vmul.f32 %v572, %v1279
    %v2432 = vmul.f32 %v575, %v1280
    %v2433 = vmul.f32 %v578, %v1281
    %v2434 = vmul.f32 %v581, %v1282
    %v2435 = vmul.f32 %v584, %v1283
    %v2436 = vmul.f32 %v587, %v1284
    %v2437 = vmul.f32 %v590, %v1285
    %v2438 = vmul.f32 %v593, %v1286
    %v2439 = vmul.f32 %v596, %v1287
    %v2440 = vmul.f32 %v599, %v1288
    %v2441 = vmul.f32 %v602, %v1289
    %v2442 = vmul.f32 %v605, %v1290
    %v2443 = vmul.f32 %v608, %v1291
    %v2444 = vmul.f32 %v611, %v1292
    %v2445 = vmul.f32 %v614, %v1293
    %v2446 = vmul.f32 %v617, %v1294
    %v2447 = vmul.f32 %v620, %v1295
    %v2448 = vmul.f32 %v623, %v1296
    %v2449 = vmul.f32 %v626, %v1297
    %v2450 = vmul.f32 %v629, %v1298
    %v2451 = vmul.f32 %v632, %v1299
    %v2452 = vmul.f32 %v635, %v1300
    %v2453 = vmul.f32 %v638, %v1301
    %v2454 = vmul.f32 %v641, %v1302
    %v2455 = vmul.f32 %v644, %v1303
    %v2456 = vmul.f32 %v647, %v1304
    %v2457 = vmul.f32 %v650, %v1305
    %v2458 = vmul.f32 %v653, %v1306
    %v2459 = vmul.f32 %v656, %v1307
    %v2460 = vmul.f32 %v659, %v1308
    %v2461 = vmul.f32 %v662, %v1309
    %v2462 = vmul.f32 %v665, %v1310
    %v2463 = vmul.f32 %v668, %v1311
    %v2464 = vsub.f32 1.0, %v1184
    %v2465 = vsub.f32 1.0, %v1185
    %v2466 = vsub.f32 1.0, %v1186
    %v2467 = vsub.f32 1.0, %v1187
    %v2468 = vsub.f32 1.0, %v1188
    %v2469 = vsub.f32 1.0, %v1189
    %v2470 = vsub.f32 1.0, %v1190
    %v2471 = vsub.f32 1.0, %v1191
    %v2472 = vsub.f32 1.0, %v1192
    %v2473 = vsub.f32 1.0, %v1193
    %v2474 = vsub.f32 1.0, %v1194
    %v2475 = vsub.f32 1.0, %v1195
    %v2476 = vsub.f32 1.0, %v1196
    %v2477 = vsub.f32 1.0, %v1197
    %v2478 = vsub.f32 1.0, %v1198
    %v2479 = vsub.f32 1.0, %v1199
    %v2480 = vsub.f32 1.0, %v1200
    %v2481 = vsub.f32 1.0, %v1201
    %v2482 = vsub.f32 1.0, %v1202
    %v2483 = vsub.f32 1.0, %v1203
    %v2484 = vsub.f32 1.0, %v1204
    %v2485 = vsub.f32 1.0, %v1205
    %v2486 = vsub.f32 1.0, %v1206
    %v2487 = vsub.f32 1.0, %v1207
    %v2488 = vsub.f32 1.0, %v1208
    %v2489 = vsub.f32 1.0, %v1209
    %v2490 = vsub.f32 1.0, %v1210
    %v2491 = vsub.f32 1.0, %v1211
    %v2492 = vsub.f32 1.0, %v1212
    %v2493 = vsub.f32 1.0, %v1213
    %v2494 = vsub.f32 1.0, %v1214
    %v2495 = vsub.f32 1.0, %v1215
    %v2496 = vsub.f32 1.0, %v1216
    %v2497 = vsub.f32 1.0, %v1217
    %v2498 = vsub.f32 1.0, %v1218
    %v2499 = vsub.f32 1.0, %v1219
    %v2500 = vsub.f32 1.0, %v1220
    %v2501 = vsub.f32 1.0, %v1221
    %v2502 = vsub.f32 1.0, %v1222
    %v2503 = vsub.f32 1.0, %v1223
    %v2504 = vsub.f32 1.0, %v1224
    %v2505 = vsub.f32 1.0, %v1225
    %v2506 = vsub.f32 1.0, %v1226
    %v2507 = vsub.f32 1.0, %v1227
    %v2508 = vsub.f32 1.0, %v1228
    %v2509 = vsub.f32 1.0, %v1229
    %v2510 = vsub.f32 1.0, %v1230
    %v2511 = vsub.f32 1.0, %v1231
    %v2512 = vsub.f32 1.0, %v1232
    %v2513 = vsub.f32 1.0, %v1233
    %v2514 = vsub.f32 1.0, %v1234
    %v2515 = vsub.f32 1.0, %v1235
    %v2516 = vsub.f32 1.0, %v1236
    %v2517 = vsub.f32 1.0, %v1237
    %v2518 = vsub.f32 1.0, %v1238
    %v2519 = vsub.f32 1.0, %v1239
    %v2520 = vsub.f32 1.0, %v1240
    %v2521 = vsub.f32 1.0, %v1241
    %v2522 = vsub.f32 1.0, %v1242
    %v2523 = vsub.f32 1.0, %v1243
    %v2524 = vsub.f32 1.0, %v1244
    %v2525 = vsub.f32 1.0, %v1245
    %v2526 = vsub.f32 1.0, %v1246
    %v2527 = vsub.f32 1.0, %v1247
    %v2528 = vsub.f32 1.0, %v1248
    %v2529 = vsub.f32 1.0, %v1249
    %v2530 = vsub.f32 1.0, %v1250
    %v2531 = vsub.f32 1.0, %v1251
    %v2532 = vsub.f32 1.0, %v1252
    %v2533 = vsub.f32 1.0, %v1253
    %v2534 = vsub.f32 1.0, %v1254
    %v2535 = vsub.f32 1.0, %v1255
    %v2536 = vsub.f32 1.0, %v1256
    %v2537 = vsub.f32 1.0, %v1257
    %v2538 = vsub.f32 1.0, %v1258
    %v2539 = vsub.f32 1.0, %v1259
    %v2540 = vsub.f32 1.0, %v1260
    %v2541 = vsub.f32 1.0, %v1261
    %v2542 = vsub.f32 1.0, %v1262
    %v2543 = vsub.f32 1.0, %v1263
    %v2544 = vsub.f32 1.0, %v1264
    %v2545 = vsub.f32 1.0, %v1265
    %v2546 = vsub.f32 1.0, %v1266
    %v2547 = vsub.f32 1.0, %v1267
    %v2548 = vsub.f32 1.0, %v1268
    %v2549 = vsub.f32 1.0, %v1269
    %v2550 = vsub.f32 1.0, %v1270
    %v2551 = vsub.f32 1.0, %v1271
    %v2552 = vsub.f32 1.0, %v1272
    %v2553 = vsub.f32 1.0, %v1273
    %v2554 = vsub.f32 1.0, %v1274
    %v2555 = vsub.f32 1.0, %v1275
    %v2556 = vsub.f32 1.0, %v1276
    %v2557 = vsub.f32 1.0, %v1277
    %v2558 = vsub.f32 1.0, %v1278
    %v2559 = vsub.f32 1.0, %v1279
    %v2560 = vsub.f32 1.0, %v1280
    %v2561 = vsub.f32 1.0, %v1281
    %v2562 = vsub.f32 1.0, %v1282
    %v2563 = vsub.f32 1.0, %v1283
    %v2564 = vsub.f32 1.0, %v1284
    %v2565 = vsub.f32 1.0, %v1285
    %v2566 = vsub.f32 1.0, %v1286
    %v2567 = vsub.f32 1.0, %v1287
    %v2568 = vsub.f32 1.0, %v1288
    %v2569 = vsub.f32 1.0, %v1289
    %v2570 = vsub.f32 1.0, %v1290
    %v2571 = vsub.f32 1.0, %v1291
    %v2572 = vsub.f32 1.0, %v1292
    %v2573 = vsub.f32 1.0, %v1293
    %v2574 = vsub.f32 1.0, %v1294
    %v2575 = vsub.f32 1.0, %v1295
    %v2576 = vsub.f32 1.0, %v1296
    %v2577 = vsub.f32 1.0, %v1297
    %v2578 = vsub.f32 1.0, %v1298
    %v2579 = vsub.f32 1.0, %v1299
    %v2580 = vsub.f32 1.0, %v1300
    %v2581 = vsub.f32 1.0, %v1301
    %v2582 = vsub.f32 1.0, %v1302
    %v2583 = vsub.f32 1.0, %v1303
    %v2584 = vsub.f32 1.0, %v1304
    %v2585 = vsub.f32 1.0, %v1305
    %v2586 = vsub.f32 1.0, %v1306
    %v2587 = vsub.f32 1.0, %v1307
    %v2588 = vsub.f32 1.0, %v1308
    %v2589 = vsub.f32 1.0, %v1309
    %v2590 = vsub.f32 1.0, %v1310
    %v2591 = vsub.f32 1.0, %v1311
    %2720 = vrot.lane.b32.xlu0 %v2464, 96
    %v2721 = vpop.permute.xlu0 %2720
    %2722 = vrot.lane.b32.xlu0 %v2465, 96
    %v2723 = vpop.permute.xlu0 %2722
    %2724 = vrot.lane.b32.xlu0 %v2466, 96
    %v2725 = vpop.permute.xlu0 %2724
    %2726 = vrot.lane.b32.xlu0 %v2467, 96
    %v2727 = vpop.permute.xlu0 %2726
    %2728 = vrot.lane.b32.xlu0 %v2468, 96
    %v2729 = vpop.permute.xlu0 %2728
    %2730 = vrot.lane.b32.xlu0 %v2469, 96
    %v2731 = vpop.permute.xlu0 %2730
    %2732 = vrot.lane.b32.xlu0 %v2470, 96
    %v2733 = vpop.permute.xlu0 %2732
    %2734 = vrot.lane.b32.xlu0 %v2471, 96
    %v2735 = vpop.permute.xlu0 %2734
    %2736 = vrot.lane.b32.xlu0 %v2472, 96
    %v2737 = vpop.permute.xlu0 %2736
    %2738 = vrot.lane.b32.xlu0 %v2473, 96
    %v2739 = vpop.permute.xlu0 %2738
    %2740 = vrot.lane.b32.xlu0 %v2474, 96
    %v2741 = vpop.permute.xlu0 %2740
    %2742 = vrot.lane.b32.xlu0 %v2475, 96
    %v2743 = vpop.permute.xlu0 %2742
    %2744 = vrot.lane.b32.xlu0 %v2476, 96
    %v2745 = vpop.permute.xlu0 %2744
    %2746 = vrot.lane.b32.xlu0 %v2477, 96
    %v2747 = vpop.permute.xlu0 %2746
    %2748 = vrot.lane.b32.xlu0 %v2478, 96
    %v2749 = vpop.permute.xlu0 %2748
    %2750 = vrot.lane.b32.xlu0 %v2479, 96
    %v2751 = vpop.permute.xlu0 %2750
    %2752 = vrot.lane.b32.xlu0 %v2480, 96
    %v2753 = vpop.permute.xlu0 %2752
    %2754 = vrot.lane.b32.xlu0 %v2481, 96
    %v2755 = vpop.permute.xlu0 %2754
    %2756 = vrot.lane.b32.xlu0 %v2482, 96
    %v2757 = vpop.permute.xlu0 %2756
    %2758 = vrot.lane.b32.xlu0 %v2483, 96
    %v2759 = vpop.permute.xlu0 %2758
    %2760 = vrot.lane.b32.xlu0 %v2484, 96
    %v2761 = vpop.permute.xlu0 %2760
    %2762 = vrot.lane.b32.xlu0 %v2485, 96
    %v2763 = vpop.permute.xlu0 %2762
    %2764 = vrot.lane.b32.xlu0 %v2486, 96
    %v2765 = vpop.permute.xlu0 %2764
    %2766 = vrot.lane.b32.xlu0 %v2487, 96
    %v2767 = vpop.permute.xlu0 %2766
    %2768 = vrot.lane.b32.xlu0 %v2488, 96
    %v2769 = vpop.permute.xlu0 %2768
    %2770 = vrot.lane.b32.xlu0 %v2489, 96
    %v2771 = vpop.permute.xlu0 %2770
    %2772 = vrot.lane.b32.xlu0 %v2490, 96
    %v2773 = vpop.permute.xlu0 %2772
    %2774 = vrot.lane.b32.xlu0 %v2491, 96
    %v2775 = vpop.permute.xlu0 %2774
    %2776 = vrot.lane.b32.xlu0 %v2492, 96
    %v2777 = vpop.permute.xlu0 %2776
    %2778 = vrot.lane.b32.xlu0 %v2493, 96
    %v2779 = vpop.permute.xlu0 %2778
    %2780 = vrot.lane.b32.xlu0 %v2494, 96
    %v2781 = vpop.permute.xlu0 %2780
    %2782 = vrot.lane.b32.xlu0 %v2495, 96
    %v2783 = vpop.permute.xlu0 %2782
    %2784 = vrot.lane.b32.xlu0 %v2496, 96
    %v2785 = vpop.permute.xlu0 %2784
    %2786 = vrot.lane.b32.xlu0 %v2497, 96
    %v2787 = vpop.permute.xlu0 %2786
    %2788 = vrot.lane.b32.xlu0 %v2498, 96
    %v2789 = vpop.permute.xlu0 %2788
    %2790 = vrot.lane.b32.xlu0 %v2499, 96
    %v2791 = vpop.permute.xlu0 %2790
    %2792 = vrot.lane.b32.xlu0 %v2500, 96
    %v2793 = vpop.permute.xlu0 %2792
    %2794 = vrot.lane.b32.xlu0 %v2501, 96
    %v2795 = vpop.permute.xlu0 %2794
    %2796 = vrot.lane.b32.xlu0 %v2502, 96
    %v2797 = vpop.permute.xlu0 %2796
    %2798 = vrot.lane.b32.xlu0 %v2503, 96
    %v2799 = vpop.permute.xlu0 %2798
    %2800 = vrot.lane.b32.xlu0 %v2504, 96
    %v2801 = vpop.permute.xlu0 %2800
    %2802 = vrot.lane.b32.xlu0 %v2505, 96
    %v2803 = vpop.permute.xlu0 %2802
    %2804 = vrot.lane.b32.xlu0 %v2506, 96
    %v2805 = vpop.permute.xlu0 %2804
    %2806 = vrot.lane.b32.xlu0 %v2507, 96
    %v2807 = vpop.permute.xlu0 %2806
    %2808 = vrot.lane.b32.xlu0 %v2508, 96
    %v2809 = vpop.permute.xlu0 %2808
    %2810 = vrot.lane.b32.xlu0 %v2509, 96
    %v2811 = vpop.permute.xlu0 %2810
    %2812 = vrot.lane.b32.xlu0 %v2510, 96
    %v2813 = vpop.permute.xlu0 %2812
    %2814 = vrot.lane.b32.xlu0 %v2511, 96
    %v2815 = vpop.permute.xlu0 %2814
    %2816 = vrot.lane.b32.xlu0 %v2512, 96
    %v2817 = vpop.permute.xlu0 %2816
    %2818 = vrot.lane.b32.xlu0 %v2513, 96
    %v2819 = vpop.permute.xlu0 %2818
    %2820 = vrot.lane.b32.xlu0 %v2514, 96
    %v2821 = vpop.permute.xlu0 %2820
    %2822 = vrot.lane.b32.xlu0 %v2515, 96
    %v2823 = vpop.permute.xlu0 %2822
    %2824 = vrot.lane.b32.xlu0 %v2516, 96
    %v2825 = vpop.permute.xlu0 %2824
    %2826 = vrot.lane.b32.xlu0 %v2517, 96
    %v2827 = vpop.permute.xlu0 %2826
    %2828 = vrot.lane.b32.xlu0 %v2518, 96
    %v2829 = vpop.permute.xlu0 %2828
    %2830 = vrot.lane.b32.xlu0 %v2519, 96
    %v2831 = vpop.permute.xlu0 %2830
    %2832 = vrot.lane.b32.xlu0 %v2520, 96
    %v2833 = vpop.permute.xlu0 %2832
    %2834 = vrot.lane.b32.xlu0 %v2521, 96
    %v2835 = vpop.permute.xlu0 %2834
    %2836 = vrot.lane.b32.xlu0 %v2522, 96
    %v2837 = vpop.permute.xlu0 %2836
    %2838 = vrot.lane.b32.xlu0 %v2523, 96
    %v2839 = vpop.permute.xlu0 %2838
    %2840 = vrot.lane.b32.xlu0 %v2524, 96
    %v2841 = vpop.permute.xlu0 %2840
    %2842 = vrot.lane.b32.xlu0 %v2525, 96
    %v2843 = vpop.permute.xlu0 %2842
    %2844 = vrot.lane.b32.xlu0 %v2526, 96
    %v2845 = vpop.permute.xlu0 %2844
    %2846 = vrot.lane.b32.xlu0 %v2527, 96
    %v2847 = vpop.permute.xlu0 %2846
    %2848 = vrot.lane.b32.xlu0 %v2528, 96
    %v2849 = vpop.permute.xlu0 %2848
    %2850 = vrot.lane.b32.xlu0 %v2529, 96
    %v2851 = vpop.permute.xlu0 %2850
    %2852 = vrot.lane.b32.xlu0 %v2530, 96
    %v2853 = vpop.permute.xlu0 %2852
    %2854 = vrot.lane.b32.xlu0 %v2531, 96
    %v2855 = vpop.permute.xlu0 %2854
    %2856 = vrot.lane.b32.xlu0 %v2532, 96
    %v2857 = vpop.permute.xlu0 %2856
    %2858 = vrot.lane.b32.xlu0 %v2533, 96
    %v2859 = vpop.permute.xlu0 %2858
    %2860 = vrot.lane.b32.xlu0 %v2534, 96
    %v2861 = vpop.permute.xlu0 %2860
    %2862 = vrot.lane.b32.xlu0 %v2535, 96
    %v2863 = vpop.permute.xlu0 %2862
    %2864 = vrot.lane.b32.xlu0 %v2536, 96
    %v2865 = vpop.permute.xlu0 %2864
    %2866 = vrot.lane.b32.xlu0 %v2537, 96
    %v2867 = vpop.permute.xlu0 %2866
    %2868 = vrot.lane.b32.xlu0 %v2538, 96
    %v2869 = vpop.permute.xlu0 %2868
    %2870 = vrot.lane.b32.xlu0 %v2539, 96
    %v2871 = vpop.permute.xlu0 %2870
    %2872 = vrot.lane.b32.xlu0 %v2540, 96
    %v2873 = vpop.permute.xlu0 %2872
    %2874 = vrot.lane.b32.xlu0 %v2541, 96
    %v2875 = vpop.permute.xlu0 %2874
    %2876 = vrot.lane.b32.xlu0 %v2542, 96
    %v2877 = vpop.permute.xlu0 %2876
    %2878 = vrot.lane.b32.xlu0 %v2543, 96
    %v2879 = vpop.permute.xlu0 %2878
    %2880 = vrot.lane.b32.xlu0 %v2544, 96
    %v2881 = vpop.permute.xlu0 %2880
    %2882 = vrot.lane.b32.xlu0 %v2545, 96
    %v2883 = vpop.permute.xlu0 %2882
    %2884 = vrot.lane.b32.xlu0 %v2546, 96
    %v2885 = vpop.permute.xlu0 %2884
    %2886 = vrot.lane.b32.xlu0 %v2547, 96
    %v2887 = vpop.permute.xlu0 %2886
    %2888 = vrot.lane.b32.xlu0 %v2548, 96
    %v2889 = vpop.permute.xlu0 %2888
    %2890 = vrot.lane.b32.xlu0 %v2549, 96
    %v2891 = vpop.permute.xlu0 %2890
    %2892 = vrot.lane.b32.xlu0 %v2550, 96
    %v2893 = vpop.permute.xlu0 %2892
    %2894 = vrot.lane.b32.xlu0 %v2551, 96
    %v2895 = vpop.permute.xlu0 %2894
    %2896 = vrot.lane.b32.xlu0 %v2552, 96
    %v2897 = vpop.permute.xlu0 %2896
    %2898 = vrot.lane.b32.xlu0 %v2553, 96
    %v2899 = vpop.permute.xlu0 %2898
    %2900 = vrot.lane.b32.xlu0 %v2554, 96
    %v2901 = vpop.permute.xlu0 %2900
    %2902 = vrot.lane.b32.xlu0 %v2555, 96
    %v2903 = vpop.permute.xlu0 %2902
    %2904 = vrot.lane.b32.xlu0 %v2556, 96
    %v2905 = vpop.permute.xlu0 %2904
    %2906 = vrot.lane.b32.xlu0 %v2557, 96
    %v2907 = vpop.permute.xlu0 %2906
    %2908 = vrot.lane.b32.xlu0 %v2558, 96
    %v2909 = vpop.permute.xlu0 %2908
    %2910 = vrot.lane.b32.xlu0 %v2559, 96
    %v2911 = vpop.permute.xlu0 %2910
    %2912 = vrot.lane.b32.xlu0 %v2560, 96
    %v2913 = vpop.permute.xlu0 %2912
    %2914 = vrot.lane.b32.xlu0 %v2561, 96
    %v2915 = vpop.permute.xlu0 %2914
    %2916 = vrot.lane.b32.xlu0 %v2562, 96
    %v2917 = vpop.permute.xlu0 %2916
    %2918 = vrot.lane.b32.xlu0 %v2563, 96
    %v2919 = vpop.permute.xlu0 %2918
    %2920 = vrot.lane.b32.xlu0 %v2564, 96
    %v2921 = vpop.permute.xlu0 %2920
    %2922 = vrot.lane.b32.xlu0 %v2565, 96
    %v2923 = vpop.permute.xlu0 %2922
    %2924 = vrot.lane.b32.xlu0 %v2566, 96
    %v2925 = vpop.permute.xlu0 %2924
    %2926 = vrot.lane.b32.xlu0 %v2567, 96
    %v2927 = vpop.permute.xlu0 %2926
    %2928 = vrot.lane.b32.xlu0 %v2568, 96
    %v2929 = vpop.permute.xlu0 %2928
    %2930 = vrot.lane.b32.xlu0 %v2569, 96
    %v2931 = vpop.permute.xlu0 %2930
    %2932 = vrot.lane.b32.xlu0 %v2570, 96
    %v2933 = vpop.permute.xlu0 %2932
    %2934 = vrot.lane.b32.xlu0 %v2571, 96
    %v2935 = vpop.permute.xlu0 %2934
    %2936 = vrot.lane.b32.xlu0 %v2572, 96
    %v2937 = vpop.permute.xlu0 %2936
    %2938 = vrot.lane.b32.xlu0 %v2573, 96
    %v2939 = vpop.permute.xlu0 %2938
    %2940 = vrot.lane.b32.xlu0 %v2574, 96
    %v2941 = vpop.permute.xlu0 %2940
    %2942 = vrot.lane.b32.xlu0 %v2575, 96
    %v2943 = vpop.permute.xlu0 %2942
    %2944 = vrot.lane.b32.xlu0 %v2576, 96
    %v2945 = vpop.permute.xlu0 %2944
    %2946 = vrot.lane.b32.xlu0 %v2577, 96
    %v2947 = vpop.permute.xlu0 %2946
    %2948 = vrot.lane.b32.xlu0 %v2578, 96
    %v2949 = vpop.permute.xlu0 %2948
    %2950 = vrot.lane.b32.xlu0 %v2579, 96
    %v2951 = vpop.permute.xlu0 %2950
    %2952 = vrot.lane.b32.xlu0 %v2580, 96
    %v2953 = vpop.permute.xlu0 %2952
    %2954 = vrot.lane.b32.xlu0 %v2581, 96
    %v2955 = vpop.permute.xlu0 %2954
    %2956 = vrot.lane.b32.xlu0 %v2582, 96
    %v2957 = vpop.permute.xlu0 %2956
    %2958 = vrot.lane.b32.xlu0 %v2583, 96
    %v2959 = vpop.permute.xlu0 %2958
    %2960 = vrot.lane.b32.xlu0 %v2584, 96
    %v2961 = vpop.permute.xlu0 %2960
    %2962 = vrot.lane.b32.xlu0 %v2585, 96
    %v2963 = vpop.permute.xlu0 %2962
    %2964 = vrot.lane.b32.xlu0 %v2586, 96
    %v2965 = vpop.permute.xlu0 %2964
    %2966 = vrot.lane.b32.xlu0 %v2587, 96
    %v2967 = vpop.permute.xlu0 %2966
    %2968 = vrot.lane.b32.xlu0 %v2588, 96
    %v2969 = vpop.permute.xlu0 %2968
    %2970 = vrot.lane.b32.xlu0 %v2589, 96
    %v2971 = vpop.permute.xlu0 %2970
    %2972 = vrot.lane.b32.xlu0 %v2590, 96
    %v2973 = vpop.permute.xlu0 %2972
    %2974 = vrot.lane.b32.xlu0 %v2591, 96
    %v2975 = vpop.permute.xlu0 %2974
    %v3104 = vmul.f32 %v287, %v2721
    %v3105 = vmul.f32 %v290, %v2723
    %v3106 = vmul.f32 %v293, %v2725
    %v3107 = vmul.f32 %v296, %v2727
    %v3108 = vmul.f32 %v299, %v2729
    %v3109 = vmul.f32 %v302, %v2731
    %v3110 = vmul.f32 %v305, %v2733
    %v3111 = vmul.f32 %v308, %v2735
    %v3112 = vmul.f32 %v311, %v2737
    %v3113 = vmul.f32 %v314, %v2739
    %v3114 = vmul.f32 %v317, %v2741
    %v3115 = vmul.f32 %v320, %v2743
    %v3116 = vmul.f32 %v323, %v2745
    %v3117 = vmul.f32 %v326, %v2747
    %v3118 = vmul.f32 %v329, %v2749
    %v3119 = vmul.f32 %v332, %v2751
    %v3120 = vmul.f32 %v335, %v2753
    %v3121 = vmul.f32 %v338, %v2755
    %v3122 = vmul.f32 %v341, %v2757
    %v3123 = vmul.f32 %v344, %v2759
    %v3124 = vmul.f32 %v347, %v2761
    %v3125 = vmul.f32 %v350, %v2763
    %v3126 = vmul.f32 %v353, %v2765
    %v3127 = vmul.f32 %v356, %v2767
    %v3128 = vmul.f32 %v359, %v2769
    %v3129 = vmul.f32 %v362, %v2771
    %v3130 = vmul.f32 %v365, %v2773
    %v3131 = vmul.f32 %v368, %v2775
    %v3132 = vmul.f32 %v371, %v2777
    %v3133 = vmul.f32 %v374, %v2779
    %v3134 = vmul.f32 %v377, %v2781
    %v3135 = vmul.f32 %v380, %v2783
    %v3136 = vmul.f32 %v383, %v2785
    %v3137 = vmul.f32 %v386, %v2787
    %v3138 = vmul.f32 %v389, %v2789
    %v3139 = vmul.f32 %v392, %v2791
    %v3140 = vmul.f32 %v395, %v2793
    %v3141 = vmul.f32 %v398, %v2795
    %v3142 = vmul.f32 %v401, %v2797
    %v3143 = vmul.f32 %v404, %v2799
    %v3144 = vmul.f32 %v407, %v2801
    %v3145 = vmul.f32 %v410, %v2803
    %v3146 = vmul.f32 %v413, %v2805
    %v3147 = vmul.f32 %v416, %v2807
    %v3148 = vmul.f32 %v419, %v2809
    %v3149 = vmul.f32 %v422, %v2811
    %v3150 = vmul.f32 %v425, %v2813
    %v3151 = vmul.f32 %v428, %v2815
    %v3152 = vmul.f32 %v431, %v2817
    %v3153 = vmul.f32 %v434, %v2819
    %v3154 = vmul.f32 %v437, %v2821
    %v3155 = vmul.f32 %v440, %v2823
    %v3156 = vmul.f32 %v443, %v2825
    %v3157 = vmul.f32 %v446, %v2827
    %v3158 = vmul.f32 %v449, %v2829
    %v3159 = vmul.f32 %v452, %v2831
    %v3160 = vmul.f32 %v455, %v2833
    %v3161 = vmul.f32 %v458, %v2835
    %v3162 = vmul.f32 %v461, %v2837
    %v3163 = vmul.f32 %v464, %v2839
    %v3164 = vmul.f32 %v467, %v2841
    %v3165 = vmul.f32 %v470, %v2843
    %v3166 = vmul.f32 %v473, %v2845
    %v3167 = vmul.f32 %v476, %v2847
    %v3168 = vmul.f32 %v479, %v2849
    %v3169 = vmul.f32 %v482, %v2851
    %v3170 = vmul.f32 %v485, %v2853
    %v3171 = vmul.f32 %v488, %v2855
    %v3172 = vmul.f32 %v491, %v2857
    %v3173 = vmul.f32 %v494, %v2859
    %v3174 = vmul.f32 %v497, %v2861
    %v3175 = vmul.f32 %v500, %v2863
    %v3176 = vmul.f32 %v503, %v2865
    %v3177 = vmul.f32 %v506, %v2867
    %v3178 = vmul.f32 %v509, %v2869
    %v3179 = vmul.f32 %v512, %v2871
    %v3180 = vmul.f32 %v515, %v2873
    %v3181 = vmul.f32 %v518, %v2875
    %v3182 = vmul.f32 %v521, %v2877
    %v3183 = vmul.f32 %v524, %v2879
    %v3184 = vmul.f32 %v527, %v2881
    %v3185 = vmul.f32 %v530, %v2883
    %v3186 = vmul.f32 %v533, %v2885
    %v3187 = vmul.f32 %v536, %v2887
    %v3188 = vmul.f32 %v539, %v2889
    %v3189 = vmul.f32 %v542, %v2891
    %v3190 = vmul.f32 %v545, %v2893
    %v3191 = vmul.f32 %v548, %v2895
    %v3192 = vmul.f32 %v551, %v2897
    %v3193 = vmul.f32 %v554, %v2899
    %v3194 = vmul.f32 %v557, %v2901
    %v3195 = vmul.f32 %v560, %v2903
    %v3196 = vmul.f32 %v563, %v2905
    %v3197 = vmul.f32 %v566, %v2907
    %v3198 = vmul.f32 %v569, %v2909
    %v3199 = vmul.f32 %v572, %v2911
    %v3200 = vmul.f32 %v575, %v2913
    %v3201 = vmul.f32 %v578, %v2915
    %v3202 = vmul.f32 %v581, %v2917
    %v3203 = vmul.f32 %v584, %v2919
    %v3204 = vmul.f32 %v587, %v2921
    %v3205 = vmul.f32 %v590, %v2923
    %v3206 = vmul.f32 %v593, %v2925
    %v3207 = vmul.f32 %v596, %v2927
    %v3208 = vmul.f32 %v599, %v2929
    %v3209 = vmul.f32 %v602, %v2931
    %v3210 = vmul.f32 %v605, %v2933
    %v3211 = vmul.f32 %v608, %v2935
    %v3212 = vmul.f32 %v611, %v2937
    %v3213 = vmul.f32 %v614, %v2939
    %v3214 = vmul.f32 %v617, %v2941
    %v3215 = vmul.f32 %v620, %v2943
    %v3216 = vmul.f32 %v623, %v2945
    %v3217 = vmul.f32 %v626, %v2947
    %v3218 = vmul.f32 %v629, %v2949
    %v3219 = vmul.f32 %v632, %v2951
    %v3220 = vmul.f32 %v635, %v2953
    %v3221 = vmul.f32 %v638, %v2955
    %v3222 = vmul.f32 %v641, %v2957
    %v3223 = vmul.f32 %v644, %v2959
    %v3224 = vmul.f32 %v647, %v2961
    %v3225 = vmul.f32 %v650, %v2963
    %v3226 = vmul.f32 %v653, %v2965
    %v3227 = vmul.f32 %v656, %v2967
    %v3228 = vmul.f32 %v659, %v2969
    %v3229 = vmul.f32 %v662, %v2971
    %v3230 = vmul.f32 %v665, %v2973
    %v3231 = vmul.f32 %v668, %v2975
    %3360 = vrot.lane.b32.xlu0 %v3104, 32
    %v3361 = vpop.permute.xlu0 %3360
    %3362 = vrot.lane.b32.xlu0 %v3105, 32
    %v3363 = vpop.permute.xlu0 %3362
    %3364 = vrot.lane.b32.xlu0 %v3106, 32
    %v3365 = vpop.permute.xlu0 %3364
    %3366 = vrot.lane.b32.xlu0 %v3107, 32
    %v3367 = vpop.permute.xlu0 %3366
    %3368 = vrot.lane.b32.xlu0 %v3108, 32
    %v3369 = vpop.permute.xlu0 %3368
    %3370 = vrot.lane.b32.xlu0 %v3109, 32
    %v3371 = vpop.permute.xlu0 %3370
    %3372 = vrot.lane.b32.xlu0 %v3110, 32
    %v3373 = vpop.permute.xlu0 %3372
    %3374 = vrot.lane.b32.xlu0 %v3111, 32
    %v3375 = vpop.permute.xlu0 %3374
    %3376 = vrot.lane.b32.xlu0 %v3112, 32
    %v3377 = vpop.permute.xlu0 %3376
    %3378 = vrot.lane.b32.xlu0 %v3113, 32
    %v3379 = vpop.permute.xlu0 %3378
    %3380 = vrot.lane.b32.xlu0 %v3114, 32
    %v3381 = vpop.permute.xlu0 %3380
    %3382 = vrot.lane.b32.xlu0 %v3115, 32
    %v3383 = vpop.permute.xlu0 %3382
    %3384 = vrot.lane.b32.xlu0 %v3116, 32
    %v3385 = vpop.permute.xlu0 %3384
    %3386 = vrot.lane.b32.xlu0 %v3117, 32
    %v3387 = vpop.permute.xlu0 %3386
    %3388 = vrot.lane.b32.xlu0 %v3118, 32
    %v3389 = vpop.permute.xlu0 %3388
    %3390 = vrot.lane.b32.xlu0 %v3119, 32
    %v3391 = vpop.permute.xlu0 %3390
    %3392 = vrot.lane.b32.xlu0 %v3120, 32
    %v3393 = vpop.permute.xlu0 %3392
    %3394 = vrot.lane.b32.xlu0 %v3121, 32
    %v3395 = vpop.permute.xlu0 %3394
    %3396 = vrot.lane.b32.xlu0 %v3122, 32
    %v3397 = vpop.permute.xlu0 %3396
    %3398 = vrot.lane.b32.xlu0 %v3123, 32
    %v3399 = vpop.permute.xlu0 %3398
    %3400 = vrot.lane.b32.xlu0 %v3124, 32
    %v3401 = vpop.permute.xlu0 %3400
    %3402 = vrot.lane.b32.xlu0 %v3125, 32
    %v3403 = vpop.permute.xlu0 %3402
    %3404 = vrot.lane.b32.xlu0 %v3126, 32
    %v3405 = vpop.permute.xlu0 %3404
    %3406 = vrot.lane.b32.xlu0 %v3127, 32
    %v3407 = vpop.permute.xlu0 %3406
    %3408 = vrot.lane.b32.xlu0 %v3128, 32
    %v3409 = vpop.permute.xlu0 %3408
    %3410 = vrot.lane.b32.xlu0 %v3129, 32
    %v3411 = vpop.permute.xlu0 %3410
    %3412 = vrot.lane.b32.xlu0 %v3130, 32
    %v3413 = vpop.permute.xlu0 %3412
    %3414 = vrot.lane.b32.xlu0 %v3131, 32
    %v3415 = vpop.permute.xlu0 %3414
    %3416 = vrot.lane.b32.xlu0 %v3132, 32
    %v3417 = vpop.permute.xlu0 %3416
    %3418 = vrot.lane.b32.xlu0 %v3133, 32
    %v3419 = vpop.permute.xlu0 %3418
    %3420 = vrot.lane.b32.xlu0 %v3134, 32
    %v3421 = vpop.permute.xlu0 %3420
    %3422 = vrot.lane.b32.xlu0 %v3135, 32
    %v3423 = vpop.permute.xlu0 %3422
    %3424 = vrot.lane.b32.xlu0 %v3136, 32
    %v3425 = vpop.permute.xlu0 %3424
    %3426 = vrot.lane.b32.xlu0 %v3137, 32
    %v3427 = vpop.permute.xlu0 %3426
    %3428 = vrot.lane.b32.xlu0 %v3138, 32
    %v3429 = vpop.permute.xlu0 %3428
    %3430 = vrot.lane.b32.xlu0 %v3139, 32
    %v3431 = vpop.permute.xlu0 %3430
    %3432 = vrot.lane.b32.xlu0 %v3140, 32
    %v3433 = vpop.permute.xlu0 %3432
    %3434 = vrot.lane.b32.xlu0 %v3141, 32
    %v3435 = vpop.permute.xlu0 %3434
    %3436 = vrot.lane.b32.xlu0 %v3142, 32
    %v3437 = vpop.permute.xlu0 %3436
    %3438 = vrot.lane.b32.xlu0 %v3143, 32
    %v3439 = vpop.permute.xlu0 %3438
    %3440 = vrot.lane.b32.xlu0 %v3144, 32
    %v3441 = vpop.permute.xlu0 %3440
    %3442 = vrot.lane.b32.xlu0 %v3145, 32
    %v3443 = vpop.permute.xlu0 %3442
    %3444 = vrot.lane.b32.xlu0 %v3146, 32
    %v3445 = vpop.permute.xlu0 %3444
    %3446 = vrot.lane.b32.xlu0 %v3147, 32
    %v3447 = vpop.permute.xlu0 %3446
    %3448 = vrot.lane.b32.xlu0 %v3148, 32
    %v3449 = vpop.permute.xlu0 %3448
    %3450 = vrot.lane.b32.xlu0 %v3149, 32
    %v3451 = vpop.permute.xlu0 %3450
    %3452 = vrot.lane.b32.xlu0 %v3150, 32
    %v3453 = vpop.permute.xlu0 %3452
    %3454 = vrot.lane.b32.xlu0 %v3151, 32
    %v3455 = vpop.permute.xlu0 %3454
    %3456 = vrot.lane.b32.xlu0 %v3152, 32
    %v3457 = vpop.permute.xlu0 %3456
    %3458 = vrot.lane.b32.xlu0 %v3153, 32
    %v3459 = vpop.permute.xlu0 %3458
    %3460 = vrot.lane.b32.xlu0 %v3154, 32
    %v3461 = vpop.permute.xlu0 %3460
    %3462 = vrot.lane.b32.xlu0 %v3155, 32
    %v3463 = vpop.permute.xlu0 %3462
    %3464 = vrot.lane.b32.xlu0 %v3156, 32
    %v3465 = vpop.permute.xlu0 %3464
    %3466 = vrot.lane.b32.xlu0 %v3157, 32
    %v3467 = vpop.permute.xlu0 %3466
    %3468 = vrot.lane.b32.xlu0 %v3158, 32
    %v3469 = vpop.permute.xlu0 %3468
    %3470 = vrot.lane.b32.xlu0 %v3159, 32
    %v3471 = vpop.permute.xlu0 %3470
    %3472 = vrot.lane.b32.xlu0 %v3160, 32
    %v3473 = vpop.permute.xlu0 %3472
    %3474 = vrot.lane.b32.xlu0 %v3161, 32
    %v3475 = vpop.permute.xlu0 %3474
    %3476 = vrot.lane.b32.xlu0 %v3162, 32
    %v3477 = vpop.permute.xlu0 %3476
    %3478 = vrot.lane.b32.xlu0 %v3163, 32
    %v3479 = vpop.permute.xlu0 %3478
    %3480 = vrot.lane.b32.xlu0 %v3164, 32
    %v3481 = vpop.permute.xlu0 %3480
    %3482 = vrot.lane.b32.xlu0 %v3165, 32
    %v3483 = vpop.permute.xlu0 %3482
    %3484 = vrot.lane.b32.xlu0 %v3166, 32
    %v3485 = vpop.permute.xlu0 %3484
    %3486 = vrot.lane.b32.xlu0 %v3167, 32
    %v3487 = vpop.permute.xlu0 %3486
    %3488 = vrot.lane.b32.xlu0 %v3168, 32
    %v3489 = vpop.permute.xlu0 %3488
    %3490 = vrot.lane.b32.xlu0 %v3169, 32
    %v3491 = vpop.permute.xlu0 %3490
    %3492 = vrot.lane.b32.xlu0 %v3170, 32
    %v3493 = vpop.permute.xlu0 %3492
    %3494 = vrot.lane.b32.xlu0 %v3171, 32
    %v3495 = vpop.permute.xlu0 %3494
    %3496 = vrot.lane.b32.xlu0 %v3172, 32
    %v3497 = vpop.permute.xlu0 %3496
    %3498 = vrot.lane.b32.xlu0 %v3173, 32
    %v3499 = vpop.permute.xlu0 %3498
    %3500 = vrot.lane.b32.xlu0 %v3174, 32
    %v3501 = vpop.permute.xlu0 %3500
    %3502 = vrot.lane.b32.xlu0 %v3175, 32
    %v3503 = vpop.permute.xlu0 %3502
    %3504 = vrot.lane.b32.xlu0 %v3176, 32
    %v3505 = vpop.permute.xlu0 %3504
    %3506 = vrot.lane.b32.xlu0 %v3177, 32
    %v3507 = vpop.permute.xlu0 %3506
    %3508 = vrot.lane.b32.xlu0 %v3178, 32
    %v3509 = vpop.permute.xlu0 %3508
    %3510 = vrot.lane.b32.xlu0 %v3179, 32
    %v3511 = vpop.permute.xlu0 %3510
    %3512 = vrot.lane.b32.xlu0 %v3180, 32
    %v3513 = vpop.permute.xlu0 %3512
    %3514 = vrot.lane.b32.xlu0 %v3181, 32
    %v3515 = vpop.permute.xlu0 %3514
    %3516 = vrot.lane.b32.xlu0 %v3182, 32
    %v3517 = vpop.permute.xlu0 %3516
    %3518 = vrot.lane.b32.xlu0 %v3183, 32
    %v3519 = vpop.permute.xlu0 %3518
    %3520 = vrot.lane.b32.xlu0 %v3184, 32
    %v3521 = vpop.permute.xlu0 %3520
    %3522 = vrot.lane.b32.xlu0 %v3185, 32
    %v3523 = vpop.permute.xlu0 %3522
    %3524 = vrot.lane.b32.xlu0 %v3186, 32
    %v3525 = vpop.permute.xlu0 %3524
    %3526 = vrot.lane.b32.xlu0 %v3187, 32
    %v3527 = vpop.permute.xlu0 %3526
    %3528 = vrot.lane.b32.xlu0 %v3188, 32
    %v3529 = vpop.permute.xlu0 %3528
    %3530 = vrot.lane.b32.xlu0 %v3189, 32
    %v3531 = vpop.permute.xlu0 %3530
    %3532 = vrot.lane.b32.xlu0 %v3190, 32
    %v3533 = vpop.permute.xlu0 %3532
    %3534 = vrot.lane.b32.xlu0 %v3191, 32
    %v3535 = vpop.permute.xlu0 %3534
    %3536 = vrot.lane.b32.xlu0 %v3192, 32
    %v3537 = vpop.permute.xlu0 %3536
    %3538 = vrot.lane.b32.xlu0 %v3193, 32
    %v3539 = vpop.permute.xlu0 %3538
    %3540 = vrot.lane.b32.xlu0 %v3194, 32
    %v3541 = vpop.permute.xlu0 %3540
    %3542 = vrot.lane.b32.xlu0 %v3195, 32
    %v3543 = vpop.permute.xlu0 %3542
    %3544 = vrot.lane.b32.xlu0 %v3196, 32
    %v3545 = vpop.permute.xlu0 %3544
    %3546 = vrot.lane.b32.xlu0 %v3197, 32
    %v3547 = vpop.permute.xlu0 %3546
    %3548 = vrot.lane.b32.xlu0 %v3198, 32
    %v3549 = vpop.permute.xlu0 %3548
    %3550 = vrot.lane.b32.xlu0 %v3199, 32
    %v3551 = vpop.permute.xlu0 %3550
    %3552 = vrot.lane.b32.xlu0 %v3200, 32
    %v3553 = vpop.permute.xlu0 %3552
    %3554 = vrot.lane.b32.xlu0 %v3201, 32
    %v3555 = vpop.permute.xlu0 %3554
    %3556 = vrot.lane.b32.xlu0 %v3202, 32
    %v3557 = vpop.permute.xlu0 %3556
    %3558 = vrot.lane.b32.xlu0 %v3203, 32
    %v3559 = vpop.permute.xlu0 %3558
    %3560 = vrot.lane.b32.xlu0 %v3204, 32
    %v3561 = vpop.permute.xlu0 %3560
    %3562 = vrot.lane.b32.xlu0 %v3205, 32
    %v3563 = vpop.permute.xlu0 %3562
    %3564 = vrot.lane.b32.xlu0 %v3206, 32
    %v3565 = vpop.permute.xlu0 %3564
    %3566 = vrot.lane.b32.xlu0 %v3207, 32
    %v3567 = vpop.permute.xlu0 %3566
    %3568 = vrot.lane.b32.xlu0 %v3208, 32
    %v3569 = vpop.permute.xlu0 %3568
    %3570 = vrot.lane.b32.xlu0 %v3209, 32
    %v3571 = vpop.permute.xlu0 %3570
    %3572 = vrot.lane.b32.xlu0 %v3210, 32
    %v3573 = vpop.permute.xlu0 %3572
    %3574 = vrot.lane.b32.xlu0 %v3211, 32
    %v3575 = vpop.permute.xlu0 %3574
    %3576 = vrot.lane.b32.xlu0 %v3212, 32
    %v3577 = vpop.permute.xlu0 %3576
    %3578 = vrot.lane.b32.xlu0 %v3213, 32
    %v3579 = vpop.permute.xlu0 %3578
    %3580 = vrot.lane.b32.xlu0 %v3214, 32
    %v3581 = vpop.permute.xlu0 %3580
    %3582 = vrot.lane.b32.xlu0 %v3215, 32
    %v3583 = vpop.permute.xlu0 %3582
    %3584 = vrot.lane.b32.xlu0 %v3216, 32
    %v3585 = vpop.permute.xlu0 %3584
    %3586 = vrot.lane.b32.xlu0 %v3217, 32
    %v3587 = vpop.permute.xlu0 %3586
    %3588 = vrot.lane.b32.xlu0 %v3218, 32
    %v3589 = vpop.permute.xlu0 %3588
    %3590 = vrot.lane.b32.xlu0 %v3219, 32
    %v3591 = vpop.permute.xlu0 %3590
    %3592 = vrot.lane.b32.xlu0 %v3220, 32
    %v3593 = vpop.permute.xlu0 %3592
    %3594 = vrot.lane.b32.xlu0 %v3221, 32
    %v3595 = vpop.permute.xlu0 %3594
    %3596 = vrot.lane.b32.xlu0 %v3222, 32
    %v3597 = vpop.permute.xlu0 %3596
    %3598 = vrot.lane.b32.xlu0 %v3223, 32
    %v3599 = vpop.permute.xlu0 %3598
    %3600 = vrot.lane.b32.xlu0 %v3224, 32
    %v3601 = vpop.permute.xlu0 %3600
    %3602 = vrot.lane.b32.xlu0 %v3225, 32
    %v3603 = vpop.permute.xlu0 %3602
    %3604 = vrot.lane.b32.xlu0 %v3226, 32
    %v3605 = vpop.permute.xlu0 %3604
    %3606 = vrot.lane.b32.xlu0 %v3227, 32
    %v3607 = vpop.permute.xlu0 %3606
    %3608 = vrot.lane.b32.xlu0 %v3228, 32
    %v3609 = vpop.permute.xlu0 %3608
    %3610 = vrot.lane.b32.xlu0 %v3229, 32
    %v3611 = vpop.permute.xlu0 %3610
    %3612 = vrot.lane.b32.xlu0 %v3230, 32
    %v3613 = vpop.permute.xlu0 %3612
    %3614 = vrot.lane.b32.xlu0 %v3231, 32
    %v3615 = vpop.permute.xlu0 %3614
    %v3744 = vadd.f32 %v2336, %v3361
    %v3745 = vadd.f32 %v2337, %v3363
    %v3746 = vadd.f32 %v2338, %v3365
    %v3747 = vadd.f32 %v2339, %v3367
    %v3748 = vadd.f32 %v2340, %v3369
    %v3749 = vadd.f32 %v2341, %v3371
    %v3750 = vadd.f32 %v2342, %v3373
    %v3751 = vadd.f32 %v2343, %v3375
    %v3752 = vadd.f32 %v2344, %v3377
    %v3753 = vadd.f32 %v2345, %v3379
    %v3754 = vadd.f32 %v2346, %v3381
    %v3755 = vadd.f32 %v2347, %v3383
    %v3756 = vadd.f32 %v2348, %v3385
    %v3757 = vadd.f32 %v2349, %v3387
    %v3758 = vadd.f32 %v2350, %v3389
    %v3759 = vadd.f32 %v2351, %v3391
    %v3760 = vadd.f32 %v2352, %v3393
    %v3761 = vadd.f32 %v2353, %v3395
    %v3762 = vadd.f32 %v2354, %v3397
    %v3763 = vadd.f32 %v2355, %v3399
    %v3764 = vadd.f32 %v2356, %v3401
    %v3765 = vadd.f32 %v2357, %v3403
    %v3766 = vadd.f32 %v2358, %v3405
    %v3767 = vadd.f32 %v2359, %v3407
    %v3768 = vadd.f32 %v2360, %v3409
    %v3769 = vadd.f32 %v2361, %v3411
    %v3770 = vadd.f32 %v2362, %v3413
    %v3771 = vadd.f32 %v2363, %v3415
    %v3772 = vadd.f32 %v2364, %v3417
    %v3773 = vadd.f32 %v2365, %v3419
    %v3774 = vadd.f32 %v2366, %v3421
    %v3775 = vadd.f32 %v2367, %v3423
    %v3776 = vadd.f32 %v2368, %v3425
    %v3777 = vadd.f32 %v2369, %v3427
    %v3778 = vadd.f32 %v2370, %v3429
    %v3779 = vadd.f32 %v2371, %v3431
    %v3780 = vadd.f32 %v2372, %v3433
    %v3781 = vadd.f32 %v2373, %v3435
    %v3782 = vadd.f32 %v2374, %v3437
    %v3783 = vadd.f32 %v2375, %v3439
    %v3784 = vadd.f32 %v2376, %v3441
    %v3785 = vadd.f32 %v2377, %v3443
    %v3786 = vadd.f32 %v2378, %v3445
    %v3787 = vadd.f32 %v2379, %v3447
    %v3788 = vadd.f32 %v2380, %v3449
    %v3789 = vadd.f32 %v2381, %v3451
    %v3790 = vadd.f32 %v2382, %v3453
    %v3791 = vadd.f32 %v2383, %v3455
    %v3792 = vadd.f32 %v2384, %v3457
    %v3793 = vadd.f32 %v2385, %v3459
    %v3794 = vadd.f32 %v2386, %v3461
    %v3795 = vadd.f32 %v2387, %v3463
    %v3796 = vadd.f32 %v2388, %v3465
    %v3797 = vadd.f32 %v2389, %v3467
    %v3798 = vadd.f32 %v2390, %v3469
    %v3799 = vadd.f32 %v2391, %v3471
    %v3800 = vadd.f32 %v2392, %v3473
    %v3801 = vadd.f32 %v2393, %v3475
    %v3802 = vadd.f32 %v2394, %v3477
    %v3803 = vadd.f32 %v2395, %v3479
    %v3804 = vadd.f32 %v2396, %v3481
    %v3805 = vadd.f32 %v2397, %v3483
    %v3806 = vadd.f32 %v2398, %v3485
    %v3807 = vadd.f32 %v2399, %v3487
    %v3808 = vadd.f32 %v2400, %v3489
    %v3809 = vadd.f32 %v2401, %v3491
    %v3810 = vadd.f32 %v2402, %v3493
    %v3811 = vadd.f32 %v2403, %v3495
    %v3812 = vadd.f32 %v2404, %v3497
    %v3813 = vadd.f32 %v2405, %v3499
    %v3814 = vadd.f32 %v2406, %v3501
    %v3815 = vadd.f32 %v2407, %v3503
    %v3816 = vadd.f32 %v2408, %v3505
    %v3817 = vadd.f32 %v2409, %v3507
    %v3818 = vadd.f32 %v2410, %v3509
    %v3819 = vadd.f32 %v2411, %v3511
    %v3820 = vadd.f32 %v2412, %v3513
    %v3821 = vadd.f32 %v2413, %v3515
    %v3822 = vadd.f32 %v2414, %v3517
    %v3823 = vadd.f32 %v2415, %v3519
    %v3824 = vadd.f32 %v2416, %v3521
    %v3825 = vadd.f32 %v2417, %v3523
    %v3826 = vadd.f32 %v2418, %v3525
    %v3827 = vadd.f32 %v2419, %v3527
    %v3828 = vadd.f32 %v2420, %v3529
    %v3829 = vadd.f32 %v2421, %v3531
    %v3830 = vadd.f32 %v2422, %v3533
    %v3831 = vadd.f32 %v2423, %v3535
    %v3832 = vadd.f32 %v2424, %v3537
    %v3833 = vadd.f32 %v2425, %v3539
    %v3834 = vadd.f32 %v2426, %v3541
    %v3835 = vadd.f32 %v2427, %v3543
    %v3836 = vadd.f32 %v2428, %v3545
    %v3837 = vadd.f32 %v2429, %v3547
    %v3838 = vadd.f32 %v2430, %v3549
    %v3839 = vadd.f32 %v2431, %v3551
    %v3840 = vadd.f32 %v2432, %v3553
    %v3841 = vadd.f32 %v2433, %v3555
    %v3842 = vadd.f32 %v2434, %v3557
    %v3843 = vadd.f32 %v2435, %v3559
    %v3844 = vadd.f32 %v2436, %v3561
    %v3845 = vadd.f32 %v2437, %v3563
    %v3846 = vadd.f32 %v2438, %v3565
    %v3847 = vadd.f32 %v2439, %v3567
    %v3848 = vadd.f32 %v2440, %v3569
    %v3849 = vadd.f32 %v2441, %v3571
    %v3850 = vadd.f32 %v2442, %v3573
    %v3851 = vadd.f32 %v2443, %v3575
    %v3852 = vadd.f32 %v2444, %v3577
    %v3853 = vadd.f32 %v2445, %v3579
    %v3854 = vadd.f32 %v2446, %v3581
    %v3855 = vadd.f32 %v2447, %v3583
    %v3856 = vadd.f32 %v2448, %v3585
    %v3857 = vadd.f32 %v2449, %v3587
    %v3858 = vadd.f32 %v2450, %v3589
    %v3859 = vadd.f32 %v2451, %v3591
    %v3860 = vadd.f32 %v2452, %v3593
    %v3861 = vadd.f32 %v2453, %v3595
    %v3862 = vadd.f32 %v2454, %v3597
    %v3863 = vadd.f32 %v2455, %v3599
    %v3864 = vadd.f32 %v2456, %v3601
    %v3865 = vadd.f32 %v2457, %v3603
    %v3866 = vadd.f32 %v2458, %v3605
    %v3867 = vadd.f32 %v2459, %v3607
    %v3868 = vadd.f32 %v2460, %v3609
    %v3869 = vadd.f32 %v2461, %v3611
    %v3870 = vadd.f32 %v2462, %v3613
    %v3871 = vadd.f32 %v2463, %v3615
    %4000 = vrot.lane.b32.xlu0 %v1184, 32
    %v4001 = vpop.permute.xlu0 %4000
    %4002 = vrot.lane.b32.xlu0 %v1185, 32
    %v4003 = vpop.permute.xlu0 %4002
    %4004 = vrot.lane.b32.xlu0 %v1186, 32
    %v4005 = vpop.permute.xlu0 %4004
    %4006 = vrot.lane.b32.xlu0 %v1187, 32
    %v4007 = vpop.permute.xlu0 %4006
    %4008 = vrot.lane.b32.xlu0 %v1188, 32
    %v4009 = vpop.permute.xlu0 %4008
    %4010 = vrot.lane.b32.xlu0 %v1189, 32
    %v4011 = vpop.permute.xlu0 %4010
    %4012 = vrot.lane.b32.xlu0 %v1190, 32
    %v4013 = vpop.permute.xlu0 %4012
    %4014 = vrot.lane.b32.xlu0 %v1191, 32
    %v4015 = vpop.permute.xlu0 %4014
    %4016 = vrot.lane.b32.xlu0 %v1192, 32
    %v4017 = vpop.permute.xlu0 %4016
    %4018 = vrot.lane.b32.xlu0 %v1193, 32
    %v4019 = vpop.permute.xlu0 %4018
    %4020 = vrot.lane.b32.xlu0 %v1194, 32
    %v4021 = vpop.permute.xlu0 %4020
    %4022 = vrot.lane.b32.xlu0 %v1195, 32
    %v4023 = vpop.permute.xlu0 %4022
    %4024 = vrot.lane.b32.xlu0 %v1196, 32
    %v4025 = vpop.permute.xlu0 %4024
    %4026 = vrot.lane.b32.xlu0 %v1197, 32
    %v4027 = vpop.permute.xlu0 %4026
    %4028 = vrot.lane.b32.xlu0 %v1198, 32
    %v4029 = vpop.permute.xlu0 %4028
    %4030 = vrot.lane.b32.xlu0 %v1199, 32
    %v4031 = vpop.permute.xlu0 %4030
    %4032 = vrot.lane.b32.xlu0 %v1200, 32
    %v4033 = vpop.permute.xlu0 %4032
    %4034 = vrot.lane.b32.xlu0 %v1201, 32
    %v4035 = vpop.permute.xlu0 %4034
    %4036 = vrot.lane.b32.xlu0 %v1202, 32
    %v4037 = vpop.permute.xlu0 %4036
    %4038 = vrot.lane.b32.xlu0 %v1203, 32
    %v4039 = vpop.permute.xlu0 %4038
    %4040 = vrot.lane.b32.xlu0 %v1204, 32
    %v4041 = vpop.permute.xlu0 %4040
    %4042 = vrot.lane.b32.xlu0 %v1205, 32
    %v4043 = vpop.permute.xlu0 %4042
    %4044 = vrot.lane.b32.xlu0 %v1206, 32
    %v4045 = vpop.permute.xlu0 %4044
    %4046 = vrot.lane.b32.xlu0 %v1207, 32
    %v4047 = vpop.permute.xlu0 %4046
    %4048 = vrot.lane.b32.xlu0 %v1208, 32
    %v4049 = vpop.permute.xlu0 %4048
    %4050 = vrot.lane.b32.xlu0 %v1209, 32
    %v4051 = vpop.permute.xlu0 %4050
    %4052 = vrot.lane.b32.xlu0 %v1210, 32
    %v4053 = vpop.permute.xlu0 %4052
    %4054 = vrot.lane.b32.xlu0 %v1211, 32
    %v4055 = vpop.permute.xlu0 %4054
    %4056 = vrot.lane.b32.xlu0 %v1212, 32
    %v4057 = vpop.permute.xlu0 %4056
    %4058 = vrot.lane.b32.xlu0 %v1213, 32
    %v4059 = vpop.permute.xlu0 %4058
    %4060 = vrot.lane.b32.xlu0 %v1214, 32
    %v4061 = vpop.permute.xlu0 %4060
    %4062 = vrot.lane.b32.xlu0 %v1215, 32
    %v4063 = vpop.permute.xlu0 %4062
    %4064 = vrot.lane.b32.xlu0 %v1216, 32
    %v4065 = vpop.permute.xlu0 %4064
    %4066 = vrot.lane.b32.xlu0 %v1217, 32
    %v4067 = vpop.permute.xlu0 %4066
    %4068 = vrot.lane.b32.xlu0 %v1218, 32
    %v4069 = vpop.permute.xlu0 %4068
    %4070 = vrot.lane.b32.xlu0 %v1219, 32
    %v4071 = vpop.permute.xlu0 %4070
    %4072 = vrot.lane.b32.xlu0 %v1220, 32
    %v4073 = vpop.permute.xlu0 %4072
    %4074 = vrot.lane.b32.xlu0 %v1221, 32
    %v4075 = vpop.permute.xlu0 %4074
    %4076 = vrot.lane.b32.xlu0 %v1222, 32
    %v4077 = vpop.permute.xlu0 %4076
    %4078 = vrot.lane.b32.xlu0 %v1223, 32
    %v4079 = vpop.permute.xlu0 %4078
    %4080 = vrot.lane.b32.xlu0 %v1224, 32
    %v4081 = vpop.permute.xlu0 %4080
    %4082 = vrot.lane.b32.xlu0 %v1225, 32
    %v4083 = vpop.permute.xlu0 %4082
    %4084 = vrot.lane.b32.xlu0 %v1226, 32
    %v4085 = vpop.permute.xlu0 %4084
    %4086 = vrot.lane.b32.xlu0 %v1227, 32
    %v4087 = vpop.permute.xlu0 %4086
    %4088 = vrot.lane.b32.xlu0 %v1228, 32
    %v4089 = vpop.permute.xlu0 %4088
    %4090 = vrot.lane.b32.xlu0 %v1229, 32
    %v4091 = vpop.permute.xlu0 %4090
    %4092 = vrot.lane.b32.xlu0 %v1230, 32
    %v4093 = vpop.permute.xlu0 %4092
    %4094 = vrot.lane.b32.xlu0 %v1231, 32
    %v4095 = vpop.permute.xlu0 %4094
    %4096 = vrot.lane.b32.xlu0 %v1232, 32
    %v4097 = vpop.permute.xlu0 %4096
    %4098 = vrot.lane.b32.xlu0 %v1233, 32
    %v4099 = vpop.permute.xlu0 %4098
    %4100 = vrot.lane.b32.xlu0 %v1234, 32
    %v4101 = vpop.permute.xlu0 %4100
    %4102 = vrot.lane.b32.xlu0 %v1235, 32
    %v4103 = vpop.permute.xlu0 %4102
    %4104 = vrot.lane.b32.xlu0 %v1236, 32
    %v4105 = vpop.permute.xlu0 %4104
    %4106 = vrot.lane.b32.xlu0 %v1237, 32
    %v4107 = vpop.permute.xlu0 %4106
    %4108 = vrot.lane.b32.xlu0 %v1238, 32
    %v4109 = vpop.permute.xlu0 %4108
    %4110 = vrot.lane.b32.xlu0 %v1239, 32
    %v4111 = vpop.permute.xlu0 %4110
    %4112 = vrot.lane.b32.xlu0 %v1240, 32
    %v4113 = vpop.permute.xlu0 %4112
    %4114 = vrot.lane.b32.xlu0 %v1241, 32
    %v4115 = vpop.permute.xlu0 %4114
    %4116 = vrot.lane.b32.xlu0 %v1242, 32
    %v4117 = vpop.permute.xlu0 %4116
    %4118 = vrot.lane.b32.xlu0 %v1243, 32
    %v4119 = vpop.permute.xlu0 %4118
    %4120 = vrot.lane.b32.xlu0 %v1244, 32
    %v4121 = vpop.permute.xlu0 %4120
    %4122 = vrot.lane.b32.xlu0 %v1245, 32
    %v4123 = vpop.permute.xlu0 %4122
    %4124 = vrot.lane.b32.xlu0 %v1246, 32
    %v4125 = vpop.permute.xlu0 %4124
    %4126 = vrot.lane.b32.xlu0 %v1247, 32
    %v4127 = vpop.permute.xlu0 %4126
    %4128 = vrot.lane.b32.xlu0 %v1248, 32
    %v4129 = vpop.permute.xlu0 %4128
    %4130 = vrot.lane.b32.xlu0 %v1249, 32
    %v4131 = vpop.permute.xlu0 %4130
    %4132 = vrot.lane.b32.xlu0 %v1250, 32
    %v4133 = vpop.permute.xlu0 %4132
    %4134 = vrot.lane.b32.xlu0 %v1251, 32
    %v4135 = vpop.permute.xlu0 %4134
    %4136 = vrot.lane.b32.xlu0 %v1252, 32
    %v4137 = vpop.permute.xlu0 %4136
    %4138 = vrot.lane.b32.xlu0 %v1253, 32
    %v4139 = vpop.permute.xlu0 %4138
    %4140 = vrot.lane.b32.xlu0 %v1254, 32
    %v4141 = vpop.permute.xlu0 %4140
    %4142 = vrot.lane.b32.xlu0 %v1255, 32
    %v4143 = vpop.permute.xlu0 %4142
    %4144 = vrot.lane.b32.xlu0 %v1256, 32
    %v4145 = vpop.permute.xlu0 %4144
    %4146 = vrot.lane.b32.xlu0 %v1257, 32
    %v4147 = vpop.permute.xlu0 %4146
    %4148 = vrot.lane.b32.xlu0 %v1258, 32
    %v4149 = vpop.permute.xlu0 %4148
    %4150 = vrot.lane.b32.xlu0 %v1259, 32
    %v4151 = vpop.permute.xlu0 %4150
    %4152 = vrot.lane.b32.xlu0 %v1260, 32
    %v4153 = vpop.permute.xlu0 %4152
    %4154 = vrot.lane.b32.xlu0 %v1261, 32
    %v4155 = vpop.permute.xlu0 %4154
    %4156 = vrot.lane.b32.xlu0 %v1262, 32
    %v4157 = vpop.permute.xlu0 %4156
    %4158 = vrot.lane.b32.xlu0 %v1263, 32
    %v4159 = vpop.permute.xlu0 %4158
    %4160 = vrot.lane.b32.xlu0 %v1264, 32
    %v4161 = vpop.permute.xlu0 %4160
    %4162 = vrot.lane.b32.xlu0 %v1265, 32
    %v4163 = vpop.permute.xlu0 %4162
    %4164 = vrot.lane.b32.xlu0 %v1266, 32
    %v4165 = vpop.permute.xlu0 %4164
    %4166 = vrot.lane.b32.xlu0 %v1267, 32
    %v4167 = vpop.permute.xlu0 %4166
    %4168 = vrot.lane.b32.xlu0 %v1268, 32
    %v4169 = vpop.permute.xlu0 %4168
    %4170 = vrot.lane.b32.xlu0 %v1269, 32
    %v4171 = vpop.permute.xlu0 %4170
    %4172 = vrot.lane.b32.xlu0 %v1270, 32
    %v4173 = vpop.permute.xlu0 %4172
    %4174 = vrot.lane.b32.xlu0 %v1271, 32
    %v4175 = vpop.permute.xlu0 %4174
    %4176 = vrot.lane.b32.xlu0 %v1272, 32
    %v4177 = vpop.permute.xlu0 %4176
    %4178 = vrot.lane.b32.xlu0 %v1273, 32
    %v4179 = vpop.permute.xlu0 %4178
    %4180 = vrot.lane.b32.xlu0 %v1274, 32
    %v4181 = vpop.permute.xlu0 %4180
    %4182 = vrot.lane.b32.xlu0 %v1275, 32
    %v4183 = vpop.permute.xlu0 %4182
    %4184 = vrot.lane.b32.xlu0 %v1276, 32
    %v4185 = vpop.permute.xlu0 %4184
    %4186 = vrot.lane.b32.xlu0 %v1277, 32
    %v4187 = vpop.permute.xlu0 %4186
    %4188 = vrot.lane.b32.xlu0 %v1278, 32
    %v4189 = vpop.permute.xlu0 %4188
    %4190 = vrot.lane.b32.xlu0 %v1279, 32
    %v4191 = vpop.permute.xlu0 %4190
    %4192 = vrot.lane.b32.xlu0 %v1280, 32
    %v4193 = vpop.permute.xlu0 %4192
    %4194 = vrot.lane.b32.xlu0 %v1281, 32
    %v4195 = vpop.permute.xlu0 %4194
    %4196 = vrot.lane.b32.xlu0 %v1282, 32
    %v4197 = vpop.permute.xlu0 %4196
    %4198 = vrot.lane.b32.xlu0 %v1283, 32
    %v4199 = vpop.permute.xlu0 %4198
    %4200 = vrot.lane.b32.xlu0 %v1284, 32
    %v4201 = vpop.permute.xlu0 %4200
    %4202 = vrot.lane.b32.xlu0 %v1285, 32
    %v4203 = vpop.permute.xlu0 %4202
    %4204 = vrot.lane.b32.xlu0 %v1286, 32
    %v4205 = vpop.permute.xlu0 %4204
    %4206 = vrot.lane.b32.xlu0 %v1287, 32
    %v4207 = vpop.permute.xlu0 %4206
    %4208 = vrot.lane.b32.xlu0 %v1288, 32
    %v4209 = vpop.permute.xlu0 %4208
    %4210 = vrot.lane.b32.xlu0 %v1289, 32
    %v4211 = vpop.permute.xlu0 %4210
    %4212 = vrot.lane.b32.xlu0 %v1290, 32
    %v4213 = vpop.permute.xlu0 %4212
    %4214 = vrot.lane.b32.xlu0 %v1291, 32
    %v4215 = vpop.permute.xlu0 %4214
    %4216 = vrot.lane.b32.xlu0 %v1292, 32
    %v4217 = vpop.permute.xlu0 %4216
    %4218 = vrot.lane.b32.xlu0 %v1293, 32
    %v4219 = vpop.permute.xlu0 %4218
    %4220 = vrot.lane.b32.xlu0 %v1294, 32
    %v4221 = vpop.permute.xlu0 %4220
    %4222 = vrot.lane.b32.xlu0 %v1295, 32
    %v4223 = vpop.permute.xlu0 %4222
    %4224 = vrot.lane.b32.xlu0 %v1296, 32
    %v4225 = vpop.permute.xlu0 %4224
    %4226 = vrot.lane.b32.xlu0 %v1297, 32
    %v4227 = vpop.permute.xlu0 %4226
    %4228 = vrot.lane.b32.xlu0 %v1298, 32
    %v4229 = vpop.permute.xlu0 %4228
    %4230 = vrot.lane.b32.xlu0 %v1299, 32
    %v4231 = vpop.permute.xlu0 %4230
    %4232 = vrot.lane.b32.xlu0 %v1300, 32
    %v4233 = vpop.permute.xlu0 %4232
    %4234 = vrot.lane.b32.xlu0 %v1301, 32
    %v4235 = vpop.permute.xlu0 %4234
    %4236 = vrot.lane.b32.xlu0 %v1302, 32
    %v4237 = vpop.permute.xlu0 %4236
    %4238 = vrot.lane.b32.xlu0 %v1303, 32
    %v4239 = vpop.permute.xlu0 %4238
    %4240 = vrot.lane.b32.xlu0 %v1304, 32
    %v4241 = vpop.permute.xlu0 %4240
    %4242 = vrot.lane.b32.xlu0 %v1305, 32
    %v4243 = vpop.permute.xlu0 %4242
    %4244 = vrot.lane.b32.xlu0 %v1306, 32
    %v4245 = vpop.permute.xlu0 %4244
    %4246 = vrot.lane.b32.xlu0 %v1307, 32
    %v4247 = vpop.permute.xlu0 %4246
    %4248 = vrot.lane.b32.xlu0 %v1308, 32
    %v4249 = vpop.permute.xlu0 %4248
    %4250 = vrot.lane.b32.xlu0 %v1309, 32
    %v4251 = vpop.permute.xlu0 %4250
    %4252 = vrot.lane.b32.xlu0 %v1310, 32
    %v4253 = vpop.permute.xlu0 %4252
    %4254 = vrot.lane.b32.xlu0 %v1311, 32
    %v4255 = vpop.permute.xlu0 %4254
    %v4384 = vmul.f32 %v287, %v4001
    %v4385 = vmul.f32 %v290, %v4003
    %v4386 = vmul.f32 %v293, %v4005
    %v4387 = vmul.f32 %v296, %v4007
    %v4388 = vmul.f32 %v299, %v4009
    %v4389 = vmul.f32 %v302, %v4011
    %v4390 = vmul.f32 %v305, %v4013
    %v4391 = vmul.f32 %v308, %v4015
    %v4392 = vmul.f32 %v311, %v4017
    %v4393 = vmul.f32 %v314, %v4019
    %v4394 = vmul.f32 %v317, %v4021
    %v4395 = vmul.f32 %v320, %v4023
    %v4396 = vmul.f32 %v323, %v4025
    %v4397 = vmul.f32 %v326, %v4027
    %v4398 = vmul.f32 %v329, %v4029
    %v4399 = vmul.f32 %v332, %v4031
    %v4400 = vmul.f32 %v335, %v4033
    %v4401 = vmul.f32 %v338, %v4035
    %v4402 = vmul.f32 %v341, %v4037
    %v4403 = vmul.f32 %v344, %v4039
    %v4404 = vmul.f32 %v347, %v4041
    %v4405 = vmul.f32 %v350, %v4043
    %v4406 = vmul.f32 %v353, %v4045
    %v4407 = vmul.f32 %v356, %v4047
    %v4408 = vmul.f32 %v359, %v4049
    %v4409 = vmul.f32 %v362, %v4051
    %v4410 = vmul.f32 %v365, %v4053
    %v4411 = vmul.f32 %v368, %v4055
    %v4412 = vmul.f32 %v371, %v4057
    %v4413 = vmul.f32 %v374, %v4059
    %v4414 = vmul.f32 %v377, %v4061
    %v4415 = vmul.f32 %v380, %v4063
    %v4416 = vmul.f32 %v383, %v4065
    %v4417 = vmul.f32 %v386, %v4067
    %v4418 = vmul.f32 %v389, %v4069
    %v4419 = vmul.f32 %v392, %v4071
    %v4420 = vmul.f32 %v395, %v4073
    %v4421 = vmul.f32 %v398, %v4075
    %v4422 = vmul.f32 %v401, %v4077
    %v4423 = vmul.f32 %v404, %v4079
    %v4424 = vmul.f32 %v407, %v4081
    %v4425 = vmul.f32 %v410, %v4083
    %v4426 = vmul.f32 %v413, %v4085
    %v4427 = vmul.f32 %v416, %v4087
    %v4428 = vmul.f32 %v419, %v4089
    %v4429 = vmul.f32 %v422, %v4091
    %v4430 = vmul.f32 %v425, %v4093
    %v4431 = vmul.f32 %v428, %v4095
    %v4432 = vmul.f32 %v431, %v4097
    %v4433 = vmul.f32 %v434, %v4099
    %v4434 = vmul.f32 %v437, %v4101
    %v4435 = vmul.f32 %v440, %v4103
    %v4436 = vmul.f32 %v443, %v4105
    %v4437 = vmul.f32 %v446, %v4107
    %v4438 = vmul.f32 %v449, %v4109
    %v4439 = vmul.f32 %v452, %v4111
    %v4440 = vmul.f32 %v455, %v4113
    %v4441 = vmul.f32 %v458, %v4115
    %v4442 = vmul.f32 %v461, %v4117
    %v4443 = vmul.f32 %v464, %v4119
    %v4444 = vmul.f32 %v467, %v4121
    %v4445 = vmul.f32 %v470, %v4123
    %v4446 = vmul.f32 %v473, %v4125
    %v4447 = vmul.f32 %v476, %v4127
    %v4448 = vmul.f32 %v479, %v4129
    %v4449 = vmul.f32 %v482, %v4131
    %v4450 = vmul.f32 %v485, %v4133
    %v4451 = vmul.f32 %v488, %v4135
    %v4452 = vmul.f32 %v491, %v4137
    %v4453 = vmul.f32 %v494, %v4139
    %v4454 = vmul.f32 %v497, %v4141
    %v4455 = vmul.f32 %v500, %v4143
    %v4456 = vmul.f32 %v503, %v4145
    %v4457 = vmul.f32 %v506, %v4147
    %v4458 = vmul.f32 %v509, %v4149
    %v4459 = vmul.f32 %v512, %v4151
    %v4460 = vmul.f32 %v515, %v4153
    %v4461 = vmul.f32 %v518, %v4155
    %v4462 = vmul.f32 %v521, %v4157
    %v4463 = vmul.f32 %v524, %v4159
    %v4464 = vmul.f32 %v527, %v4161
    %v4465 = vmul.f32 %v530, %v4163
    %v4466 = vmul.f32 %v533, %v4165
    %v4467 = vmul.f32 %v536, %v4167
    %v4468 = vmul.f32 %v539, %v4169
    %v4469 = vmul.f32 %v542, %v4171
    %v4470 = vmul.f32 %v545, %v4173
    %v4471 = vmul.f32 %v548, %v4175
    %v4472 = vmul.f32 %v551, %v4177
    %v4473 = vmul.f32 %v554, %v4179
    %v4474 = vmul.f32 %v557, %v4181
    %v4475 = vmul.f32 %v560, %v4183
    %v4476 = vmul.f32 %v563, %v4185
    %v4477 = vmul.f32 %v566, %v4187
    %v4478 = vmul.f32 %v569, %v4189
    %v4479 = vmul.f32 %v572, %v4191
    %v4480 = vmul.f32 %v575, %v4193
    %v4481 = vmul.f32 %v578, %v4195
    %v4482 = vmul.f32 %v581, %v4197
    %v4483 = vmul.f32 %v584, %v4199
    %v4484 = vmul.f32 %v587, %v4201
    %v4485 = vmul.f32 %v590, %v4203
    %v4486 = vmul.f32 %v593, %v4205
    %v4487 = vmul.f32 %v596, %v4207
    %v4488 = vmul.f32 %v599, %v4209
    %v4489 = vmul.f32 %v602, %v4211
    %v4490 = vmul.f32 %v605, %v4213
    %v4491 = vmul.f32 %v608, %v4215
    %v4492 = vmul.f32 %v611, %v4217
    %v4493 = vmul.f32 %v614, %v4219
    %v4494 = vmul.f32 %v617, %v4221
    %v4495 = vmul.f32 %v620, %v4223
    %v4496 = vmul.f32 %v623, %v4225
    %v4497 = vmul.f32 %v626, %v4227
    %v4498 = vmul.f32 %v629, %v4229
    %v4499 = vmul.f32 %v632, %v4231
    %v4500 = vmul.f32 %v635, %v4233
    %v4501 = vmul.f32 %v638, %v4235
    %v4502 = vmul.f32 %v641, %v4237
    %v4503 = vmul.f32 %v644, %v4239
    %v4504 = vmul.f32 %v647, %v4241
    %v4505 = vmul.f32 %v650, %v4243
    %v4506 = vmul.f32 %v653, %v4245
    %v4507 = vmul.f32 %v656, %v4247
    %v4508 = vmul.f32 %v659, %v4249
    %v4509 = vmul.f32 %v662, %v4251
    %v4510 = vmul.f32 %v665, %v4253
    %v4511 = vmul.f32 %v668, %v4255
    %4512 = vrot.lane.b32.xlu0 %v2464, 64
    %v4513 = vpop.permute.xlu0 %4512
    %4514 = vrot.lane.b32.xlu0 %v2465, 64
    %v4515 = vpop.permute.xlu0 %4514
    %4516 = vrot.lane.b32.xlu0 %v2466, 64
    %v4517 = vpop.permute.xlu0 %4516
    %4518 = vrot.lane.b32.xlu0 %v2467, 64
    %v4519 = vpop.permute.xlu0 %4518
    %4520 = vrot.lane.b32.xlu0 %v2468, 64
    %v4521 = vpop.permute.xlu0 %4520
    %4522 = vrot.lane.b32.xlu0 %v2469, 64
    %v4523 = vpop.permute.xlu0 %4522
    %4524 = vrot.lane.b32.xlu0 %v2470, 64
    %v4525 = vpop.permute.xlu0 %4524
    %4526 = vrot.lane.b32.xlu0 %v2471, 64
    %v4527 = vpop.permute.xlu0 %4526
    %4528 = vrot.lane.b32.xlu0 %v2472, 64
    %v4529 = vpop.permute.xlu0 %4528
    %4530 = vrot.lane.b32.xlu0 %v2473, 64
    %v4531 = vpop.permute.xlu0 %4530
    %4532 = vrot.lane.b32.xlu0 %v2474, 64
    %v4533 = vpop.permute.xlu0 %4532
    %4534 = vrot.lane.b32.xlu0 %v2475, 64
    %v4535 = vpop.permute.xlu0 %4534
    %4536 = vrot.lane.b32.xlu0 %v2476, 64
    %v4537 = vpop.permute.xlu0 %4536
    %4538 = vrot.lane.b32.xlu0 %v2477, 64
    %v4539 = vpop.permute.xlu0 %4538
    %4540 = vrot.lane.b32.xlu0 %v2478, 64
    %v4541 = vpop.permute.xlu0 %4540
    %4542 = vrot.lane.b32.xlu0 %v2479, 64
    %v4543 = vpop.permute.xlu0 %4542
    %4544 = vrot.lane.b32.xlu0 %v2480, 64
    %v4545 = vpop.permute.xlu0 %4544
    %4546 = vrot.lane.b32.xlu0 %v2481, 64
    %v4547 = vpop.permute.xlu0 %4546
    %4548 = vrot.lane.b32.xlu0 %v2482, 64
    %v4549 = vpop.permute.xlu0 %4548
    %4550 = vrot.lane.b32.xlu0 %v2483, 64
    %v4551 = vpop.permute.xlu0 %4550
    %4552 = vrot.lane.b32.xlu0 %v2484, 64
    %v4553 = vpop.permute.xlu0 %4552
    %4554 = vrot.lane.b32.xlu0 %v2485, 64
    %v4555 = vpop.permute.xlu0 %4554
    %4556 = vrot.lane.b32.xlu0 %v2486, 64
    %v4557 = vpop.permute.xlu0 %4556
    %4558 = vrot.lane.b32.xlu0 %v2487, 64
    %v4559 = vpop.permute.xlu0 %4558
    %4560 = vrot.lane.b32.xlu0 %v2488, 64
    %v4561 = vpop.permute.xlu0 %4560
    %4562 = vrot.lane.b32.xlu0 %v2489, 64
    %v4563 = vpop.permute.xlu0 %4562
    %4564 = vrot.lane.b32.xlu0 %v2490, 64
    %v4565 = vpop.permute.xlu0 %4564
    %4566 = vrot.lane.b32.xlu0 %v2491, 64
    %v4567 = vpop.permute.xlu0 %4566
    %4568 = vrot.lane.b32.xlu0 %v2492, 64
    %v4569 = vpop.permute.xlu0 %4568
    %4570 = vrot.lane.b32.xlu0 %v2493, 64
    %v4571 = vpop.permute.xlu0 %4570
    %4572 = vrot.lane.b32.xlu0 %v2494, 64
    %v4573 = vpop.permute.xlu0 %4572
    %4574 = vrot.lane.b32.xlu0 %v2495, 64
    %v4575 = vpop.permute.xlu0 %4574
    %4576 = vrot.lane.b32.xlu0 %v2496, 64
    %v4577 = vpop.permute.xlu0 %4576
    %4578 = vrot.lane.b32.xlu0 %v2497, 64
    %v4579 = vpop.permute.xlu0 %4578
    %4580 = vrot.lane.b32.xlu0 %v2498, 64
    %v4581 = vpop.permute.xlu0 %4580
    %4582 = vrot.lane.b32.xlu0 %v2499, 64
    %v4583 = vpop.permute.xlu0 %4582
    %4584 = vrot.lane.b32.xlu0 %v2500, 64
    %v4585 = vpop.permute.xlu0 %4584
    %4586 = vrot.lane.b32.xlu0 %v2501, 64
    %v4587 = vpop.permute.xlu0 %4586
    %4588 = vrot.lane.b32.xlu0 %v2502, 64
    %v4589 = vpop.permute.xlu0 %4588
    %4590 = vrot.lane.b32.xlu0 %v2503, 64
    %v4591 = vpop.permute.xlu0 %4590
    %4592 = vrot.lane.b32.xlu0 %v2504, 64
    %v4593 = vpop.permute.xlu0 %4592
    %4594 = vrot.lane.b32.xlu0 %v2505, 64
    %v4595 = vpop.permute.xlu0 %4594
    %4596 = vrot.lane.b32.xlu0 %v2506, 64
    %v4597 = vpop.permute.xlu0 %4596
    %4598 = vrot.lane.b32.xlu0 %v2507, 64
    %v4599 = vpop.permute.xlu0 %4598
    %4600 = vrot.lane.b32.xlu0 %v2508, 64
    %v4601 = vpop.permute.xlu0 %4600
    %4602 = vrot.lane.b32.xlu0 %v2509, 64
    %v4603 = vpop.permute.xlu0 %4602
    %4604 = vrot.lane.b32.xlu0 %v2510, 64
    %v4605 = vpop.permute.xlu0 %4604
    %4606 = vrot.lane.b32.xlu0 %v2511, 64
    %v4607 = vpop.permute.xlu0 %4606
    %4608 = vrot.lane.b32.xlu0 %v2512, 64
    %v4609 = vpop.permute.xlu0 %4608
    %4610 = vrot.lane.b32.xlu0 %v2513, 64
    %v4611 = vpop.permute.xlu0 %4610
    %4612 = vrot.lane.b32.xlu0 %v2514, 64
    %v4613 = vpop.permute.xlu0 %4612
    %4614 = vrot.lane.b32.xlu0 %v2515, 64
    %v4615 = vpop.permute.xlu0 %4614
    %4616 = vrot.lane.b32.xlu0 %v2516, 64
    %v4617 = vpop.permute.xlu0 %4616
    %4618 = vrot.lane.b32.xlu0 %v2517, 64
    %v4619 = vpop.permute.xlu0 %4618
    %4620 = vrot.lane.b32.xlu0 %v2518, 64
    %v4621 = vpop.permute.xlu0 %4620
    %4622 = vrot.lane.b32.xlu0 %v2519, 64
    %v4623 = vpop.permute.xlu0 %4622
    %4624 = vrot.lane.b32.xlu0 %v2520, 64
    %v4625 = vpop.permute.xlu0 %4624
    %4626 = vrot.lane.b32.xlu0 %v2521, 64
    %v4627 = vpop.permute.xlu0 %4626
    %4628 = vrot.lane.b32.xlu0 %v2522, 64
    %v4629 = vpop.permute.xlu0 %4628
    %4630 = vrot.lane.b32.xlu0 %v2523, 64
    %v4631 = vpop.permute.xlu0 %4630
    %4632 = vrot.lane.b32.xlu0 %v2524, 64
    %v4633 = vpop.permute.xlu0 %4632
    %4634 = vrot.lane.b32.xlu0 %v2525, 64
    %v4635 = vpop.permute.xlu0 %4634
    %4636 = vrot.lane.b32.xlu0 %v2526, 64
    %v4637 = vpop.permute.xlu0 %4636
    %4638 = vrot.lane.b32.xlu0 %v2527, 64
    %v4639 = vpop.permute.xlu0 %4638
    %4640 = vrot.lane.b32.xlu0 %v2528, 64
    %v4641 = vpop.permute.xlu0 %4640
    %4642 = vrot.lane.b32.xlu0 %v2529, 64
    %v4643 = vpop.permute.xlu0 %4642
    %4644 = vrot.lane.b32.xlu0 %v2530, 64
    %v4645 = vpop.permute.xlu0 %4644
    %4646 = vrot.lane.b32.xlu0 %v2531, 64
    %v4647 = vpop.permute.xlu0 %4646
    %4648 = vrot.lane.b32.xlu0 %v2532, 64
    %v4649 = vpop.permute.xlu0 %4648
    %4650 = vrot.lane.b32.xlu0 %v2533, 64
    %v4651 = vpop.permute.xlu0 %4650
    %4652 = vrot.lane.b32.xlu0 %v2534, 64
    %v4653 = vpop.permute.xlu0 %4652
    %4654 = vrot.lane.b32.xlu0 %v2535, 64
    %v4655 = vpop.permute.xlu0 %4654
    %4656 = vrot.lane.b32.xlu0 %v2536, 64
    %v4657 = vpop.permute.xlu0 %4656
    %4658 = vrot.lane.b32.xlu0 %v2537, 64
    %v4659 = vpop.permute.xlu0 %4658
    %4660 = vrot.lane.b32.xlu0 %v2538, 64
    %v4661 = vpop.permute.xlu0 %4660
    %4662 = vrot.lane.b32.xlu0 %v2539, 64
    %v4663 = vpop.permute.xlu0 %4662
    %4664 = vrot.lane.b32.xlu0 %v2540, 64
    %v4665 = vpop.permute.xlu0 %4664
    %4666 = vrot.lane.b32.xlu0 %v2541, 64
    %v4667 = vpop.permute.xlu0 %4666
    %4668 = vrot.lane.b32.xlu0 %v2542, 64
    %v4669 = vpop.permute.xlu0 %4668
    %4670 = vrot.lane.b32.xlu0 %v2543, 64
    %v4671 = vpop.permute.xlu0 %4670
    %4672 = vrot.lane.b32.xlu0 %v2544, 64
    %v4673 = vpop.permute.xlu0 %4672
    %4674 = vrot.lane.b32.xlu0 %v2545, 64
    %v4675 = vpop.permute.xlu0 %4674
    %4676 = vrot.lane.b32.xlu0 %v2546, 64
    %v4677 = vpop.permute.xlu0 %4676
    %4678 = vrot.lane.b32.xlu0 %v2547, 64
    %v4679 = vpop.permute.xlu0 %4678
    %4680 = vrot.lane.b32.xlu0 %v2548, 64
    %v4681 = vpop.permute.xlu0 %4680
    %4682 = vrot.lane.b32.xlu0 %v2549, 64
    %v4683 = vpop.permute.xlu0 %4682
    %4684 = vrot.lane.b32.xlu0 %v2550, 64
    %v4685 = vpop.permute.xlu0 %4684
    %4686 = vrot.lane.b32.xlu0 %v2551, 64
    %v4687 = vpop.permute.xlu0 %4686
    %4688 = vrot.lane.b32.xlu0 %v2552, 64
    %v4689 = vpop.permute.xlu0 %4688
    %4690 = vrot.lane.b32.xlu0 %v2553, 64
    %v4691 = vpop.permute.xlu0 %4690
    %4692 = vrot.lane.b32.xlu0 %v2554, 64
    %v4693 = vpop.permute.xlu0 %4692
    %4694 = vrot.lane.b32.xlu0 %v2555, 64
    %v4695 = vpop.permute.xlu0 %4694
    %4696 = vrot.lane.b32.xlu0 %v2556, 64
    %v4697 = vpop.permute.xlu0 %4696
    %4698 = vrot.lane.b32.xlu0 %v2557, 64
    %v4699 = vpop.permute.xlu0 %4698
    %4700 = vrot.lane.b32.xlu0 %v2558, 64
    %v4701 = vpop.permute.xlu0 %4700
    %4702 = vrot.lane.b32.xlu0 %v2559, 64
    %v4703 = vpop.permute.xlu0 %4702
    %4704 = vrot.lane.b32.xlu0 %v2560, 64
    %v4705 = vpop.permute.xlu0 %4704
    %4706 = vrot.lane.b32.xlu0 %v2561, 64
    %v4707 = vpop.permute.xlu0 %4706
    %4708 = vrot.lane.b32.xlu0 %v2562, 64
    %v4709 = vpop.permute.xlu0 %4708
    %4710 = vrot.lane.b32.xlu0 %v2563, 64
    %v4711 = vpop.permute.xlu0 %4710
    %4712 = vrot.lane.b32.xlu0 %v2564, 64
    %v4713 = vpop.permute.xlu0 %4712
    %4714 = vrot.lane.b32.xlu0 %v2565, 64
    %v4715 = vpop.permute.xlu0 %4714
    %4716 = vrot.lane.b32.xlu0 %v2566, 64
    %v4717 = vpop.permute.xlu0 %4716
    %4718 = vrot.lane.b32.xlu0 %v2567, 64
    %v4719 = vpop.permute.xlu0 %4718
    %4720 = vrot.lane.b32.xlu0 %v2568, 64
    %v4721 = vpop.permute.xlu0 %4720
    %4722 = vrot.lane.b32.xlu0 %v2569, 64
    %v4723 = vpop.permute.xlu0 %4722
    %4724 = vrot.lane.b32.xlu0 %v2570, 64
    %v4725 = vpop.permute.xlu0 %4724
    %4726 = vrot.lane.b32.xlu0 %v2571, 64
    %v4727 = vpop.permute.xlu0 %4726
    %4728 = vrot.lane.b32.xlu0 %v2572, 64
    %v4729 = vpop.permute.xlu0 %4728
    %4730 = vrot.lane.b32.xlu0 %v2573, 64
    %v4731 = vpop.permute.xlu0 %4730
    %4732 = vrot.lane.b32.xlu0 %v2574, 64
    %v4733 = vpop.permute.xlu0 %4732
    %4734 = vrot.lane.b32.xlu0 %v2575, 64
    %v4735 = vpop.permute.xlu0 %4734
    %4736 = vrot.lane.b32.xlu0 %v2576, 64
    %v4737 = vpop.permute.xlu0 %4736
    %4738 = vrot.lane.b32.xlu0 %v2577, 64
    %v4739 = vpop.permute.xlu0 %4738
    %4740 = vrot.lane.b32.xlu0 %v2578, 64
    %v4741 = vpop.permute.xlu0 %4740
    %4742 = vrot.lane.b32.xlu0 %v2579, 64
    %v4743 = vpop.permute.xlu0 %4742
    %4744 = vrot.lane.b32.xlu0 %v2580, 64
    %v4745 = vpop.permute.xlu0 %4744
    %4746 = vrot.lane.b32.xlu0 %v2581, 64
    %v4747 = vpop.permute.xlu0 %4746
    %4748 = vrot.lane.b32.xlu0 %v2582, 64
    %v4749 = vpop.permute.xlu0 %4748
    %4750 = vrot.lane.b32.xlu0 %v2583, 64
    %v4751 = vpop.permute.xlu0 %4750
    %4752 = vrot.lane.b32.xlu0 %v2584, 64
    %v4753 = vpop.permute.xlu0 %4752
    %4754 = vrot.lane.b32.xlu0 %v2585, 64
    %v4755 = vpop.permute.xlu0 %4754
    %4756 = vrot.lane.b32.xlu0 %v2586, 64
    %v4757 = vpop.permute.xlu0 %4756
    %4758 = vrot.lane.b32.xlu0 %v2587, 64
    %v4759 = vpop.permute.xlu0 %4758
    %4760 = vrot.lane.b32.xlu0 %v2588, 64
    %v4761 = vpop.permute.xlu0 %4760
    %4762 = vrot.lane.b32.xlu0 %v2589, 64
    %v4763 = vpop.permute.xlu0 %4762
    %4764 = vrot.lane.b32.xlu0 %v2590, 64
    %v4765 = vpop.permute.xlu0 %4764
    %4766 = vrot.lane.b32.xlu0 %v2591, 64
    %v4767 = vpop.permute.xlu0 %4766
    %v4896 = vmul.f32 %v287, %v4513
    %v4897 = vmul.f32 %v290, %v4515
    %v4898 = vmul.f32 %v293, %v4517
    %v4899 = vmul.f32 %v296, %v4519
    %v4900 = vmul.f32 %v299, %v4521
    %v4901 = vmul.f32 %v302, %v4523
    %v4902 = vmul.f32 %v305, %v4525
    %v4903 = vmul.f32 %v308, %v4527
    %v4904 = vmul.f32 %v311, %v4529
    %v4905 = vmul.f32 %v314, %v4531
    %v4906 = vmul.f32 %v317, %v4533
    %v4907 = vmul.f32 %v320, %v4535
    %v4908 = vmul.f32 %v323, %v4537
    %v4909 = vmul.f32 %v326, %v4539
    %v4910 = vmul.f32 %v329, %v4541
    %v4911 = vmul.f32 %v332, %v4543
    %v4912 = vmul.f32 %v335, %v4545
    %v4913 = vmul.f32 %v338, %v4547
    %v4914 = vmul.f32 %v341, %v4549
    %v4915 = vmul.f32 %v344, %v4551
    %v4916 = vmul.f32 %v347, %v4553
    %v4917 = vmul.f32 %v350, %v4555
    %v4918 = vmul.f32 %v353, %v4557
    %v4919 = vmul.f32 %v356, %v4559
    %v4920 = vmul.f32 %v359, %v4561
    %v4921 = vmul.f32 %v362, %v4563
    %v4922 = vmul.f32 %v365, %v4565
    %v4923 = vmul.f32 %v368, %v4567
    %v4924 = vmul.f32 %v371, %v4569
    %v4925 = vmul.f32 %v374, %v4571
    %v4926 = vmul.f32 %v377, %v4573
    %v4927 = vmul.f32 %v380, %v4575
    %v4928 = vmul.f32 %v383, %v4577
    %v4929 = vmul.f32 %v386, %v4579
    %v4930 = vmul.f32 %v389, %v4581
    %v4931 = vmul.f32 %v392, %v4583
    %v4932 = vmul.f32 %v395, %v4585
    %v4933 = vmul.f32 %v398, %v4587
    %v4934 = vmul.f32 %v401, %v4589
    %v4935 = vmul.f32 %v404, %v4591
    %v4936 = vmul.f32 %v407, %v4593
    %v4937 = vmul.f32 %v410, %v4595
    %v4938 = vmul.f32 %v413, %v4597
    %v4939 = vmul.f32 %v416, %v4599
    %v4940 = vmul.f32 %v419, %v4601
    %v4941 = vmul.f32 %v422, %v4603
    %v4942 = vmul.f32 %v425, %v4605
    %v4943 = vmul.f32 %v428, %v4607
    %v4944 = vmul.f32 %v431, %v4609
    %v4945 = vmul.f32 %v434, %v4611
    %v4946 = vmul.f32 %v437, %v4613
    %v4947 = vmul.f32 %v440, %v4615
    %v4948 = vmul.f32 %v443, %v4617
    %v4949 = vmul.f32 %v446, %v4619
    %v4950 = vmul.f32 %v449, %v4621
    %v4951 = vmul.f32 %v452, %v4623
    %v4952 = vmul.f32 %v455, %v4625
    %v4953 = vmul.f32 %v458, %v4627
    %v4954 = vmul.f32 %v461, %v4629
    %v4955 = vmul.f32 %v464, %v4631
    %v4956 = vmul.f32 %v467, %v4633
    %v4957 = vmul.f32 %v470, %v4635
    %v4958 = vmul.f32 %v473, %v4637
    %v4959 = vmul.f32 %v476, %v4639
    %v4960 = vmul.f32 %v479, %v4641
    %v4961 = vmul.f32 %v482, %v4643
    %v4962 = vmul.f32 %v485, %v4645
    %v4963 = vmul.f32 %v488, %v4647
    %v4964 = vmul.f32 %v491, %v4649
    %v4965 = vmul.f32 %v494, %v4651
    %v4966 = vmul.f32 %v497, %v4653
    %v4967 = vmul.f32 %v500, %v4655
    %v4968 = vmul.f32 %v503, %v4657
    %v4969 = vmul.f32 %v506, %v4659
    %v4970 = vmul.f32 %v509, %v4661
    %v4971 = vmul.f32 %v512, %v4663
    %v4972 = vmul.f32 %v515, %v4665
    %v4973 = vmul.f32 %v518, %v4667
    %v4974 = vmul.f32 %v521, %v4669
    %v4975 = vmul.f32 %v524, %v4671
    %v4976 = vmul.f32 %v527, %v4673
    %v4977 = vmul.f32 %v530, %v4675
    %v4978 = vmul.f32 %v533, %v4677
    %v4979 = vmul.f32 %v536, %v4679
    %v4980 = vmul.f32 %v539, %v4681
    %v4981 = vmul.f32 %v542, %v4683
    %v4982 = vmul.f32 %v545, %v4685
    %v4983 = vmul.f32 %v548, %v4687
    %v4984 = vmul.f32 %v551, %v4689
    %v4985 = vmul.f32 %v554, %v4691
    %v4986 = vmul.f32 %v557, %v4693
    %v4987 = vmul.f32 %v560, %v4695
    %v4988 = vmul.f32 %v563, %v4697
    %v4989 = vmul.f32 %v566, %v4699
    %v4990 = vmul.f32 %v569, %v4701
    %v4991 = vmul.f32 %v572, %v4703
    %v4992 = vmul.f32 %v575, %v4705
    %v4993 = vmul.f32 %v578, %v4707
    %v4994 = vmul.f32 %v581, %v4709
    %v4995 = vmul.f32 %v584, %v4711
    %v4996 = vmul.f32 %v587, %v4713
    %v4997 = vmul.f32 %v590, %v4715
    %v4998 = vmul.f32 %v593, %v4717
    %v4999 = vmul.f32 %v596, %v4719
    %v5000 = vmul.f32 %v599, %v4721
    %v5001 = vmul.f32 %v602, %v4723
    %v5002 = vmul.f32 %v605, %v4725
    %v5003 = vmul.f32 %v608, %v4727
    %v5004 = vmul.f32 %v611, %v4729
    %v5005 = vmul.f32 %v614, %v4731
    %v5006 = vmul.f32 %v617, %v4733
    %v5007 = vmul.f32 %v620, %v4735
    %v5008 = vmul.f32 %v623, %v4737
    %v5009 = vmul.f32 %v626, %v4739
    %v5010 = vmul.f32 %v629, %v4741
    %v5011 = vmul.f32 %v632, %v4743
    %v5012 = vmul.f32 %v635, %v4745
    %v5013 = vmul.f32 %v638, %v4747
    %v5014 = vmul.f32 %v641, %v4749
    %v5015 = vmul.f32 %v644, %v4751
    %v5016 = vmul.f32 %v647, %v4753
    %v5017 = vmul.f32 %v650, %v4755
    %v5018 = vmul.f32 %v653, %v4757
    %v5019 = vmul.f32 %v656, %v4759
    %v5020 = vmul.f32 %v659, %v4761
    %v5021 = vmul.f32 %v662, %v4763
    %v5022 = vmul.f32 %v665, %v4765
    %v5023 = vmul.f32 %v668, %v4767
    %5152 = vrot.lane.b32.xlu0 %v4896, 96
    %v5153 = vpop.permute.xlu0 %5152
    %5154 = vrot.lane.b32.xlu0 %v4897, 96
    %v5155 = vpop.permute.xlu0 %5154
    %5156 = vrot.lane.b32.xlu0 %v4898, 96
    %v5157 = vpop.permute.xlu0 %5156
    %5158 = vrot.lane.b32.xlu0 %v4899, 96
    %v5159 = vpop.permute.xlu0 %5158
    %5160 = vrot.lane.b32.xlu0 %v4900, 96
    %v5161 = vpop.permute.xlu0 %5160
    %5162 = vrot.lane.b32.xlu0 %v4901, 96
    %v5163 = vpop.permute.xlu0 %5162
    %5164 = vrot.lane.b32.xlu0 %v4902, 96
    %v5165 = vpop.permute.xlu0 %5164
    %5166 = vrot.lane.b32.xlu0 %v4903, 96
    %v5167 = vpop.permute.xlu0 %5166
    %5168 = vrot.lane.b32.xlu0 %v4904, 96
    %v5169 = vpop.permute.xlu0 %5168
    %5170 = vrot.lane.b32.xlu0 %v4905, 96
    %v5171 = vpop.permute.xlu0 %5170
    %5172 = vrot.lane.b32.xlu0 %v4906, 96
    %v5173 = vpop.permute.xlu0 %5172
    %5174 = vrot.lane.b32.xlu0 %v4907, 96
    %v5175 = vpop.permute.xlu0 %5174
    %5176 = vrot.lane.b32.xlu0 %v4908, 96
    %v5177 = vpop.permute.xlu0 %5176
    %5178 = vrot.lane.b32.xlu0 %v4909, 96
    %v5179 = vpop.permute.xlu0 %5178
    %5180 = vrot.lane.b32.xlu0 %v4910, 96
    %v5181 = vpop.permute.xlu0 %5180
    %5182 = vrot.lane.b32.xlu0 %v4911, 96
    %v5183 = vpop.permute.xlu0 %5182
    %5184 = vrot.lane.b32.xlu0 %v4912, 96
    %v5185 = vpop.permute.xlu0 %5184
    %5186 = vrot.lane.b32.xlu0 %v4913, 96
    %v5187 = vpop.permute.xlu0 %5186
    %5188 = vrot.lane.b32.xlu0 %v4914, 96
    %v5189 = vpop.permute.xlu0 %5188
    %5190 = vrot.lane.b32.xlu0 %v4915, 96
    %v5191 = vpop.permute.xlu0 %5190
    %5192 = vrot.lane.b32.xlu0 %v4916, 96
    %v5193 = vpop.permute.xlu0 %5192
    %5194 = vrot.lane.b32.xlu0 %v4917, 96
    %v5195 = vpop.permute.xlu0 %5194
    %5196 = vrot.lane.b32.xlu0 %v4918, 96
    %v5197 = vpop.permute.xlu0 %5196
    %5198 = vrot.lane.b32.xlu0 %v4919, 96
    %v5199 = vpop.permute.xlu0 %5198
    %5200 = vrot.lane.b32.xlu0 %v4920, 96
    %v5201 = vpop.permute.xlu0 %5200
    %5202 = vrot.lane.b32.xlu0 %v4921, 96
    %v5203 = vpop.permute.xlu0 %5202
    %5204 = vrot.lane.b32.xlu0 %v4922, 96
    %v5205 = vpop.permute.xlu0 %5204
    %5206 = vrot.lane.b32.xlu0 %v4923, 96
    %v5207 = vpop.permute.xlu0 %5206
    %5208 = vrot.lane.b32.xlu0 %v4924, 96
    %v5209 = vpop.permute.xlu0 %5208
    %5210 = vrot.lane.b32.xlu0 %v4925, 96
    %v5211 = vpop.permute.xlu0 %5210
    %5212 = vrot.lane.b32.xlu0 %v4926, 96
    %v5213 = vpop.permute.xlu0 %5212
    %5214 = vrot.lane.b32.xlu0 %v4927, 96
    %v5215 = vpop.permute.xlu0 %5214
    %5216 = vrot.lane.b32.xlu0 %v4928, 96
    %v5217 = vpop.permute.xlu0 %5216
    %5218 = vrot.lane.b32.xlu0 %v4929, 96
    %v5219 = vpop.permute.xlu0 %5218
    %5220 = vrot.lane.b32.xlu0 %v4930, 96
    %v5221 = vpop.permute.xlu0 %5220
    %5222 = vrot.lane.b32.xlu0 %v4931, 96
    %v5223 = vpop.permute.xlu0 %5222
    %5224 = vrot.lane.b32.xlu0 %v4932, 96
    %v5225 = vpop.permute.xlu0 %5224
    %5226 = vrot.lane.b32.xlu0 %v4933, 96
    %v5227 = vpop.permute.xlu0 %5226
    %5228 = vrot.lane.b32.xlu0 %v4934, 96
    %v5229 = vpop.permute.xlu0 %5228
    %5230 = vrot.lane.b32.xlu0 %v4935, 96
    %v5231 = vpop.permute.xlu0 %5230
    %5232 = vrot.lane.b32.xlu0 %v4936, 96
    %v5233 = vpop.permute.xlu0 %5232
    %5234 = vrot.lane.b32.xlu0 %v4937, 96
    %v5235 = vpop.permute.xlu0 %5234
    %5236 = vrot.lane.b32.xlu0 %v4938, 96
    %v5237 = vpop.permute.xlu0 %5236
    %5238 = vrot.lane.b32.xlu0 %v4939, 96
    %v5239 = vpop.permute.xlu0 %5238
    %5240 = vrot.lane.b32.xlu0 %v4940, 96
    %v5241 = vpop.permute.xlu0 %5240
    %5242 = vrot.lane.b32.xlu0 %v4941, 96
    %v5243 = vpop.permute.xlu0 %5242
    %5244 = vrot.lane.b32.xlu0 %v4942, 96
    %v5245 = vpop.permute.xlu0 %5244
    %5246 = vrot.lane.b32.xlu0 %v4943, 96
    %v5247 = vpop.permute.xlu0 %5246
    %5248 = vrot.lane.b32.xlu0 %v4944, 96
    %v5249 = vpop.permute.xlu0 %5248
    %5250 = vrot.lane.b32.xlu0 %v4945, 96
    %v5251 = vpop.permute.xlu0 %5250
    %5252 = vrot.lane.b32.xlu0 %v4946, 96
    %v5253 = vpop.permute.xlu0 %5252
    %5254 = vrot.lane.b32.xlu0 %v4947, 96
    %v5255 = vpop.permute.xlu0 %5254
    %5256 = vrot.lane.b32.xlu0 %v4948, 96
    %v5257 = vpop.permute.xlu0 %5256
    %5258 = vrot.lane.b32.xlu0 %v4949, 96
    %v5259 = vpop.permute.xlu0 %5258
    %5260 = vrot.lane.b32.xlu0 %v4950, 96
    %v5261 = vpop.permute.xlu0 %5260
    %5262 = vrot.lane.b32.xlu0 %v4951, 96
    %v5263 = vpop.permute.xlu0 %5262
    %5264 = vrot.lane.b32.xlu0 %v4952, 96
    %v5265 = vpop.permute.xlu0 %5264
    %5266 = vrot.lane.b32.xlu0 %v4953, 96
    %v5267 = vpop.permute.xlu0 %5266
    %5268 = vrot.lane.b32.xlu0 %v4954, 96
    %v5269 = vpop.permute.xlu0 %5268
    %5270 = vrot.lane.b32.xlu0 %v4955, 96
    %v5271 = vpop.permute.xlu0 %5270
    %5272 = vrot.lane.b32.xlu0 %v4956, 96
    %v5273 = vpop.permute.xlu0 %5272
    %5274 = vrot.lane.b32.xlu0 %v4957, 96
    %v5275 = vpop.permute.xlu0 %5274
    %5276 = vrot.lane.b32.xlu0 %v4958, 96
    %v5277 = vpop.permute.xlu0 %5276
    %5278 = vrot.lane.b32.xlu0 %v4959, 96
    %v5279 = vpop.permute.xlu0 %5278
    %5280 = vrot.lane.b32.xlu0 %v4960, 96
    %v5281 = vpop.permute.xlu0 %5280
    %5282 = vrot.lane.b32.xlu0 %v4961, 96
    %v5283 = vpop.permute.xlu0 %5282
    %5284 = vrot.lane.b32.xlu0 %v4962, 96
    %v5285 = vpop.permute.xlu0 %5284
    %5286 = vrot.lane.b32.xlu0 %v4963, 96
    %v5287 = vpop.permute.xlu0 %5286
    %5288 = vrot.lane.b32.xlu0 %v4964, 96
    %v5289 = vpop.permute.xlu0 %5288
    %5290 = vrot.lane.b32.xlu0 %v4965, 96
    %v5291 = vpop.permute.xlu0 %5290
    %5292 = vrot.lane.b32.xlu0 %v4966, 96
    %v5293 = vpop.permute.xlu0 %5292
    %5294 = vrot.lane.b32.xlu0 %v4967, 96
    %v5295 = vpop.permute.xlu0 %5294
    %5296 = vrot.lane.b32.xlu0 %v4968, 96
    %v5297 = vpop.permute.xlu0 %5296
    %5298 = vrot.lane.b32.xlu0 %v4969, 96
    %v5299 = vpop.permute.xlu0 %5298
    %5300 = vrot.lane.b32.xlu0 %v4970, 96
    %v5301 = vpop.permute.xlu0 %5300
    %5302 = vrot.lane.b32.xlu0 %v4971, 96
    %v5303 = vpop.permute.xlu0 %5302
    %5304 = vrot.lane.b32.xlu0 %v4972, 96
    %v5305 = vpop.permute.xlu0 %5304
    %5306 = vrot.lane.b32.xlu0 %v4973, 96
    %v5307 = vpop.permute.xlu0 %5306
    %5308 = vrot.lane.b32.xlu0 %v4974, 96
    %v5309 = vpop.permute.xlu0 %5308
    %5310 = vrot.lane.b32.xlu0 %v4975, 96
    %v5311 = vpop.permute.xlu0 %5310
    %5312 = vrot.lane.b32.xlu0 %v4976, 96
    %v5313 = vpop.permute.xlu0 %5312
    %5314 = vrot.lane.b32.xlu0 %v4977, 96
    %v5315 = vpop.permute.xlu0 %5314
    %5316 = vrot.lane.b32.xlu0 %v4978, 96
    %v5317 = vpop.permute.xlu0 %5316
    %5318 = vrot.lane.b32.xlu0 %v4979, 96
    %v5319 = vpop.permute.xlu0 %5318
    %5320 = vrot.lane.b32.xlu0 %v4980, 96
    %v5321 = vpop.permute.xlu0 %5320
    %5322 = vrot.lane.b32.xlu0 %v4981, 96
    %v5323 = vpop.permute.xlu0 %5322
    %5324 = vrot.lane.b32.xlu0 %v4982, 96
    %v5325 = vpop.permute.xlu0 %5324
    %5326 = vrot.lane.b32.xlu0 %v4983, 96
    %v5327 = vpop.permute.xlu0 %5326
    %5328 = vrot.lane.b32.xlu0 %v4984, 96
    %v5329 = vpop.permute.xlu0 %5328
    %5330 = vrot.lane.b32.xlu0 %v4985, 96
    %v5331 = vpop.permute.xlu0 %5330
    %5332 = vrot.lane.b32.xlu0 %v4986, 96
    %v5333 = vpop.permute.xlu0 %5332
    %5334 = vrot.lane.b32.xlu0 %v4987, 96
    %v5335 = vpop.permute.xlu0 %5334
    %5336 = vrot.lane.b32.xlu0 %v4988, 96
    %v5337 = vpop.permute.xlu0 %5336
    %5338 = vrot.lane.b32.xlu0 %v4989, 96
    %v5339 = vpop.permute.xlu0 %5338
    %5340 = vrot.lane.b32.xlu0 %v4990, 96
    %v5341 = vpop.permute.xlu0 %5340
    %5342 = vrot.lane.b32.xlu0 %v4991, 96
    %v5343 = vpop.permute.xlu0 %5342
    %5344 = vrot.lane.b32.xlu0 %v4992, 96
    %v5345 = vpop.permute.xlu0 %5344
    %5346 = vrot.lane.b32.xlu0 %v4993, 96
    %v5347 = vpop.permute.xlu0 %5346
    %5348 = vrot.lane.b32.xlu0 %v4994, 96
    %v5349 = vpop.permute.xlu0 %5348
    %5350 = vrot.lane.b32.xlu0 %v4995, 96
    %v5351 = vpop.permute.xlu0 %5350
    %5352 = vrot.lane.b32.xlu0 %v4996, 96
    %v5353 = vpop.permute.xlu0 %5352
    %5354 = vrot.lane.b32.xlu0 %v4997, 96
    %v5355 = vpop.permute.xlu0 %5354
    %5356 = vrot.lane.b32.xlu0 %v4998, 96
    %v5357 = vpop.permute.xlu0 %5356
    %5358 = vrot.lane.b32.xlu0 %v4999, 96
    %v5359 = vpop.permute.xlu0 %5358
    %5360 = vrot.lane.b32.xlu0 %v5000, 96
    %v5361 = vpop.permute.xlu0 %5360
    %5362 = vrot.lane.b32.xlu0 %v5001, 96
    %v5363 = vpop.permute.xlu0 %5362
    %5364 = vrot.lane.b32.xlu0 %v5002, 96
    %v5365 = vpop.permute.xlu0 %5364
    %5366 = vrot.lane.b32.xlu0 %v5003, 96
    %v5367 = vpop.permute.xlu0 %5366
    %5368 = vrot.lane.b32.xlu0 %v5004, 96
    %v5369 = vpop.permute.xlu0 %5368
    %5370 = vrot.lane.b32.xlu0 %v5005, 96
    %v5371 = vpop.permute.xlu0 %5370
    %5372 = vrot.lane.b32.xlu0 %v5006, 96
    %v5373 = vpop.permute.xlu0 %5372
    %5374 = vrot.lane.b32.xlu0 %v5007, 96
    %v5375 = vpop.permute.xlu0 %5374
    %5376 = vrot.lane.b32.xlu0 %v5008, 96
    %v5377 = vpop.permute.xlu0 %5376
    %5378 = vrot.lane.b32.xlu0 %v5009, 96
    %v5379 = vpop.permute.xlu0 %5378
    %5380 = vrot.lane.b32.xlu0 %v5010, 96
    %v5381 = vpop.permute.xlu0 %5380
    %5382 = vrot.lane.b32.xlu0 %v5011, 96
    %v5383 = vpop.permute.xlu0 %5382
    %5384 = vrot.lane.b32.xlu0 %v5012, 96
    %v5385 = vpop.permute.xlu0 %5384
    %5386 = vrot.lane.b32.xlu0 %v5013, 96
    %v5387 = vpop.permute.xlu0 %5386
    %5388 = vrot.lane.b32.xlu0 %v5014, 96
    %v5389 = vpop.permute.xlu0 %5388
    %5390 = vrot.lane.b32.xlu0 %v5015, 96
    %v5391 = vpop.permute.xlu0 %5390
    %5392 = vrot.lane.b32.xlu0 %v5016, 96
    %v5393 = vpop.permute.xlu0 %5392
    %5394 = vrot.lane.b32.xlu0 %v5017, 96
    %v5395 = vpop.permute.xlu0 %5394
    %5396 = vrot.lane.b32.xlu0 %v5018, 96
    %v5397 = vpop.permute.xlu0 %5396
    %5398 = vrot.lane.b32.xlu0 %v5019, 96
    %v5399 = vpop.permute.xlu0 %5398
    %5400 = vrot.lane.b32.xlu0 %v5020, 96
    %v5401 = vpop.permute.xlu0 %5400
    %5402 = vrot.lane.b32.xlu0 %v5021, 96
    %v5403 = vpop.permute.xlu0 %5402
    %5404 = vrot.lane.b32.xlu0 %v5022, 96
    %v5405 = vpop.permute.xlu0 %5404
    %5406 = vrot.lane.b32.xlu0 %v5023, 96
    %v5407 = vpop.permute.xlu0 %5406
    %v5536 = vadd.f32 %v4384, %v5153
    %v5537 = vadd.f32 %v4385, %v5155
    %v5538 = vadd.f32 %v4386, %v5157
    %v5539 = vadd.f32 %v4387, %v5159
    %v5540 = vadd.f32 %v4388, %v5161
    %v5541 = vadd.f32 %v4389, %v5163
    %v5542 = vadd.f32 %v4390, %v5165
    %v5543 = vadd.f32 %v4391, %v5167
    %v5544 = vadd.f32 %v4392, %v5169
    %v5545 = vadd.f32 %v4393, %v5171
    %v5546 = vadd.f32 %v4394, %v5173
    %v5547 = vadd.f32 %v4395, %v5175
    %v5548 = vadd.f32 %v4396, %v5177
    %v5549 = vadd.f32 %v4397, %v5179
    %v5550 = vadd.f32 %v4398, %v5181
    %v5551 = vadd.f32 %v4399, %v5183
    %v5552 = vadd.f32 %v4400, %v5185
    %v5553 = vadd.f32 %v4401, %v5187
    %v5554 = vadd.f32 %v4402, %v5189
    %v5555 = vadd.f32 %v4403, %v5191
    %v5556 = vadd.f32 %v4404, %v5193
    %v5557 = vadd.f32 %v4405, %v5195
    %v5558 = vadd.f32 %v4406, %v5197
    %v5559 = vadd.f32 %v4407, %v5199
    %v5560 = vadd.f32 %v4408, %v5201
    %v5561 = vadd.f32 %v4409, %v5203
    %v5562 = vadd.f32 %v4410, %v5205
    %v5563 = vadd.f32 %v4411, %v5207
    %v5564 = vadd.f32 %v4412, %v5209
    %v5565 = vadd.f32 %v4413, %v5211
    %v5566 = vadd.f32 %v4414, %v5213
    %v5567 = vadd.f32 %v4415, %v5215
    %v5568 = vadd.f32 %v4416, %v5217
    %v5569 = vadd.f32 %v4417, %v5219
    %v5570 = vadd.f32 %v4418, %v5221
    %v5571 = vadd.f32 %v4419, %v5223
    %v5572 = vadd.f32 %v4420, %v5225
    %v5573 = vadd.f32 %v4421, %v5227
    %v5574 = vadd.f32 %v4422, %v5229
    %v5575 = vadd.f32 %v4423, %v5231
    %v5576 = vadd.f32 %v4424, %v5233
    %v5577 = vadd.f32 %v4425, %v5235
    %v5578 = vadd.f32 %v4426, %v5237
    %v5579 = vadd.f32 %v4427, %v5239
    %v5580 = vadd.f32 %v4428, %v5241
    %v5581 = vadd.f32 %v4429, %v5243
    %v5582 = vadd.f32 %v4430, %v5245
    %v5583 = vadd.f32 %v4431, %v5247
    %v5584 = vadd.f32 %v4432, %v5249
    %v5585 = vadd.f32 %v4433, %v5251
    %v5586 = vadd.f32 %v4434, %v5253
    %v5587 = vadd.f32 %v4435, %v5255
    %v5588 = vadd.f32 %v4436, %v5257
    %v5589 = vadd.f32 %v4437, %v5259
    %v5590 = vadd.f32 %v4438, %v5261
    %v5591 = vadd.f32 %v4439, %v5263
    %v5592 = vadd.f32 %v4440, %v5265
    %v5593 = vadd.f32 %v4441, %v5267
    %v5594 = vadd.f32 %v4442, %v5269
    %v5595 = vadd.f32 %v4443, %v5271
    %v5596 = vadd.f32 %v4444, %v5273
    %v5597 = vadd.f32 %v4445, %v5275
    %v5598 = vadd.f32 %v4446, %v5277
    %v5599 = vadd.f32 %v4447, %v5279
    %v5600 = vadd.f32 %v4448, %v5281
    %v5601 = vadd.f32 %v4449, %v5283
    %v5602 = vadd.f32 %v4450, %v5285
    %v5603 = vadd.f32 %v4451, %v5287
    %v5604 = vadd.f32 %v4452, %v5289
    %v5605 = vadd.f32 %v4453, %v5291
    %v5606 = vadd.f32 %v4454, %v5293
    %v5607 = vadd.f32 %v4455, %v5295
    %v5608 = vadd.f32 %v4456, %v5297
    %v5609 = vadd.f32 %v4457, %v5299
    %v5610 = vadd.f32 %v4458, %v5301
    %v5611 = vadd.f32 %v4459, %v5303
    %v5612 = vadd.f32 %v4460, %v5305
    %v5613 = vadd.f32 %v4461, %v5307
    %v5614 = vadd.f32 %v4462, %v5309
    %v5615 = vadd.f32 %v4463, %v5311
    %v5616 = vadd.f32 %v4464, %v5313
    %v5617 = vadd.f32 %v4465, %v5315
    %v5618 = vadd.f32 %v4466, %v5317
    %v5619 = vadd.f32 %v4467, %v5319
    %v5620 = vadd.f32 %v4468, %v5321
    %v5621 = vadd.f32 %v4469, %v5323
    %v5622 = vadd.f32 %v4470, %v5325
    %v5623 = vadd.f32 %v4471, %v5327
    %v5624 = vadd.f32 %v4472, %v5329
    %v5625 = vadd.f32 %v4473, %v5331
    %v5626 = vadd.f32 %v4474, %v5333
    %v5627 = vadd.f32 %v4475, %v5335
    %v5628 = vadd.f32 %v4476, %v5337
    %v5629 = vadd.f32 %v4477, %v5339
    %v5630 = vadd.f32 %v4478, %v5341
    %v5631 = vadd.f32 %v4479, %v5343
    %v5632 = vadd.f32 %v4480, %v5345
    %v5633 = vadd.f32 %v4481, %v5347
    %v5634 = vadd.f32 %v4482, %v5349
    %v5635 = vadd.f32 %v4483, %v5351
    %v5636 = vadd.f32 %v4484, %v5353
    %v5637 = vadd.f32 %v4485, %v5355
    %v5638 = vadd.f32 %v4486, %v5357
    %v5639 = vadd.f32 %v4487, %v5359
    %v5640 = vadd.f32 %v4488, %v5361
    %v5641 = vadd.f32 %v4489, %v5363
    %v5642 = vadd.f32 %v4490, %v5365
    %v5643 = vadd.f32 %v4491, %v5367
    %v5644 = vadd.f32 %v4492, %v5369
    %v5645 = vadd.f32 %v4493, %v5371
    %v5646 = vadd.f32 %v4494, %v5373
    %v5647 = vadd.f32 %v4495, %v5375
    %v5648 = vadd.f32 %v4496, %v5377
    %v5649 = vadd.f32 %v4497, %v5379
    %v5650 = vadd.f32 %v4498, %v5381
    %v5651 = vadd.f32 %v4499, %v5383
    %v5652 = vadd.f32 %v4500, %v5385
    %v5653 = vadd.f32 %v4501, %v5387
    %v5654 = vadd.f32 %v4502, %v5389
    %v5655 = vadd.f32 %v4503, %v5391
    %v5656 = vadd.f32 %v4504, %v5393
    %v5657 = vadd.f32 %v4505, %v5395
    %v5658 = vadd.f32 %v4506, %v5397
    %v5659 = vadd.f32 %v4507, %v5399
    %v5660 = vadd.f32 %v4508, %v5401
    %v5661 = vadd.f32 %v4509, %v5403
    %v5662 = vadd.f32 %v4510, %v5405
    %v5663 = vadd.f32 %v4511, %v5407
    %v5664 = vmul.f32 %v288, %v4001
    %v5665 = vmul.f32 %v291, %v4003
    %v5666 = vmul.f32 %v294, %v4005
    %v5667 = vmul.f32 %v297, %v4007
    %v5668 = vmul.f32 %v300, %v4009
    %v5669 = vmul.f32 %v303, %v4011
    %v5670 = vmul.f32 %v306, %v4013
    %v5671 = vmul.f32 %v309, %v4015
    %v5672 = vmul.f32 %v312, %v4017
    %v5673 = vmul.f32 %v315, %v4019
    %v5674 = vmul.f32 %v318, %v4021
    %v5675 = vmul.f32 %v321, %v4023
    %v5676 = vmul.f32 %v324, %v4025
    %v5677 = vmul.f32 %v327, %v4027
    %v5678 = vmul.f32 %v330, %v4029
    %v5679 = vmul.f32 %v333, %v4031
    %v5680 = vmul.f32 %v336, %v4033
    %v5681 = vmul.f32 %v339, %v4035
    %v5682 = vmul.f32 %v342, %v4037
    %v5683 = vmul.f32 %v345, %v4039
    %v5684 = vmul.f32 %v348, %v4041
    %v5685 = vmul.f32 %v351, %v4043
    %v5686 = vmul.f32 %v354, %v4045
    %v5687 = vmul.f32 %v357, %v4047
    %v5688 = vmul.f32 %v360, %v4049
    %v5689 = vmul.f32 %v363, %v4051
    %v5690 = vmul.f32 %v366, %v4053
    %v5691 = vmul.f32 %v369, %v4055
    %v5692 = vmul.f32 %v372, %v4057
    %v5693 = vmul.f32 %v375, %v4059
    %v5694 = vmul.f32 %v378, %v4061
    %v5695 = vmul.f32 %v381, %v4063
    %v5696 = vmul.f32 %v384, %v4065
    %v5697 = vmul.f32 %v387, %v4067
    %v5698 = vmul.f32 %v390, %v4069
    %v5699 = vmul.f32 %v393, %v4071
    %v5700 = vmul.f32 %v396, %v4073
    %v5701 = vmul.f32 %v399, %v4075
    %v5702 = vmul.f32 %v402, %v4077
    %v5703 = vmul.f32 %v405, %v4079
    %v5704 = vmul.f32 %v408, %v4081
    %v5705 = vmul.f32 %v411, %v4083
    %v5706 = vmul.f32 %v414, %v4085
    %v5707 = vmul.f32 %v417, %v4087
    %v5708 = vmul.f32 %v420, %v4089
    %v5709 = vmul.f32 %v423, %v4091
    %v5710 = vmul.f32 %v426, %v4093
    %v5711 = vmul.f32 %v429, %v4095
    %v5712 = vmul.f32 %v432, %v4097
    %v5713 = vmul.f32 %v435, %v4099
    %v5714 = vmul.f32 %v438, %v4101
    %v5715 = vmul.f32 %v441, %v4103
    %v5716 = vmul.f32 %v444, %v4105
    %v5717 = vmul.f32 %v447, %v4107
    %v5718 = vmul.f32 %v450, %v4109
    %v5719 = vmul.f32 %v453, %v4111
    %v5720 = vmul.f32 %v456, %v4113
    %v5721 = vmul.f32 %v459, %v4115
    %v5722 = vmul.f32 %v462, %v4117
    %v5723 = vmul.f32 %v465, %v4119
    %v5724 = vmul.f32 %v468, %v4121
    %v5725 = vmul.f32 %v471, %v4123
    %v5726 = vmul.f32 %v474, %v4125
    %v5727 = vmul.f32 %v477, %v4127
    %v5728 = vmul.f32 %v480, %v4129
    %v5729 = vmul.f32 %v483, %v4131
    %v5730 = vmul.f32 %v486, %v4133
    %v5731 = vmul.f32 %v489, %v4135
    %v5732 = vmul.f32 %v492, %v4137
    %v5733 = vmul.f32 %v495, %v4139
    %v5734 = vmul.f32 %v498, %v4141
    %v5735 = vmul.f32 %v501, %v4143
    %v5736 = vmul.f32 %v504, %v4145
    %v5737 = vmul.f32 %v507, %v4147
    %v5738 = vmul.f32 %v510, %v4149
    %v5739 = vmul.f32 %v513, %v4151
    %v5740 = vmul.f32 %v516, %v4153
    %v5741 = vmul.f32 %v519, %v4155
    %v5742 = vmul.f32 %v522, %v4157
    %v5743 = vmul.f32 %v525, %v4159
    %v5744 = vmul.f32 %v528, %v4161
    %v5745 = vmul.f32 %v531, %v4163
    %v5746 = vmul.f32 %v534, %v4165
    %v5747 = vmul.f32 %v537, %v4167
    %v5748 = vmul.f32 %v540, %v4169
    %v5749 = vmul.f32 %v543, %v4171
    %v5750 = vmul.f32 %v546, %v4173
    %v5751 = vmul.f32 %v549, %v4175
    %v5752 = vmul.f32 %v552, %v4177
    %v5753 = vmul.f32 %v555, %v4179
    %v5754 = vmul.f32 %v558, %v4181
    %v5755 = vmul.f32 %v561, %v4183
    %v5756 = vmul.f32 %v564, %v4185
    %v5757 = vmul.f32 %v567, %v4187
    %v5758 = vmul.f32 %v570, %v4189
    %v5759 = vmul.f32 %v573, %v4191
    %v5760 = vmul.f32 %v576, %v4193
    %v5761 = vmul.f32 %v579, %v4195
    %v5762 = vmul.f32 %v582, %v4197
    %v5763 = vmul.f32 %v585, %v4199
    %v5764 = vmul.f32 %v588, %v4201
    %v5765 = vmul.f32 %v591, %v4203
    %v5766 = vmul.f32 %v594, %v4205
    %v5767 = vmul.f32 %v597, %v4207
    %v5768 = vmul.f32 %v600, %v4209
    %v5769 = vmul.f32 %v603, %v4211
    %v5770 = vmul.f32 %v606, %v4213
    %v5771 = vmul.f32 %v609, %v4215
    %v5772 = vmul.f32 %v612, %v4217
    %v5773 = vmul.f32 %v615, %v4219
    %v5774 = vmul.f32 %v618, %v4221
    %v5775 = vmul.f32 %v621, %v4223
    %v5776 = vmul.f32 %v624, %v4225
    %v5777 = vmul.f32 %v627, %v4227
    %v5778 = vmul.f32 %v630, %v4229
    %v5779 = vmul.f32 %v633, %v4231
    %v5780 = vmul.f32 %v636, %v4233
    %v5781 = vmul.f32 %v639, %v4235
    %v5782 = vmul.f32 %v642, %v4237
    %v5783 = vmul.f32 %v645, %v4239
    %v5784 = vmul.f32 %v648, %v4241
    %v5785 = vmul.f32 %v651, %v4243
    %v5786 = vmul.f32 %v654, %v4245
    %v5787 = vmul.f32 %v657, %v4247
    %v5788 = vmul.f32 %v660, %v4249
    %v5789 = vmul.f32 %v663, %v4251
    %v5790 = vmul.f32 %v666, %v4253
    %v5791 = vmul.f32 %v669, %v4255
    %v5792 = vmul.f32 %v288, %v4513
    %v5793 = vmul.f32 %v291, %v4515
    %v5794 = vmul.f32 %v294, %v4517
    %v5795 = vmul.f32 %v297, %v4519
    %v5796 = vmul.f32 %v300, %v4521
    %v5797 = vmul.f32 %v303, %v4523
    %v5798 = vmul.f32 %v306, %v4525
    %v5799 = vmul.f32 %v309, %v4527
    %v5800 = vmul.f32 %v312, %v4529
    %v5801 = vmul.f32 %v315, %v4531
    %v5802 = vmul.f32 %v318, %v4533
    %v5803 = vmul.f32 %v321, %v4535
    %v5804 = vmul.f32 %v324, %v4537
    %v5805 = vmul.f32 %v327, %v4539
    %v5806 = vmul.f32 %v330, %v4541
    %v5807 = vmul.f32 %v333, %v4543
    %v5808 = vmul.f32 %v336, %v4545
    %v5809 = vmul.f32 %v339, %v4547
    %v5810 = vmul.f32 %v342, %v4549
    %v5811 = vmul.f32 %v345, %v4551
    %v5812 = vmul.f32 %v348, %v4553
    %v5813 = vmul.f32 %v351, %v4555
    %v5814 = vmul.f32 %v354, %v4557
    %v5815 = vmul.f32 %v357, %v4559
    %v5816 = vmul.f32 %v360, %v4561
    %v5817 = vmul.f32 %v363, %v4563
    %v5818 = vmul.f32 %v366, %v4565
    %v5819 = vmul.f32 %v369, %v4567
    %v5820 = vmul.f32 %v372, %v4569
    %v5821 = vmul.f32 %v375, %v4571
    %v5822 = vmul.f32 %v378, %v4573
    %v5823 = vmul.f32 %v381, %v4575
    %v5824 = vmul.f32 %v384, %v4577
    %v5825 = vmul.f32 %v387, %v4579
    %v5826 = vmul.f32 %v390, %v4581
    %v5827 = vmul.f32 %v393, %v4583
    %v5828 = vmul.f32 %v396, %v4585
    %v5829 = vmul.f32 %v399, %v4587
    %v5830 = vmul.f32 %v402, %v4589
    %v5831 = vmul.f32 %v405, %v4591
    %v5832 = vmul.f32 %v408, %v4593
    %v5833 = vmul.f32 %v411, %v4595
    %v5834 = vmul.f32 %v414, %v4597
    %v5835 = vmul.f32 %v417, %v4599
    %v5836 = vmul.f32 %v420, %v4601
    %v5837 = vmul.f32 %v423, %v4603
    %v5838 = vmul.f32 %v426, %v4605
    %v5839 = vmul.f32 %v429, %v4607
    %v5840 = vmul.f32 %v432, %v4609
    %v5841 = vmul.f32 %v435, %v4611
    %v5842 = vmul.f32 %v438, %v4613
    %v5843 = vmul.f32 %v441, %v4615
    %v5844 = vmul.f32 %v444, %v4617
    %v5845 = vmul.f32 %v447, %v4619
    %v5846 = vmul.f32 %v450, %v4621
    %v5847 = vmul.f32 %v453, %v4623
    %v5848 = vmul.f32 %v456, %v4625
    %v5849 = vmul.f32 %v459, %v4627
    %v5850 = vmul.f32 %v462, %v4629
    %v5851 = vmul.f32 %v465, %v4631
    %v5852 = vmul.f32 %v468, %v4633
    %v5853 = vmul.f32 %v471, %v4635
    %v5854 = vmul.f32 %v474, %v4637
    %v5855 = vmul.f32 %v477, %v4639
    %v5856 = vmul.f32 %v480, %v4641
    %v5857 = vmul.f32 %v483, %v4643
    %v5858 = vmul.f32 %v486, %v4645
    %v5859 = vmul.f32 %v489, %v4647
    %v5860 = vmul.f32 %v492, %v4649
    %v5861 = vmul.f32 %v495, %v4651
    %v5862 = vmul.f32 %v498, %v4653
    %v5863 = vmul.f32 %v501, %v4655
    %v5864 = vmul.f32 %v504, %v4657
    %v5865 = vmul.f32 %v507, %v4659
    %v5866 = vmul.f32 %v510, %v4661
    %v5867 = vmul.f32 %v513, %v4663
    %v5868 = vmul.f32 %v516, %v4665
    %v5869 = vmul.f32 %v519, %v4667
    %v5870 = vmul.f32 %v522, %v4669
    %v5871 = vmul.f32 %v525, %v4671
    %v5872 = vmul.f32 %v528, %v4673
    %v5873 = vmul.f32 %v531, %v4675
    %v5874 = vmul.f32 %v534, %v4677
    %v5875 = vmul.f32 %v537, %v4679
    %v5876 = vmul.f32 %v540, %v4681
    %v5877 = vmul.f32 %v543, %v4683
    %v5878 = vmul.f32 %v546, %v4685
    %v5879 = vmul.f32 %v549, %v4687
    %v5880 = vmul.f32 %v552, %v4689
    %v5881 = vmul.f32 %v555, %v4691
    %v5882 = vmul.f32 %v558, %v4693
    %v5883 = vmul.f32 %v561, %v4695
    %v5884 = vmul.f32 %v564, %v4697
    %v5885 = vmul.f32 %v567, %v4699
    %v5886 = vmul.f32 %v570, %v4701
    %v5887 = vmul.f32 %v573, %v4703
    %v5888 = vmul.f32 %v576, %v4705
    %v5889 = vmul.f32 %v579, %v4707
    %v5890 = vmul.f32 %v582, %v4709
    %v5891 = vmul.f32 %v585, %v4711
    %v5892 = vmul.f32 %v588, %v4713
    %v5893 = vmul.f32 %v591, %v4715
    %v5894 = vmul.f32 %v594, %v4717
    %v5895 = vmul.f32 %v597, %v4719
    %v5896 = vmul.f32 %v600, %v4721
    %v5897 = vmul.f32 %v603, %v4723
    %v5898 = vmul.f32 %v606, %v4725
    %v5899 = vmul.f32 %v609, %v4727
    %v5900 = vmul.f32 %v612, %v4729
    %v5901 = vmul.f32 %v615, %v4731
    %v5902 = vmul.f32 %v618, %v4733
    %v5903 = vmul.f32 %v621, %v4735
    %v5904 = vmul.f32 %v624, %v4737
    %v5905 = vmul.f32 %v627, %v4739
    %v5906 = vmul.f32 %v630, %v4741
    %v5907 = vmul.f32 %v633, %v4743
    %v5908 = vmul.f32 %v636, %v4745
    %v5909 = vmul.f32 %v639, %v4747
    %v5910 = vmul.f32 %v642, %v4749
    %v5911 = vmul.f32 %v645, %v4751
    %v5912 = vmul.f32 %v648, %v4753
    %v5913 = vmul.f32 %v651, %v4755
    %v5914 = vmul.f32 %v654, %v4757
    %v5915 = vmul.f32 %v657, %v4759
    %v5916 = vmul.f32 %v660, %v4761
    %v5917 = vmul.f32 %v663, %v4763
    %v5918 = vmul.f32 %v666, %v4765
    %v5919 = vmul.f32 %v669, %v4767
    %6048 = vrot.lane.b32.xlu0 %v5792, 96
    %v6049 = vpop.permute.xlu0 %6048
    %6050 = vrot.lane.b32.xlu0 %v5793, 96
    %v6051 = vpop.permute.xlu0 %6050
    %6052 = vrot.lane.b32.xlu0 %v5794, 96
    %v6053 = vpop.permute.xlu0 %6052
    %6054 = vrot.lane.b32.xlu0 %v5795, 96
    %v6055 = vpop.permute.xlu0 %6054
    %6056 = vrot.lane.b32.xlu0 %v5796, 96
    %v6057 = vpop.permute.xlu0 %6056
    %6058 = vrot.lane.b32.xlu0 %v5797, 96
    %v6059 = vpop.permute.xlu0 %6058
    %6060 = vrot.lane.b32.xlu0 %v5798, 96
    %v6061 = vpop.permute.xlu0 %6060
    %6062 = vrot.lane.b32.xlu0 %v5799, 96
    %v6063 = vpop.permute.xlu0 %6062
    %6064 = vrot.lane.b32.xlu0 %v5800, 96
    %v6065 = vpop.permute.xlu0 %6064
    %6066 = vrot.lane.b32.xlu0 %v5801, 96
    %v6067 = vpop.permute.xlu0 %6066
    %6068 = vrot.lane.b32.xlu0 %v5802, 96
    %v6069 = vpop.permute.xlu0 %6068
    %6070 = vrot.lane.b32.xlu0 %v5803, 96
    %v6071 = vpop.permute.xlu0 %6070
    %6072 = vrot.lane.b32.xlu0 %v5804, 96
    %v6073 = vpop.permute.xlu0 %6072
    %6074 = vrot.lane.b32.xlu0 %v5805, 96
    %v6075 = vpop.permute.xlu0 %6074
    %6076 = vrot.lane.b32.xlu0 %v5806, 96
    %v6077 = vpop.permute.xlu0 %6076
    %6078 = vrot.lane.b32.xlu0 %v5807, 96
    %v6079 = vpop.permute.xlu0 %6078
    %6080 = vrot.lane.b32.xlu0 %v5808, 96
    %v6081 = vpop.permute.xlu0 %6080
    %6082 = vrot.lane.b32.xlu0 %v5809, 96
    %v6083 = vpop.permute.xlu0 %6082
    %6084 = vrot.lane.b32.xlu0 %v5810, 96
    %v6085 = vpop.permute.xlu0 %6084
    %6086 = vrot.lane.b32.xlu0 %v5811, 96
    %v6087 = vpop.permute.xlu0 %6086
    %6088 = vrot.lane.b32.xlu0 %v5812, 96
    %v6089 = vpop.permute.xlu0 %6088
    %6090 = vrot.lane.b32.xlu0 %v5813, 96
    %v6091 = vpop.permute.xlu0 %6090
    %6092 = vrot.lane.b32.xlu0 %v5814, 96
    %v6093 = vpop.permute.xlu0 %6092
    %6094 = vrot.lane.b32.xlu0 %v5815, 96
    %v6095 = vpop.permute.xlu0 %6094
    %6096 = vrot.lane.b32.xlu0 %v5816, 96
    %v6097 = vpop.permute.xlu0 %6096
    %6098 = vrot.lane.b32.xlu0 %v5817, 96
    %v6099 = vpop.permute.xlu0 %6098
    %6100 = vrot.lane.b32.xlu0 %v5818, 96
    %v6101 = vpop.permute.xlu0 %6100
    %6102 = vrot.lane.b32.xlu0 %v5819, 96
    %v6103 = vpop.permute.xlu0 %6102
    %6104 = vrot.lane.b32.xlu0 %v5820, 96
    %v6105 = vpop.permute.xlu0 %6104
    %6106 = vrot.lane.b32.xlu0 %v5821, 96
    %v6107 = vpop.permute.xlu0 %6106
    %6108 = vrot.lane.b32.xlu0 %v5822, 96
    %v6109 = vpop.permute.xlu0 %6108
    %6110 = vrot.lane.b32.xlu0 %v5823, 96
    %v6111 = vpop.permute.xlu0 %6110
    %6112 = vrot.lane.b32.xlu0 %v5824, 96
    %v6113 = vpop.permute.xlu0 %6112
    %6114 = vrot.lane.b32.xlu0 %v5825, 96
    %v6115 = vpop.permute.xlu0 %6114
    %6116 = vrot.lane.b32.xlu0 %v5826, 96
    %v6117 = vpop.permute.xlu0 %6116
    %6118 = vrot.lane.b32.xlu0 %v5827, 96
    %v6119 = vpop.permute.xlu0 %6118
    %6120 = vrot.lane.b32.xlu0 %v5828, 96
    %v6121 = vpop.permute.xlu0 %6120
    %6122 = vrot.lane.b32.xlu0 %v5829, 96
    %v6123 = vpop.permute.xlu0 %6122
    %6124 = vrot.lane.b32.xlu0 %v5830, 96
    %v6125 = vpop.permute.xlu0 %6124
    %6126 = vrot.lane.b32.xlu0 %v5831, 96
    %v6127 = vpop.permute.xlu0 %6126
    %6128 = vrot.lane.b32.xlu0 %v5832, 96
    %v6129 = vpop.permute.xlu0 %6128
    %6130 = vrot.lane.b32.xlu0 %v5833, 96
    %v6131 = vpop.permute.xlu0 %6130
    %6132 = vrot.lane.b32.xlu0 %v5834, 96
    %v6133 = vpop.permute.xlu0 %6132
    %6134 = vrot.lane.b32.xlu0 %v5835, 96
    %v6135 = vpop.permute.xlu0 %6134
    %6136 = vrot.lane.b32.xlu0 %v5836, 96
    %v6137 = vpop.permute.xlu0 %6136
    %6138 = vrot.lane.b32.xlu0 %v5837, 96
    %v6139 = vpop.permute.xlu0 %6138
    %6140 = vrot.lane.b32.xlu0 %v5838, 96
    %v6141 = vpop.permute.xlu0 %6140
    %6142 = vrot.lane.b32.xlu0 %v5839, 96
    %v6143 = vpop.permute.xlu0 %6142
    %6144 = vrot.lane.b32.xlu0 %v5840, 96
    %v6145 = vpop.permute.xlu0 %6144
    %6146 = vrot.lane.b32.xlu0 %v5841, 96
    %v6147 = vpop.permute.xlu0 %6146
    %6148 = vrot.lane.b32.xlu0 %v5842, 96
    %v6149 = vpop.permute.xlu0 %6148
    %6150 = vrot.lane.b32.xlu0 %v5843, 96
    %v6151 = vpop.permute.xlu0 %6150
    %6152 = vrot.lane.b32.xlu0 %v5844, 96
    %v6153 = vpop.permute.xlu0 %6152
    %6154 = vrot.lane.b32.xlu0 %v5845, 96
    %v6155 = vpop.permute.xlu0 %6154
    %6156 = vrot.lane.b32.xlu0 %v5846, 96
    %v6157 = vpop.permute.xlu0 %6156
    %6158 = vrot.lane.b32.xlu0 %v5847, 96
    %v6159 = vpop.permute.xlu0 %6158
    %6160 = vrot.lane.b32.xlu0 %v5848, 96
    %v6161 = vpop.permute.xlu0 %6160
    %6162 = vrot.lane.b32.xlu0 %v5849, 96
    %v6163 = vpop.permute.xlu0 %6162
    %6164 = vrot.lane.b32.xlu0 %v5850, 96
    %v6165 = vpop.permute.xlu0 %6164
    %6166 = vrot.lane.b32.xlu0 %v5851, 96
    %v6167 = vpop.permute.xlu0 %6166
    %6168 = vrot.lane.b32.xlu0 %v5852, 96
    %v6169 = vpop.permute.xlu0 %6168
    %6170 = vrot.lane.b32.xlu0 %v5853, 96
    %v6171 = vpop.permute.xlu0 %6170
    %6172 = vrot.lane.b32.xlu0 %v5854, 96
    %v6173 = vpop.permute.xlu0 %6172
    %6174 = vrot.lane.b32.xlu0 %v5855, 96
    %v6175 = vpop.permute.xlu0 %6174
    %6176 = vrot.lane.b32.xlu0 %v5856, 96
    %v6177 = vpop.permute.xlu0 %6176
    %6178 = vrot.lane.b32.xlu0 %v5857, 96
    %v6179 = vpop.permute.xlu0 %6178
    %6180 = vrot.lane.b32.xlu0 %v5858, 96
    %v6181 = vpop.permute.xlu0 %6180
    %6182 = vrot.lane.b32.xlu0 %v5859, 96
    %v6183 = vpop.permute.xlu0 %6182
    %6184 = vrot.lane.b32.xlu0 %v5860, 96
    %v6185 = vpop.permute.xlu0 %6184
    %6186 = vrot.lane.b32.xlu0 %v5861, 96
    %v6187 = vpop.permute.xlu0 %6186
    %6188 = vrot.lane.b32.xlu0 %v5862, 96
    %v6189 = vpop.permute.xlu0 %6188
    %6190 = vrot.lane.b32.xlu0 %v5863, 96
    %v6191 = vpop.permute.xlu0 %6190
    %6192 = vrot.lane.b32.xlu0 %v5864, 96
    %v6193 = vpop.permute.xlu0 %6192
    %6194 = vrot.lane.b32.xlu0 %v5865, 96
    %v6195 = vpop.permute.xlu0 %6194
    %6196 = vrot.lane.b32.xlu0 %v5866, 96
    %v6197 = vpop.permute.xlu0 %6196
    %6198 = vrot.lane.b32.xlu0 %v5867, 96
    %v6199 = vpop.permute.xlu0 %6198
    %6200 = vrot.lane.b32.xlu0 %v5868, 96
    %v6201 = vpop.permute.xlu0 %6200
    %6202 = vrot.lane.b32.xlu0 %v5869, 96
    %v6203 = vpop.permute.xlu0 %6202
    %6204 = vrot.lane.b32.xlu0 %v5870, 96
    %v6205 = vpop.permute.xlu0 %6204
    %6206 = vrot.lane.b32.xlu0 %v5871, 96
    %v6207 = vpop.permute.xlu0 %6206
    %6208 = vrot.lane.b32.xlu0 %v5872, 96
    %v6209 = vpop.permute.xlu0 %6208
    %6210 = vrot.lane.b32.xlu0 %v5873, 96
    %v6211 = vpop.permute.xlu0 %6210
    %6212 = vrot.lane.b32.xlu0 %v5874, 96
    %v6213 = vpop.permute.xlu0 %6212
    %6214 = vrot.lane.b32.xlu0 %v5875, 96
    %v6215 = vpop.permute.xlu0 %6214
    %6216 = vrot.lane.b32.xlu0 %v5876, 96
    %v6217 = vpop.permute.xlu0 %6216
    %6218 = vrot.lane.b32.xlu0 %v5877, 96
    %v6219 = vpop.permute.xlu0 %6218
    %6220 = vrot.lane.b32.xlu0 %v5878, 96
    %v6221 = vpop.permute.xlu0 %6220
    %6222 = vrot.lane.b32.xlu0 %v5879, 96
    %v6223 = vpop.permute.xlu0 %6222
    %6224 = vrot.lane.b32.xlu0 %v5880, 96
    %v6225 = vpop.permute.xlu0 %6224
    %6226 = vrot.lane.b32.xlu0 %v5881, 96
    %v6227 = vpop.permute.xlu0 %6226
    %6228 = vrot.lane.b32.xlu0 %v5882, 96
    %v6229 = vpop.permute.xlu0 %6228
    %6230 = vrot.lane.b32.xlu0 %v5883, 96
    %v6231 = vpop.permute.xlu0 %6230
    %6232 = vrot.lane.b32.xlu0 %v5884, 96
    %v6233 = vpop.permute.xlu0 %6232
    %6234 = vrot.lane.b32.xlu0 %v5885, 96
    %v6235 = vpop.permute.xlu0 %6234
    %6236 = vrot.lane.b32.xlu0 %v5886, 96
    %v6237 = vpop.permute.xlu0 %6236
    %6238 = vrot.lane.b32.xlu0 %v5887, 96
    %v6239 = vpop.permute.xlu0 %6238
    %6240 = vrot.lane.b32.xlu0 %v5888, 96
    %v6241 = vpop.permute.xlu0 %6240
    %6242 = vrot.lane.b32.xlu0 %v5889, 96
    %v6243 = vpop.permute.xlu0 %6242
    %6244 = vrot.lane.b32.xlu0 %v5890, 96
    %v6245 = vpop.permute.xlu0 %6244
    %6246 = vrot.lane.b32.xlu0 %v5891, 96
    %v6247 = vpop.permute.xlu0 %6246
    %6248 = vrot.lane.b32.xlu0 %v5892, 96
    %v6249 = vpop.permute.xlu0 %6248
    %6250 = vrot.lane.b32.xlu0 %v5893, 96
    %v6251 = vpop.permute.xlu0 %6250
    %6252 = vrot.lane.b32.xlu0 %v5894, 96
    %v6253 = vpop.permute.xlu0 %6252
    %6254 = vrot.lane.b32.xlu0 %v5895, 96
    %v6255 = vpop.permute.xlu0 %6254
    %6256 = vrot.lane.b32.xlu0 %v5896, 96
    %v6257 = vpop.permute.xlu0 %6256
    %6258 = vrot.lane.b32.xlu0 %v5897, 96
    %v6259 = vpop.permute.xlu0 %6258
    %6260 = vrot.lane.b32.xlu0 %v5898, 96
    %v6261 = vpop.permute.xlu0 %6260
    %6262 = vrot.lane.b32.xlu0 %v5899, 96
    %v6263 = vpop.permute.xlu0 %6262
    %6264 = vrot.lane.b32.xlu0 %v5900, 96
    %v6265 = vpop.permute.xlu0 %6264
    %6266 = vrot.lane.b32.xlu0 %v5901, 96
    %v6267 = vpop.permute.xlu0 %6266
    %6268 = vrot.lane.b32.xlu0 %v5902, 96
    %v6269 = vpop.permute.xlu0 %6268
    %6270 = vrot.lane.b32.xlu0 %v5903, 96
    %v6271 = vpop.permute.xlu0 %6270
    %6272 = vrot.lane.b32.xlu0 %v5904, 96
    %v6273 = vpop.permute.xlu0 %6272
    %6274 = vrot.lane.b32.xlu0 %v5905, 96
    %v6275 = vpop.permute.xlu0 %6274
    %6276 = vrot.lane.b32.xlu0 %v5906, 96
    %v6277 = vpop.permute.xlu0 %6276
    %6278 = vrot.lane.b32.xlu0 %v5907, 96
    %v6279 = vpop.permute.xlu0 %6278
    %6280 = vrot.lane.b32.xlu0 %v5908, 96
    %v6281 = vpop.permute.xlu0 %6280
    %6282 = vrot.lane.b32.xlu0 %v5909, 96
    %v6283 = vpop.permute.xlu0 %6282
    %6284 = vrot.lane.b32.xlu0 %v5910, 96
    %v6285 = vpop.permute.xlu0 %6284
    %6286 = vrot.lane.b32.xlu0 %v5911, 96
    %v6287 = vpop.permute.xlu0 %6286
    %6288 = vrot.lane.b32.xlu0 %v5912, 96
    %v6289 = vpop.permute.xlu0 %6288
    %6290 = vrot.lane.b32.xlu0 %v5913, 96
    %v6291 = vpop.permute.xlu0 %6290
    %6292 = vrot.lane.b32.xlu0 %v5914, 96
    %v6293 = vpop.permute.xlu0 %6292
    %6294 = vrot.lane.b32.xlu0 %v5915, 96
    %v6295 = vpop.permute.xlu0 %6294
    %6296 = vrot.lane.b32.xlu0 %v5916, 96
    %v6297 = vpop.permute.xlu0 %6296
    %6298 = vrot.lane.b32.xlu0 %v5917, 96
    %v6299 = vpop.permute.xlu0 %6298
    %6300 = vrot.lane.b32.xlu0 %v5918, 96
    %v6301 = vpop.permute.xlu0 %6300
    %6302 = vrot.lane.b32.xlu0 %v5919, 96
    %v6303 = vpop.permute.xlu0 %6302
    %v6432 = vadd.f32 %v5664, %v6049
    %v6433 = vadd.f32 %v5665, %v6051
    %v6434 = vadd.f32 %v5666, %v6053
    %v6435 = vadd.f32 %v5667, %v6055
    %v6436 = vadd.f32 %v5668, %v6057
    %v6437 = vadd.f32 %v5669, %v6059
    %v6438 = vadd.f32 %v5670, %v6061
    %v6439 = vadd.f32 %v5671, %v6063
    %v6440 = vadd.f32 %v5672, %v6065
    %v6441 = vadd.f32 %v5673, %v6067
    %v6442 = vadd.f32 %v5674, %v6069
    %v6443 = vadd.f32 %v5675, %v6071
    %v6444 = vadd.f32 %v5676, %v6073
    %v6445 = vadd.f32 %v5677, %v6075
    %v6446 = vadd.f32 %v5678, %v6077
    %v6447 = vadd.f32 %v5679, %v6079
    %v6448 = vadd.f32 %v5680, %v6081
    %v6449 = vadd.f32 %v5681, %v6083
    %v6450 = vadd.f32 %v5682, %v6085
    %v6451 = vadd.f32 %v5683, %v6087
    %v6452 = vadd.f32 %v5684, %v6089
    %v6453 = vadd.f32 %v5685, %v6091
    %v6454 = vadd.f32 %v5686, %v6093
    %v6455 = vadd.f32 %v5687, %v6095
    %v6456 = vadd.f32 %v5688, %v6097
    %v6457 = vadd.f32 %v5689, %v6099
    %v6458 = vadd.f32 %v5690, %v6101
    %v6459 = vadd.f32 %v5691, %v6103
    %v6460 = vadd.f32 %v5692, %v6105
    %v6461 = vadd.f32 %v5693, %v6107
    %v6462 = vadd.f32 %v5694, %v6109
    %v6463 = vadd.f32 %v5695, %v6111
    %v6464 = vadd.f32 %v5696, %v6113
    %v6465 = vadd.f32 %v5697, %v6115
    %v6466 = vadd.f32 %v5698, %v6117
    %v6467 = vadd.f32 %v5699, %v6119
    %v6468 = vadd.f32 %v5700, %v6121
    %v6469 = vadd.f32 %v5701, %v6123
    %v6470 = vadd.f32 %v5702, %v6125
    %v6471 = vadd.f32 %v5703, %v6127
    %v6472 = vadd.f32 %v5704, %v6129
    %v6473 = vadd.f32 %v5705, %v6131
    %v6474 = vadd.f32 %v5706, %v6133
    %v6475 = vadd.f32 %v5707, %v6135
    %v6476 = vadd.f32 %v5708, %v6137
    %v6477 = vadd.f32 %v5709, %v6139
    %v6478 = vadd.f32 %v5710, %v6141
    %v6479 = vadd.f32 %v5711, %v6143
    %v6480 = vadd.f32 %v5712, %v6145
    %v6481 = vadd.f32 %v5713, %v6147
    %v6482 = vadd.f32 %v5714, %v6149
    %v6483 = vadd.f32 %v5715, %v6151
    %v6484 = vadd.f32 %v5716, %v6153
    %v6485 = vadd.f32 %v5717, %v6155
    %v6486 = vadd.f32 %v5718, %v6157
    %v6487 = vadd.f32 %v5719, %v6159
    %v6488 = vadd.f32 %v5720, %v6161
    %v6489 = vadd.f32 %v5721, %v6163
    %v6490 = vadd.f32 %v5722, %v6165
    %v6491 = vadd.f32 %v5723, %v6167
    %v6492 = vadd.f32 %v5724, %v6169
    %v6493 = vadd.f32 %v5725, %v6171
    %v6494 = vadd.f32 %v5726, %v6173
    %v6495 = vadd.f32 %v5727, %v6175
    %v6496 = vadd.f32 %v5728, %v6177
    %v6497 = vadd.f32 %v5729, %v6179
    %v6498 = vadd.f32 %v5730, %v6181
    %v6499 = vadd.f32 %v5731, %v6183
    %v6500 = vadd.f32 %v5732, %v6185
    %v6501 = vadd.f32 %v5733, %v6187
    %v6502 = vadd.f32 %v5734, %v6189
    %v6503 = vadd.f32 %v5735, %v6191
    %v6504 = vadd.f32 %v5736, %v6193
    %v6505 = vadd.f32 %v5737, %v6195
    %v6506 = vadd.f32 %v5738, %v6197
    %v6507 = vadd.f32 %v5739, %v6199
    %v6508 = vadd.f32 %v5740, %v6201
    %v6509 = vadd.f32 %v5741, %v6203
    %v6510 = vadd.f32 %v5742, %v6205
    %v6511 = vadd.f32 %v5743, %v6207
    %v6512 = vadd.f32 %v5744, %v6209
    %v6513 = vadd.f32 %v5745, %v6211
    %v6514 = vadd.f32 %v5746, %v6213
    %v6515 = vadd.f32 %v5747, %v6215
    %v6516 = vadd.f32 %v5748, %v6217
    %v6517 = vadd.f32 %v5749, %v6219
    %v6518 = vadd.f32 %v5750, %v6221
    %v6519 = vadd.f32 %v5751, %v6223
    %v6520 = vadd.f32 %v5752, %v6225
    %v6521 = vadd.f32 %v5753, %v6227
    %v6522 = vadd.f32 %v5754, %v6229
    %v6523 = vadd.f32 %v5755, %v6231
    %v6524 = vadd.f32 %v5756, %v6233
    %v6525 = vadd.f32 %v5757, %v6235
    %v6526 = vadd.f32 %v5758, %v6237
    %v6527 = vadd.f32 %v5759, %v6239
    %v6528 = vadd.f32 %v5760, %v6241
    %v6529 = vadd.f32 %v5761, %v6243
    %v6530 = vadd.f32 %v5762, %v6245
    %v6531 = vadd.f32 %v5763, %v6247
    %v6532 = vadd.f32 %v5764, %v6249
    %v6533 = vadd.f32 %v5765, %v6251
    %v6534 = vadd.f32 %v5766, %v6253
    %v6535 = vadd.f32 %v5767, %v6255
    %v6536 = vadd.f32 %v5768, %v6257
    %v6537 = vadd.f32 %v5769, %v6259
    %v6538 = vadd.f32 %v5770, %v6261
    %v6539 = vadd.f32 %v5771, %v6263
    %v6540 = vadd.f32 %v5772, %v6265
    %v6541 = vadd.f32 %v5773, %v6267
    %v6542 = vadd.f32 %v5774, %v6269
    %v6543 = vadd.f32 %v5775, %v6271
    %v6544 = vadd.f32 %v5776, %v6273
    %v6545 = vadd.f32 %v5777, %v6275
    %v6546 = vadd.f32 %v5778, %v6277
    %v6547 = vadd.f32 %v5779, %v6279
    %v6548 = vadd.f32 %v5780, %v6281
    %v6549 = vadd.f32 %v5781, %v6283
    %v6550 = vadd.f32 %v5782, %v6285
    %v6551 = vadd.f32 %v5783, %v6287
    %v6552 = vadd.f32 %v5784, %v6289
    %v6553 = vadd.f32 %v5785, %v6291
    %v6554 = vadd.f32 %v5786, %v6293
    %v6555 = vadd.f32 %v5787, %v6295
    %v6556 = vadd.f32 %v5788, %v6297
    %v6557 = vadd.f32 %v5789, %v6299
    %v6558 = vadd.f32 %v5790, %v6301
    %v6559 = vadd.f32 %v5791, %v6303
    %v6560 = vmul.f32 %v288, %v1184
    %v6561 = vmul.f32 %v291, %v1185
    %v6562 = vmul.f32 %v294, %v1186
    %v6563 = vmul.f32 %v297, %v1187
    %v6564 = vmul.f32 %v300, %v1188
    %v6565 = vmul.f32 %v303, %v1189
    %v6566 = vmul.f32 %v306, %v1190
    %v6567 = vmul.f32 %v309, %v1191
    %v6568 = vmul.f32 %v312, %v1192
    %v6569 = vmul.f32 %v315, %v1193
    %v6570 = vmul.f32 %v318, %v1194
    %v6571 = vmul.f32 %v321, %v1195
    %v6572 = vmul.f32 %v324, %v1196
    %v6573 = vmul.f32 %v327, %v1197
    %v6574 = vmul.f32 %v330, %v1198
    %v6575 = vmul.f32 %v333, %v1199
    %v6576 = vmul.f32 %v336, %v1200
    %v6577 = vmul.f32 %v339, %v1201
    %v6578 = vmul.f32 %v342, %v1202
    %v6579 = vmul.f32 %v345, %v1203
    %v6580 = vmul.f32 %v348, %v1204
    %v6581 = vmul.f32 %v351, %v1205
    %v6582 = vmul.f32 %v354, %v1206
    %v6583 = vmul.f32 %v357, %v1207
    %v6584 = vmul.f32 %v360, %v1208
    %v6585 = vmul.f32 %v363, %v1209
    %v6586 = vmul.f32 %v366, %v1210
    %v6587 = vmul.f32 %v369, %v1211
    %v6588 = vmul.f32 %v372, %v1212
    %v6589 = vmul.f32 %v375, %v1213
    %v6590 = vmul.f32 %v378, %v1214
    %v6591 = vmul.f32 %v381, %v1215
    %v6592 = vmul.f32 %v384, %v1216
    %v6593 = vmul.f32 %v387, %v1217
    %v6594 = vmul.f32 %v390, %v1218
    %v6595 = vmul.f32 %v393, %v1219
    %v6596 = vmul.f32 %v396, %v1220
    %v6597 = vmul.f32 %v399, %v1221
    %v6598 = vmul.f32 %v402, %v1222
    %v6599 = vmul.f32 %v405, %v1223
    %v6600 = vmul.f32 %v408, %v1224
    %v6601 = vmul.f32 %v411, %v1225
    %v6602 = vmul.f32 %v414, %v1226
    %v6603 = vmul.f32 %v417, %v1227
    %v6604 = vmul.f32 %v420, %v1228
    %v6605 = vmul.f32 %v423, %v1229
    %v6606 = vmul.f32 %v426, %v1230
    %v6607 = vmul.f32 %v429, %v1231
    %v6608 = vmul.f32 %v432, %v1232
    %v6609 = vmul.f32 %v435, %v1233
    %v6610 = vmul.f32 %v438, %v1234
    %v6611 = vmul.f32 %v441, %v1235
    %v6612 = vmul.f32 %v444, %v1236
    %v6613 = vmul.f32 %v447, %v1237
    %v6614 = vmul.f32 %v450, %v1238
    %v6615 = vmul.f32 %v453, %v1239
    %v6616 = vmul.f32 %v456, %v1240
    %v6617 = vmul.f32 %v459, %v1241
    %v6618 = vmul.f32 %v462, %v1242
    %v6619 = vmul.f32 %v465, %v1243
    %v6620 = vmul.f32 %v468, %v1244
    %v6621 = vmul.f32 %v471, %v1245
    %v6622 = vmul.f32 %v474, %v1246
    %v6623 = vmul.f32 %v477, %v1247
    %v6624 = vmul.f32 %v480, %v1248
    %v6625 = vmul.f32 %v483, %v1249
    %v6626 = vmul.f32 %v486, %v1250
    %v6627 = vmul.f32 %v489, %v1251
    %v6628 = vmul.f32 %v492, %v1252
    %v6629 = vmul.f32 %v495, %v1253
    %v6630 = vmul.f32 %v498, %v1254
    %v6631 = vmul.f32 %v501, %v1255
    %v6632 = vmul.f32 %v504, %v1256
    %v6633 = vmul.f32 %v507, %v1257
    %v6634 = vmul.f32 %v510, %v1258
    %v6635 = vmul.f32 %v513, %v1259
    %v6636 = vmul.f32 %v516, %v1260
    %v6637 = vmul.f32 %v519, %v1261
    %v6638 = vmul.f32 %v522, %v1262
    %v6639 = vmul.f32 %v525, %v1263
    %v6640 = vmul.f32 %v528, %v1264
    %v6641 = vmul.f32 %v531, %v1265
    %v6642 = vmul.f32 %v534, %v1266
    %v6643 = vmul.f32 %v537, %v1267
    %v6644 = vmul.f32 %v540, %v1268
    %v6645 = vmul.f32 %v543, %v1269
    %v6646 = vmul.f32 %v546, %v1270
    %v6647 = vmul.f32 %v549, %v1271
    %v6648 = vmul.f32 %v552, %v1272
    %v6649 = vmul.f32 %v555, %v1273
    %v6650 = vmul.f32 %v558, %v1274
    %v6651 = vmul.f32 %v561, %v1275
    %v6652 = vmul.f32 %v564, %v1276
    %v6653 = vmul.f32 %v567, %v1277
    %v6654 = vmul.f32 %v570, %v1278
    %v6655 = vmul.f32 %v573, %v1279
    %v6656 = vmul.f32 %v576, %v1280
    %v6657 = vmul.f32 %v579, %v1281
    %v6658 = vmul.f32 %v582, %v1282
    %v6659 = vmul.f32 %v585, %v1283
    %v6660 = vmul.f32 %v588, %v1284
    %v6661 = vmul.f32 %v591, %v1285
    %v6662 = vmul.f32 %v594, %v1286
    %v6663 = vmul.f32 %v597, %v1287
    %v6664 = vmul.f32 %v600, %v1288
    %v6665 = vmul.f32 %v603, %v1289
    %v6666 = vmul.f32 %v606, %v1290
    %v6667 = vmul.f32 %v609, %v1291
    %v6668 = vmul.f32 %v612, %v1292
    %v6669 = vmul.f32 %v615, %v1293
    %v6670 = vmul.f32 %v618, %v1294
    %v6671 = vmul.f32 %v621, %v1295
    %v6672 = vmul.f32 %v624, %v1296
    %v6673 = vmul.f32 %v627, %v1297
    %v6674 = vmul.f32 %v630, %v1298
    %v6675 = vmul.f32 %v633, %v1299
    %v6676 = vmul.f32 %v636, %v1300
    %v6677 = vmul.f32 %v639, %v1301
    %v6678 = vmul.f32 %v642, %v1302
    %v6679 = vmul.f32 %v645, %v1303
    %v6680 = vmul.f32 %v648, %v1304
    %v6681 = vmul.f32 %v651, %v1305
    %v6682 = vmul.f32 %v654, %v1306
    %v6683 = vmul.f32 %v657, %v1307
    %v6684 = vmul.f32 %v660, %v1308
    %v6685 = vmul.f32 %v663, %v1309
    %v6686 = vmul.f32 %v666, %v1310
    %v6687 = vmul.f32 %v669, %v1311
    %v6688 = vmul.f32 %v288, %v2721
    %v6689 = vmul.f32 %v291, %v2723
    %v6690 = vmul.f32 %v294, %v2725
    %v6691 = vmul.f32 %v297, %v2727
    %v6692 = vmul.f32 %v300, %v2729
    %v6693 = vmul.f32 %v303, %v2731
    %v6694 = vmul.f32 %v306, %v2733
    %v6695 = vmul.f32 %v309, %v2735
    %v6696 = vmul.f32 %v312, %v2737
    %v6697 = vmul.f32 %v315, %v2739
    %v6698 = vmul.f32 %v318, %v2741
    %v6699 = vmul.f32 %v321, %v2743
    %v6700 = vmul.f32 %v324, %v2745
    %v6701 = vmul.f32 %v327, %v2747
    %v6702 = vmul.f32 %v330, %v2749
    %v6703 = vmul.f32 %v333, %v2751
    %v6704 = vmul.f32 %v336, %v2753
    %v6705 = vmul.f32 %v339, %v2755
    %v6706 = vmul.f32 %v342, %v2757
    %v6707 = vmul.f32 %v345, %v2759
    %v6708 = vmul.f32 %v348, %v2761
    %v6709 = vmul.f32 %v351, %v2763
    %v6710 = vmul.f32 %v354, %v2765
    %v6711 = vmul.f32 %v357, %v2767
    %v6712 = vmul.f32 %v360, %v2769
    %v6713 = vmul.f32 %v363, %v2771
    %v6714 = vmul.f32 %v366, %v2773
    %v6715 = vmul.f32 %v369, %v2775
    %v6716 = vmul.f32 %v372, %v2777
    %v6717 = vmul.f32 %v375, %v2779
    %v6718 = vmul.f32 %v378, %v2781
    %v6719 = vmul.f32 %v381, %v2783
    %v6720 = vmul.f32 %v384, %v2785
    %v6721 = vmul.f32 %v387, %v2787
    %v6722 = vmul.f32 %v390, %v2789
    %v6723 = vmul.f32 %v393, %v2791
    %v6724 = vmul.f32 %v396, %v2793
    %v6725 = vmul.f32 %v399, %v2795
    %v6726 = vmul.f32 %v402, %v2797
    %v6727 = vmul.f32 %v405, %v2799
    %v6728 = vmul.f32 %v408, %v2801
    %v6729 = vmul.f32 %v411, %v2803
    %v6730 = vmul.f32 %v414, %v2805
    %v6731 = vmul.f32 %v417, %v2807
    %v6732 = vmul.f32 %v420, %v2809
    %v6733 = vmul.f32 %v423, %v2811
    %v6734 = vmul.f32 %v426, %v2813
    %v6735 = vmul.f32 %v429, %v2815
    %v6736 = vmul.f32 %v432, %v2817
    %v6737 = vmul.f32 %v435, %v2819
    %v6738 = vmul.f32 %v438, %v2821
    %v6739 = vmul.f32 %v441, %v2823
    %v6740 = vmul.f32 %v444, %v2825
    %v6741 = vmul.f32 %v447, %v2827
    %v6742 = vmul.f32 %v450, %v2829
    %v6743 = vmul.f32 %v453, %v2831
    %v6744 = vmul.f32 %v456, %v2833
    %v6745 = vmul.f32 %v459, %v2835
    %v6746 = vmul.f32 %v462, %v2837
    %v6747 = vmul.f32 %v465, %v2839
    %v6748 = vmul.f32 %v468, %v2841
    %v6749 = vmul.f32 %v471, %v2843
    %v6750 = vmul.f32 %v474, %v2845
    %v6751 = vmul.f32 %v477, %v2847
    %v6752 = vmul.f32 %v480, %v2849
    %v6753 = vmul.f32 %v483, %v2851
    %v6754 = vmul.f32 %v486, %v2853
    %v6755 = vmul.f32 %v489, %v2855
    %v6756 = vmul.f32 %v492, %v2857
    %v6757 = vmul.f32 %v495, %v2859
    %v6758 = vmul.f32 %v498, %v2861
    %v6759 = vmul.f32 %v501, %v2863
    %v6760 = vmul.f32 %v504, %v2865
    %v6761 = vmul.f32 %v507, %v2867
    %v6762 = vmul.f32 %v510, %v2869
    %v6763 = vmul.f32 %v513, %v2871
    %v6764 = vmul.f32 %v516, %v2873
    %v6765 = vmul.f32 %v519, %v2875
    %v6766 = vmul.f32 %v522, %v2877
    %v6767 = vmul.f32 %v525, %v2879
    %v6768 = vmul.f32 %v528, %v2881
    %v6769 = vmul.f32 %v531, %v2883
    %v6770 = vmul.f32 %v534, %v2885
    %v6771 = vmul.f32 %v537, %v2887
    %v6772 = vmul.f32 %v540, %v2889
    %v6773 = vmul.f32 %v543, %v2891
    %v6774 = vmul.f32 %v546, %v2893
    %v6775 = vmul.f32 %v549, %v2895
    %v6776 = vmul.f32 %v552, %v2897
    %v6777 = vmul.f32 %v555, %v2899
    %v6778 = vmul.f32 %v558, %v2901
    %v6779 = vmul.f32 %v561, %v2903
    %v6780 = vmul.f32 %v564, %v2905
    %v6781 = vmul.f32 %v567, %v2907
    %v6782 = vmul.f32 %v570, %v2909
    %v6783 = vmul.f32 %v573, %v2911
    %v6784 = vmul.f32 %v576, %v2913
    %v6785 = vmul.f32 %v579, %v2915
    %v6786 = vmul.f32 %v582, %v2917
    %v6787 = vmul.f32 %v585, %v2919
    %v6788 = vmul.f32 %v588, %v2921
    %v6789 = vmul.f32 %v591, %v2923
    %v6790 = vmul.f32 %v594, %v2925
    %v6791 = vmul.f32 %v597, %v2927
    %v6792 = vmul.f32 %v600, %v2929
    %v6793 = vmul.f32 %v603, %v2931
    %v6794 = vmul.f32 %v606, %v2933
    %v6795 = vmul.f32 %v609, %v2935
    %v6796 = vmul.f32 %v612, %v2937
    %v6797 = vmul.f32 %v615, %v2939
    %v6798 = vmul.f32 %v618, %v2941
    %v6799 = vmul.f32 %v621, %v2943
    %v6800 = vmul.f32 %v624, %v2945
    %v6801 = vmul.f32 %v627, %v2947
    %v6802 = vmul.f32 %v630, %v2949
    %v6803 = vmul.f32 %v633, %v2951
    %v6804 = vmul.f32 %v636, %v2953
    %v6805 = vmul.f32 %v639, %v2955
    %v6806 = vmul.f32 %v642, %v2957
    %v6807 = vmul.f32 %v645, %v2959
    %v6808 = vmul.f32 %v648, %v2961
    %v6809 = vmul.f32 %v651, %v2963
    %v6810 = vmul.f32 %v654, %v2965
    %v6811 = vmul.f32 %v657, %v2967
    %v6812 = vmul.f32 %v660, %v2969
    %v6813 = vmul.f32 %v663, %v2971
    %v6814 = vmul.f32 %v666, %v2973
    %v6815 = vmul.f32 %v669, %v2975
    %6944 = vrot.lane.b32.xlu0 %v6688, 32
    %v6945 = vpop.permute.xlu0 %6944
    %6946 = vrot.lane.b32.xlu0 %v6689, 32
    %v6947 = vpop.permute.xlu0 %6946
    %6948 = vrot.lane.b32.xlu0 %v6690, 32
    %v6949 = vpop.permute.xlu0 %6948
    %6950 = vrot.lane.b32.xlu0 %v6691, 32
    %v6951 = vpop.permute.xlu0 %6950
    %6952 = vrot.lane.b32.xlu0 %v6692, 32
    %v6953 = vpop.permute.xlu0 %6952
    %6954 = vrot.lane.b32.xlu0 %v6693, 32
    %v6955 = vpop.permute.xlu0 %6954
    %6956 = vrot.lane.b32.xlu0 %v6694, 32
    %v6957 = vpop.permute.xlu0 %6956
    %6958 = vrot.lane.b32.xlu0 %v6695, 32
    %v6959 = vpop.permute.xlu0 %6958
    %6960 = vrot.lane.b32.xlu0 %v6696, 32
    %v6961 = vpop.permute.xlu0 %6960
    %6962 = vrot.lane.b32.xlu0 %v6697, 32
    %v6963 = vpop.permute.xlu0 %6962
    %6964 = vrot.lane.b32.xlu0 %v6698, 32
    %v6965 = vpop.permute.xlu0 %6964
    %6966 = vrot.lane.b32.xlu0 %v6699, 32
    %v6967 = vpop.permute.xlu0 %6966
    %6968 = vrot.lane.b32.xlu0 %v6700, 32
    %v6969 = vpop.permute.xlu0 %6968
    %6970 = vrot.lane.b32.xlu0 %v6701, 32
    %v6971 = vpop.permute.xlu0 %6970
    %6972 = vrot.lane.b32.xlu0 %v6702, 32
    %v6973 = vpop.permute.xlu0 %6972
    %6974 = vrot.lane.b32.xlu0 %v6703, 32
    %v6975 = vpop.permute.xlu0 %6974
    %6976 = vrot.lane.b32.xlu0 %v6704, 32
    %v6977 = vpop.permute.xlu0 %6976
    %6978 = vrot.lane.b32.xlu0 %v6705, 32
    %v6979 = vpop.permute.xlu0 %6978
    %6980 = vrot.lane.b32.xlu0 %v6706, 32
    %v6981 = vpop.permute.xlu0 %6980
    %6982 = vrot.lane.b32.xlu0 %v6707, 32
    %v6983 = vpop.permute.xlu0 %6982
    %6984 = vrot.lane.b32.xlu0 %v6708, 32
    %v6985 = vpop.permute.xlu0 %6984
    %6986 = vrot.lane.b32.xlu0 %v6709, 32
    %v6987 = vpop.permute.xlu0 %6986
    %6988 = vrot.lane.b32.xlu0 %v6710, 32
    %v6989 = vpop.permute.xlu0 %6988
    %6990 = vrot.lane.b32.xlu0 %v6711, 32
    %v6991 = vpop.permute.xlu0 %6990
    %6992 = vrot.lane.b32.xlu0 %v6712, 32
    %v6993 = vpop.permute.xlu0 %6992
    %6994 = vrot.lane.b32.xlu0 %v6713, 32
    %v6995 = vpop.permute.xlu0 %6994
    %6996 = vrot.lane.b32.xlu0 %v6714, 32
    %v6997 = vpop.permute.xlu0 %6996
    %6998 = vrot.lane.b32.xlu0 %v6715, 32
    %v6999 = vpop.permute.xlu0 %6998
    %7000 = vrot.lane.b32.xlu0 %v6716, 32
    %v7001 = vpop.permute.xlu0 %7000
    %7002 = vrot.lane.b32.xlu0 %v6717, 32
    %v7003 = vpop.permute.xlu0 %7002
    %7004 = vrot.lane.b32.xlu0 %v6718, 32
    %v7005 = vpop.permute.xlu0 %7004
    %7006 = vrot.lane.b32.xlu0 %v6719, 32
    %v7007 = vpop.permute.xlu0 %7006
    %7008 = vrot.lane.b32.xlu0 %v6720, 32
    %v7009 = vpop.permute.xlu0 %7008
    %7010 = vrot.lane.b32.xlu0 %v6721, 32
    %v7011 = vpop.permute.xlu0 %7010
    %7012 = vrot.lane.b32.xlu0 %v6722, 32
    %v7013 = vpop.permute.xlu0 %7012
    %7014 = vrot.lane.b32.xlu0 %v6723, 32
    %v7015 = vpop.permute.xlu0 %7014
    %7016 = vrot.lane.b32.xlu0 %v6724, 32
    %v7017 = vpop.permute.xlu0 %7016
    %7018 = vrot.lane.b32.xlu0 %v6725, 32
    %v7019 = vpop.permute.xlu0 %7018
    %7020 = vrot.lane.b32.xlu0 %v6726, 32
    %v7021 = vpop.permute.xlu0 %7020
    %7022 = vrot.lane.b32.xlu0 %v6727, 32
    %v7023 = vpop.permute.xlu0 %7022
    %7024 = vrot.lane.b32.xlu0 %v6728, 32
    %v7025 = vpop.permute.xlu0 %7024
    %7026 = vrot.lane.b32.xlu0 %v6729, 32
    %v7027 = vpop.permute.xlu0 %7026
    %7028 = vrot.lane.b32.xlu0 %v6730, 32
    %v7029 = vpop.permute.xlu0 %7028
    %7030 = vrot.lane.b32.xlu0 %v6731, 32
    %v7031 = vpop.permute.xlu0 %7030
    %7032 = vrot.lane.b32.xlu0 %v6732, 32
    %v7033 = vpop.permute.xlu0 %7032
    %7034 = vrot.lane.b32.xlu0 %v6733, 32
    %v7035 = vpop.permute.xlu0 %7034
    %7036 = vrot.lane.b32.xlu0 %v6734, 32
    %v7037 = vpop.permute.xlu0 %7036
    %7038 = vrot.lane.b32.xlu0 %v6735, 32
    %v7039 = vpop.permute.xlu0 %7038
    %7040 = vrot.lane.b32.xlu0 %v6736, 32
    %v7041 = vpop.permute.xlu0 %7040
    %7042 = vrot.lane.b32.xlu0 %v6737, 32
    %v7043 = vpop.permute.xlu0 %7042
    %7044 = vrot.lane.b32.xlu0 %v6738, 32
    %v7045 = vpop.permute.xlu0 %7044
    %7046 = vrot.lane.b32.xlu0 %v6739, 32
    %v7047 = vpop.permute.xlu0 %7046
    %7048 = vrot.lane.b32.xlu0 %v6740, 32
    %v7049 = vpop.permute.xlu0 %7048
    %7050 = vrot.lane.b32.xlu0 %v6741, 32
    %v7051 = vpop.permute.xlu0 %7050
    %7052 = vrot.lane.b32.xlu0 %v6742, 32
    %v7053 = vpop.permute.xlu0 %7052
    %7054 = vrot.lane.b32.xlu0 %v6743, 32
    %v7055 = vpop.permute.xlu0 %7054
    %7056 = vrot.lane.b32.xlu0 %v6744, 32
    %v7057 = vpop.permute.xlu0 %7056
    %7058 = vrot.lane.b32.xlu0 %v6745, 32
    %v7059 = vpop.permute.xlu0 %7058
    %7060 = vrot.lane.b32.xlu0 %v6746, 32
    %v7061 = vpop.permute.xlu0 %7060
    %7062 = vrot.lane.b32.xlu0 %v6747, 32
    %v7063 = vpop.permute.xlu0 %7062
    %7064 = vrot.lane.b32.xlu0 %v6748, 32
    %v7065 = vpop.permute.xlu0 %7064
    %7066 = vrot.lane.b32.xlu0 %v6749, 32
    %v7067 = vpop.permute.xlu0 %7066
    %7068 = vrot.lane.b32.xlu0 %v6750, 32
    %v7069 = vpop.permute.xlu0 %7068
    %7070 = vrot.lane.b32.xlu0 %v6751, 32
    %v7071 = vpop.permute.xlu0 %7070
    %7072 = vrot.lane.b32.xlu0 %v6752, 32
    %v7073 = vpop.permute.xlu0 %7072
    %7074 = vrot.lane.b32.xlu0 %v6753, 32
    %v7075 = vpop.permute.xlu0 %7074
    %7076 = vrot.lane.b32.xlu0 %v6754, 32
    %v7077 = vpop.permute.xlu0 %7076
    %7078 = vrot.lane.b32.xlu0 %v6755, 32
    %v7079 = vpop.permute.xlu0 %7078
    %7080 = vrot.lane.b32.xlu0 %v6756, 32
    %v7081 = vpop.permute.xlu0 %7080
    %7082 = vrot.lane.b32.xlu0 %v6757, 32
    %v7083 = vpop.permute.xlu0 %7082
    %7084 = vrot.lane.b32.xlu0 %v6758, 32
    %v7085 = vpop.permute.xlu0 %7084
    %7086 = vrot.lane.b32.xlu0 %v6759, 32
    %v7087 = vpop.permute.xlu0 %7086
    %7088 = vrot.lane.b32.xlu0 %v6760, 32
    %v7089 = vpop.permute.xlu0 %7088
    %7090 = vrot.lane.b32.xlu0 %v6761, 32
    %v7091 = vpop.permute.xlu0 %7090
    %7092 = vrot.lane.b32.xlu0 %v6762, 32
    %v7093 = vpop.permute.xlu0 %7092
    %7094 = vrot.lane.b32.xlu0 %v6763, 32
    %v7095 = vpop.permute.xlu0 %7094
    %7096 = vrot.lane.b32.xlu0 %v6764, 32
    %v7097 = vpop.permute.xlu0 %7096
    %7098 = vrot.lane.b32.xlu0 %v6765, 32
    %v7099 = vpop.permute.xlu0 %7098
    %7100 = vrot.lane.b32.xlu0 %v6766, 32
    %v7101 = vpop.permute.xlu0 %7100
    %7102 = vrot.lane.b32.xlu0 %v6767, 32
    %v7103 = vpop.permute.xlu0 %7102
    %7104 = vrot.lane.b32.xlu0 %v6768, 32
    %v7105 = vpop.permute.xlu0 %7104
    %7106 = vrot.lane.b32.xlu0 %v6769, 32
    %v7107 = vpop.permute.xlu0 %7106
    %7108 = vrot.lane.b32.xlu0 %v6770, 32
    %v7109 = vpop.permute.xlu0 %7108
    %7110 = vrot.lane.b32.xlu0 %v6771, 32
    %v7111 = vpop.permute.xlu0 %7110
    %7112 = vrot.lane.b32.xlu0 %v6772, 32
    %v7113 = vpop.permute.xlu0 %7112
    %7114 = vrot.lane.b32.xlu0 %v6773, 32
    %v7115 = vpop.permute.xlu0 %7114
    %7116 = vrot.lane.b32.xlu0 %v6774, 32
    %v7117 = vpop.permute.xlu0 %7116
    %7118 = vrot.lane.b32.xlu0 %v6775, 32
    %v7119 = vpop.permute.xlu0 %7118
    %7120 = vrot.lane.b32.xlu0 %v6776, 32
    %v7121 = vpop.permute.xlu0 %7120
    %7122 = vrot.lane.b32.xlu0 %v6777, 32
    %v7123 = vpop.permute.xlu0 %7122
    %7124 = vrot.lane.b32.xlu0 %v6778, 32
    %v7125 = vpop.permute.xlu0 %7124
    %7126 = vrot.lane.b32.xlu0 %v6779, 32
    %v7127 = vpop.permute.xlu0 %7126
    %7128 = vrot.lane.b32.xlu0 %v6780, 32
    %v7129 = vpop.permute.xlu0 %7128
    %7130 = vrot.lane.b32.xlu0 %v6781, 32
    %v7131 = vpop.permute.xlu0 %7130
    %7132 = vrot.lane.b32.xlu0 %v6782, 32
    %v7133 = vpop.permute.xlu0 %7132
    %7134 = vrot.lane.b32.xlu0 %v6783, 32
    %v7135 = vpop.permute.xlu0 %7134
    %7136 = vrot.lane.b32.xlu0 %v6784, 32
    %v7137 = vpop.permute.xlu0 %7136
    %7138 = vrot.lane.b32.xlu0 %v6785, 32
    %v7139 = vpop.permute.xlu0 %7138
    %7140 = vrot.lane.b32.xlu0 %v6786, 32
    %v7141 = vpop.permute.xlu0 %7140
    %7142 = vrot.lane.b32.xlu0 %v6787, 32
    %v7143 = vpop.permute.xlu0 %7142
    %7144 = vrot.lane.b32.xlu0 %v6788, 32
    %v7145 = vpop.permute.xlu0 %7144
    %7146 = vrot.lane.b32.xlu0 %v6789, 32
    %v7147 = vpop.permute.xlu0 %7146
    %7148 = vrot.lane.b32.xlu0 %v6790, 32
    %v7149 = vpop.permute.xlu0 %7148
    %7150 = vrot.lane.b32.xlu0 %v6791, 32
    %v7151 = vpop.permute.xlu0 %7150
    %7152 = vrot.lane.b32.xlu0 %v6792, 32
    %v7153 = vpop.permute.xlu0 %7152
    %7154 = vrot.lane.b32.xlu0 %v6793, 32
    %v7155 = vpop.permute.xlu0 %7154
    %7156 = vrot.lane.b32.xlu0 %v6794, 32
    %v7157 = vpop.permute.xlu0 %7156
    %7158 = vrot.lane.b32.xlu0 %v6795, 32
    %v7159 = vpop.permute.xlu0 %7158
    %7160 = vrot.lane.b32.xlu0 %v6796, 32
    %v7161 = vpop.permute.xlu0 %7160
    %7162 = vrot.lane.b32.xlu0 %v6797, 32
    %v7163 = vpop.permute.xlu0 %7162
    %7164 = vrot.lane.b32.xlu0 %v6798, 32
    %v7165 = vpop.permute.xlu0 %7164
    %7166 = vrot.lane.b32.xlu0 %v6799, 32
    %v7167 = vpop.permute.xlu0 %7166
    %7168 = vrot.lane.b32.xlu0 %v6800, 32
    %v7169 = vpop.permute.xlu0 %7168
    %7170 = vrot.lane.b32.xlu0 %v6801, 32
    %v7171 = vpop.permute.xlu0 %7170
    %7172 = vrot.lane.b32.xlu0 %v6802, 32
    %v7173 = vpop.permute.xlu0 %7172
    %7174 = vrot.lane.b32.xlu0 %v6803, 32
    %v7175 = vpop.permute.xlu0 %7174
    %7176 = vrot.lane.b32.xlu0 %v6804, 32
    %v7177 = vpop.permute.xlu0 %7176
    %7178 = vrot.lane.b32.xlu0 %v6805, 32
    %v7179 = vpop.permute.xlu0 %7178
    %7180 = vrot.lane.b32.xlu0 %v6806, 32
    %v7181 = vpop.permute.xlu0 %7180
    %7182 = vrot.lane.b32.xlu0 %v6807, 32
    %v7183 = vpop.permute.xlu0 %7182
    %7184 = vrot.lane.b32.xlu0 %v6808, 32
    %v7185 = vpop.permute.xlu0 %7184
    %7186 = vrot.lane.b32.xlu0 %v6809, 32
    %v7187 = vpop.permute.xlu0 %7186
    %7188 = vrot.lane.b32.xlu0 %v6810, 32
    %v7189 = vpop.permute.xlu0 %7188
    %7190 = vrot.lane.b32.xlu0 %v6811, 32
    %v7191 = vpop.permute.xlu0 %7190
    %7192 = vrot.lane.b32.xlu0 %v6812, 32
    %v7193 = vpop.permute.xlu0 %7192
    %7194 = vrot.lane.b32.xlu0 %v6813, 32
    %v7195 = vpop.permute.xlu0 %7194
    %7196 = vrot.lane.b32.xlu0 %v6814, 32
    %v7197 = vpop.permute.xlu0 %7196
    %7198 = vrot.lane.b32.xlu0 %v6815, 32
    %v7199 = vpop.permute.xlu0 %7198
    %v7328 = vadd.f32 %v6560, %v6945
    %v7329 = vadd.f32 %v6561, %v6947
    %v7330 = vadd.f32 %v6562, %v6949
    %v7331 = vadd.f32 %v6563, %v6951
    %v7332 = vadd.f32 %v6564, %v6953
    %v7333 = vadd.f32 %v6565, %v6955
    %v7334 = vadd.f32 %v6566, %v6957
    %v7335 = vadd.f32 %v6567, %v6959
    %v7336 = vadd.f32 %v6568, %v6961
    %v7337 = vadd.f32 %v6569, %v6963
    %v7338 = vadd.f32 %v6570, %v6965
    %v7339 = vadd.f32 %v6571, %v6967
    %v7340 = vadd.f32 %v6572, %v6969
    %v7341 = vadd.f32 %v6573, %v6971
    %v7342 = vadd.f32 %v6574, %v6973
    %v7343 = vadd.f32 %v6575, %v6975
    %v7344 = vadd.f32 %v6576, %v6977
    %v7345 = vadd.f32 %v6577, %v6979
    %v7346 = vadd.f32 %v6578, %v6981
    %v7347 = vadd.f32 %v6579, %v6983
    %v7348 = vadd.f32 %v6580, %v6985
    %v7349 = vadd.f32 %v6581, %v6987
    %v7350 = vadd.f32 %v6582, %v6989
    %v7351 = vadd.f32 %v6583, %v6991
    %v7352 = vadd.f32 %v6584, %v6993
    %v7353 = vadd.f32 %v6585, %v6995
    %v7354 = vadd.f32 %v6586, %v6997
    %v7355 = vadd.f32 %v6587, %v6999
    %v7356 = vadd.f32 %v6588, %v7001
    %v7357 = vadd.f32 %v6589, %v7003
    %v7358 = vadd.f32 %v6590, %v7005
    %v7359 = vadd.f32 %v6591, %v7007
    %v7360 = vadd.f32 %v6592, %v7009
    %v7361 = vadd.f32 %v6593, %v7011
    %v7362 = vadd.f32 %v6594, %v7013
    %v7363 = vadd.f32 %v6595, %v7015
    %v7364 = vadd.f32 %v6596, %v7017
    %v7365 = vadd.f32 %v6597, %v7019
    %v7366 = vadd.f32 %v6598, %v7021
    %v7367 = vadd.f32 %v6599, %v7023
    %v7368 = vadd.f32 %v6600, %v7025
    %v7369 = vadd.f32 %v6601, %v7027
    %v7370 = vadd.f32 %v6602, %v7029
    %v7371 = vadd.f32 %v6603, %v7031
    %v7372 = vadd.f32 %v6604, %v7033
    %v7373 = vadd.f32 %v6605, %v7035
    %v7374 = vadd.f32 %v6606, %v7037
    %v7375 = vadd.f32 %v6607, %v7039
    %v7376 = vadd.f32 %v6608, %v7041
    %v7377 = vadd.f32 %v6609, %v7043
    %v7378 = vadd.f32 %v6610, %v7045
    %v7379 = vadd.f32 %v6611, %v7047
    %v7380 = vadd.f32 %v6612, %v7049
    %v7381 = vadd.f32 %v6613, %v7051
    %v7382 = vadd.f32 %v6614, %v7053
    %v7383 = vadd.f32 %v6615, %v7055
    %v7384 = vadd.f32 %v6616, %v7057
    %v7385 = vadd.f32 %v6617, %v7059
    %v7386 = vadd.f32 %v6618, %v7061
    %v7387 = vadd.f32 %v6619, %v7063
    %v7388 = vadd.f32 %v6620, %v7065
    %v7389 = vadd.f32 %v6621, %v7067
    %v7390 = vadd.f32 %v6622, %v7069
    %v7391 = vadd.f32 %v6623, %v7071
    %v7392 = vadd.f32 %v6624, %v7073
    %v7393 = vadd.f32 %v6625, %v7075
    %v7394 = vadd.f32 %v6626, %v7077
    %v7395 = vadd.f32 %v6627, %v7079
    %v7396 = vadd.f32 %v6628, %v7081
    %v7397 = vadd.f32 %v6629, %v7083
    %v7398 = vadd.f32 %v6630, %v7085
    %v7399 = vadd.f32 %v6631, %v7087
    %v7400 = vadd.f32 %v6632, %v7089
    %v7401 = vadd.f32 %v6633, %v7091
    %v7402 = vadd.f32 %v6634, %v7093
    %v7403 = vadd.f32 %v6635, %v7095
    %v7404 = vadd.f32 %v6636, %v7097
    %v7405 = vadd.f32 %v6637, %v7099
    %v7406 = vadd.f32 %v6638, %v7101
    %v7407 = vadd.f32 %v6639, %v7103
    %v7408 = vadd.f32 %v6640, %v7105
    %v7409 = vadd.f32 %v6641, %v7107
    %v7410 = vadd.f32 %v6642, %v7109
    %v7411 = vadd.f32 %v6643, %v7111
    %v7412 = vadd.f32 %v6644, %v7113
    %v7413 = vadd.f32 %v6645, %v7115
    %v7414 = vadd.f32 %v6646, %v7117
    %v7415 = vadd.f32 %v6647, %v7119
    %v7416 = vadd.f32 %v6648, %v7121
    %v7417 = vadd.f32 %v6649, %v7123
    %v7418 = vadd.f32 %v6650, %v7125
    %v7419 = vadd.f32 %v6651, %v7127
    %v7420 = vadd.f32 %v6652, %v7129
    %v7421 = vadd.f32 %v6653, %v7131
    %v7422 = vadd.f32 %v6654, %v7133
    %v7423 = vadd.f32 %v6655, %v7135
    %v7424 = vadd.f32 %v6656, %v7137
    %v7425 = vadd.f32 %v6657, %v7139
    %v7426 = vadd.f32 %v6658, %v7141
    %v7427 = vadd.f32 %v6659, %v7143
    %v7428 = vadd.f32 %v6660, %v7145
    %v7429 = vadd.f32 %v6661, %v7147
    %v7430 = vadd.f32 %v6662, %v7149
    %v7431 = vadd.f32 %v6663, %v7151
    %v7432 = vadd.f32 %v6664, %v7153
    %v7433 = vadd.f32 %v6665, %v7155
    %v7434 = vadd.f32 %v6666, %v7157
    %v7435 = vadd.f32 %v6667, %v7159
    %v7436 = vadd.f32 %v6668, %v7161
    %v7437 = vadd.f32 %v6669, %v7163
    %v7438 = vadd.f32 %v6670, %v7165
    %v7439 = vadd.f32 %v6671, %v7167
    %v7440 = vadd.f32 %v6672, %v7169
    %v7441 = vadd.f32 %v6673, %v7171
    %v7442 = vadd.f32 %v6674, %v7173
    %v7443 = vadd.f32 %v6675, %v7175
    %v7444 = vadd.f32 %v6676, %v7177
    %v7445 = vadd.f32 %v6677, %v7179
    %v7446 = vadd.f32 %v6678, %v7181
    %v7447 = vadd.f32 %v6679, %v7183
    %v7448 = vadd.f32 %v6680, %v7185
    %v7449 = vadd.f32 %v6681, %v7187
    %v7450 = vadd.f32 %v6682, %v7189
    %v7451 = vadd.f32 %v6683, %v7191
    %v7452 = vadd.f32 %v6684, %v7193
    %v7453 = vadd.f32 %v6685, %v7195
    %v7454 = vadd.f32 %v6686, %v7197
    %v7455 = vadd.f32 %v6687, %v7199
    %v7456 = vmul.f32 %v3744, %v1696
    %v7457 = vmul.f32 %v3745, %v1697
    %v7458 = vmul.f32 %v3746, %v1698
    %v7459 = vmul.f32 %v3747, %v1699
    %v7460 = vmul.f32 %v3748, %v1700
    %v7461 = vmul.f32 %v3749, %v1701
    %v7462 = vmul.f32 %v3750, %v1702
    %v7463 = vmul.f32 %v3751, %v1703
    %v7464 = vmul.f32 %v3752, %v1704
    %v7465 = vmul.f32 %v3753, %v1705
    %v7466 = vmul.f32 %v3754, %v1706
    %v7467 = vmul.f32 %v3755, %v1707
    %v7468 = vmul.f32 %v3756, %v1708
    %v7469 = vmul.f32 %v3757, %v1709
    %v7470 = vmul.f32 %v3758, %v1710
    %v7471 = vmul.f32 %v3759, %v1711
    %v7472 = vmul.f32 %v3760, %v1712
    %v7473 = vmul.f32 %v3761, %v1713
    %v7474 = vmul.f32 %v3762, %v1714
    %v7475 = vmul.f32 %v3763, %v1715
    %v7476 = vmul.f32 %v3764, %v1716
    %v7477 = vmul.f32 %v3765, %v1717
    %v7478 = vmul.f32 %v3766, %v1718
    %v7479 = vmul.f32 %v3767, %v1719
    %v7480 = vmul.f32 %v3768, %v1720
    %v7481 = vmul.f32 %v3769, %v1721
    %v7482 = vmul.f32 %v3770, %v1722
    %v7483 = vmul.f32 %v3771, %v1723
    %v7484 = vmul.f32 %v3772, %v1724
    %v7485 = vmul.f32 %v3773, %v1725
    %v7486 = vmul.f32 %v3774, %v1726
    %v7487 = vmul.f32 %v3775, %v1727
    %v7488 = vmul.f32 %v3776, %v1728
    %v7489 = vmul.f32 %v3777, %v1729
    %v7490 = vmul.f32 %v3778, %v1730
    %v7491 = vmul.f32 %v3779, %v1731
    %v7492 = vmul.f32 %v3780, %v1732
    %v7493 = vmul.f32 %v3781, %v1733
    %v7494 = vmul.f32 %v3782, %v1734
    %v7495 = vmul.f32 %v3783, %v1735
    %v7496 = vmul.f32 %v3784, %v1736
    %v7497 = vmul.f32 %v3785, %v1737
    %v7498 = vmul.f32 %v3786, %v1738
    %v7499 = vmul.f32 %v3787, %v1739
    %v7500 = vmul.f32 %v3788, %v1740
    %v7501 = vmul.f32 %v3789, %v1741
    %v7502 = vmul.f32 %v3790, %v1742
    %v7503 = vmul.f32 %v3791, %v1743
    %v7504 = vmul.f32 %v3792, %v1744
    %v7505 = vmul.f32 %v3793, %v1745
    %v7506 = vmul.f32 %v3794, %v1746
    %v7507 = vmul.f32 %v3795, %v1747
    %v7508 = vmul.f32 %v3796, %v1748
    %v7509 = vmul.f32 %v3797, %v1749
    %v7510 = vmul.f32 %v3798, %v1750
    %v7511 = vmul.f32 %v3799, %v1751
    %v7512 = vmul.f32 %v3800, %v1752
    %v7513 = vmul.f32 %v3801, %v1753
    %v7514 = vmul.f32 %v3802, %v1754
    %v7515 = vmul.f32 %v3803, %v1755
    %v7516 = vmul.f32 %v3804, %v1756
    %v7517 = vmul.f32 %v3805, %v1757
    %v7518 = vmul.f32 %v3806, %v1758
    %v7519 = vmul.f32 %v3807, %v1759
    %v7520 = vmul.f32 %v3808, %v1760
    %v7521 = vmul.f32 %v3809, %v1761
    %v7522 = vmul.f32 %v3810, %v1762
    %v7523 = vmul.f32 %v3811, %v1763
    %v7524 = vmul.f32 %v3812, %v1764
    %v7525 = vmul.f32 %v3813, %v1765
    %v7526 = vmul.f32 %v3814, %v1766
    %v7527 = vmul.f32 %v3815, %v1767
    %v7528 = vmul.f32 %v3816, %v1768
    %v7529 = vmul.f32 %v3817, %v1769
    %v7530 = vmul.f32 %v3818, %v1770
    %v7531 = vmul.f32 %v3819, %v1771
    %v7532 = vmul.f32 %v3820, %v1772
    %v7533 = vmul.f32 %v3821, %v1773
    %v7534 = vmul.f32 %v3822, %v1774
    %v7535 = vmul.f32 %v3823, %v1775
    %v7536 = vmul.f32 %v3824, %v1776
    %v7537 = vmul.f32 %v3825, %v1777
    %v7538 = vmul.f32 %v3826, %v1778
    %v7539 = vmul.f32 %v3827, %v1779
    %v7540 = vmul.f32 %v3828, %v1780
    %v7541 = vmul.f32 %v3829, %v1781
    %v7542 = vmul.f32 %v3830, %v1782
    %v7543 = vmul.f32 %v3831, %v1783
    %v7544 = vmul.f32 %v3832, %v1784
    %v7545 = vmul.f32 %v3833, %v1785
    %v7546 = vmul.f32 %v3834, %v1786
    %v7547 = vmul.f32 %v3835, %v1787
    %v7548 = vmul.f32 %v3836, %v1788
    %v7549 = vmul.f32 %v3837, %v1789
    %v7550 = vmul.f32 %v3838, %v1790
    %v7551 = vmul.f32 %v3839, %v1791
    %v7552 = vmul.f32 %v3840, %v1792
    %v7553 = vmul.f32 %v3841, %v1793
    %v7554 = vmul.f32 %v3842, %v1794
    %v7555 = vmul.f32 %v3843, %v1795
    %v7556 = vmul.f32 %v3844, %v1796
    %v7557 = vmul.f32 %v3845, %v1797
    %v7558 = vmul.f32 %v3846, %v1798
    %v7559 = vmul.f32 %v3847, %v1799
    %v7560 = vmul.f32 %v3848, %v1800
    %v7561 = vmul.f32 %v3849, %v1801
    %v7562 = vmul.f32 %v3850, %v1802
    %v7563 = vmul.f32 %v3851, %v1803
    %v7564 = vmul.f32 %v3852, %v1804
    %v7565 = vmul.f32 %v3853, %v1805
    %v7566 = vmul.f32 %v3854, %v1806
    %v7567 = vmul.f32 %v3855, %v1807
    %v7568 = vmul.f32 %v3856, %v1808
    %v7569 = vmul.f32 %v3857, %v1809
    %v7570 = vmul.f32 %v3858, %v1810
    %v7571 = vmul.f32 %v3859, %v1811
    %v7572 = vmul.f32 %v3860, %v1812
    %v7573 = vmul.f32 %v3861, %v1813
    %v7574 = vmul.f32 %v3862, %v1814
    %v7575 = vmul.f32 %v3863, %v1815
    %v7576 = vmul.f32 %v3864, %v1816
    %v7577 = vmul.f32 %v3865, %v1817
    %v7578 = vmul.f32 %v3866, %v1818
    %v7579 = vmul.f32 %v3867, %v1819
    %v7580 = vmul.f32 %v3868, %v1820
    %v7581 = vmul.f32 %v3869, %v1821
    %v7582 = vmul.f32 %v3870, %v1822
    %v7583 = vmul.f32 %v3871, %v1823
    %v7584 = vsub.f32 1.0, %v1696
    %v7585 = vsub.f32 1.0, %v1697
    %v7586 = vsub.f32 1.0, %v1698
    %v7587 = vsub.f32 1.0, %v1699
    %v7588 = vsub.f32 1.0, %v1700
    %v7589 = vsub.f32 1.0, %v1701
    %v7590 = vsub.f32 1.0, %v1702
    %v7591 = vsub.f32 1.0, %v1703
    %v7592 = vsub.f32 1.0, %v1704
    %v7593 = vsub.f32 1.0, %v1705
    %v7594 = vsub.f32 1.0, %v1706
    %v7595 = vsub.f32 1.0, %v1707
    %v7596 = vsub.f32 1.0, %v1708
    %v7597 = vsub.f32 1.0, %v1709
    %v7598 = vsub.f32 1.0, %v1710
    %v7599 = vsub.f32 1.0, %v1711
    %v7600 = vsub.f32 1.0, %v1712
    %v7601 = vsub.f32 1.0, %v1713
    %v7602 = vsub.f32 1.0, %v1714
    %v7603 = vsub.f32 1.0, %v1715
    %v7604 = vsub.f32 1.0, %v1716
    %v7605 = vsub.f32 1.0, %v1717
    %v7606 = vsub.f32 1.0, %v1718
    %v7607 = vsub.f32 1.0, %v1719
    %v7608 = vsub.f32 1.0, %v1720
    %v7609 = vsub.f32 1.0, %v1721
    %v7610 = vsub.f32 1.0, %v1722
    %v7611 = vsub.f32 1.0, %v1723
    %v7612 = vsub.f32 1.0, %v1724
    %v7613 = vsub.f32 1.0, %v1725
    %v7614 = vsub.f32 1.0, %v1726
    %v7615 = vsub.f32 1.0, %v1727
    %v7616 = vsub.f32 1.0, %v1728
    %v7617 = vsub.f32 1.0, %v1729
    %v7618 = vsub.f32 1.0, %v1730
    %v7619 = vsub.f32 1.0, %v1731
    %v7620 = vsub.f32 1.0, %v1732
    %v7621 = vsub.f32 1.0, %v1733
    %v7622 = vsub.f32 1.0, %v1734
    %v7623 = vsub.f32 1.0, %v1735
    %v7624 = vsub.f32 1.0, %v1736
    %v7625 = vsub.f32 1.0, %v1737
    %v7626 = vsub.f32 1.0, %v1738
    %v7627 = vsub.f32 1.0, %v1739
    %v7628 = vsub.f32 1.0, %v1740
    %v7629 = vsub.f32 1.0, %v1741
    %v7630 = vsub.f32 1.0, %v1742
    %v7631 = vsub.f32 1.0, %v1743
    %v7632 = vsub.f32 1.0, %v1744
    %v7633 = vsub.f32 1.0, %v1745
    %v7634 = vsub.f32 1.0, %v1746
    %v7635 = vsub.f32 1.0, %v1747
    %v7636 = vsub.f32 1.0, %v1748
    %v7637 = vsub.f32 1.0, %v1749
    %v7638 = vsub.f32 1.0, %v1750
    %v7639 = vsub.f32 1.0, %v1751
    %v7640 = vsub.f32 1.0, %v1752
    %v7641 = vsub.f32 1.0, %v1753
    %v7642 = vsub.f32 1.0, %v1754
    %v7643 = vsub.f32 1.0, %v1755
    %v7644 = vsub.f32 1.0, %v1756
    %v7645 = vsub.f32 1.0, %v1757
    %v7646 = vsub.f32 1.0, %v1758
    %v7647 = vsub.f32 1.0, %v1759
    %v7648 = vsub.f32 1.0, %v1760
    %v7649 = vsub.f32 1.0, %v1761
    %v7650 = vsub.f32 1.0, %v1762
    %v7651 = vsub.f32 1.0, %v1763
    %v7652 = vsub.f32 1.0, %v1764
    %v7653 = vsub.f32 1.0, %v1765
    %v7654 = vsub.f32 1.0, %v1766
    %v7655 = vsub.f32 1.0, %v1767
    %v7656 = vsub.f32 1.0, %v1768
    %v7657 = vsub.f32 1.0, %v1769
    %v7658 = vsub.f32 1.0, %v1770
    %v7659 = vsub.f32 1.0, %v1771
    %v7660 = vsub.f32 1.0, %v1772
    %v7661 = vsub.f32 1.0, %v1773
    %v7662 = vsub.f32 1.0, %v1774
    %v7663 = vsub.f32 1.0, %v1775
    %v7664 = vsub.f32 1.0, %v1776
    %v7665 = vsub.f32 1.0, %v1777
    %v7666 = vsub.f32 1.0, %v1778
    %v7667 = vsub.f32 1.0, %v1779
    %v7668 = vsub.f32 1.0, %v1780
    %v7669 = vsub.f32 1.0, %v1781
    %v7670 = vsub.f32 1.0, %v1782
    %v7671 = vsub.f32 1.0, %v1783
    %v7672 = vsub.f32 1.0, %v1784
    %v7673 = vsub.f32 1.0, %v1785
    %v7674 = vsub.f32 1.0, %v1786
    %v7675 = vsub.f32 1.0, %v1787
    %v7676 = vsub.f32 1.0, %v1788
    %v7677 = vsub.f32 1.0, %v1789
    %v7678 = vsub.f32 1.0, %v1790
    %v7679 = vsub.f32 1.0, %v1791
    %v7680 = vsub.f32 1.0, %v1792
    %v7681 = vsub.f32 1.0, %v1793
    %v7682 = vsub.f32 1.0, %v1794
    %v7683 = vsub.f32 1.0, %v1795
    %v7684 = vsub.f32 1.0, %v1796
    %v7685 = vsub.f32 1.0, %v1797
    %v7686 = vsub.f32 1.0, %v1798
    %v7687 = vsub.f32 1.0, %v1799
    %v7688 = vsub.f32 1.0, %v1800
    %v7689 = vsub.f32 1.0, %v1801
    %v7690 = vsub.f32 1.0, %v1802
    %v7691 = vsub.f32 1.0, %v1803
    %v7692 = vsub.f32 1.0, %v1804
    %v7693 = vsub.f32 1.0, %v1805
    %v7694 = vsub.f32 1.0, %v1806
    %v7695 = vsub.f32 1.0, %v1807
    %v7696 = vsub.f32 1.0, %v1808
    %v7697 = vsub.f32 1.0, %v1809
    %v7698 = vsub.f32 1.0, %v1810
    %v7699 = vsub.f32 1.0, %v1811
    %v7700 = vsub.f32 1.0, %v1812
    %v7701 = vsub.f32 1.0, %v1813
    %v7702 = vsub.f32 1.0, %v1814
    %v7703 = vsub.f32 1.0, %v1815
    %v7704 = vsub.f32 1.0, %v1816
    %v7705 = vsub.f32 1.0, %v1817
    %v7706 = vsub.f32 1.0, %v1818
    %v7707 = vsub.f32 1.0, %v1819
    %v7708 = vsub.f32 1.0, %v1820
    %v7709 = vsub.f32 1.0, %v1821
    %v7710 = vsub.f32 1.0, %v1822
    %v7711 = vsub.f32 1.0, %v1823
    %7840 = vrot.lane.b32.xlu0 %v7584, 32
    %v7841 = vpop.permute.xlu0 %7840
    %7842 = vrot.lane.b32.xlu0 %v7585, 32
    %v7843 = vpop.permute.xlu0 %7842
    %7844 = vrot.lane.b32.xlu0 %v7586, 32
    %v7845 = vpop.permute.xlu0 %7844
    %7846 = vrot.lane.b32.xlu0 %v7587, 32
    %v7847 = vpop.permute.xlu0 %7846
    %7848 = vrot.lane.b32.xlu0 %v7588, 32
    %v7849 = vpop.permute.xlu0 %7848
    %7850 = vrot.lane.b32.xlu0 %v7589, 32
    %v7851 = vpop.permute.xlu0 %7850
    %7852 = vrot.lane.b32.xlu0 %v7590, 32
    %v7853 = vpop.permute.xlu0 %7852
    %7854 = vrot.lane.b32.xlu0 %v7591, 32
    %v7855 = vpop.permute.xlu0 %7854
    %7856 = vrot.lane.b32.xlu0 %v7592, 32
    %v7857 = vpop.permute.xlu0 %7856
    %7858 = vrot.lane.b32.xlu0 %v7593, 32
    %v7859 = vpop.permute.xlu0 %7858
    %7860 = vrot.lane.b32.xlu0 %v7594, 32
    %v7861 = vpop.permute.xlu0 %7860
    %7862 = vrot.lane.b32.xlu0 %v7595, 32
    %v7863 = vpop.permute.xlu0 %7862
    %7864 = vrot.lane.b32.xlu0 %v7596, 32
    %v7865 = vpop.permute.xlu0 %7864
    %7866 = vrot.lane.b32.xlu0 %v7597, 32
    %v7867 = vpop.permute.xlu0 %7866
    %7868 = vrot.lane.b32.xlu0 %v7598, 32
    %v7869 = vpop.permute.xlu0 %7868
    %7870 = vrot.lane.b32.xlu0 %v7599, 32
    %v7871 = vpop.permute.xlu0 %7870
    %7872 = vrot.lane.b32.xlu0 %v7600, 32
    %v7873 = vpop.permute.xlu0 %7872
    %7874 = vrot.lane.b32.xlu0 %v7601, 32
    %v7875 = vpop.permute.xlu0 %7874
    %7876 = vrot.lane.b32.xlu0 %v7602, 32
    %v7877 = vpop.permute.xlu0 %7876
    %7878 = vrot.lane.b32.xlu0 %v7603, 32
    %v7879 = vpop.permute.xlu0 %7878
    %7880 = vrot.lane.b32.xlu0 %v7604, 32
    %v7881 = vpop.permute.xlu0 %7880
    %7882 = vrot.lane.b32.xlu0 %v7605, 32
    %v7883 = vpop.permute.xlu0 %7882
    %7884 = vrot.lane.b32.xlu0 %v7606, 32
    %v7885 = vpop.permute.xlu0 %7884
    %7886 = vrot.lane.b32.xlu0 %v7607, 32
    %v7887 = vpop.permute.xlu0 %7886
    %7888 = vrot.lane.b32.xlu0 %v7608, 32
    %v7889 = vpop.permute.xlu0 %7888
    %7890 = vrot.lane.b32.xlu0 %v7609, 32
    %v7891 = vpop.permute.xlu0 %7890
    %7892 = vrot.lane.b32.xlu0 %v7610, 32
    %v7893 = vpop.permute.xlu0 %7892
    %7894 = vrot.lane.b32.xlu0 %v7611, 32
    %v7895 = vpop.permute.xlu0 %7894
    %7896 = vrot.lane.b32.xlu0 %v7612, 32
    %v7897 = vpop.permute.xlu0 %7896
    %7898 = vrot.lane.b32.xlu0 %v7613, 32
    %v7899 = vpop.permute.xlu0 %7898
    %7900 = vrot.lane.b32.xlu0 %v7614, 32
    %v7901 = vpop.permute.xlu0 %7900
    %7902 = vrot.lane.b32.xlu0 %v7615, 32
    %v7903 = vpop.permute.xlu0 %7902
    %7904 = vrot.lane.b32.xlu0 %v7616, 32
    %v7905 = vpop.permute.xlu0 %7904
    %7906 = vrot.lane.b32.xlu0 %v7617, 32
    %v7907 = vpop.permute.xlu0 %7906
    %7908 = vrot.lane.b32.xlu0 %v7618, 32
    %v7909 = vpop.permute.xlu0 %7908
    %7910 = vrot.lane.b32.xlu0 %v7619, 32
    %v7911 = vpop.permute.xlu0 %7910
    %7912 = vrot.lane.b32.xlu0 %v7620, 32
    %v7913 = vpop.permute.xlu0 %7912
    %7914 = vrot.lane.b32.xlu0 %v7621, 32
    %v7915 = vpop.permute.xlu0 %7914
    %7916 = vrot.lane.b32.xlu0 %v7622, 32
    %v7917 = vpop.permute.xlu0 %7916
    %7918 = vrot.lane.b32.xlu0 %v7623, 32
    %v7919 = vpop.permute.xlu0 %7918
    %7920 = vrot.lane.b32.xlu0 %v7624, 32
    %v7921 = vpop.permute.xlu0 %7920
    %7922 = vrot.lane.b32.xlu0 %v7625, 32
    %v7923 = vpop.permute.xlu0 %7922
    %7924 = vrot.lane.b32.xlu0 %v7626, 32
    %v7925 = vpop.permute.xlu0 %7924
    %7926 = vrot.lane.b32.xlu0 %v7627, 32
    %v7927 = vpop.permute.xlu0 %7926
    %7928 = vrot.lane.b32.xlu0 %v7628, 32
    %v7929 = vpop.permute.xlu0 %7928
    %7930 = vrot.lane.b32.xlu0 %v7629, 32
    %v7931 = vpop.permute.xlu0 %7930
    %7932 = vrot.lane.b32.xlu0 %v7630, 32
    %v7933 = vpop.permute.xlu0 %7932
    %7934 = vrot.lane.b32.xlu0 %v7631, 32
    %v7935 = vpop.permute.xlu0 %7934
    %7936 = vrot.lane.b32.xlu0 %v7632, 32
    %v7937 = vpop.permute.xlu0 %7936
    %7938 = vrot.lane.b32.xlu0 %v7633, 32
    %v7939 = vpop.permute.xlu0 %7938
    %7940 = vrot.lane.b32.xlu0 %v7634, 32
    %v7941 = vpop.permute.xlu0 %7940
    %7942 = vrot.lane.b32.xlu0 %v7635, 32
    %v7943 = vpop.permute.xlu0 %7942
    %7944 = vrot.lane.b32.xlu0 %v7636, 32
    %v7945 = vpop.permute.xlu0 %7944
    %7946 = vrot.lane.b32.xlu0 %v7637, 32
    %v7947 = vpop.permute.xlu0 %7946
    %7948 = vrot.lane.b32.xlu0 %v7638, 32
    %v7949 = vpop.permute.xlu0 %7948
    %7950 = vrot.lane.b32.xlu0 %v7639, 32
    %v7951 = vpop.permute.xlu0 %7950
    %7952 = vrot.lane.b32.xlu0 %v7640, 32
    %v7953 = vpop.permute.xlu0 %7952
    %7954 = vrot.lane.b32.xlu0 %v7641, 32
    %v7955 = vpop.permute.xlu0 %7954
    %7956 = vrot.lane.b32.xlu0 %v7642, 32
    %v7957 = vpop.permute.xlu0 %7956
    %7958 = vrot.lane.b32.xlu0 %v7643, 32
    %v7959 = vpop.permute.xlu0 %7958
    %7960 = vrot.lane.b32.xlu0 %v7644, 32
    %v7961 = vpop.permute.xlu0 %7960
    %7962 = vrot.lane.b32.xlu0 %v7645, 32
    %v7963 = vpop.permute.xlu0 %7962
    %7964 = vrot.lane.b32.xlu0 %v7646, 32
    %v7965 = vpop.permute.xlu0 %7964
    %7966 = vrot.lane.b32.xlu0 %v7647, 32
    %v7967 = vpop.permute.xlu0 %7966
    %7968 = vrot.lane.b32.xlu0 %v7648, 32
    %v7969 = vpop.permute.xlu0 %7968
    %7970 = vrot.lane.b32.xlu0 %v7649, 32
    %v7971 = vpop.permute.xlu0 %7970
    %7972 = vrot.lane.b32.xlu0 %v7650, 32
    %v7973 = vpop.permute.xlu0 %7972
    %7974 = vrot.lane.b32.xlu0 %v7651, 32
    %v7975 = vpop.permute.xlu0 %7974
    %7976 = vrot.lane.b32.xlu0 %v7652, 32
    %v7977 = vpop.permute.xlu0 %7976
    %7978 = vrot.lane.b32.xlu0 %v7653, 32
    %v7979 = vpop.permute.xlu0 %7978
    %7980 = vrot.lane.b32.xlu0 %v7654, 32
    %v7981 = vpop.permute.xlu0 %7980
    %7982 = vrot.lane.b32.xlu0 %v7655, 32
    %v7983 = vpop.permute.xlu0 %7982
    %7984 = vrot.lane.b32.xlu0 %v7656, 32
    %v7985 = vpop.permute.xlu0 %7984
    %7986 = vrot.lane.b32.xlu0 %v7657, 32
    %v7987 = vpop.permute.xlu0 %7986
    %7988 = vrot.lane.b32.xlu0 %v7658, 32
    %v7989 = vpop.permute.xlu0 %7988
    %7990 = vrot.lane.b32.xlu0 %v7659, 32
    %v7991 = vpop.permute.xlu0 %7990
    %7992 = vrot.lane.b32.xlu0 %v7660, 32
    %v7993 = vpop.permute.xlu0 %7992
    %7994 = vrot.lane.b32.xlu0 %v7661, 32
    %v7995 = vpop.permute.xlu0 %7994
    %7996 = vrot.lane.b32.xlu0 %v7662, 32
    %v7997 = vpop.permute.xlu0 %7996
    %7998 = vrot.lane.b32.xlu0 %v7663, 32
    %v7999 = vpop.permute.xlu0 %7998
    %8000 = vrot.lane.b32.xlu0 %v7664, 32
    %v8001 = vpop.permute.xlu0 %8000
    %8002 = vrot.lane.b32.xlu0 %v7665, 32
    %v8003 = vpop.permute.xlu0 %8002
    %8004 = vrot.lane.b32.xlu0 %v7666, 32
    %v8005 = vpop.permute.xlu0 %8004
    %8006 = vrot.lane.b32.xlu0 %v7667, 32
    %v8007 = vpop.permute.xlu0 %8006
    %8008 = vrot.lane.b32.xlu0 %v7668, 32
    %v8009 = vpop.permute.xlu0 %8008
    %8010 = vrot.lane.b32.xlu0 %v7669, 32
    %v8011 = vpop.permute.xlu0 %8010
    %8012 = vrot.lane.b32.xlu0 %v7670, 32
    %v8013 = vpop.permute.xlu0 %8012
    %8014 = vrot.lane.b32.xlu0 %v7671, 32
    %v8015 = vpop.permute.xlu0 %8014
    %8016 = vrot.lane.b32.xlu0 %v7672, 32
    %v8017 = vpop.permute.xlu0 %8016
    %8018 = vrot.lane.b32.xlu0 %v7673, 32
    %v8019 = vpop.permute.xlu0 %8018
    %8020 = vrot.lane.b32.xlu0 %v7674, 32
    %v8021 = vpop.permute.xlu0 %8020
    %8022 = vrot.lane.b32.xlu0 %v7675, 32
    %v8023 = vpop.permute.xlu0 %8022
    %8024 = vrot.lane.b32.xlu0 %v7676, 32
    %v8025 = vpop.permute.xlu0 %8024
    %8026 = vrot.lane.b32.xlu0 %v7677, 32
    %v8027 = vpop.permute.xlu0 %8026
    %8028 = vrot.lane.b32.xlu0 %v7678, 32
    %v8029 = vpop.permute.xlu0 %8028
    %8030 = vrot.lane.b32.xlu0 %v7679, 32
    %v8031 = vpop.permute.xlu0 %8030
    %8032 = vrot.lane.b32.xlu0 %v7680, 32
    %v8033 = vpop.permute.xlu0 %8032
    %8034 = vrot.lane.b32.xlu0 %v7681, 32
    %v8035 = vpop.permute.xlu0 %8034
    %8036 = vrot.lane.b32.xlu0 %v7682, 32
    %v8037 = vpop.permute.xlu0 %8036
    %8038 = vrot.lane.b32.xlu0 %v7683, 32
    %v8039 = vpop.permute.xlu0 %8038
    %8040 = vrot.lane.b32.xlu0 %v7684, 32
    %v8041 = vpop.permute.xlu0 %8040
    %8042 = vrot.lane.b32.xlu0 %v7685, 32
    %v8043 = vpop.permute.xlu0 %8042
    %8044 = vrot.lane.b32.xlu0 %v7686, 32
    %v8045 = vpop.permute.xlu0 %8044
    %8046 = vrot.lane.b32.xlu0 %v7687, 32
    %v8047 = vpop.permute.xlu0 %8046
    %8048 = vrot.lane.b32.xlu0 %v7688, 32
    %v8049 = vpop.permute.xlu0 %8048
    %8050 = vrot.lane.b32.xlu0 %v7689, 32
    %v8051 = vpop.permute.xlu0 %8050
    %8052 = vrot.lane.b32.xlu0 %v7690, 32
    %v8053 = vpop.permute.xlu0 %8052
    %8054 = vrot.lane.b32.xlu0 %v7691, 32
    %v8055 = vpop.permute.xlu0 %8054
    %8056 = vrot.lane.b32.xlu0 %v7692, 32
    %v8057 = vpop.permute.xlu0 %8056
    %8058 = vrot.lane.b32.xlu0 %v7693, 32
    %v8059 = vpop.permute.xlu0 %8058
    %8060 = vrot.lane.b32.xlu0 %v7694, 32
    %v8061 = vpop.permute.xlu0 %8060
    %8062 = vrot.lane.b32.xlu0 %v7695, 32
    %v8063 = vpop.permute.xlu0 %8062
    %8064 = vrot.lane.b32.xlu0 %v7696, 32
    %v8065 = vpop.permute.xlu0 %8064
    %8066 = vrot.lane.b32.xlu0 %v7697, 32
    %v8067 = vpop.permute.xlu0 %8066
    %8068 = vrot.lane.b32.xlu0 %v7698, 32
    %v8069 = vpop.permute.xlu0 %8068
    %8070 = vrot.lane.b32.xlu0 %v7699, 32
    %v8071 = vpop.permute.xlu0 %8070
    %8072 = vrot.lane.b32.xlu0 %v7700, 32
    %v8073 = vpop.permute.xlu0 %8072
    %8074 = vrot.lane.b32.xlu0 %v7701, 32
    %v8075 = vpop.permute.xlu0 %8074
    %8076 = vrot.lane.b32.xlu0 %v7702, 32
    %v8077 = vpop.permute.xlu0 %8076
    %8078 = vrot.lane.b32.xlu0 %v7703, 32
    %v8079 = vpop.permute.xlu0 %8078
    %8080 = vrot.lane.b32.xlu0 %v7704, 32
    %v8081 = vpop.permute.xlu0 %8080
    %8082 = vrot.lane.b32.xlu0 %v7705, 32
    %v8083 = vpop.permute.xlu0 %8082
    %8084 = vrot.lane.b32.xlu0 %v7706, 32
    %v8085 = vpop.permute.xlu0 %8084
    %8086 = vrot.lane.b32.xlu0 %v7707, 32
    %v8087 = vpop.permute.xlu0 %8086
    %8088 = vrot.lane.b32.xlu0 %v7708, 32
    %v8089 = vpop.permute.xlu0 %8088
    %8090 = vrot.lane.b32.xlu0 %v7709, 32
    %v8091 = vpop.permute.xlu0 %8090
    %8092 = vrot.lane.b32.xlu0 %v7710, 32
    %v8093 = vpop.permute.xlu0 %8092
    %8094 = vrot.lane.b32.xlu0 %v7711, 32
    %v8095 = vpop.permute.xlu0 %8094
    %v8224 = vmul.f32 %v5536, %v7841
    %v8225 = vmul.f32 %v5537, %v7843
    %v8226 = vmul.f32 %v5538, %v7845
    %v8227 = vmul.f32 %v5539, %v7847
    %v8228 = vmul.f32 %v5540, %v7849
    %v8229 = vmul.f32 %v5541, %v7851
    %v8230 = vmul.f32 %v5542, %v7853
    %v8231 = vmul.f32 %v5543, %v7855
    %v8232 = vmul.f32 %v5544, %v7857
    %v8233 = vmul.f32 %v5545, %v7859
    %v8234 = vmul.f32 %v5546, %v7861
    %v8235 = vmul.f32 %v5547, %v7863
    %v8236 = vmul.f32 %v5548, %v7865
    %v8237 = vmul.f32 %v5549, %v7867
    %v8238 = vmul.f32 %v5550, %v7869
    %v8239 = vmul.f32 %v5551, %v7871
    %v8240 = vmul.f32 %v5552, %v7873
    %v8241 = vmul.f32 %v5553, %v7875
    %v8242 = vmul.f32 %v5554, %v7877
    %v8243 = vmul.f32 %v5555, %v7879
    %v8244 = vmul.f32 %v5556, %v7881
    %v8245 = vmul.f32 %v5557, %v7883
    %v8246 = vmul.f32 %v5558, %v7885
    %v8247 = vmul.f32 %v5559, %v7887
    %v8248 = vmul.f32 %v5560, %v7889
    %v8249 = vmul.f32 %v5561, %v7891
    %v8250 = vmul.f32 %v5562, %v7893
    %v8251 = vmul.f32 %v5563, %v7895
    %v8252 = vmul.f32 %v5564, %v7897
    %v8253 = vmul.f32 %v5565, %v7899
    %v8254 = vmul.f32 %v5566, %v7901
    %v8255 = vmul.f32 %v5567, %v7903
    %v8256 = vmul.f32 %v5568, %v7905
    %v8257 = vmul.f32 %v5569, %v7907
    %v8258 = vmul.f32 %v5570, %v7909
    %v8259 = vmul.f32 %v5571, %v7911
    %v8260 = vmul.f32 %v5572, %v7913
    %v8261 = vmul.f32 %v5573, %v7915
    %v8262 = vmul.f32 %v5574, %v7917
    %v8263 = vmul.f32 %v5575, %v7919
    %v8264 = vmul.f32 %v5576, %v7921
    %v8265 = vmul.f32 %v5577, %v7923
    %v8266 = vmul.f32 %v5578, %v7925
    %v8267 = vmul.f32 %v5579, %v7927
    %v8268 = vmul.f32 %v5580, %v7929
    %v8269 = vmul.f32 %v5581, %v7931
    %v8270 = vmul.f32 %v5582, %v7933
    %v8271 = vmul.f32 %v5583, %v7935
    %v8272 = vmul.f32 %v5584, %v7937
    %v8273 = vmul.f32 %v5585, %v7939
    %v8274 = vmul.f32 %v5586, %v7941
    %v8275 = vmul.f32 %v5587, %v7943
    %v8276 = vmul.f32 %v5588, %v7945
    %v8277 = vmul.f32 %v5589, %v7947
    %v8278 = vmul.f32 %v5590, %v7949
    %v8279 = vmul.f32 %v5591, %v7951
    %v8280 = vmul.f32 %v5592, %v7953
    %v8281 = vmul.f32 %v5593, %v7955
    %v8282 = vmul.f32 %v5594, %v7957
    %v8283 = vmul.f32 %v5595, %v7959
    %v8284 = vmul.f32 %v5596, %v7961
    %v8285 = vmul.f32 %v5597, %v7963
    %v8286 = vmul.f32 %v5598, %v7965
    %v8287 = vmul.f32 %v5599, %v7967
    %v8288 = vmul.f32 %v5600, %v7969
    %v8289 = vmul.f32 %v5601, %v7971
    %v8290 = vmul.f32 %v5602, %v7973
    %v8291 = vmul.f32 %v5603, %v7975
    %v8292 = vmul.f32 %v5604, %v7977
    %v8293 = vmul.f32 %v5605, %v7979
    %v8294 = vmul.f32 %v5606, %v7981
    %v8295 = vmul.f32 %v5607, %v7983
    %v8296 = vmul.f32 %v5608, %v7985
    %v8297 = vmul.f32 %v5609, %v7987
    %v8298 = vmul.f32 %v5610, %v7989
    %v8299 = vmul.f32 %v5611, %v7991
    %v8300 = vmul.f32 %v5612, %v7993
    %v8301 = vmul.f32 %v5613, %v7995
    %v8302 = vmul.f32 %v5614, %v7997
    %v8303 = vmul.f32 %v5615, %v7999
    %v8304 = vmul.f32 %v5616, %v8001
    %v8305 = vmul.f32 %v5617, %v8003
    %v8306 = vmul.f32 %v5618, %v8005
    %v8307 = vmul.f32 %v5619, %v8007
    %v8308 = vmul.f32 %v5620, %v8009
    %v8309 = vmul.f32 %v5621, %v8011
    %v8310 = vmul.f32 %v5622, %v8013
    %v8311 = vmul.f32 %v5623, %v8015
    %v8312 = vmul.f32 %v5624, %v8017
    %v8313 = vmul.f32 %v5625, %v8019
    %v8314 = vmul.f32 %v5626, %v8021
    %v8315 = vmul.f32 %v5627, %v8023
    %v8316 = vmul.f32 %v5628, %v8025
    %v8317 = vmul.f32 %v5629, %v8027
    %v8318 = vmul.f32 %v5630, %v8029
    %v8319 = vmul.f32 %v5631, %v8031
    %v8320 = vmul.f32 %v5632, %v8033
    %v8321 = vmul.f32 %v5633, %v8035
    %v8322 = vmul.f32 %v5634, %v8037
    %v8323 = vmul.f32 %v5635, %v8039
    %v8324 = vmul.f32 %v5636, %v8041
    %v8325 = vmul.f32 %v5637, %v8043
    %v8326 = vmul.f32 %v5638, %v8045
    %v8327 = vmul.f32 %v5639, %v8047
    %v8328 = vmul.f32 %v5640, %v8049
    %v8329 = vmul.f32 %v5641, %v8051
    %v8330 = vmul.f32 %v5642, %v8053
    %v8331 = vmul.f32 %v5643, %v8055
    %v8332 = vmul.f32 %v5644, %v8057
    %v8333 = vmul.f32 %v5645, %v8059
    %v8334 = vmul.f32 %v5646, %v8061
    %v8335 = vmul.f32 %v5647, %v8063
    %v8336 = vmul.f32 %v5648, %v8065
    %v8337 = vmul.f32 %v5649, %v8067
    %v8338 = vmul.f32 %v5650, %v8069
    %v8339 = vmul.f32 %v5651, %v8071
    %v8340 = vmul.f32 %v5652, %v8073
    %v8341 = vmul.f32 %v5653, %v8075
    %v8342 = vmul.f32 %v5654, %v8077
    %v8343 = vmul.f32 %v5655, %v8079
    %v8344 = vmul.f32 %v5656, %v8081
    %v8345 = vmul.f32 %v5657, %v8083
    %v8346 = vmul.f32 %v5658, %v8085
    %v8347 = vmul.f32 %v5659, %v8087
    %v8348 = vmul.f32 %v5660, %v8089
    %v8349 = vmul.f32 %v5661, %v8091
    %v8350 = vmul.f32 %v5662, %v8093
    %v8351 = vmul.f32 %v5663, %v8095
    %8480 = vrot.lane.b32.xlu0 %v8224, 96
    %v8481 = vpop.permute.xlu0 %8480
    %8482 = vrot.lane.b32.xlu0 %v8225, 96
    %v8483 = vpop.permute.xlu0 %8482
    %8484 = vrot.lane.b32.xlu0 %v8226, 96
    %v8485 = vpop.permute.xlu0 %8484
    %8486 = vrot.lane.b32.xlu0 %v8227, 96
    %v8487 = vpop.permute.xlu0 %8486
    %8488 = vrot.lane.b32.xlu0 %v8228, 96
    %v8489 = vpop.permute.xlu0 %8488
    %8490 = vrot.lane.b32.xlu0 %v8229, 96
    %v8491 = vpop.permute.xlu0 %8490
    %8492 = vrot.lane.b32.xlu0 %v8230, 96
    %v8493 = vpop.permute.xlu0 %8492
    %8494 = vrot.lane.b32.xlu0 %v8231, 96
    %v8495 = vpop.permute.xlu0 %8494
    %8496 = vrot.lane.b32.xlu0 %v8232, 96
    %v8497 = vpop.permute.xlu0 %8496
    %8498 = vrot.lane.b32.xlu0 %v8233, 96
    %v8499 = vpop.permute.xlu0 %8498
    %8500 = vrot.lane.b32.xlu0 %v8234, 96
    %v8501 = vpop.permute.xlu0 %8500
    %8502 = vrot.lane.b32.xlu0 %v8235, 96
    %v8503 = vpop.permute.xlu0 %8502
    %8504 = vrot.lane.b32.xlu0 %v8236, 96
    %v8505 = vpop.permute.xlu0 %8504
    %8506 = vrot.lane.b32.xlu0 %v8237, 96
    %v8507 = vpop.permute.xlu0 %8506
    %8508 = vrot.lane.b32.xlu0 %v8238, 96
    %v8509 = vpop.permute.xlu0 %8508
    %8510 = vrot.lane.b32.xlu0 %v8239, 96
    %v8511 = vpop.permute.xlu0 %8510
    %8512 = vrot.lane.b32.xlu0 %v8240, 96
    %v8513 = vpop.permute.xlu0 %8512
    %8514 = vrot.lane.b32.xlu0 %v8241, 96
    %v8515 = vpop.permute.xlu0 %8514
    %8516 = vrot.lane.b32.xlu0 %v8242, 96
    %v8517 = vpop.permute.xlu0 %8516
    %8518 = vrot.lane.b32.xlu0 %v8243, 96
    %v8519 = vpop.permute.xlu0 %8518
    %8520 = vrot.lane.b32.xlu0 %v8244, 96
    %v8521 = vpop.permute.xlu0 %8520
    %8522 = vrot.lane.b32.xlu0 %v8245, 96
    %v8523 = vpop.permute.xlu0 %8522
    %8524 = vrot.lane.b32.xlu0 %v8246, 96
    %v8525 = vpop.permute.xlu0 %8524
    %8526 = vrot.lane.b32.xlu0 %v8247, 96
    %v8527 = vpop.permute.xlu0 %8526
    %8528 = vrot.lane.b32.xlu0 %v8248, 96
    %v8529 = vpop.permute.xlu0 %8528
    %8530 = vrot.lane.b32.xlu0 %v8249, 96
    %v8531 = vpop.permute.xlu0 %8530
    %8532 = vrot.lane.b32.xlu0 %v8250, 96
    %v8533 = vpop.permute.xlu0 %8532
    %8534 = vrot.lane.b32.xlu0 %v8251, 96
    %v8535 = vpop.permute.xlu0 %8534
    %8536 = vrot.lane.b32.xlu0 %v8252, 96
    %v8537 = vpop.permute.xlu0 %8536
    %8538 = vrot.lane.b32.xlu0 %v8253, 96
    %v8539 = vpop.permute.xlu0 %8538
    %8540 = vrot.lane.b32.xlu0 %v8254, 96
    %v8541 = vpop.permute.xlu0 %8540
    %8542 = vrot.lane.b32.xlu0 %v8255, 96
    %v8543 = vpop.permute.xlu0 %8542
    %8544 = vrot.lane.b32.xlu0 %v8256, 96
    %v8545 = vpop.permute.xlu0 %8544
    %8546 = vrot.lane.b32.xlu0 %v8257, 96
    %v8547 = vpop.permute.xlu0 %8546
    %8548 = vrot.lane.b32.xlu0 %v8258, 96
    %v8549 = vpop.permute.xlu0 %8548
    %8550 = vrot.lane.b32.xlu0 %v8259, 96
    %v8551 = vpop.permute.xlu0 %8550
    %8552 = vrot.lane.b32.xlu0 %v8260, 96
    %v8553 = vpop.permute.xlu0 %8552
    %8554 = vrot.lane.b32.xlu0 %v8261, 96
    %v8555 = vpop.permute.xlu0 %8554
    %8556 = vrot.lane.b32.xlu0 %v8262, 96
    %v8557 = vpop.permute.xlu0 %8556
    %8558 = vrot.lane.b32.xlu0 %v8263, 96
    %v8559 = vpop.permute.xlu0 %8558
    %8560 = vrot.lane.b32.xlu0 %v8264, 96
    %v8561 = vpop.permute.xlu0 %8560
    %8562 = vrot.lane.b32.xlu0 %v8265, 96
    %v8563 = vpop.permute.xlu0 %8562
    %8564 = vrot.lane.b32.xlu0 %v8266, 96
    %v8565 = vpop.permute.xlu0 %8564
    %8566 = vrot.lane.b32.xlu0 %v8267, 96
    %v8567 = vpop.permute.xlu0 %8566
    %8568 = vrot.lane.b32.xlu0 %v8268, 96
    %v8569 = vpop.permute.xlu0 %8568
    %8570 = vrot.lane.b32.xlu0 %v8269, 96
    %v8571 = vpop.permute.xlu0 %8570
    %8572 = vrot.lane.b32.xlu0 %v8270, 96
    %v8573 = vpop.permute.xlu0 %8572
    %8574 = vrot.lane.b32.xlu0 %v8271, 96
    %v8575 = vpop.permute.xlu0 %8574
    %8576 = vrot.lane.b32.xlu0 %v8272, 96
    %v8577 = vpop.permute.xlu0 %8576
    %8578 = vrot.lane.b32.xlu0 %v8273, 96
    %v8579 = vpop.permute.xlu0 %8578
    %8580 = vrot.lane.b32.xlu0 %v8274, 96
    %v8581 = vpop.permute.xlu0 %8580
    %8582 = vrot.lane.b32.xlu0 %v8275, 96
    %v8583 = vpop.permute.xlu0 %8582
    %8584 = vrot.lane.b32.xlu0 %v8276, 96
    %v8585 = vpop.permute.xlu0 %8584
    %8586 = vrot.lane.b32.xlu0 %v8277, 96
    %v8587 = vpop.permute.xlu0 %8586
    %8588 = vrot.lane.b32.xlu0 %v8278, 96
    %v8589 = vpop.permute.xlu0 %8588
    %8590 = vrot.lane.b32.xlu0 %v8279, 96
    %v8591 = vpop.permute.xlu0 %8590
    %8592 = vrot.lane.b32.xlu0 %v8280, 96
    %v8593 = vpop.permute.xlu0 %8592
    %8594 = vrot.lane.b32.xlu0 %v8281, 96
    %v8595 = vpop.permute.xlu0 %8594
    %8596 = vrot.lane.b32.xlu0 %v8282, 96
    %v8597 = vpop.permute.xlu0 %8596
    %8598 = vrot.lane.b32.xlu0 %v8283, 96
    %v8599 = vpop.permute.xlu0 %8598
    %8600 = vrot.lane.b32.xlu0 %v8284, 96
    %v8601 = vpop.permute.xlu0 %8600
    %8602 = vrot.lane.b32.xlu0 %v8285, 96
    %v8603 = vpop.permute.xlu0 %8602
    %8604 = vrot.lane.b32.xlu0 %v8286, 96
    %v8605 = vpop.permute.xlu0 %8604
    %8606 = vrot.lane.b32.xlu0 %v8287, 96
    %v8607 = vpop.permute.xlu0 %8606
    %8608 = vrot.lane.b32.xlu0 %v8288, 96
    %v8609 = vpop.permute.xlu0 %8608
    %8610 = vrot.lane.b32.xlu0 %v8289, 96
    %v8611 = vpop.permute.xlu0 %8610
    %8612 = vrot.lane.b32.xlu0 %v8290, 96
    %v8613 = vpop.permute.xlu0 %8612
    %8614 = vrot.lane.b32.xlu0 %v8291, 96
    %v8615 = vpop.permute.xlu0 %8614
    %8616 = vrot.lane.b32.xlu0 %v8292, 96
    %v8617 = vpop.permute.xlu0 %8616
    %8618 = vrot.lane.b32.xlu0 %v8293, 96
    %v8619 = vpop.permute.xlu0 %8618
    %8620 = vrot.lane.b32.xlu0 %v8294, 96
    %v8621 = vpop.permute.xlu0 %8620
    %8622 = vrot.lane.b32.xlu0 %v8295, 96
    %v8623 = vpop.permute.xlu0 %8622
    %8624 = vrot.lane.b32.xlu0 %v8296, 96
    %v8625 = vpop.permute.xlu0 %8624
    %8626 = vrot.lane.b32.xlu0 %v8297, 96
    %v8627 = vpop.permute.xlu0 %8626
    %8628 = vrot.lane.b32.xlu0 %v8298, 96
    %v8629 = vpop.permute.xlu0 %8628
    %8630 = vrot.lane.b32.xlu0 %v8299, 96
    %v8631 = vpop.permute.xlu0 %8630
    %8632 = vrot.lane.b32.xlu0 %v8300, 96
    %v8633 = vpop.permute.xlu0 %8632
    %8634 = vrot.lane.b32.xlu0 %v8301, 96
    %v8635 = vpop.permute.xlu0 %8634
    %8636 = vrot.lane.b32.xlu0 %v8302, 96
    %v8637 = vpop.permute.xlu0 %8636
    %8638 = vrot.lane.b32.xlu0 %v8303, 96
    %v8639 = vpop.permute.xlu0 %8638
    %8640 = vrot.lane.b32.xlu0 %v8304, 96
    %v8641 = vpop.permute.xlu0 %8640
    %8642 = vrot.lane.b32.xlu0 %v8305, 96
    %v8643 = vpop.permute.xlu0 %8642
    %8644 = vrot.lane.b32.xlu0 %v8306, 96
    %v8645 = vpop.permute.xlu0 %8644
    %8646 = vrot.lane.b32.xlu0 %v8307, 96
    %v8647 = vpop.permute.xlu0 %8646
    %8648 = vrot.lane.b32.xlu0 %v8308, 96
    %v8649 = vpop.permute.xlu0 %8648
    %8650 = vrot.lane.b32.xlu0 %v8309, 96
    %v8651 = vpop.permute.xlu0 %8650
    %8652 = vrot.lane.b32.xlu0 %v8310, 96
    %v8653 = vpop.permute.xlu0 %8652
    %8654 = vrot.lane.b32.xlu0 %v8311, 96
    %v8655 = vpop.permute.xlu0 %8654
    %8656 = vrot.lane.b32.xlu0 %v8312, 96
    %v8657 = vpop.permute.xlu0 %8656
    %8658 = vrot.lane.b32.xlu0 %v8313, 96
    %v8659 = vpop.permute.xlu0 %8658
    %8660 = vrot.lane.b32.xlu0 %v8314, 96
    %v8661 = vpop.permute.xlu0 %8660
    %8662 = vrot.lane.b32.xlu0 %v8315, 96
    %v8663 = vpop.permute.xlu0 %8662
    %8664 = vrot.lane.b32.xlu0 %v8316, 96
    %v8665 = vpop.permute.xlu0 %8664
    %8666 = vrot.lane.b32.xlu0 %v8317, 96
    %v8667 = vpop.permute.xlu0 %8666
    %8668 = vrot.lane.b32.xlu0 %v8318, 96
    %v8669 = vpop.permute.xlu0 %8668
    %8670 = vrot.lane.b32.xlu0 %v8319, 96
    %v8671 = vpop.permute.xlu0 %8670
    %8672 = vrot.lane.b32.xlu0 %v8320, 96
    %v8673 = vpop.permute.xlu0 %8672
    %8674 = vrot.lane.b32.xlu0 %v8321, 96
    %v8675 = vpop.permute.xlu0 %8674
    %8676 = vrot.lane.b32.xlu0 %v8322, 96
    %v8677 = vpop.permute.xlu0 %8676
    %8678 = vrot.lane.b32.xlu0 %v8323, 96
    %v8679 = vpop.permute.xlu0 %8678
    %8680 = vrot.lane.b32.xlu0 %v8324, 96
    %v8681 = vpop.permute.xlu0 %8680
    %8682 = vrot.lane.b32.xlu0 %v8325, 96
    %v8683 = vpop.permute.xlu0 %8682
    %8684 = vrot.lane.b32.xlu0 %v8326, 96
    %v8685 = vpop.permute.xlu0 %8684
    %8686 = vrot.lane.b32.xlu0 %v8327, 96
    %v8687 = vpop.permute.xlu0 %8686
    %8688 = vrot.lane.b32.xlu0 %v8328, 96
    %v8689 = vpop.permute.xlu0 %8688
    %8690 = vrot.lane.b32.xlu0 %v8329, 96
    %v8691 = vpop.permute.xlu0 %8690
    %8692 = vrot.lane.b32.xlu0 %v8330, 96
    %v8693 = vpop.permute.xlu0 %8692
    %8694 = vrot.lane.b32.xlu0 %v8331, 96
    %v8695 = vpop.permute.xlu0 %8694
    %8696 = vrot.lane.b32.xlu0 %v8332, 96
    %v8697 = vpop.permute.xlu0 %8696
    %8698 = vrot.lane.b32.xlu0 %v8333, 96
    %v8699 = vpop.permute.xlu0 %8698
    %8700 = vrot.lane.b32.xlu0 %v8334, 96
    %v8701 = vpop.permute.xlu0 %8700
    %8702 = vrot.lane.b32.xlu0 %v8335, 96
    %v8703 = vpop.permute.xlu0 %8702
    %8704 = vrot.lane.b32.xlu0 %v8336, 96
    %v8705 = vpop.permute.xlu0 %8704
    %8706 = vrot.lane.b32.xlu0 %v8337, 96
    %v8707 = vpop.permute.xlu0 %8706
    %8708 = vrot.lane.b32.xlu0 %v8338, 96
    %v8709 = vpop.permute.xlu0 %8708
    %8710 = vrot.lane.b32.xlu0 %v8339, 96
    %v8711 = vpop.permute.xlu0 %8710
    %8712 = vrot.lane.b32.xlu0 %v8340, 96
    %v8713 = vpop.permute.xlu0 %8712
    %8714 = vrot.lane.b32.xlu0 %v8341, 96
    %v8715 = vpop.permute.xlu0 %8714
    %8716 = vrot.lane.b32.xlu0 %v8342, 96
    %v8717 = vpop.permute.xlu0 %8716
    %8718 = vrot.lane.b32.xlu0 %v8343, 96
    %v8719 = vpop.permute.xlu0 %8718
    %8720 = vrot.lane.b32.xlu0 %v8344, 96
    %v8721 = vpop.permute.xlu0 %8720
    %8722 = vrot.lane.b32.xlu0 %v8345, 96
    %v8723 = vpop.permute.xlu0 %8722
    %8724 = vrot.lane.b32.xlu0 %v8346, 96
    %v8725 = vpop.permute.xlu0 %8724
    %8726 = vrot.lane.b32.xlu0 %v8347, 96
    %v8727 = vpop.permute.xlu0 %8726
    %8728 = vrot.lane.b32.xlu0 %v8348, 96
    %v8729 = vpop.permute.xlu0 %8728
    %8730 = vrot.lane.b32.xlu0 %v8349, 96
    %v8731 = vpop.permute.xlu0 %8730
    %8732 = vrot.lane.b32.xlu0 %v8350, 96
    %v8733 = vpop.permute.xlu0 %8732
    %8734 = vrot.lane.b32.xlu0 %v8351, 96
    %v8735 = vpop.permute.xlu0 %8734
    %v8864 = vadd.f32 %v7456, %v8481
    %v8865 = vadd.f32 %v7457, %v8483
    %v8866 = vadd.f32 %v7458, %v8485
    %v8867 = vadd.f32 %v7459, %v8487
    %v8868 = vadd.f32 %v7460, %v8489
    %v8869 = vadd.f32 %v7461, %v8491
    %v8870 = vadd.f32 %v7462, %v8493
    %v8871 = vadd.f32 %v7463, %v8495
    %v8872 = vadd.f32 %v7464, %v8497
    %v8873 = vadd.f32 %v7465, %v8499
    %v8874 = vadd.f32 %v7466, %v8501
    %v8875 = vadd.f32 %v7467, %v8503
    %v8876 = vadd.f32 %v7468, %v8505
    %v8877 = vadd.f32 %v7469, %v8507
    %v8878 = vadd.f32 %v7470, %v8509
    %v8879 = vadd.f32 %v7471, %v8511
    %v8880 = vadd.f32 %v7472, %v8513
    %v8881 = vadd.f32 %v7473, %v8515
    %v8882 = vadd.f32 %v7474, %v8517
    %v8883 = vadd.f32 %v7475, %v8519
    %v8884 = vadd.f32 %v7476, %v8521
    %v8885 = vadd.f32 %v7477, %v8523
    %v8886 = vadd.f32 %v7478, %v8525
    %v8887 = vadd.f32 %v7479, %v8527
    %v8888 = vadd.f32 %v7480, %v8529
    %v8889 = vadd.f32 %v7481, %v8531
    %v8890 = vadd.f32 %v7482, %v8533
    %v8891 = vadd.f32 %v7483, %v8535
    %v8892 = vadd.f32 %v7484, %v8537
    %v8893 = vadd.f32 %v7485, %v8539
    %v8894 = vadd.f32 %v7486, %v8541
    %v8895 = vadd.f32 %v7487, %v8543
    %v8896 = vadd.f32 %v7488, %v8545
    %v8897 = vadd.f32 %v7489, %v8547
    %v8898 = vadd.f32 %v7490, %v8549
    %v8899 = vadd.f32 %v7491, %v8551
    %v8900 = vadd.f32 %v7492, %v8553
    %v8901 = vadd.f32 %v7493, %v8555
    %v8902 = vadd.f32 %v7494, %v8557
    %v8903 = vadd.f32 %v7495, %v8559
    %v8904 = vadd.f32 %v7496, %v8561
    %v8905 = vadd.f32 %v7497, %v8563
    %v8906 = vadd.f32 %v7498, %v8565
    %v8907 = vadd.f32 %v7499, %v8567
    %v8908 = vadd.f32 %v7500, %v8569
    %v8909 = vadd.f32 %v7501, %v8571
    %v8910 = vadd.f32 %v7502, %v8573
    %v8911 = vadd.f32 %v7503, %v8575
    %v8912 = vadd.f32 %v7504, %v8577
    %v8913 = vadd.f32 %v7505, %v8579
    %v8914 = vadd.f32 %v7506, %v8581
    %v8915 = vadd.f32 %v7507, %v8583
    %v8916 = vadd.f32 %v7508, %v8585
    %v8917 = vadd.f32 %v7509, %v8587
    %v8918 = vadd.f32 %v7510, %v8589
    %v8919 = vadd.f32 %v7511, %v8591
    %v8920 = vadd.f32 %v7512, %v8593
    %v8921 = vadd.f32 %v7513, %v8595
    %v8922 = vadd.f32 %v7514, %v8597
    %v8923 = vadd.f32 %v7515, %v8599
    %v8924 = vadd.f32 %v7516, %v8601
    %v8925 = vadd.f32 %v7517, %v8603
    %v8926 = vadd.f32 %v7518, %v8605
    %v8927 = vadd.f32 %v7519, %v8607
    %v8928 = vadd.f32 %v7520, %v8609
    %v8929 = vadd.f32 %v7521, %v8611
    %v8930 = vadd.f32 %v7522, %v8613
    %v8931 = vadd.f32 %v7523, %v8615
    %v8932 = vadd.f32 %v7524, %v8617
    %v8933 = vadd.f32 %v7525, %v8619
    %v8934 = vadd.f32 %v7526, %v8621
    %v8935 = vadd.f32 %v7527, %v8623
    %v8936 = vadd.f32 %v7528, %v8625
    %v8937 = vadd.f32 %v7529, %v8627
    %v8938 = vadd.f32 %v7530, %v8629
    %v8939 = vadd.f32 %v7531, %v8631
    %v8940 = vadd.f32 %v7532, %v8633
    %v8941 = vadd.f32 %v7533, %v8635
    %v8942 = vadd.f32 %v7534, %v8637
    %v8943 = vadd.f32 %v7535, %v8639
    %v8944 = vadd.f32 %v7536, %v8641
    %v8945 = vadd.f32 %v7537, %v8643
    %v8946 = vadd.f32 %v7538, %v8645
    %v8947 = vadd.f32 %v7539, %v8647
    %v8948 = vadd.f32 %v7540, %v8649
    %v8949 = vadd.f32 %v7541, %v8651
    %v8950 = vadd.f32 %v7542, %v8653
    %v8951 = vadd.f32 %v7543, %v8655
    %v8952 = vadd.f32 %v7544, %v8657
    %v8953 = vadd.f32 %v7545, %v8659
    %v8954 = vadd.f32 %v7546, %v8661
    %v8955 = vadd.f32 %v7547, %v8663
    %v8956 = vadd.f32 %v7548, %v8665
    %v8957 = vadd.f32 %v7549, %v8667
    %v8958 = vadd.f32 %v7550, %v8669
    %v8959 = vadd.f32 %v7551, %v8671
    %v8960 = vadd.f32 %v7552, %v8673
    %v8961 = vadd.f32 %v7553, %v8675
    %v8962 = vadd.f32 %v7554, %v8677
    %v8963 = vadd.f32 %v7555, %v8679
    %v8964 = vadd.f32 %v7556, %v8681
    %v8965 = vadd.f32 %v7557, %v8683
    %v8966 = vadd.f32 %v7558, %v8685
    %v8967 = vadd.f32 %v7559, %v8687
    %v8968 = vadd.f32 %v7560, %v8689
    %v8969 = vadd.f32 %v7561, %v8691
    %v8970 = vadd.f32 %v7562, %v8693
    %v8971 = vadd.f32 %v7563, %v8695
    %v8972 = vadd.f32 %v7564, %v8697
    %v8973 = vadd.f32 %v7565, %v8699
    %v8974 = vadd.f32 %v7566, %v8701
    %v8975 = vadd.f32 %v7567, %v8703
    %v8976 = vadd.f32 %v7568, %v8705
    %v8977 = vadd.f32 %v7569, %v8707
    %v8978 = vadd.f32 %v7570, %v8709
    %v8979 = vadd.f32 %v7571, %v8711
    %v8980 = vadd.f32 %v7572, %v8713
    %v8981 = vadd.f32 %v7573, %v8715
    %v8982 = vadd.f32 %v7574, %v8717
    %v8983 = vadd.f32 %v7575, %v8719
    %v8984 = vadd.f32 %v7576, %v8721
    %v8985 = vadd.f32 %v7577, %v8723
    %v8986 = vadd.f32 %v7578, %v8725
    %v8987 = vadd.f32 %v7579, %v8727
    %v8988 = vadd.f32 %v7580, %v8729
    %v8989 = vadd.f32 %v7581, %v8731
    %v8990 = vadd.f32 %v7582, %v8733
    %v8991 = vadd.f32 %v7583, %v8735
    %v8992 = vmul.f32 %v7328, %v1696
    %v8993 = vmul.f32 %v7329, %v1697
    %v8994 = vmul.f32 %v7330, %v1698
    %v8995 = vmul.f32 %v7331, %v1699
    %v8996 = vmul.f32 %v7332, %v1700
    %v8997 = vmul.f32 %v7333, %v1701
    %v8998 = vmul.f32 %v7334, %v1702
    %v8999 = vmul.f32 %v7335, %v1703
    %v9000 = vmul.f32 %v7336, %v1704
    %v9001 = vmul.f32 %v7337, %v1705
    %v9002 = vmul.f32 %v7338, %v1706
    %v9003 = vmul.f32 %v7339, %v1707
    %v9004 = vmul.f32 %v7340, %v1708
    %v9005 = vmul.f32 %v7341, %v1709
    %v9006 = vmul.f32 %v7342, %v1710
    %v9007 = vmul.f32 %v7343, %v1711
    %v9008 = vmul.f32 %v7344, %v1712
    %v9009 = vmul.f32 %v7345, %v1713
    %v9010 = vmul.f32 %v7346, %v1714
    %v9011 = vmul.f32 %v7347, %v1715
    %v9012 = vmul.f32 %v7348, %v1716
    %v9013 = vmul.f32 %v7349, %v1717
    %v9014 = vmul.f32 %v7350, %v1718
    %v9015 = vmul.f32 %v7351, %v1719
    %v9016 = vmul.f32 %v7352, %v1720
    %v9017 = vmul.f32 %v7353, %v1721
    %v9018 = vmul.f32 %v7354, %v1722
    %v9019 = vmul.f32 %v7355, %v1723
    %v9020 = vmul.f32 %v7356, %v1724
    %v9021 = vmul.f32 %v7357, %v1725
    %v9022 = vmul.f32 %v7358, %v1726
    %v9023 = vmul.f32 %v7359, %v1727
    %v9024 = vmul.f32 %v7360, %v1728
    %v9025 = vmul.f32 %v7361, %v1729
    %v9026 = vmul.f32 %v7362, %v1730
    %v9027 = vmul.f32 %v7363, %v1731
    %v9028 = vmul.f32 %v7364, %v1732
    %v9029 = vmul.f32 %v7365, %v1733
    %v9030 = vmul.f32 %v7366, %v1734
    %v9031 = vmul.f32 %v7367, %v1735
    %v9032 = vmul.f32 %v7368, %v1736
    %v9033 = vmul.f32 %v7369, %v1737
    %v9034 = vmul.f32 %v7370, %v1738
    %v9035 = vmul.f32 %v7371, %v1739
    %v9036 = vmul.f32 %v7372, %v1740
    %v9037 = vmul.f32 %v7373, %v1741
    %v9038 = vmul.f32 %v7374, %v1742
    %v9039 = vmul.f32 %v7375, %v1743
    %v9040 = vmul.f32 %v7376, %v1744
    %v9041 = vmul.f32 %v7377, %v1745
    %v9042 = vmul.f32 %v7378, %v1746
    %v9043 = vmul.f32 %v7379, %v1747
    %v9044 = vmul.f32 %v7380, %v1748
    %v9045 = vmul.f32 %v7381, %v1749
    %v9046 = vmul.f32 %v7382, %v1750
    %v9047 = vmul.f32 %v7383, %v1751
    %v9048 = vmul.f32 %v7384, %v1752
    %v9049 = vmul.f32 %v7385, %v1753
    %v9050 = vmul.f32 %v7386, %v1754
    %v9051 = vmul.f32 %v7387, %v1755
    %v9052 = vmul.f32 %v7388, %v1756
    %v9053 = vmul.f32 %v7389, %v1757
    %v9054 = vmul.f32 %v7390, %v1758
    %v9055 = vmul.f32 %v7391, %v1759
    %v9056 = vmul.f32 %v7392, %v1760
    %v9057 = vmul.f32 %v7393, %v1761
    %v9058 = vmul.f32 %v7394, %v1762
    %v9059 = vmul.f32 %v7395, %v1763
    %v9060 = vmul.f32 %v7396, %v1764
    %v9061 = vmul.f32 %v7397, %v1765
    %v9062 = vmul.f32 %v7398, %v1766
    %v9063 = vmul.f32 %v7399, %v1767
    %v9064 = vmul.f32 %v7400, %v1768
    %v9065 = vmul.f32 %v7401, %v1769
    %v9066 = vmul.f32 %v7402, %v1770
    %v9067 = vmul.f32 %v7403, %v1771
    %v9068 = vmul.f32 %v7404, %v1772
    %v9069 = vmul.f32 %v7405, %v1773
    %v9070 = vmul.f32 %v7406, %v1774
    %v9071 = vmul.f32 %v7407, %v1775
    %v9072 = vmul.f32 %v7408, %v1776
    %v9073 = vmul.f32 %v7409, %v1777
    %v9074 = vmul.f32 %v7410, %v1778
    %v9075 = vmul.f32 %v7411, %v1779
    %v9076 = vmul.f32 %v7412, %v1780
    %v9077 = vmul.f32 %v7413, %v1781
    %v9078 = vmul.f32 %v7414, %v1782
    %v9079 = vmul.f32 %v7415, %v1783
    %v9080 = vmul.f32 %v7416, %v1784
    %v9081 = vmul.f32 %v7417, %v1785
    %v9082 = vmul.f32 %v7418, %v1786
    %v9083 = vmul.f32 %v7419, %v1787
    %v9084 = vmul.f32 %v7420, %v1788
    %v9085 = vmul.f32 %v7421, %v1789
    %v9086 = vmul.f32 %v7422, %v1790
    %v9087 = vmul.f32 %v7423, %v1791
    %v9088 = vmul.f32 %v7424, %v1792
    %v9089 = vmul.f32 %v7425, %v1793
    %v9090 = vmul.f32 %v7426, %v1794
    %v9091 = vmul.f32 %v7427, %v1795
    %v9092 = vmul.f32 %v7428, %v1796
    %v9093 = vmul.f32 %v7429, %v1797
    %v9094 = vmul.f32 %v7430, %v1798
    %v9095 = vmul.f32 %v7431, %v1799
    %v9096 = vmul.f32 %v7432, %v1800
    %v9097 = vmul.f32 %v7433, %v1801
    %v9098 = vmul.f32 %v7434, %v1802
    %v9099 = vmul.f32 %v7435, %v1803
    %v9100 = vmul.f32 %v7436, %v1804
    %v9101 = vmul.f32 %v7437, %v1805
    %v9102 = vmul.f32 %v7438, %v1806
    %v9103 = vmul.f32 %v7439, %v1807
    %v9104 = vmul.f32 %v7440, %v1808
    %v9105 = vmul.f32 %v7441, %v1809
    %v9106 = vmul.f32 %v7442, %v1810
    %v9107 = vmul.f32 %v7443, %v1811
    %v9108 = vmul.f32 %v7444, %v1812
    %v9109 = vmul.f32 %v7445, %v1813
    %v9110 = vmul.f32 %v7446, %v1814
    %v9111 = vmul.f32 %v7447, %v1815
    %v9112 = vmul.f32 %v7448, %v1816
    %v9113 = vmul.f32 %v7449, %v1817
    %v9114 = vmul.f32 %v7450, %v1818
    %v9115 = vmul.f32 %v7451, %v1819
    %v9116 = vmul.f32 %v7452, %v1820
    %v9117 = vmul.f32 %v7453, %v1821
    %v9118 = vmul.f32 %v7454, %v1822
    %v9119 = vmul.f32 %v7455, %v1823
    %v9120 = vmul.f32 %v6432, %v7841
    %v9121 = vmul.f32 %v6433, %v7843
    %v9122 = vmul.f32 %v6434, %v7845
    %v9123 = vmul.f32 %v6435, %v7847
    %v9124 = vmul.f32 %v6436, %v7849
    %v9125 = vmul.f32 %v6437, %v7851
    %v9126 = vmul.f32 %v6438, %v7853
    %v9127 = vmul.f32 %v6439, %v7855
    %v9128 = vmul.f32 %v6440, %v7857
    %v9129 = vmul.f32 %v6441, %v7859
    %v9130 = vmul.f32 %v6442, %v7861
    %v9131 = vmul.f32 %v6443, %v7863
    %v9132 = vmul.f32 %v6444, %v7865
    %v9133 = vmul.f32 %v6445, %v7867
    %v9134 = vmul.f32 %v6446, %v7869
    %v9135 = vmul.f32 %v6447, %v7871
    %v9136 = vmul.f32 %v6448, %v7873
    %v9137 = vmul.f32 %v6449, %v7875
    %v9138 = vmul.f32 %v6450, %v7877
    %v9139 = vmul.f32 %v6451, %v7879
    %v9140 = vmul.f32 %v6452, %v7881
    %v9141 = vmul.f32 %v6453, %v7883
    %v9142 = vmul.f32 %v6454, %v7885
    %v9143 = vmul.f32 %v6455, %v7887
    %v9144 = vmul.f32 %v6456, %v7889
    %v9145 = vmul.f32 %v6457, %v7891
    %v9146 = vmul.f32 %v6458, %v7893
    %v9147 = vmul.f32 %v6459, %v7895
    %v9148 = vmul.f32 %v6460, %v7897
    %v9149 = vmul.f32 %v6461, %v7899
    %v9150 = vmul.f32 %v6462, %v7901
    %v9151 = vmul.f32 %v6463, %v7903
    %v9152 = vmul.f32 %v6464, %v7905
    %v9153 = vmul.f32 %v6465, %v7907
    %v9154 = vmul.f32 %v6466, %v7909
    %v9155 = vmul.f32 %v6467, %v7911
    %v9156 = vmul.f32 %v6468, %v7913
    %v9157 = vmul.f32 %v6469, %v7915
    %v9158 = vmul.f32 %v6470, %v7917
    %v9159 = vmul.f32 %v6471, %v7919
    %v9160 = vmul.f32 %v6472, %v7921
    %v9161 = vmul.f32 %v6473, %v7923
    %v9162 = vmul.f32 %v6474, %v7925
    %v9163 = vmul.f32 %v6475, %v7927
    %v9164 = vmul.f32 %v6476, %v7929
    %v9165 = vmul.f32 %v6477, %v7931
    %v9166 = vmul.f32 %v6478, %v7933
    %v9167 = vmul.f32 %v6479, %v7935
    %v9168 = vmul.f32 %v6480, %v7937
    %v9169 = vmul.f32 %v6481, %v7939
    %v9170 = vmul.f32 %v6482, %v7941
    %v9171 = vmul.f32 %v6483, %v7943
    %v9172 = vmul.f32 %v6484, %v7945
    %v9173 = vmul.f32 %v6485, %v7947
    %v9174 = vmul.f32 %v6486, %v7949
    %v9175 = vmul.f32 %v6487, %v7951
    %v9176 = vmul.f32 %v6488, %v7953
    %v9177 = vmul.f32 %v6489, %v7955
    %v9178 = vmul.f32 %v6490, %v7957
    %v9179 = vmul.f32 %v6491, %v7959
    %v9180 = vmul.f32 %v6492, %v7961
    %v9181 = vmul.f32 %v6493, %v7963
    %v9182 = vmul.f32 %v6494, %v7965
    %v9183 = vmul.f32 %v6495, %v7967
    %v9184 = vmul.f32 %v6496, %v7969
    %v9185 = vmul.f32 %v6497, %v7971
    %v9186 = vmul.f32 %v6498, %v7973
    %v9187 = vmul.f32 %v6499, %v7975
    %v9188 = vmul.f32 %v6500, %v7977
    %v9189 = vmul.f32 %v6501, %v7979
    %v9190 = vmul.f32 %v6502, %v7981
    %v9191 = vmul.f32 %v6503, %v7983
    %v9192 = vmul.f32 %v6504, %v7985
    %v9193 = vmul.f32 %v6505, %v7987
    %v9194 = vmul.f32 %v6506, %v7989
    %v9195 = vmul.f32 %v6507, %v7991
    %v9196 = vmul.f32 %v6508, %v7993
    %v9197 = vmul.f32 %v6509, %v7995
    %v9198 = vmul.f32 %v6510, %v7997
    %v9199 = vmul.f32 %v6511, %v7999
    %v9200 = vmul.f32 %v6512, %v8001
    %v9201 = vmul.f32 %v6513, %v8003
    %v9202 = vmul.f32 %v6514, %v8005
    %v9203 = vmul.f32 %v6515, %v8007
    %v9204 = vmul.f32 %v6516, %v8009
    %v9205 = vmul.f32 %v6517, %v8011
    %v9206 = vmul.f32 %v6518, %v8013
    %v9207 = vmul.f32 %v6519, %v8015
    %v9208 = vmul.f32 %v6520, %v8017
    %v9209 = vmul.f32 %v6521, %v8019
    %v9210 = vmul.f32 %v6522, %v8021
    %v9211 = vmul.f32 %v6523, %v8023
    %v9212 = vmul.f32 %v6524, %v8025
    %v9213 = vmul.f32 %v6525, %v8027
    %v9214 = vmul.f32 %v6526, %v8029
    %v9215 = vmul.f32 %v6527, %v8031
    %v9216 = vmul.f32 %v6528, %v8033
    %v9217 = vmul.f32 %v6529, %v8035
    %v9218 = vmul.f32 %v6530, %v8037
    %v9219 = vmul.f32 %v6531, %v8039
    %v9220 = vmul.f32 %v6532, %v8041
    %v9221 = vmul.f32 %v6533, %v8043
    %v9222 = vmul.f32 %v6534, %v8045
    %v9223 = vmul.f32 %v6535, %v8047
    %v9224 = vmul.f32 %v6536, %v8049
    %v9225 = vmul.f32 %v6537, %v8051
    %v9226 = vmul.f32 %v6538, %v8053
    %v9227 = vmul.f32 %v6539, %v8055
    %v9228 = vmul.f32 %v6540, %v8057
    %v9229 = vmul.f32 %v6541, %v8059
    %v9230 = vmul.f32 %v6542, %v8061
    %v9231 = vmul.f32 %v6543, %v8063
    %v9232 = vmul.f32 %v6544, %v8065
    %v9233 = vmul.f32 %v6545, %v8067
    %v9234 = vmul.f32 %v6546, %v8069
    %v9235 = vmul.f32 %v6547, %v8071
    %v9236 = vmul.f32 %v6548, %v8073
    %v9237 = vmul.f32 %v6549, %v8075
    %v9238 = vmul.f32 %v6550, %v8077
    %v9239 = vmul.f32 %v6551, %v8079
    %v9240 = vmul.f32 %v6552, %v8081
    %v9241 = vmul.f32 %v6553, %v8083
    %v9242 = vmul.f32 %v6554, %v8085
    %v9243 = vmul.f32 %v6555, %v8087
    %v9244 = vmul.f32 %v6556, %v8089
    %v9245 = vmul.f32 %v6557, %v8091
    %v9246 = vmul.f32 %v6558, %v8093
    %v9247 = vmul.f32 %v6559, %v8095
    %9376 = vrot.lane.b32.xlu0 %v9120, 96
    %v9377 = vpop.permute.xlu0 %9376
    %9378 = vrot.lane.b32.xlu0 %v9121, 96
    %v9379 = vpop.permute.xlu0 %9378
    %9380 = vrot.lane.b32.xlu0 %v9122, 96
    %v9381 = vpop.permute.xlu0 %9380
    %9382 = vrot.lane.b32.xlu0 %v9123, 96
    %v9383 = vpop.permute.xlu0 %9382
    %9384 = vrot.lane.b32.xlu0 %v9124, 96
    %v9385 = vpop.permute.xlu0 %9384
    %9386 = vrot.lane.b32.xlu0 %v9125, 96
    %v9387 = vpop.permute.xlu0 %9386
    %9388 = vrot.lane.b32.xlu0 %v9126, 96
    %v9389 = vpop.permute.xlu0 %9388
    %9390 = vrot.lane.b32.xlu0 %v9127, 96
    %v9391 = vpop.permute.xlu0 %9390
    %9392 = vrot.lane.b32.xlu0 %v9128, 96
    %v9393 = vpop.permute.xlu0 %9392
    %9394 = vrot.lane.b32.xlu0 %v9129, 96
    %v9395 = vpop.permute.xlu0 %9394
    %9396 = vrot.lane.b32.xlu0 %v9130, 96
    %v9397 = vpop.permute.xlu0 %9396
    %9398 = vrot.lane.b32.xlu0 %v9131, 96
    %v9399 = vpop.permute.xlu0 %9398
    %9400 = vrot.lane.b32.xlu0 %v9132, 96
    %v9401 = vpop.permute.xlu0 %9400
    %9402 = vrot.lane.b32.xlu0 %v9133, 96
    %v9403 = vpop.permute.xlu0 %9402
    %9404 = vrot.lane.b32.xlu0 %v9134, 96
    %v9405 = vpop.permute.xlu0 %9404
    %9406 = vrot.lane.b32.xlu0 %v9135, 96
    %v9407 = vpop.permute.xlu0 %9406
    %9408 = vrot.lane.b32.xlu0 %v9136, 96
    %v9409 = vpop.permute.xlu0 %9408
    %9410 = vrot.lane.b32.xlu0 %v9137, 96
    %v9411 = vpop.permute.xlu0 %9410
    %9412 = vrot.lane.b32.xlu0 %v9138, 96
    %v9413 = vpop.permute.xlu0 %9412
    %9414 = vrot.lane.b32.xlu0 %v9139, 96
    %v9415 = vpop.permute.xlu0 %9414
    %9416 = vrot.lane.b32.xlu0 %v9140, 96
    %v9417 = vpop.permute.xlu0 %9416
    %9418 = vrot.lane.b32.xlu0 %v9141, 96
    %v9419 = vpop.permute.xlu0 %9418
    %9420 = vrot.lane.b32.xlu0 %v9142, 96
    %v9421 = vpop.permute.xlu0 %9420
    %9422 = vrot.lane.b32.xlu0 %v9143, 96
    %v9423 = vpop.permute.xlu0 %9422
    %9424 = vrot.lane.b32.xlu0 %v9144, 96
    %v9425 = vpop.permute.xlu0 %9424
    %9426 = vrot.lane.b32.xlu0 %v9145, 96
    %v9427 = vpop.permute.xlu0 %9426
    %9428 = vrot.lane.b32.xlu0 %v9146, 96
    %v9429 = vpop.permute.xlu0 %9428
    %9430 = vrot.lane.b32.xlu0 %v9147, 96
    %v9431 = vpop.permute.xlu0 %9430
    %9432 = vrot.lane.b32.xlu0 %v9148, 96
    %v9433 = vpop.permute.xlu0 %9432
    %9434 = vrot.lane.b32.xlu0 %v9149, 96
    %v9435 = vpop.permute.xlu0 %9434
    %9436 = vrot.lane.b32.xlu0 %v9150, 96
    %v9437 = vpop.permute.xlu0 %9436
    %9438 = vrot.lane.b32.xlu0 %v9151, 96
    %v9439 = vpop.permute.xlu0 %9438
    %9440 = vrot.lane.b32.xlu0 %v9152, 96
    %v9441 = vpop.permute.xlu0 %9440
    %9442 = vrot.lane.b32.xlu0 %v9153, 96
    %v9443 = vpop.permute.xlu0 %9442
    %9444 = vrot.lane.b32.xlu0 %v9154, 96
    %v9445 = vpop.permute.xlu0 %9444
    %9446 = vrot.lane.b32.xlu0 %v9155, 96
    %v9447 = vpop.permute.xlu0 %9446
    %9448 = vrot.lane.b32.xlu0 %v9156, 96
    %v9449 = vpop.permute.xlu0 %9448
    %9450 = vrot.lane.b32.xlu0 %v9157, 96
    %v9451 = vpop.permute.xlu0 %9450
    %9452 = vrot.lane.b32.xlu0 %v9158, 96
    %v9453 = vpop.permute.xlu0 %9452
    %9454 = vrot.lane.b32.xlu0 %v9159, 96
    %v9455 = vpop.permute.xlu0 %9454
    %9456 = vrot.lane.b32.xlu0 %v9160, 96
    %v9457 = vpop.permute.xlu0 %9456
    %9458 = vrot.lane.b32.xlu0 %v9161, 96
    %v9459 = vpop.permute.xlu0 %9458
    %9460 = vrot.lane.b32.xlu0 %v9162, 96
    %v9461 = vpop.permute.xlu0 %9460
    %9462 = vrot.lane.b32.xlu0 %v9163, 96
    %v9463 = vpop.permute.xlu0 %9462
    %9464 = vrot.lane.b32.xlu0 %v9164, 96
    %v9465 = vpop.permute.xlu0 %9464
    %9466 = vrot.lane.b32.xlu0 %v9165, 96
    %v9467 = vpop.permute.xlu0 %9466
    %9468 = vrot.lane.b32.xlu0 %v9166, 96
    %v9469 = vpop.permute.xlu0 %9468
    %9470 = vrot.lane.b32.xlu0 %v9167, 96
    %v9471 = vpop.permute.xlu0 %9470
    %9472 = vrot.lane.b32.xlu0 %v9168, 96
    %v9473 = vpop.permute.xlu0 %9472
    %9474 = vrot.lane.b32.xlu0 %v9169, 96
    %v9475 = vpop.permute.xlu0 %9474
    %9476 = vrot.lane.b32.xlu0 %v9170, 96
    %v9477 = vpop.permute.xlu0 %9476
    %9478 = vrot.lane.b32.xlu0 %v9171, 96
    %v9479 = vpop.permute.xlu0 %9478
    %9480 = vrot.lane.b32.xlu0 %v9172, 96
    %v9481 = vpop.permute.xlu0 %9480
    %9482 = vrot.lane.b32.xlu0 %v9173, 96
    %v9483 = vpop.permute.xlu0 %9482
    %9484 = vrot.lane.b32.xlu0 %v9174, 96
    %v9485 = vpop.permute.xlu0 %9484
    %9486 = vrot.lane.b32.xlu0 %v9175, 96
    %v9487 = vpop.permute.xlu0 %9486
    %9488 = vrot.lane.b32.xlu0 %v9176, 96
    %v9489 = vpop.permute.xlu0 %9488
    %9490 = vrot.lane.b32.xlu0 %v9177, 96
    %v9491 = vpop.permute.xlu0 %9490
    %9492 = vrot.lane.b32.xlu0 %v9178, 96
    %v9493 = vpop.permute.xlu0 %9492
    %9494 = vrot.lane.b32.xlu0 %v9179, 96
    %v9495 = vpop.permute.xlu0 %9494
    %9496 = vrot.lane.b32.xlu0 %v9180, 96
    %v9497 = vpop.permute.xlu0 %9496
    %9498 = vrot.lane.b32.xlu0 %v9181, 96
    %v9499 = vpop.permute.xlu0 %9498
    %9500 = vrot.lane.b32.xlu0 %v9182, 96
    %v9501 = vpop.permute.xlu0 %9500
    %9502 = vrot.lane.b32.xlu0 %v9183, 96
    %v9503 = vpop.permute.xlu0 %9502
    %9504 = vrot.lane.b32.xlu0 %v9184, 96
    %v9505 = vpop.permute.xlu0 %9504
    %9506 = vrot.lane.b32.xlu0 %v9185, 96
    %v9507 = vpop.permute.xlu0 %9506
    %9508 = vrot.lane.b32.xlu0 %v9186, 96
    %v9509 = vpop.permute.xlu0 %9508
    %9510 = vrot.lane.b32.xlu0 %v9187, 96
    %v9511 = vpop.permute.xlu0 %9510
    %9512 = vrot.lane.b32.xlu0 %v9188, 96
    %v9513 = vpop.permute.xlu0 %9512
    %9514 = vrot.lane.b32.xlu0 %v9189, 96
    %v9515 = vpop.permute.xlu0 %9514
    %9516 = vrot.lane.b32.xlu0 %v9190, 96
    %v9517 = vpop.permute.xlu0 %9516
    %9518 = vrot.lane.b32.xlu0 %v9191, 96
    %v9519 = vpop.permute.xlu0 %9518
    %9520 = vrot.lane.b32.xlu0 %v9192, 96
    %v9521 = vpop.permute.xlu0 %9520
    %9522 = vrot.lane.b32.xlu0 %v9193, 96
    %v9523 = vpop.permute.xlu0 %9522
    %9524 = vrot.lane.b32.xlu0 %v9194, 96
    %v9525 = vpop.permute.xlu0 %9524
    %9526 = vrot.lane.b32.xlu0 %v9195, 96
    %v9527 = vpop.permute.xlu0 %9526
    %9528 = vrot.lane.b32.xlu0 %v9196, 96
    %v9529 = vpop.permute.xlu0 %9528
    %9530 = vrot.lane.b32.xlu0 %v9197, 96
    %v9531 = vpop.permute.xlu0 %9530
    %9532 = vrot.lane.b32.xlu0 %v9198, 96
    %v9533 = vpop.permute.xlu0 %9532
    %9534 = vrot.lane.b32.xlu0 %v9199, 96
    %v9535 = vpop.permute.xlu0 %9534
    %9536 = vrot.lane.b32.xlu0 %v9200, 96
    %v9537 = vpop.permute.xlu0 %9536
    %9538 = vrot.lane.b32.xlu0 %v9201, 96
    %v9539 = vpop.permute.xlu0 %9538
    %9540 = vrot.lane.b32.xlu0 %v9202, 96
    %v9541 = vpop.permute.xlu0 %9540
    %9542 = vrot.lane.b32.xlu0 %v9203, 96
    %v9543 = vpop.permute.xlu0 %9542
    %9544 = vrot.lane.b32.xlu0 %v9204, 96
    %v9545 = vpop.permute.xlu0 %9544
    %9546 = vrot.lane.b32.xlu0 %v9205, 96
    %v9547 = vpop.permute.xlu0 %9546
    %9548 = vrot.lane.b32.xlu0 %v9206, 96
    %v9549 = vpop.permute.xlu0 %9548
    %9550 = vrot.lane.b32.xlu0 %v9207, 96
    %v9551 = vpop.permute.xlu0 %9550
    %9552 = vrot.lane.b32.xlu0 %v9208, 96
    %v9553 = vpop.permute.xlu0 %9552
    %9554 = vrot.lane.b32.xlu0 %v9209, 96
    %v9555 = vpop.permute.xlu0 %9554
    %9556 = vrot.lane.b32.xlu0 %v9210, 96
    %v9557 = vpop.permute.xlu0 %9556
    %9558 = vrot.lane.b32.xlu0 %v9211, 96
    %v9559 = vpop.permute.xlu0 %9558
    %9560 = vrot.lane.b32.xlu0 %v9212, 96
    %v9561 = vpop.permute.xlu0 %9560
    %9562 = vrot.lane.b32.xlu0 %v9213, 96
    %v9563 = vpop.permute.xlu0 %9562
    %9564 = vrot.lane.b32.xlu0 %v9214, 96
    %v9565 = vpop.permute.xlu0 %9564
    %9566 = vrot.lane.b32.xlu0 %v9215, 96
    %v9567 = vpop.permute.xlu0 %9566
    %9568 = vrot.lane.b32.xlu0 %v9216, 96
    %v9569 = vpop.permute.xlu0 %9568
    %9570 = vrot.lane.b32.xlu0 %v9217, 96
    %v9571 = vpop.permute.xlu0 %9570
    %9572 = vrot.lane.b32.xlu0 %v9218, 96
    %v9573 = vpop.permute.xlu0 %9572
    %9574 = vrot.lane.b32.xlu0 %v9219, 96
    %v9575 = vpop.permute.xlu0 %9574
    %9576 = vrot.lane.b32.xlu0 %v9220, 96
    %v9577 = vpop.permute.xlu0 %9576
    %9578 = vrot.lane.b32.xlu0 %v9221, 96
    %v9579 = vpop.permute.xlu0 %9578
    %9580 = vrot.lane.b32.xlu0 %v9222, 96
    %v9581 = vpop.permute.xlu0 %9580
    %9582 = vrot.lane.b32.xlu0 %v9223, 96
    %v9583 = vpop.permute.xlu0 %9582
    %9584 = vrot.lane.b32.xlu0 %v9224, 96
    %v9585 = vpop.permute.xlu0 %9584
    %9586 = vrot.lane.b32.xlu0 %v9225, 96
    %v9587 = vpop.permute.xlu0 %9586
    %9588 = vrot.lane.b32.xlu0 %v9226, 96
    %v9589 = vpop.permute.xlu0 %9588
    %9590 = vrot.lane.b32.xlu0 %v9227, 96
    %v9591 = vpop.permute.xlu0 %9590
    %9592 = vrot.lane.b32.xlu0 %v9228, 96
    %v9593 = vpop.permute.xlu0 %9592
    %9594 = vrot.lane.b32.xlu0 %v9229, 96
    %v9595 = vpop.permute.xlu0 %9594
    %9596 = vrot.lane.b32.xlu0 %v9230, 96
    %v9597 = vpop.permute.xlu0 %9596
    %9598 = vrot.lane.b32.xlu0 %v9231, 96
    %v9599 = vpop.permute.xlu0 %9598
    %9600 = vrot.lane.b32.xlu0 %v9232, 96
    %v9601 = vpop.permute.xlu0 %9600
    %9602 = vrot.lane.b32.xlu0 %v9233, 96
    %v9603 = vpop.permute.xlu0 %9602
    %9604 = vrot.lane.b32.xlu0 %v9234, 96
    %v9605 = vpop.permute.xlu0 %9604
    %9606 = vrot.lane.b32.xlu0 %v9235, 96
    %v9607 = vpop.permute.xlu0 %9606
    %9608 = vrot.lane.b32.xlu0 %v9236, 96
    %v9609 = vpop.permute.xlu0 %9608
    %9610 = vrot.lane.b32.xlu0 %v9237, 96
    %v9611 = vpop.permute.xlu0 %9610
    %9612 = vrot.lane.b32.xlu0 %v9238, 96
    %v9613 = vpop.permute.xlu0 %9612
    %9614 = vrot.lane.b32.xlu0 %v9239, 96
    %v9615 = vpop.permute.xlu0 %9614
    %9616 = vrot.lane.b32.xlu0 %v9240, 96
    %v9617 = vpop.permute.xlu0 %9616
    %9618 = vrot.lane.b32.xlu0 %v9241, 96
    %v9619 = vpop.permute.xlu0 %9618
    %9620 = vrot.lane.b32.xlu0 %v9242, 96
    %v9621 = vpop.permute.xlu0 %9620
    %9622 = vrot.lane.b32.xlu0 %v9243, 96
    %v9623 = vpop.permute.xlu0 %9622
    %9624 = vrot.lane.b32.xlu0 %v9244, 96
    %v9625 = vpop.permute.xlu0 %9624
    %9626 = vrot.lane.b32.xlu0 %v9245, 96
    %v9627 = vpop.permute.xlu0 %9626
    %9628 = vrot.lane.b32.xlu0 %v9246, 96
    %v9629 = vpop.permute.xlu0 %9628
    %9630 = vrot.lane.b32.xlu0 %v9247, 96
    %v9631 = vpop.permute.xlu0 %9630
    %v9760 = vadd.f32 %v8992, %v9377
    %v9761 = vadd.f32 %v8993, %v9379
    %v9762 = vadd.f32 %v8994, %v9381
    %v9763 = vadd.f32 %v8995, %v9383
    %v9764 = vadd.f32 %v8996, %v9385
    %v9765 = vadd.f32 %v8997, %v9387
    %v9766 = vadd.f32 %v8998, %v9389
    %v9767 = vadd.f32 %v8999, %v9391
    %v9768 = vadd.f32 %v9000, %v9393
    %v9769 = vadd.f32 %v9001, %v9395
    %v9770 = vadd.f32 %v9002, %v9397
    %v9771 = vadd.f32 %v9003, %v9399
    %v9772 = vadd.f32 %v9004, %v9401
    %v9773 = vadd.f32 %v9005, %v9403
    %v9774 = vadd.f32 %v9006, %v9405
    %v9775 = vadd.f32 %v9007, %v9407
    %v9776 = vadd.f32 %v9008, %v9409
    %v9777 = vadd.f32 %v9009, %v9411
    %v9778 = vadd.f32 %v9010, %v9413
    %v9779 = vadd.f32 %v9011, %v9415
    %v9780 = vadd.f32 %v9012, %v9417
    %v9781 = vadd.f32 %v9013, %v9419
    %v9782 = vadd.f32 %v9014, %v9421
    %v9783 = vadd.f32 %v9015, %v9423
    %v9784 = vadd.f32 %v9016, %v9425
    %v9785 = vadd.f32 %v9017, %v9427
    %v9786 = vadd.f32 %v9018, %v9429
    %v9787 = vadd.f32 %v9019, %v9431
    %v9788 = vadd.f32 %v9020, %v9433
    %v9789 = vadd.f32 %v9021, %v9435
    %v9790 = vadd.f32 %v9022, %v9437
    %v9791 = vadd.f32 %v9023, %v9439
    %v9792 = vadd.f32 %v9024, %v9441
    %v9793 = vadd.f32 %v9025, %v9443
    %v9794 = vadd.f32 %v9026, %v9445
    %v9795 = vadd.f32 %v9027, %v9447
    %v9796 = vadd.f32 %v9028, %v9449
    %v9797 = vadd.f32 %v9029, %v9451
    %v9798 = vadd.f32 %v9030, %v9453
    %v9799 = vadd.f32 %v9031, %v9455
    %v9800 = vadd.f32 %v9032, %v9457
    %v9801 = vadd.f32 %v9033, %v9459
    %v9802 = vadd.f32 %v9034, %v9461
    %v9803 = vadd.f32 %v9035, %v9463
    %v9804 = vadd.f32 %v9036, %v9465
    %v9805 = vadd.f32 %v9037, %v9467
    %v9806 = vadd.f32 %v9038, %v9469
    %v9807 = vadd.f32 %v9039, %v9471
    %v9808 = vadd.f32 %v9040, %v9473
    %v9809 = vadd.f32 %v9041, %v9475
    %v9810 = vadd.f32 %v9042, %v9477
    %v9811 = vadd.f32 %v9043, %v9479
    %v9812 = vadd.f32 %v9044, %v9481
    %v9813 = vadd.f32 %v9045, %v9483
    %v9814 = vadd.f32 %v9046, %v9485
    %v9815 = vadd.f32 %v9047, %v9487
    %v9816 = vadd.f32 %v9048, %v9489
    %v9817 = vadd.f32 %v9049, %v9491
    %v9818 = vadd.f32 %v9050, %v9493
    %v9819 = vadd.f32 %v9051, %v9495
    %v9820 = vadd.f32 %v9052, %v9497
    %v9821 = vadd.f32 %v9053, %v9499
    %v9822 = vadd.f32 %v9054, %v9501
    %v9823 = vadd.f32 %v9055, %v9503
    %v9824 = vadd.f32 %v9056, %v9505
    %v9825 = vadd.f32 %v9057, %v9507
    %v9826 = vadd.f32 %v9058, %v9509
    %v9827 = vadd.f32 %v9059, %v9511
    %v9828 = vadd.f32 %v9060, %v9513
    %v9829 = vadd.f32 %v9061, %v9515
    %v9830 = vadd.f32 %v9062, %v9517
    %v9831 = vadd.f32 %v9063, %v9519
    %v9832 = vadd.f32 %v9064, %v9521
    %v9833 = vadd.f32 %v9065, %v9523
    %v9834 = vadd.f32 %v9066, %v9525
    %v9835 = vadd.f32 %v9067, %v9527
    %v9836 = vadd.f32 %v9068, %v9529
    %v9837 = vadd.f32 %v9069, %v9531
    %v9838 = vadd.f32 %v9070, %v9533
    %v9839 = vadd.f32 %v9071, %v9535
    %v9840 = vadd.f32 %v9072, %v9537
    %v9841 = vadd.f32 %v9073, %v9539
    %v9842 = vadd.f32 %v9074, %v9541
    %v9843 = vadd.f32 %v9075, %v9543
    %v9844 = vadd.f32 %v9076, %v9545
    %v9845 = vadd.f32 %v9077, %v9547
    %v9846 = vadd.f32 %v9078, %v9549
    %v9847 = vadd.f32 %v9079, %v9551
    %v9848 = vadd.f32 %v9080, %v9553
    %v9849 = vadd.f32 %v9081, %v9555
    %v9850 = vadd.f32 %v9082, %v9557
    %v9851 = vadd.f32 %v9083, %v9559
    %v9852 = vadd.f32 %v9084, %v9561
    %v9853 = vadd.f32 %v9085, %v9563
    %v9854 = vadd.f32 %v9086, %v9565
    %v9855 = vadd.f32 %v9087, %v9567
    %v9856 = vadd.f32 %v9088, %v9569
    %v9857 = vadd.f32 %v9089, %v9571
    %v9858 = vadd.f32 %v9090, %v9573
    %v9859 = vadd.f32 %v9091, %v9575
    %v9860 = vadd.f32 %v9092, %v9577
    %v9861 = vadd.f32 %v9093, %v9579
    %v9862 = vadd.f32 %v9094, %v9581
    %v9863 = vadd.f32 %v9095, %v9583
    %v9864 = vadd.f32 %v9096, %v9585
    %v9865 = vadd.f32 %v9097, %v9587
    %v9866 = vadd.f32 %v9098, %v9589
    %v9867 = vadd.f32 %v9099, %v9591
    %v9868 = vadd.f32 %v9100, %v9593
    %v9869 = vadd.f32 %v9101, %v9595
    %v9870 = vadd.f32 %v9102, %v9597
    %v9871 = vadd.f32 %v9103, %v9599
    %v9872 = vadd.f32 %v9104, %v9601
    %v9873 = vadd.f32 %v9105, %v9603
    %v9874 = vadd.f32 %v9106, %v9605
    %v9875 = vadd.f32 %v9107, %v9607
    %v9876 = vadd.f32 %v9108, %v9609
    %v9877 = vadd.f32 %v9109, %v9611
    %v9878 = vadd.f32 %v9110, %v9613
    %v9879 = vadd.f32 %v9111, %v9615
    %v9880 = vadd.f32 %v9112, %v9617
    %v9881 = vadd.f32 %v9113, %v9619
    %v9882 = vadd.f32 %v9114, %v9621
    %v9883 = vadd.f32 %v9115, %v9623
    %v9884 = vadd.f32 %v9116, %v9625
    %v9885 = vadd.f32 %v9117, %v9627
    %v9886 = vadd.f32 %v9118, %v9629
    %v9887 = vadd.f32 %v9119, %v9631
    %v9888 = vmul.f32 %v8864, %v2208
    %v9889 = vmul.f32 %v8865, %v2209
    %v9890 = vmul.f32 %v8866, %v2210
    %v9891 = vmul.f32 %v8867, %v2211
    %v9892 = vmul.f32 %v8868, %v2212
    %v9893 = vmul.f32 %v8869, %v2213
    %v9894 = vmul.f32 %v8870, %v2214
    %v9895 = vmul.f32 %v8871, %v2215
    %v9896 = vmul.f32 %v8872, %v2216
    %v9897 = vmul.f32 %v8873, %v2217
    %v9898 = vmul.f32 %v8874, %v2218
    %v9899 = vmul.f32 %v8875, %v2219
    %v9900 = vmul.f32 %v8876, %v2220
    %v9901 = vmul.f32 %v8877, %v2221
    %v9902 = vmul.f32 %v8878, %v2222
    %v9903 = vmul.f32 %v8879, %v2223
    %v9904 = vmul.f32 %v8880, %v2224
    %v9905 = vmul.f32 %v8881, %v2225
    %v9906 = vmul.f32 %v8882, %v2226
    %v9907 = vmul.f32 %v8883, %v2227
    %v9908 = vmul.f32 %v8884, %v2228
    %v9909 = vmul.f32 %v8885, %v2229
    %v9910 = vmul.f32 %v8886, %v2230
    %v9911 = vmul.f32 %v8887, %v2231
    %v9912 = vmul.f32 %v8888, %v2232
    %v9913 = vmul.f32 %v8889, %v2233
    %v9914 = vmul.f32 %v8890, %v2234
    %v9915 = vmul.f32 %v8891, %v2235
    %v9916 = vmul.f32 %v8892, %v2236
    %v9917 = vmul.f32 %v8893, %v2237
    %v9918 = vmul.f32 %v8894, %v2238
    %v9919 = vmul.f32 %v8895, %v2239
    %v9920 = vmul.f32 %v8896, %v2240
    %v9921 = vmul.f32 %v8897, %v2241
    %v9922 = vmul.f32 %v8898, %v2242
    %v9923 = vmul.f32 %v8899, %v2243
    %v9924 = vmul.f32 %v8900, %v2244
    %v9925 = vmul.f32 %v8901, %v2245
    %v9926 = vmul.f32 %v8902, %v2246
    %v9927 = vmul.f32 %v8903, %v2247
    %v9928 = vmul.f32 %v8904, %v2248
    %v9929 = vmul.f32 %v8905, %v2249
    %v9930 = vmul.f32 %v8906, %v2250
    %v9931 = vmul.f32 %v8907, %v2251
    %v9932 = vmul.f32 %v8908, %v2252
    %v9933 = vmul.f32 %v8909, %v2253
    %v9934 = vmul.f32 %v8910, %v2254
    %v9935 = vmul.f32 %v8911, %v2255
    %v9936 = vmul.f32 %v8912, %v2256
    %v9937 = vmul.f32 %v8913, %v2257
    %v9938 = vmul.f32 %v8914, %v2258
    %v9939 = vmul.f32 %v8915, %v2259
    %v9940 = vmul.f32 %v8916, %v2260
    %v9941 = vmul.f32 %v8917, %v2261
    %v9942 = vmul.f32 %v8918, %v2262
    %v9943 = vmul.f32 %v8919, %v2263
    %v9944 = vmul.f32 %v8920, %v2264
    %v9945 = vmul.f32 %v8921, %v2265
    %v9946 = vmul.f32 %v8922, %v2266
    %v9947 = vmul.f32 %v8923, %v2267
    %v9948 = vmul.f32 %v8924, %v2268
    %v9949 = vmul.f32 %v8925, %v2269
    %v9950 = vmul.f32 %v8926, %v2270
    %v9951 = vmul.f32 %v8927, %v2271
    %v9952 = vmul.f32 %v8928, %v2272
    %v9953 = vmul.f32 %v8929, %v2273
    %v9954 = vmul.f32 %v8930, %v2274
    %v9955 = vmul.f32 %v8931, %v2275
    %v9956 = vmul.f32 %v8932, %v2276
    %v9957 = vmul.f32 %v8933, %v2277
    %v9958 = vmul.f32 %v8934, %v2278
    %v9959 = vmul.f32 %v8935, %v2279
    %v9960 = vmul.f32 %v8936, %v2280
    %v9961 = vmul.f32 %v8937, %v2281
    %v9962 = vmul.f32 %v8938, %v2282
    %v9963 = vmul.f32 %v8939, %v2283
    %v9964 = vmul.f32 %v8940, %v2284
    %v9965 = vmul.f32 %v8941, %v2285
    %v9966 = vmul.f32 %v8942, %v2286
    %v9967 = vmul.f32 %v8943, %v2287
    %v9968 = vmul.f32 %v8944, %v2288
    %v9969 = vmul.f32 %v8945, %v2289
    %v9970 = vmul.f32 %v8946, %v2290
    %v9971 = vmul.f32 %v8947, %v2291
    %v9972 = vmul.f32 %v8948, %v2292
    %v9973 = vmul.f32 %v8949, %v2293
    %v9974 = vmul.f32 %v8950, %v2294
    %v9975 = vmul.f32 %v8951, %v2295
    %v9976 = vmul.f32 %v8952, %v2296
    %v9977 = vmul.f32 %v8953, %v2297
    %v9978 = vmul.f32 %v8954, %v2298
    %v9979 = vmul.f32 %v8955, %v2299
    %v9980 = vmul.f32 %v8956, %v2300
    %v9981 = vmul.f32 %v8957, %v2301
    %v9982 = vmul.f32 %v8958, %v2302
    %v9983 = vmul.f32 %v8959, %v2303
    %v9984 = vmul.f32 %v8960, %v2304
    %v9985 = vmul.f32 %v8961, %v2305
    %v9986 = vmul.f32 %v8962, %v2306
    %v9987 = vmul.f32 %v8963, %v2307
    %v9988 = vmul.f32 %v8964, %v2308
    %v9989 = vmul.f32 %v8965, %v2309
    %v9990 = vmul.f32 %v8966, %v2310
    %v9991 = vmul.f32 %v8967, %v2311
    %v9992 = vmul.f32 %v8968, %v2312
    %v9993 = vmul.f32 %v8969, %v2313
    %v9994 = vmul.f32 %v8970, %v2314
    %v9995 = vmul.f32 %v8971, %v2315
    %v9996 = vmul.f32 %v8972, %v2316
    %v9997 = vmul.f32 %v8973, %v2317
    %v9998 = vmul.f32 %v8974, %v2318
    %v9999 = vmul.f32 %v8975, %v2319
    %v10000 = vmul.f32 %v8976, %v2320
    %v10001 = vmul.f32 %v8977, %v2321
    %v10002 = vmul.f32 %v8978, %v2322
    %v10003 = vmul.f32 %v8979, %v2323
    %v10004 = vmul.f32 %v8980, %v2324
    %v10005 = vmul.f32 %v8981, %v2325
    %v10006 = vmul.f32 %v8982, %v2326
    %v10007 = vmul.f32 %v8983, %v2327
    %v10008 = vmul.f32 %v8984, %v2328
    %v10009 = vmul.f32 %v8985, %v2329
    %v10010 = vmul.f32 %v8986, %v2330
    %v10011 = vmul.f32 %v8987, %v2331
    %v10012 = vmul.f32 %v8988, %v2332
    %v10013 = vmul.f32 %v8989, %v2333
    %v10014 = vmul.f32 %v8990, %v2334
    %v10015 = vmul.f32 %v8991, %v2335
    %v10016 = vsub.f32 1.0, %v2208
    %v10017 = vsub.f32 1.0, %v2209
    %v10018 = vsub.f32 1.0, %v2210
    %v10019 = vsub.f32 1.0, %v2211
    %v10020 = vsub.f32 1.0, %v2212
    %v10021 = vsub.f32 1.0, %v2213
    %v10022 = vsub.f32 1.0, %v2214
    %v10023 = vsub.f32 1.0, %v2215
    %v10024 = vsub.f32 1.0, %v2216
    %v10025 = vsub.f32 1.0, %v2217
    %v10026 = vsub.f32 1.0, %v2218
    %v10027 = vsub.f32 1.0, %v2219
    %v10028 = vsub.f32 1.0, %v2220
    %v10029 = vsub.f32 1.0, %v2221
    %v10030 = vsub.f32 1.0, %v2222
    %v10031 = vsub.f32 1.0, %v2223
    %v10032 = vsub.f32 1.0, %v2224
    %v10033 = vsub.f32 1.0, %v2225
    %v10034 = vsub.f32 1.0, %v2226
    %v10035 = vsub.f32 1.0, %v2227
    %v10036 = vsub.f32 1.0, %v2228
    %v10037 = vsub.f32 1.0, %v2229
    %v10038 = vsub.f32 1.0, %v2230
    %v10039 = vsub.f32 1.0, %v2231
    %v10040 = vsub.f32 1.0, %v2232
    %v10041 = vsub.f32 1.0, %v2233
    %v10042 = vsub.f32 1.0, %v2234
    %v10043 = vsub.f32 1.0, %v2235
    %v10044 = vsub.f32 1.0, %v2236
    %v10045 = vsub.f32 1.0, %v2237
    %v10046 = vsub.f32 1.0, %v2238
    %v10047 = vsub.f32 1.0, %v2239
    %v10048 = vsub.f32 1.0, %v2240
    %v10049 = vsub.f32 1.0, %v2241
    %v10050 = vsub.f32 1.0, %v2242
    %v10051 = vsub.f32 1.0, %v2243
    %v10052 = vsub.f32 1.0, %v2244
    %v10053 = vsub.f32 1.0, %v2245
    %v10054 = vsub.f32 1.0, %v2246
    %v10055 = vsub.f32 1.0, %v2247
    %v10056 = vsub.f32 1.0, %v2248
    %v10057 = vsub.f32 1.0, %v2249
    %v10058 = vsub.f32 1.0, %v2250
    %v10059 = vsub.f32 1.0, %v2251
    %v10060 = vsub.f32 1.0, %v2252
    %v10061 = vsub.f32 1.0, %v2253
    %v10062 = vsub.f32 1.0, %v2254
    %v10063 = vsub.f32 1.0, %v2255
    %v10064 = vsub.f32 1.0, %v2256
    %v10065 = vsub.f32 1.0, %v2257
    %v10066 = vsub.f32 1.0, %v2258
    %v10067 = vsub.f32 1.0, %v2259
    %v10068 = vsub.f32 1.0, %v2260
    %v10069 = vsub.f32 1.0, %v2261
    %v10070 = vsub.f32 1.0, %v2262
    %v10071 = vsub.f32 1.0, %v2263
    %v10072 = vsub.f32 1.0, %v2264
    %v10073 = vsub.f32 1.0, %v2265
    %v10074 = vsub.f32 1.0, %v2266
    %v10075 = vsub.f32 1.0, %v2267
    %v10076 = vsub.f32 1.0, %v2268
    %v10077 = vsub.f32 1.0, %v2269
    %v10078 = vsub.f32 1.0, %v2270
    %v10079 = vsub.f32 1.0, %v2271
    %v10080 = vsub.f32 1.0, %v2272
    %v10081 = vsub.f32 1.0, %v2273
    %v10082 = vsub.f32 1.0, %v2274
    %v10083 = vsub.f32 1.0, %v2275
    %v10084 = vsub.f32 1.0, %v2276
    %v10085 = vsub.f32 1.0, %v2277
    %v10086 = vsub.f32 1.0, %v2278
    %v10087 = vsub.f32 1.0, %v2279
    %v10088 = vsub.f32 1.0, %v2280
    %v10089 = vsub.f32 1.0, %v2281
    %v10090 = vsub.f32 1.0, %v2282
    %v10091 = vsub.f32 1.0, %v2283
    %v10092 = vsub.f32 1.0, %v2284
    %v10093 = vsub.f32 1.0, %v2285
    %v10094 = vsub.f32 1.0, %v2286
    %v10095 = vsub.f32 1.0, %v2287
    %v10096 = vsub.f32 1.0, %v2288
    %v10097 = vsub.f32 1.0, %v2289
    %v10098 = vsub.f32 1.0, %v2290
    %v10099 = vsub.f32 1.0, %v2291
    %v10100 = vsub.f32 1.0, %v2292
    %v10101 = vsub.f32 1.0, %v2293
    %v10102 = vsub.f32 1.0, %v2294
    %v10103 = vsub.f32 1.0, %v2295
    %v10104 = vsub.f32 1.0, %v2296
    %v10105 = vsub.f32 1.0, %v2297
    %v10106 = vsub.f32 1.0, %v2298
    %v10107 = vsub.f32 1.0, %v2299
    %v10108 = vsub.f32 1.0, %v2300
    %v10109 = vsub.f32 1.0, %v2301
    %v10110 = vsub.f32 1.0, %v2302
    %v10111 = vsub.f32 1.0, %v2303
    %v10112 = vsub.f32 1.0, %v2304
    %v10113 = vsub.f32 1.0, %v2305
    %v10114 = vsub.f32 1.0, %v2306
    %v10115 = vsub.f32 1.0, %v2307
    %v10116 = vsub.f32 1.0, %v2308
    %v10117 = vsub.f32 1.0, %v2309
    %v10118 = vsub.f32 1.0, %v2310
    %v10119 = vsub.f32 1.0, %v2311
    %v10120 = vsub.f32 1.0, %v2312
    %v10121 = vsub.f32 1.0, %v2313
    %v10122 = vsub.f32 1.0, %v2314
    %v10123 = vsub.f32 1.0, %v2315
    %v10124 = vsub.f32 1.0, %v2316
    %v10125 = vsub.f32 1.0, %v2317
    %v10126 = vsub.f32 1.0, %v2318
    %v10127 = vsub.f32 1.0, %v2319
    %v10128 = vsub.f32 1.0, %v2320
    %v10129 = vsub.f32 1.0, %v2321
    %v10130 = vsub.f32 1.0, %v2322
    %v10131 = vsub.f32 1.0, %v2323
    %v10132 = vsub.f32 1.0, %v2324
    %v10133 = vsub.f32 1.0, %v2325
    %v10134 = vsub.f32 1.0, %v2326
    %v10135 = vsub.f32 1.0, %v2327
    %v10136 = vsub.f32 1.0, %v2328
    %v10137 = vsub.f32 1.0, %v2329
    %v10138 = vsub.f32 1.0, %v2330
    %v10139 = vsub.f32 1.0, %v2331
    %v10140 = vsub.f32 1.0, %v2332
    %v10141 = vsub.f32 1.0, %v2333
    %v10142 = vsub.f32 1.0, %v2334
    %v10143 = vsub.f32 1.0, %v2335
    %v10144 = vmul.f32 %v9760, %v10016
    %v10145 = vmul.f32 %v9761, %v10017
    %v10146 = vmul.f32 %v9762, %v10018
    %v10147 = vmul.f32 %v9763, %v10019
    %v10148 = vmul.f32 %v9764, %v10020
    %v10149 = vmul.f32 %v9765, %v10021
    %v10150 = vmul.f32 %v9766, %v10022
    %v10151 = vmul.f32 %v9767, %v10023
    %v10152 = vmul.f32 %v9768, %v10024
    %v10153 = vmul.f32 %v9769, %v10025
    %v10154 = vmul.f32 %v9770, %v10026
    %v10155 = vmul.f32 %v9771, %v10027
    %v10156 = vmul.f32 %v9772, %v10028
    %v10157 = vmul.f32 %v9773, %v10029
    %v10158 = vmul.f32 %v9774, %v10030
    %v10159 = vmul.f32 %v9775, %v10031
    %v10160 = vmul.f32 %v9776, %v10032
    %v10161 = vmul.f32 %v9777, %v10033
    %v10162 = vmul.f32 %v9778, %v10034
    %v10163 = vmul.f32 %v9779, %v10035
    %v10164 = vmul.f32 %v9780, %v10036
    %v10165 = vmul.f32 %v9781, %v10037
    %v10166 = vmul.f32 %v9782, %v10038
    %v10167 = vmul.f32 %v9783, %v10039
    %v10168 = vmul.f32 %v9784, %v10040
    %v10169 = vmul.f32 %v9785, %v10041
    %v10170 = vmul.f32 %v9786, %v10042
    %v10171 = vmul.f32 %v9787, %v10043
    %v10172 = vmul.f32 %v9788, %v10044
    %v10173 = vmul.f32 %v9789, %v10045
    %v10174 = vmul.f32 %v9790, %v10046
    %v10175 = vmul.f32 %v9791, %v10047
    %v10176 = vmul.f32 %v9792, %v10048
    %v10177 = vmul.f32 %v9793, %v10049
    %v10178 = vmul.f32 %v9794, %v10050
    %v10179 = vmul.f32 %v9795, %v10051
    %v10180 = vmul.f32 %v9796, %v10052
    %v10181 = vmul.f32 %v9797, %v10053
    %v10182 = vmul.f32 %v9798, %v10054
    %v10183 = vmul.f32 %v9799, %v10055
    %v10184 = vmul.f32 %v9800, %v10056
    %v10185 = vmul.f32 %v9801, %v10057
    %v10186 = vmul.f32 %v9802, %v10058
    %v10187 = vmul.f32 %v9803, %v10059
    %v10188 = vmul.f32 %v9804, %v10060
    %v10189 = vmul.f32 %v9805, %v10061
    %v10190 = vmul.f32 %v9806, %v10062
    %v10191 = vmul.f32 %v9807, %v10063
    %v10192 = vmul.f32 %v9808, %v10064
    %v10193 = vmul.f32 %v9809, %v10065
    %v10194 = vmul.f32 %v9810, %v10066
    %v10195 = vmul.f32 %v9811, %v10067
    %v10196 = vmul.f32 %v9812, %v10068
    %v10197 = vmul.f32 %v9813, %v10069
    %v10198 = vmul.f32 %v9814, %v10070
    %v10199 = vmul.f32 %v9815, %v10071
    %v10200 = vmul.f32 %v9816, %v10072
    %v10201 = vmul.f32 %v9817, %v10073
    %v10202 = vmul.f32 %v9818, %v10074
    %v10203 = vmul.f32 %v9819, %v10075
    %v10204 = vmul.f32 %v9820, %v10076
    %v10205 = vmul.f32 %v9821, %v10077
    %v10206 = vmul.f32 %v9822, %v10078
    %v10207 = vmul.f32 %v9823, %v10079
    %v10208 = vmul.f32 %v9824, %v10080
    %v10209 = vmul.f32 %v9825, %v10081
    %v10210 = vmul.f32 %v9826, %v10082
    %v10211 = vmul.f32 %v9827, %v10083
    %v10212 = vmul.f32 %v9828, %v10084
    %v10213 = vmul.f32 %v9829, %v10085
    %v10214 = vmul.f32 %v9830, %v10086
    %v10215 = vmul.f32 %v9831, %v10087
    %v10216 = vmul.f32 %v9832, %v10088
    %v10217 = vmul.f32 %v9833, %v10089
    %v10218 = vmul.f32 %v9834, %v10090
    %v10219 = vmul.f32 %v9835, %v10091
    %v10220 = vmul.f32 %v9836, %v10092
    %v10221 = vmul.f32 %v9837, %v10093
    %v10222 = vmul.f32 %v9838, %v10094
    %v10223 = vmul.f32 %v9839, %v10095
    %v10224 = vmul.f32 %v9840, %v10096
    %v10225 = vmul.f32 %v9841, %v10097
    %v10226 = vmul.f32 %v9842, %v10098
    %v10227 = vmul.f32 %v9843, %v10099
    %v10228 = vmul.f32 %v9844, %v10100
    %v10229 = vmul.f32 %v9845, %v10101
    %v10230 = vmul.f32 %v9846, %v10102
    %v10231 = vmul.f32 %v9847, %v10103
    %v10232 = vmul.f32 %v9848, %v10104
    %v10233 = vmul.f32 %v9849, %v10105
    %v10234 = vmul.f32 %v9850, %v10106
    %v10235 = vmul.f32 %v9851, %v10107
    %v10236 = vmul.f32 %v9852, %v10108
    %v10237 = vmul.f32 %v9853, %v10109
    %v10238 = vmul.f32 %v9854, %v10110
    %v10239 = vmul.f32 %v9855, %v10111
    %v10240 = vmul.f32 %v9856, %v10112
    %v10241 = vmul.f32 %v9857, %v10113
    %v10242 = vmul.f32 %v9858, %v10114
    %v10243 = vmul.f32 %v9859, %v10115
    %v10244 = vmul.f32 %v9860, %v10116
    %v10245 = vmul.f32 %v9861, %v10117
    %v10246 = vmul.f32 %v9862, %v10118
    %v10247 = vmul.f32 %v9863, %v10119
    %v10248 = vmul.f32 %v9864, %v10120
    %v10249 = vmul.f32 %v9865, %v10121
    %v10250 = vmul.f32 %v9866, %v10122
    %v10251 = vmul.f32 %v9867, %v10123
    %v10252 = vmul.f32 %v9868, %v10124
    %v10253 = vmul.f32 %v9869, %v10125
    %v10254 = vmul.f32 %v9870, %v10126
    %v10255 = vmul.f32 %v9871, %v10127
    %v10256 = vmul.f32 %v9872, %v10128
    %v10257 = vmul.f32 %v9873, %v10129
    %v10258 = vmul.f32 %v9874, %v10130
    %v10259 = vmul.f32 %v9875, %v10131
    %v10260 = vmul.f32 %v9876, %v10132
    %v10261 = vmul.f32 %v9877, %v10133
    %v10262 = vmul.f32 %v9878, %v10134
    %v10263 = vmul.f32 %v9879, %v10135
    %v10264 = vmul.f32 %v9880, %v10136
    %v10265 = vmul.f32 %v9881, %v10137
    %v10266 = vmul.f32 %v9882, %v10138
    %v10267 = vmul.f32 %v9883, %v10139
    %v10268 = vmul.f32 %v9884, %v10140
    %v10269 = vmul.f32 %v9885, %v10141
    %v10270 = vmul.f32 %v9886, %v10142
    %v10271 = vmul.f32 %v9887, %v10143
    %v10272 = vadd.f32 %v9888, %v10144
    %v10273 = vadd.f32 %v9889, %v10145
    %v10274 = vadd.f32 %v9890, %v10146
    %v10275 = vadd.f32 %v9891, %v10147
    %v10276 = vadd.f32 %v9892, %v10148
    %v10277 = vadd.f32 %v9893, %v10149
    %v10278 = vadd.f32 %v9894, %v10150
    %v10279 = vadd.f32 %v9895, %v10151
    %v10280 = vadd.f32 %v9896, %v10152
    %v10281 = vadd.f32 %v9897, %v10153
    %v10282 = vadd.f32 %v9898, %v10154
    %v10283 = vadd.f32 %v9899, %v10155
    %v10284 = vadd.f32 %v9900, %v10156
    %v10285 = vadd.f32 %v9901, %v10157
    %v10286 = vadd.f32 %v9902, %v10158
    %v10287 = vadd.f32 %v9903, %v10159
    %v10288 = vadd.f32 %v9904, %v10160
    %v10289 = vadd.f32 %v9905, %v10161
    %v10290 = vadd.f32 %v9906, %v10162
    %v10291 = vadd.f32 %v9907, %v10163
    %v10292 = vadd.f32 %v9908, %v10164
    %v10293 = vadd.f32 %v9909, %v10165
    %v10294 = vadd.f32 %v9910, %v10166
    %v10295 = vadd.f32 %v9911, %v10167
    %v10296 = vadd.f32 %v9912, %v10168
    %v10297 = vadd.f32 %v9913, %v10169
    %v10298 = vadd.f32 %v9914, %v10170
    %v10299 = vadd.f32 %v9915, %v10171
    %v10300 = vadd.f32 %v9916, %v10172
    %v10301 = vadd.f32 %v9917, %v10173
    %v10302 = vadd.f32 %v9918, %v10174
    %v10303 = vadd.f32 %v9919, %v10175
    %v10304 = vadd.f32 %v9920, %v10176
    %v10305 = vadd.f32 %v9921, %v10177
    %v10306 = vadd.f32 %v9922, %v10178
    %v10307 = vadd.f32 %v9923, %v10179
    %v10308 = vadd.f32 %v9924, %v10180
    %v10309 = vadd.f32 %v9925, %v10181
    %v10310 = vadd.f32 %v9926, %v10182
    %v10311 = vadd.f32 %v9927, %v10183
    %v10312 = vadd.f32 %v9928, %v10184
    %v10313 = vadd.f32 %v9929, %v10185
    %v10314 = vadd.f32 %v9930, %v10186
    %v10315 = vadd.f32 %v9931, %v10187
    %v10316 = vadd.f32 %v9932, %v10188
    %v10317 = vadd.f32 %v9933, %v10189
    %v10318 = vadd.f32 %v9934, %v10190
    %v10319 = vadd.f32 %v9935, %v10191
    %v10320 = vadd.f32 %v9936, %v10192
    %v10321 = vadd.f32 %v9937, %v10193
    %v10322 = vadd.f32 %v9938, %v10194
    %v10323 = vadd.f32 %v9939, %v10195
    %v10324 = vadd.f32 %v9940, %v10196
    %v10325 = vadd.f32 %v9941, %v10197
    %v10326 = vadd.f32 %v9942, %v10198
    %v10327 = vadd.f32 %v9943, %v10199
    %v10328 = vadd.f32 %v9944, %v10200
    %v10329 = vadd.f32 %v9945, %v10201
    %v10330 = vadd.f32 %v9946, %v10202
    %v10331 = vadd.f32 %v9947, %v10203
    %v10332 = vadd.f32 %v9948, %v10204
    %v10333 = vadd.f32 %v9949, %v10205
    %v10334 = vadd.f32 %v9950, %v10206
    %v10335 = vadd.f32 %v9951, %v10207
    %v10336 = vadd.f32 %v9952, %v10208
    %v10337 = vadd.f32 %v9953, %v10209
    %v10338 = vadd.f32 %v9954, %v10210
    %v10339 = vadd.f32 %v9955, %v10211
    %v10340 = vadd.f32 %v9956, %v10212
    %v10341 = vadd.f32 %v9957, %v10213
    %v10342 = vadd.f32 %v9958, %v10214
    %v10343 = vadd.f32 %v9959, %v10215
    %v10344 = vadd.f32 %v9960, %v10216
    %v10345 = vadd.f32 %v9961, %v10217
    %v10346 = vadd.f32 %v9962, %v10218
    %v10347 = vadd.f32 %v9963, %v10219
    %v10348 = vadd.f32 %v9964, %v10220
    %v10349 = vadd.f32 %v9965, %v10221
    %v10350 = vadd.f32 %v9966, %v10222
    %v10351 = vadd.f32 %v9967, %v10223
    %v10352 = vadd.f32 %v9968, %v10224
    %v10353 = vadd.f32 %v9969, %v10225
    %v10354 = vadd.f32 %v9970, %v10226
    %v10355 = vadd.f32 %v9971, %v10227
    %v10356 = vadd.f32 %v9972, %v10228
    %v10357 = vadd.f32 %v9973, %v10229
    %v10358 = vadd.f32 %v9974, %v10230
    %v10359 = vadd.f32 %v9975, %v10231
    %v10360 = vadd.f32 %v9976, %v10232
    %v10361 = vadd.f32 %v9977, %v10233
    %v10362 = vadd.f32 %v9978, %v10234
    %v10363 = vadd.f32 %v9979, %v10235
    %v10364 = vadd.f32 %v9980, %v10236
    %v10365 = vadd.f32 %v9981, %v10237
    %v10366 = vadd.f32 %v9982, %v10238
    %v10367 = vadd.f32 %v9983, %v10239
    %v10368 = vadd.f32 %v9984, %v10240
    %v10369 = vadd.f32 %v9985, %v10241
    %v10370 = vadd.f32 %v9986, %v10242
    %v10371 = vadd.f32 %v9987, %v10243
    %v10372 = vadd.f32 %v9988, %v10244
    %v10373 = vadd.f32 %v9989, %v10245
    %v10374 = vadd.f32 %v9990, %v10246
    %v10375 = vadd.f32 %v9991, %v10247
    %v10376 = vadd.f32 %v9992, %v10248
    %v10377 = vadd.f32 %v9993, %v10249
    %v10378 = vadd.f32 %v9994, %v10250
    %v10379 = vadd.f32 %v9995, %v10251
    %v10380 = vadd.f32 %v9996, %v10252
    %v10381 = vadd.f32 %v9997, %v10253
    %v10382 = vadd.f32 %v9998, %v10254
    %v10383 = vadd.f32 %v9999, %v10255
    %v10384 = vadd.f32 %v10000, %v10256
    %v10385 = vadd.f32 %v10001, %v10257
    %v10386 = vadd.f32 %v10002, %v10258
    %v10387 = vadd.f32 %v10003, %v10259
    %v10388 = vadd.f32 %v10004, %v10260
    %v10389 = vadd.f32 %v10005, %v10261
    %v10390 = vadd.f32 %v10006, %v10262
    %v10391 = vadd.f32 %v10007, %v10263
    %v10392 = vadd.f32 %v10008, %v10264
    %v10393 = vadd.f32 %v10009, %v10265
    %v10394 = vadd.f32 %v10010, %v10266
    %v10395 = vadd.f32 %v10011, %v10267
    %v10396 = vadd.f32 %v10012, %v10268
    %v10397 = vadd.f32 %v10013, %v10269
    %v10398 = vadd.f32 %v10014, %v10270
    %v10399 = vadd.f32 %v10015, %v10271
    %v10400 = vld [vmem:[%s1] sm:$0xff]
    %v10401 = vld [vmem:[%s1 + $0x8] sm:$0xff]
    %v10402 = vld [vmem:[%s1 + $0x10] sm:$0xff]
    %v10403 = vld [vmem:[%s1 + $0x18] sm:$0xff]
    %vm10404 = vcmask 261120
    %v10406 = vsel %vm10404, %v10272, 0
    %v10409 = vsel %vm10404, %v10273, 0
    %v10412 = vsel %vm10404, %v10274, 0
    %v10415 = vsel %vm10404, %v10275, 0
    %v10418 = vsel %vm10404, %v10276, 0
    %v10421 = vsel %vm10404, %v10277, 0
    %v10424 = vsel %vm10404, %v10278, 0
    %v10427 = vsel %vm10404, %v10279, 0
    %v10430 = vsel %vm10404, %v10280, 0
    %v10433 = vsel %vm10404, %v10281, 0
    %v10436 = vsel %vm10404, %v10282, 0
    %v10439 = vsel %vm10404, %v10283, 0
    %v10442 = vsel %vm10404, %v10284, 0
    %v10445 = vsel %vm10404, %v10285, 0
    %v10448 = vsel %vm10404, %v10286, 0
    %v10451 = vsel %vm10404, %v10287, 0
    %v10454 = vsel %vm10404, %v10288, 0
    %v10457 = vsel %vm10404, %v10289, 0
    %v10460 = vsel %vm10404, %v10290, 0
    %v10463 = vsel %vm10404, %v10291, 0
    %v10466 = vsel %vm10404, %v10292, 0
    %v10469 = vsel %vm10404, %v10293, 0
    %v10472 = vsel %vm10404, %v10294, 0
    %v10475 = vsel %vm10404, %v10295, 0
    %v10478 = vsel %vm10404, %v10296, 0
    %v10481 = vsel %vm10404, %v10297, 0
    %v10484 = vsel %vm10404, %v10298, 0
    %v10487 = vsel %vm10404, %v10299, 0
    %v10490 = vsel %vm10404, %v10300, 0
    %v10493 = vsel %vm10404, %v10301, 0
    %v10496 = vsel %vm10404, %v10302, 0
    %v10499 = vsel %vm10404, %v10303, 0
    %v10502 = vsel %vm10404, %v10304, 0
    %v10505 = vsel %vm10404, %v10305, 0
    %v10508 = vsel %vm10404, %v10306, 0
    %v10511 = vsel %vm10404, %v10307, 0
    %v10514 = vsel %vm10404, %v10308, 0
    %v10517 = vsel %vm10404, %v10309, 0
    %v10520 = vsel %vm10404, %v10310, 0
    %v10523 = vsel %vm10404, %v10311, 0
    %v10526 = vsel %vm10404, %v10312, 0
    %v10529 = vsel %vm10404, %v10313, 0
    %v10532 = vsel %vm10404, %v10314, 0
    %v10535 = vsel %vm10404, %v10315, 0
    %v10538 = vsel %vm10404, %v10316, 0
    %v10541 = vsel %vm10404, %v10317, 0
    %v10544 = vsel %vm10404, %v10318, 0
    %v10547 = vsel %vm10404, %v10319, 0
    %v10550 = vsel %vm10404, %v10320, 0
    %v10553 = vsel %vm10404, %v10321, 0
    %v10556 = vsel %vm10404, %v10322, 0
    %v10559 = vsel %vm10404, %v10323, 0
    %v10562 = vsel %vm10404, %v10324, 0
    %v10565 = vsel %vm10404, %v10325, 0
    %v10568 = vsel %vm10404, %v10326, 0
    %v10571 = vsel %vm10404, %v10327, 0
    %v10574 = vsel %vm10404, %v10328, 0
    %v10577 = vsel %vm10404, %v10329, 0
    %v10580 = vsel %vm10404, %v10330, 0
    %v10583 = vsel %vm10404, %v10331, 0
    %v10586 = vsel %vm10404, %v10332, 0
    %v10589 = vsel %vm10404, %v10333, 0
    %v10592 = vsel %vm10404, %v10334, 0
    %v10595 = vsel %vm10404, %v10335, 0
    %v10598 = vsel %vm10404, %v10336, 0
    %v10601 = vsel %vm10404, %v10337, 0
    %v10604 = vsel %vm10404, %v10338, 0
    %v10607 = vsel %vm10404, %v10339, 0
    %v10610 = vsel %vm10404, %v10340, 0
    %v10613 = vsel %vm10404, %v10341, 0
    %v10616 = vsel %vm10404, %v10342, 0
    %v10619 = vsel %vm10404, %v10343, 0
    %v10622 = vsel %vm10404, %v10344, 0
    %v10625 = vsel %vm10404, %v10345, 0
    %v10628 = vsel %vm10404, %v10346, 0
    %v10631 = vsel %vm10404, %v10347, 0
    %v10634 = vsel %vm10404, %v10348, 0
    %v10637 = vsel %vm10404, %v10349, 0
    %v10640 = vsel %vm10404, %v10350, 0
    %v10643 = vsel %vm10404, %v10351, 0
    %v10646 = vsel %vm10404, %v10352, 0
    %v10649 = vsel %vm10404, %v10353, 0
    %v10652 = vsel %vm10404, %v10354, 0
    %v10655 = vsel %vm10404, %v10355, 0
    %v10658 = vsel %vm10404, %v10356, 0
    %v10661 = vsel %vm10404, %v10357, 0
    %v10664 = vsel %vm10404, %v10358, 0
    %v10667 = vsel %vm10404, %v10359, 0
    %v10670 = vsel %vm10404, %v10360, 0
    %v10673 = vsel %vm10404, %v10361, 0
    %v10676 = vsel %vm10404, %v10362, 0
    %v10679 = vsel %vm10404, %v10363, 0
    %v10682 = vsel %vm10404, %v10364, 0
    %v10685 = vsel %vm10404, %v10365, 0
    %v10688 = vsel %vm10404, %v10366, 0
    %v10691 = vsel %vm10404, %v10367, 0
    %v10694 = vsel %vm10404, %v10368, 0
    %v10697 = vsel %vm10404, %v10369, 0
    %v10700 = vsel %vm10404, %v10370, 0
    %v10703 = vsel %vm10404, %v10371, 0
    %v10706 = vsel %vm10404, %v10372, 0
    %v10709 = vsel %vm10404, %v10373, 0
    %v10712 = vsel %vm10404, %v10374, 0
    %v10715 = vsel %vm10404, %v10375, 0
    %v10718 = vsel %vm10404, %v10376, 0
    %v10721 = vsel %vm10404, %v10377, 0
    %v10724 = vsel %vm10404, %v10378, 0
    %v10727 = vsel %vm10404, %v10379, 0
    %v10730 = vsel %vm10404, %v10380, 0
    %v10733 = vsel %vm10404, %v10381, 0
    %v10736 = vsel %vm10404, %v10382, 0
    %v10739 = vsel %vm10404, %v10383, 0
    %v10742 = vsel %vm10404, %v10384, 0
    %v10745 = vsel %vm10404, %v10385, 0
    %v10748 = vsel %vm10404, %v10386, 0
    %v10751 = vsel %vm10404, %v10387, 0
    %v10754 = vsel %vm10404, %v10388, 0
    %v10757 = vsel %vm10404, %v10389, 0
    %v10760 = vsel %vm10404, %v10390, 0
    %v10763 = vsel %vm10404, %v10391, 0
    %v10766 = vsel %vm10404, %v10392, 0
    %v10769 = vsel %vm10404, %v10393, 0
    %v10772 = vsel %vm10404, %v10394, 0
    %v10775 = vsel %vm10404, %v10395, 0
    %v10778 = vsel %vm10404, %v10396, 0
    %v10781 = vsel %vm10404, %v10397, 0
    %v10784 = vsel %vm10404, %v10398, 0
    %v10787 = vsel %vm10404, %v10399, 0
    %10789 = vmatprep.subr.mxu0 0.0
    %10790 = vmatpush1.msra.mxu0 %v10400
    %10791 = vmatprep.subr.mxu0 0.0
    %10792 = vmatpush1.msra.mxu0 %v10401
    %10793 = vmatprep.subr.mxu0 0.0
    %10794 = vmatpush1.msra.mxu0 %v10402
    %10795 = vmatprep.subr.mxu0 0.0
    %10796 = vmatpush1.msra.mxu0 %v10403
    %10797 = vmatprep.subr.mxu0 0.0
    %10798 = vmatpush1.msra.mxu0 0.0
    %10799 = vmatprep.subr.mxu0 0.0
    %10800 = vmatpush1.msra.mxu0 0.0
    %10801 = vmatprep.subr.mxu0 0.0
    %10802 = vmatpush1.msra.mxu0 0.0
    %10803 = vmatprep.subr.mxu0 0.0
    %10804 = vmatpush1.msra.mxu0 0.0
    %10805 = vmatprep.subr.mxu0 0.0
    %10806 = vmatpush1.msra.mxu0 0.0
    %10807 = vmatprep.subr.mxu0 0.0
    %10808 = vmatpush1.msra.mxu0 0.0
    %10809 = vmatprep.subr.mxu0 0.0
    %10810 = vmatpush1.msra.mxu0 0.0
    %10811 = vmatprep.subr.mxu0 0.0
    %10812 = vmatpush1.msra.mxu0 0.0
    %10813 = vmatprep.subr.mxu0 0.0
    %10814 = vmatpush1.msra.mxu0 0.0
    %10815 = vmatprep.subr.mxu0 0.0
    %10816 = vmatpush1.msra.mxu0 0.0
    %10817 = vmatprep.subr.mxu0 0.0
    %10818 = vmatpush1.msra.mxu0 0.0
    %10819 = vmatprep.subr.mxu0 0.0
    %10820 = vmatpush1.msra.mxu0 0.0
    %10821 = vmatprep.subr.mxu0 0.0
    %10822 = vmatpush1.msra.mxu0 0.0
    %10823 = vmatprep.subr.mxu0 0.0
    %10824 = vmatpush1.msra.mxu0 0.0
    %10825 = vmatprep.subr.mxu0 0.0
    %10826 = vmatpush1.msra.mxu0 0.0
    %10827 = vmatprep.subr.mxu0 0.0
    %10828 = vmatpush1.msra.mxu0 0.0
    %10829 = vmatprep.subr.mxu0 0.0
    %10830 = vmatpush1.msra.mxu0 0.0
    %10831 = vmatprep.subr.mxu0 0.0
    %10832 = vmatpush1.msra.mxu0 0.0
    %10833 = vmatprep.subr.mxu0 0.0
    %10834 = vmatpush1.msra.mxu0 0.0
    %10835 = vmatprep.subr.mxu0 0.0
    %10836 = vmatpush1.msra.mxu0 0.0
    %10837 = vmatprep.subr.mxu0 0.0
    %10838 = vmatpush1.msra.mxu0 0.0
    %10839 = vmatprep.subr.mxu0 0.0
    %10840 = vmatpush1.msra.mxu0 0.0
    %10841 = vmatprep.subr.mxu0 0.0
    %10842 = vmatpush1.msra.mxu0 0.0
    %10843 = vmatprep.subr.mxu0 0.0
    %10844 = vmatpush1.msra.mxu0 0.0
    %10845 = vmatprep.subr.mxu0 0.0
    %10846 = vmatpush1.msra.mxu0 0.0
    %10847 = vmatprep.subr.mxu0 0.0
    %10848 = vmatpush1.msra.mxu0 0.0
    %10849 = vmatprep.subr.mxu0 0.0
    %10850 = vmatpush1.msra.mxu0 0.0
    %10851 = vmatprep.subr.mxu0 0.0
    %10852 = vmatpush1.msra.mxu0 0.0
    %10853 = vmatprep.mubr.f32.mxu0 0.0
    %10854 = vmatmul.mubr.f32.gmra.mrb[0].mxu0 %v10406
    %v10855 = vpop.f32.mrb[0].mxu0
    %v10856 = vadd.f32 0.0, %v10855
    %v10857 = vpop.f32.mrb[0].mxu0
    %10858 = vmatprep.mubr.f32.mxu0 0.0
    %10859 = vmatmul.mubr.f32.gmra.mrb[0].mxu0 %v10409
    %v10860 = vpop.f32.mrb[0].mxu0
    %v10861 = vadd.f32 0.0, %v10860
    %v10862 = vpop.f32.mrb[0].mxu0
    %10863 = vmatprep.mubr.f32.mxu0 0.0
    %10864 = vmatmul.mubr.f32.gmra.mrb[0].mxu0 %v10412
    %v10865 = vpop.f32.mrb[0].mxu0
    %v10866 = vadd.f32 0.0, %v10865
    %v10867 = vpop.f32.mrb[0].mxu0
    %10868 = vmatprep.mubr.f32.mxu0 0.0
    %10869 = vmatmul.mubr.f32.gmra.mrb[0].mxu0 %v10415
    %v10870 = vpop.f32.mrb[0].mxu0
    %v10871 = vadd.f32 0.0, %v10870
    %v10872 = vpop.f32.mrb[0].mxu0
    %10873 = vmatprep.mubr.f32.mxu0 0.0
    %10874 = vmatmul.mubr.f32.gmra.mrb[0].mxu0 %v10418
    %v10875 = vpop.f32.mrb[0].mxu0
    %v10876 = vadd.f32 0.0, %v10875
    %v10877 = vpop.f32.mrb[0].mxu0
    %10878 = vmatprep.mubr.f32.mxu0 0.0
    %10879 = vmatmul.mubr.f32.gmra.mrb[0].mxu0 %v10421
    %v10880 = vpop.f32.mrb[0].mxu0
    %v10881 = vadd.f32 0.0, %v10880
    %v10882 = vpop.f32.mrb[0].mxu0
    %10883 = vmatprep.mubr.f32.mxu0 0.0
    %10884 = vmatmul.mubr.f32.gmra.mrb[0].mxu0 %v10424
    %v10885 = vpop.f32.mrb[0].mxu0
    %v10886 = vadd.f32 0.0, %v10885
    %v10887 = vpop.f32.mrb[0].mxu0
    %10888 = vmatprep.mubr.f32.mxu0 0.0
    %10889 = vmatmul.mubr.f32.gmra.mrb[0].mxu0 %v10427
    %v10890 = vpop.f32.mrb[0].mxu0
    %v10891 = vadd.f32 0.0, %v10890
    %v10892 = vpop.f32.mrb[0].mxu0
    %10893 = vmatprep.mubr.f32.mxu0 0.0
    %10894 = vmatmul.mubr.f32.gmra.mrb[0].mxu0 %v10430
    %v10895 = vpop.f32.mrb[0].mxu0
    %v10896 = vadd.f32 0.0, %v10895
    %v10897 = vpop.f32.mrb[0].mxu0
    %10898 = vmatprep.mubr.f32.mxu0 0.0
    %10899 = vmatmul.mubr.f32.gmra.mrb[0].mxu0 %v10433
    %v10900 = vpop.f32.mrb[0].mxu0
    %v10901 = vadd.f32 0.0, %v10900
    %v10902 = vpop.f32.mrb[0].mxu0
    %10903 = vmatprep.mubr.f32.mxu0 0.0
    %10904 = vmatmul.mubr.f32.gmra.mrb[0].mxu0 %v10436
    %v10905 = vpop.f32.mrb[0].mxu0
    %v10906 = vadd.f32 0.0, %v10905
    %v10907 = vpop.f32.mrb[0].mxu0
    %10908 = vmatprep.mubr.f32.mxu0 0.0
    %10909 = vmatmul.mubr.f32.gmra.mrb[0].mxu0 %v10439
    %v10910 = vpop.f32.mrb[0].mxu0
    %v10911 = vadd.f32 0.0, %v10910
    %v10912 = vpop.f32.mrb[0].mxu0
    %10913 = vmatprep.mubr.f32.mxu0 0.0
    %10914 = vmatmul.mubr.f32.gmra.mrb[0].mxu0 %v10442
    %v10915 = vpop.f32.mrb[0].mxu0
    %v10916 = vadd.f32 0.0, %v10915
    %v10917 = vpop.f32.mrb[0].mxu0
    %10918 = vmatprep.mubr.f32.mxu0 0.0
    %10919 = vmatmul.mubr.f32.gmra.mrb[0].mxu0 %v10445
    %v10920 = vpop.f32.mrb[0].mxu0
    %v10921 = vadd.f32 0.0, %v10920
    %v10922 = vpop.f32.mrb[0].mxu0
    %10923 = vmatprep.mubr.f32.mxu0 0.0
    %10924 = vmatmul.mubr.f32.gmra.mrb[0].mxu0 %v10448
    %v10925 = vpop.f32.mrb[0].mxu0
    %v10926 = vadd.f32 0.0, %v10925
    %v10927 = vpop.f32.mrb[0].mxu0
    %10928 = vmatprep.mubr.f32.mxu0 0.0
    %10929 = vmatmul.mubr.f32.gmra.mrb[0].mxu0 %v10451
    %v10930 = vpop.f32.mrb[0].mxu0
    %v10931 = vadd.f32 0.0, %v10930
    %v10932 = vpop.f32.mrb[0].mxu0
    %10933 = vmatprep.mubr.f32.mxu0 0.0
    %10934 = vmatmul.mubr.f32.gmra.mrb[0].mxu0 %v10454
    %v10935 = vpop.f32.mrb[0].mxu0
    %v10936 = vadd.f32 0.0, %v10935
    %v10937 = vpop.f32.mrb[0].mxu0
    %10938 = vmatprep.mubr.f32.mxu0 0.0
    %10939 = vmatmul.mubr.f32.gmra.mrb[0].mxu0 %v10457
    %v10940 = vpop.f32.mrb[0].mxu0
    %v10941 = vadd.f32 0.0, %v10940
    %v10942 = vpop.f32.mrb[0].mxu0
    %10943 = vmatprep.mubr.f32.mxu0 0.0
    %10944 = vmatmul.mubr.f32.gmra.mrb[0].mxu0 %v10460
    %v10945 = vpop.f32.mrb[0].mxu0
    %v10946 = vadd.f32 0.0, %v10945
    %v10947 = vpop.f32.mrb[0].mxu0
    %10948 = vmatprep.mubr.f32.mxu0 0.0
    %10949 = vmatmul.mubr.f32.gmra.mrb[0].mxu0 %v10463
    %v10950 = vpop.f32.mrb[0].mxu0
    %v10951 = vadd.f32 0.0, %v10950
    %v10952 = vpop.f32.mrb[0].mxu0
    %10953 = vmatprep.mubr.f32.mxu0 0.0
    %10954 = vmatmul.mubr.f32.gmra.mrb[0].mxu0 %v10466
    %v10955 = vpop.f32.mrb[0].mxu0
    %v10956 = vadd.f32 0.0, %v10955
    %v10957 = vpop.f32.mrb[0].mxu0
    %10958 = vmatprep.mubr.f32.mxu0 0.0
    %10959 = vmatmul.mubr.f32.gmra.mrb[0].mxu0 %v10469
    %v10960 = vpop.f32.mrb[0].mxu0
    %v10961 = vadd.f32 0.0, %v10960
    %v10962 = vpop.f32.mrb[0].mxu0
    %10963 = vmatprep.mubr.f32.mxu0 0.0
    %10964 = vmatmul.mubr.f32.gmra.mrb[0].mxu0 %v10472
    %v10965 = vpop.f32.mrb[0].mxu0
    %v10966 = vadd.f32 0.0, %v10965
    %v10967 = vpop.f32.mrb[0].mxu0
    %10968 = vmatprep.mubr.f32.mxu0 0.0
    %10969 = vmatmul.mubr.f32.gmra.mrb[0].mxu0 %v10475
    %v10970 = vpop.f32.mrb[0].mxu0
    %v10971 = vadd.f32 0.0, %v10970
    %v10972 = vpop.f32.mrb[0].mxu0
    %10973 = vmatprep.mubr.f32.mxu0 0.0
    %10974 = vmatmul.mubr.f32.gmra.mrb[0].mxu0 %v10478
    %v10975 = vpop.f32.mrb[0].mxu0
    %v10976 = vadd.f32 0.0, %v10975
    %v10977 = vpop.f32.mrb[0].mxu0
    %10978 = vmatprep.mubr.f32.mxu0 0.0
    %10979 = vmatmul.mubr.f32.gmra.mrb[0].mxu0 %v10481
    %v10980 = vpop.f32.mrb[0].mxu0
    %v10981 = vadd.f32 0.0, %v10980
    %v10982 = vpop.f32.mrb[0].mxu0
    %10983 = vmatprep.mubr.f32.mxu0 0.0
    %10984 = vmatmul.mubr.f32.gmra.mrb[0].mxu0 %v10484
    %v10985 = vpop.f32.mrb[0].mxu0
    %v10986 = vadd.f32 0.0, %v10985
    %v10987 = vpop.f32.mrb[0].mxu0
    %10988 = vmatprep.mubr.f32.mxu0 0.0
    %10989 = vmatmul.mubr.f32.gmra.mrb[0].mxu0 %v10487
    %v10990 = vpop.f32.mrb[0].mxu0
    %v10991 = vadd.f32 0.0, %v10990
    %v10992 = vpop.f32.mrb[0].mxu0
    %10993 = vmatprep.mubr.f32.mxu0 0.0
    %10994 = vmatmul.mubr.f32.gmra.mrb[0].mxu0 %v10490
    %v10995 = vpop.f32.mrb[0].mxu0
    %v10996 = vadd.f32 0.0, %v10995
    %v10997 = vpop.f32.mrb[0].mxu0
    %10998 = vmatprep.mubr.f32.mxu0 0.0
    %10999 = vmatmul.mubr.f32.gmra.mrb[0].mxu0 %v10493
    %v11000 = vpop.f32.mrb[0].mxu0
    %v11001 = vadd.f32 0.0, %v11000
    %v11002 = vpop.f32.mrb[0].mxu0
    %11003 = vmatprep.mubr.f32.mxu0 0.0
    %11004 = vmatmul.mubr.f32.gmra.mrb[0].mxu0 %v10496
    %v11005 = vpop.f32.mrb[0].mxu0
    %v11006 = vadd.f32 0.0, %v11005
    %v11007 = vpop.f32.mrb[0].mxu0
    %11008 = vmatprep.mubr.f32.mxu0 0.0
    %11009 = vmatmul.mubr.f32.gmra.mrb[0].mxu0 %v10499
    %v11010 = vpop.f32.mrb[0].mxu0
    %v11011 = vadd.f32 0.0, %v11010
    %v11012 = vpop.f32.mrb[0].mxu0
    %11013 = vmatprep.mubr.f32.mxu0 0.0
    %11014 = vmatmul.mubr.f32.gmra.mrb[0].mxu0 %v10502
    %v11015 = vpop.f32.mrb[0].mxu0
    %v11016 = vadd.f32 0.0, %v11015
    %v11017 = vpop.f32.mrb[0].mxu0
    %11018 = vmatprep.mubr.f32.mxu0 0.0
    %11019 = vmatmul.mubr.f32.gmra.mrb[0].mxu0 %v10505
    %v11020 = vpop.f32.mrb[0].mxu0
    %v11021 = vadd.f32 0.0, %v11020
    %v11022 = vpop.f32.mrb[0].mxu0
    %11023 = vmatprep.mubr.f32.mxu0 0.0
    %11024 = vmatmul.mubr.f32.gmra.mrb[0].mxu0 %v10508
    %v11025 = vpop.f32.mrb[0].mxu0
    %v11026 = vadd.f32 0.0, %v11025
    %v11027 = vpop.f32.mrb[0].mxu0
    %11028 = vmatprep.mubr.f32.mxu0 0.0
    %11029 = vmatmul.mubr.f32.gmra.mrb[0].mxu0 %v10511
    %v11030 = vpop.f32.mrb[0].mxu0
    %v11031 = vadd.f32 0.0, %v11030
    %v11032 = vpop.f32.mrb[0].mxu0
    %11033 = vmatprep.mubr.f32.mxu0 0.0
    %11034 = vmatmul.mubr.f32.gmra.mrb[0].mxu0 %v10514
    %v11035 = vpop.f32.mrb[0].mxu0
    %v11036 = vadd.f32 0.0, %v11035
    %v11037 = vpop.f32.mrb[0].mxu0
    %11038 = vmatprep.mubr.f32.mxu0 0.0
    %11039 = vmatmul.mubr.f32.gmra.mrb[0].mxu0 %v10517
    %v11040 = vpop.f32.mrb[0].mxu0
    %v11041 = vadd.f32 0.0, %v11040
    %v11042 = vpop.f32.mrb[0].mxu0
    %11043 = vmatprep.mubr.f32.mxu0 0.0
    %11044 = vmatmul.mubr.f32.gmra.mrb[0].mxu0 %v10520
    %v11045 = vpop.f32.mrb[0].mxu0
    %v11046 = vadd.f32 0.0, %v11045
    %v11047 = vpop.f32.mrb[0].mxu0
    %11048 = vmatprep.mubr.f32.mxu0 0.0
    %11049 = vmatmul.mubr.f32.gmra.mrb[0].mxu0 %v10523
    %v11050 = vpop.f32.mrb[0].mxu0
    %v11051 = vadd.f32 0.0, %v11050
    %v11052 = vpop.f32.mrb[0].mxu0
    %11053 = vmatprep.mubr.f32.mxu0 0.0
    %11054 = vmatmul.mubr.f32.gmra.mrb[0].mxu0 %v10526
    %v11055 = vpop.f32.mrb[0].mxu0
    %v11056 = vadd.f32 0.0, %v11055
    %v11057 = vpop.f32.mrb[0].mxu0
    %11058 = vmatprep.mubr.f32.mxu0 0.0
    %11059 = vmatmul.mubr.f32.gmra.mrb[0].mxu0 %v10529
    %v11060 = vpop.f32.mrb[0].mxu0
    %v11061 = vadd.f32 0.0, %v11060
    %v11062 = vpop.f32.mrb[0].mxu0
    %11063 = vmatprep.mubr.f32.mxu0 0.0
    %11064 = vmatmul.mubr.f32.gmra.mrb[0].mxu0 %v10532
    %v11065 = vpop.f32.mrb[0].mxu0
    %v11066 = vadd.f32 0.0, %v11065
    %v11067 = vpop.f32.mrb[0].mxu0
    %11068 = vmatprep.mubr.f32.mxu0 0.0
    %11069 = vmatmul.mubr.f32.gmra.mrb[0].mxu0 %v10535
    %v11070 = vpop.f32.mrb[0].mxu0
    %v11071 = vadd.f32 0.0, %v11070
    %v11072 = vpop.f32.mrb[0].mxu0
    %11073 = vmatprep.mubr.f32.mxu0 0.0
    %11074 = vmatmul.mubr.f32.gmra.mrb[0].mxu0 %v10538
    %v11075 = vpop.f32.mrb[0].mxu0
    %v11076 = vadd.f32 0.0, %v11075
    %v11077 = vpop.f32.mrb[0].mxu0
    %11078 = vmatprep.mubr.f32.mxu0 0.0
    %11079 = vmatmul.mubr.f32.gmra.mrb[0].mxu0 %v10541
    %v11080 = vpop.f32.mrb[0].mxu0
    %v11081 = vadd.f32 0.0, %v11080
    %v11082 = vpop.f32.mrb[0].mxu0
    %11083 = vmatprep.mubr.f32.mxu0 0.0
    %11084 = vmatmul.mubr.f32.gmra.mrb[0].mxu0 %v10544
    %v11085 = vpop.f32.mrb[0].mxu0
    %v11086 = vadd.f32 0.0, %v11085
    %v11087 = vpop.f32.mrb[0].mxu0
    %11088 = vmatprep.mubr.f32.mxu0 0.0
    %11089 = vmatmul.mubr.f32.gmra.mrb[0].mxu0 %v10547
    %v11090 = vpop.f32.mrb[0].mxu0
    %v11091 = vadd.f32 0.0, %v11090
    %v11092 = vpop.f32.mrb[0].mxu0
    %11093 = vmatprep.mubr.f32.mxu0 0.0
    %11094 = vmatmul.mubr.f32.gmra.mrb[0].mxu0 %v10550
    %v11095 = vpop.f32.mrb[0].mxu0
    %v11096 = vadd.f32 0.0, %v11095
    %v11097 = vpop.f32.mrb[0].mxu0
    %11098 = vmatprep.mubr.f32.mxu0 0.0
    %11099 = vmatmul.mubr.f32.gmra.mrb[0].mxu0 %v10553
    %v11100 = vpop.f32.mrb[0].mxu0
    %v11101 = vadd.f32 0.0, %v11100
    %v11102 = vpop.f32.mrb[0].mxu0
    %11103 = vmatprep.mubr.f32.mxu0 0.0
    %11104 = vmatmul.mubr.f32.gmra.mrb[0].mxu0 %v10556
    %v11105 = vpop.f32.mrb[0].mxu0
    %v11106 = vadd.f32 0.0, %v11105
    %v11107 = vpop.f32.mrb[0].mxu0
    %11108 = vmatprep.mubr.f32.mxu0 0.0
    %11109 = vmatmul.mubr.f32.gmra.mrb[0].mxu0 %v10559
    %v11110 = vpop.f32.mrb[0].mxu0
    %v11111 = vadd.f32 0.0, %v11110
    %v11112 = vpop.f32.mrb[0].mxu0
    %11113 = vmatprep.mubr.f32.mxu0 0.0
    %11114 = vmatmul.mubr.f32.gmra.mrb[0].mxu0 %v10562
    %v11115 = vpop.f32.mrb[0].mxu0
    %v11116 = vadd.f32 0.0, %v11115
    %v11117 = vpop.f32.mrb[0].mxu0
    %11118 = vmatprep.mubr.f32.mxu0 0.0
    %11119 = vmatmul.mubr.f32.gmra.mrb[0].mxu0 %v10565
    %v11120 = vpop.f32.mrb[0].mxu0
    %v11121 = vadd.f32 0.0, %v11120
    %v11122 = vpop.f32.mrb[0].mxu0
    %11123 = vmatprep.mubr.f32.mxu0 0.0
    %11124 = vmatmul.mubr.f32.gmra.mrb[0].mxu0 %v10568
    %v11125 = vpop.f32.mrb[0].mxu0
    %v11126 = vadd.f32 0.0, %v11125
    %v11127 = vpop.f32.mrb[0].mxu0
    %11128 = vmatprep.mubr.f32.mxu0 0.0
    %11129 = vmatmul.mubr.f32.gmra.mrb[0].mxu0 %v10571
    %v11130 = vpop.f32.mrb[0].mxu0
    %v11131 = vadd.f32 0.0, %v11130
    %v11132 = vpop.f32.mrb[0].mxu0
    %11133 = vmatprep.mubr.f32.mxu0 0.0
    %11134 = vmatmul.mubr.f32.gmra.mrb[0].mxu0 %v10574
    %v11135 = vpop.f32.mrb[0].mxu0
    %v11136 = vadd.f32 0.0, %v11135
    %v11137 = vpop.f32.mrb[0].mxu0
    %11138 = vmatprep.mubr.f32.mxu0 0.0
    %11139 = vmatmul.mubr.f32.gmra.mrb[0].mxu0 %v10577
    %v11140 = vpop.f32.mrb[0].mxu0
    %v11141 = vadd.f32 0.0, %v11140
    %v11142 = vpop.f32.mrb[0].mxu0
    %11143 = vmatprep.mubr.f32.mxu0 0.0
    %11144 = vmatmul.mubr.f32.gmra.mrb[0].mxu0 %v10580
    %v11145 = vpop.f32.mrb[0].mxu0
    %v11146 = vadd.f32 0.0, %v11145
    %v11147 = vpop.f32.mrb[0].mxu0
    %11148 = vmatprep.mubr.f32.mxu0 0.0
    %11149 = vmatmul.mubr.f32.gmra.mrb[0].mxu0 %v10583
    %v11150 = vpop.f32.mrb[0].mxu0
    %v11151 = vadd.f32 0.0, %v11150
    %v11152 = vpop.f32.mrb[0].mxu0
    %11153 = vmatprep.mubr.f32.mxu0 0.0
    %11154 = vmatmul.mubr.f32.gmra.mrb[0].mxu0 %v10586
    %v11155 = vpop.f32.mrb[0].mxu0
    %v11156 = vadd.f32 0.0, %v11155
    %v11157 = vpop.f32.mrb[0].mxu0
    %11158 = vmatprep.mubr.f32.mxu0 0.0
    %11159 = vmatmul.mubr.f32.gmra.mrb[0].mxu0 %v10589
    %v11160 = vpop.f32.mrb[0].mxu0
    %v11161 = vadd.f32 0.0, %v11160
    %v11162 = vpop.f32.mrb[0].mxu0
    %11163 = vmatprep.mubr.f32.mxu0 0.0
    %11164 = vmatmul.mubr.f32.gmra.mrb[0].mxu0 %v10592
    %v11165 = vpop.f32.mrb[0].mxu0
    %v11166 = vadd.f32 0.0, %v11165
    %v11167 = vpop.f32.mrb[0].mxu0
    %11168 = vmatprep.mubr.f32.mxu0 0.0
    %11169 = vmatmul.mubr.f32.gmra.mrb[0].mxu0 %v10595
    %v11170 = vpop.f32.mrb[0].mxu0
    %v11171 = vadd.f32 0.0, %v11170
    %v11172 = vpop.f32.mrb[0].mxu0
    %11173 = vmatprep.mubr.f32.mxu0 0.0
    %11174 = vmatmul.mubr.f32.gmra.mrb[0].mxu0 %v10598
    %v11175 = vpop.f32.mrb[0].mxu0
    %v11176 = vadd.f32 0.0, %v11175
    %v11177 = vpop.f32.mrb[0].mxu0
    %11178 = vmatprep.mubr.f32.mxu0 0.0
    %11179 = vmatmul.mubr.f32.gmra.mrb[0].mxu0 %v10601
    %v11180 = vpop.f32.mrb[0].mxu0
    %v11181 = vadd.f32 0.0, %v11180
    %v11182 = vpop.f32.mrb[0].mxu0
    %11183 = vmatprep.mubr.f32.mxu0 0.0
    %11184 = vmatmul.mubr.f32.gmra.mrb[0].mxu0 %v10604
    %v11185 = vpop.f32.mrb[0].mxu0
    %v11186 = vadd.f32 0.0, %v11185
    %v11187 = vpop.f32.mrb[0].mxu0
    %11188 = vmatprep.mubr.f32.mxu0 0.0
    %11189 = vmatmul.mubr.f32.gmra.mrb[0].mxu0 %v10607
    %v11190 = vpop.f32.mrb[0].mxu0
    %v11191 = vadd.f32 0.0, %v11190
    %v11192 = vpop.f32.mrb[0].mxu0
    %11193 = vmatprep.mubr.f32.mxu0 0.0
    %11194 = vmatmul.mubr.f32.gmra.mrb[0].mxu0 %v10610
    %v11195 = vpop.f32.mrb[0].mxu0
    %v11196 = vadd.f32 0.0, %v11195
    %v11197 = vpop.f32.mrb[0].mxu0
    %11198 = vmatprep.mubr.f32.mxu0 0.0
    %11199 = vmatmul.mubr.f32.gmra.mrb[0].mxu0 %v10613
    %v11200 = vpop.f32.mrb[0].mxu0
    %v11201 = vadd.f32 0.0, %v11200
    %v11202 = vpop.f32.mrb[0].mxu0
    %11203 = vmatprep.mubr.f32.mxu0 0.0
    %11204 = vmatmul.mubr.f32.gmra.mrb[0].mxu0 %v10616
    %v11205 = vpop.f32.mrb[0].mxu0
    %v11206 = vadd.f32 0.0, %v11205
    %v11207 = vpop.f32.mrb[0].mxu0
    %11208 = vmatprep.mubr.f32.mxu0 0.0
    %11209 = vmatmul.mubr.f32.gmra.mrb[0].mxu0 %v10619
    %v11210 = vpop.f32.mrb[0].mxu0
    %v11211 = vadd.f32 0.0, %v11210
    %v11212 = vpop.f32.mrb[0].mxu0
    %11213 = vmatprep.mubr.f32.mxu0 0.0
    %11214 = vmatmul.mubr.f32.gmra.mrb[0].mxu0 %v10622
    %v11215 = vpop.f32.mrb[0].mxu0
    %v11216 = vadd.f32 0.0, %v11215
    %v11217 = vpop.f32.mrb[0].mxu0
    %11218 = vmatprep.mubr.f32.mxu0 0.0
    %11219 = vmatmul.mubr.f32.gmra.mrb[0].mxu0 %v10625
    %v11220 = vpop.f32.mrb[0].mxu0
    %v11221 = vadd.f32 0.0, %v11220
    %v11222 = vpop.f32.mrb[0].mxu0
    %11223 = vmatprep.mubr.f32.mxu0 0.0
    %11224 = vmatmul.mubr.f32.gmra.mrb[0].mxu0 %v10628
    %v11225 = vpop.f32.mrb[0].mxu0
    %v11226 = vadd.f32 0.0, %v11225
    %v11227 = vpop.f32.mrb[0].mxu0
    %11228 = vmatprep.mubr.f32.mxu0 0.0
    %11229 = vmatmul.mubr.f32.gmra.mrb[0].mxu0 %v10631
    %v11230 = vpop.f32.mrb[0].mxu0
    %v11231 = vadd.f32 0.0, %v11230
    %v11232 = vpop.f32.mrb[0].mxu0
    %11233 = vmatprep.mubr.f32.mxu0 0.0
    %11234 = vmatmul.mubr.f32.gmra.mrb[0].mxu0 %v10634
    %v11235 = vpop.f32.mrb[0].mxu0
    %v11236 = vadd.f32 0.0, %v11235
    %v11237 = vpop.f32.mrb[0].mxu0
    %11238 = vmatprep.mubr.f32.mxu0 0.0
    %11239 = vmatmul.mubr.f32.gmra.mrb[0].mxu0 %v10637
    %v11240 = vpop.f32.mrb[0].mxu0
    %v11241 = vadd.f32 0.0, %v11240
    %v11242 = vpop.f32.mrb[0].mxu0
    %11243 = vmatprep.mubr.f32.mxu0 0.0
    %11244 = vmatmul.mubr.f32.gmra.mrb[0].mxu0 %v10640
    %v11245 = vpop.f32.mrb[0].mxu0
    %v11246 = vadd.f32 0.0, %v11245
    %v11247 = vpop.f32.mrb[0].mxu0
    %11248 = vmatprep.mubr.f32.mxu0 0.0
    %11249 = vmatmul.mubr.f32.gmra.mrb[0].mxu0 %v10643
    %v11250 = vpop.f32.mrb[0].mxu0
    %v11251 = vadd.f32 0.0, %v11250
    %v11252 = vpop.f32.mrb[0].mxu0
    %11253 = vmatprep.mubr.f32.mxu0 0.0
    %11254 = vmatmul.mubr.f32.gmra.mrb[0].mxu0 %v10646
    %v11255 = vpop.f32.mrb[0].mxu0
    %v11256 = vadd.f32 0.0, %v11255
    %v11257 = vpop.f32.mrb[0].mxu0
    %11258 = vmatprep.mubr.f32.mxu0 0.0
    %11259 = vmatmul.mubr.f32.gmra.mrb[0].mxu0 %v10649
    %v11260 = vpop.f32.mrb[0].mxu0
    %v11261 = vadd.f32 0.0, %v11260
    %v11262 = vpop.f32.mrb[0].mxu0
    %11263 = vmatprep.mubr.f32.mxu0 0.0
    %11264 = vmatmul.mubr.f32.gmra.mrb[0].mxu0 %v10652
    %v11265 = vpop.f32.mrb[0].mxu0
    %v11266 = vadd.f32 0.0, %v11265
    %v11267 = vpop.f32.mrb[0].mxu0
    %11268 = vmatprep.mubr.f32.mxu0 0.0
    %11269 = vmatmul.mubr.f32.gmra.mrb[0].mxu0 %v10655
    %v11270 = vpop.f32.mrb[0].mxu0
    %v11271 = vadd.f32 0.0, %v11270
    %v11272 = vpop.f32.mrb[0].mxu0
    %11273 = vmatprep.mubr.f32.mxu0 0.0
    %11274 = vmatmul.mubr.f32.gmra.mrb[0].mxu0 %v10658
    %v11275 = vpop.f32.mrb[0].mxu0
    %v11276 = vadd.f32 0.0, %v11275
    %v11277 = vpop.f32.mrb[0].mxu0
    %11278 = vmatprep.mubr.f32.mxu0 0.0
    %11279 = vmatmul.mubr.f32.gmra.mrb[0].mxu0 %v10661
    %v11280 = vpop.f32.mrb[0].mxu0
    %v11281 = vadd.f32 0.0, %v11280
    %v11282 = vpop.f32.mrb[0].mxu0
    %11283 = vmatprep.mubr.f32.mxu0 0.0
    %11284 = vmatmul.mubr.f32.gmra.mrb[0].mxu0 %v10664
    %v11285 = vpop.f32.mrb[0].mxu0
    %v11286 = vadd.f32 0.0, %v11285
    %v11287 = vpop.f32.mrb[0].mxu0
    %11288 = vmatprep.mubr.f32.mxu0 0.0
    %11289 = vmatmul.mubr.f32.gmra.mrb[0].mxu0 %v10667
    %v11290 = vpop.f32.mrb[0].mxu0
    %v11291 = vadd.f32 0.0, %v11290
    %v11292 = vpop.f32.mrb[0].mxu0
    %11293 = vmatprep.mubr.f32.mxu0 0.0
    %11294 = vmatmul.mubr.f32.gmra.mrb[0].mxu0 %v10670
    %v11295 = vpop.f32.mrb[0].mxu0
    %v11296 = vadd.f32 0.0, %v11295
    %v11297 = vpop.f32.mrb[0].mxu0
    %11298 = vmatprep.mubr.f32.mxu0 0.0
    %11299 = vmatmul.mubr.f32.gmra.mrb[0].mxu0 %v10673
    %v11300 = vpop.f32.mrb[0].mxu0
    %v11301 = vadd.f32 0.0, %v11300
    %v11302 = vpop.f32.mrb[0].mxu0
    %11303 = vmatprep.mubr.f32.mxu0 0.0
    %11304 = vmatmul.mubr.f32.gmra.mrb[0].mxu0 %v10676
    %v11305 = vpop.f32.mrb[0].mxu0
    %v11306 = vadd.f32 0.0, %v11305
    %v11307 = vpop.f32.mrb[0].mxu0
    %11308 = vmatprep.mubr.f32.mxu0 0.0
    %11309 = vmatmul.mubr.f32.gmra.mrb[0].mxu0 %v10679
    %v11310 = vpop.f32.mrb[0].mxu0
    %v11311 = vadd.f32 0.0, %v11310
    %v11312 = vpop.f32.mrb[0].mxu0
    %11313 = vmatprep.mubr.f32.mxu0 0.0
    %11314 = vmatmul.mubr.f32.gmra.mrb[0].mxu0 %v10682
    %v11315 = vpop.f32.mrb[0].mxu0
    %v11316 = vadd.f32 0.0, %v11315
    %v11317 = vpop.f32.mrb[0].mxu0
    %11318 = vmatprep.mubr.f32.mxu0 0.0
    %11319 = vmatmul.mubr.f32.gmra.mrb[0].mxu0 %v10685
    %v11320 = vpop.f32.mrb[0].mxu0
    %v11321 = vadd.f32 0.0, %v11320
    %v11322 = vpop.f32.mrb[0].mxu0
    %11323 = vmatprep.mubr.f32.mxu0 0.0
    %11324 = vmatmul.mubr.f32.gmra.mrb[0].mxu0 %v10688
    %v11325 = vpop.f32.mrb[0].mxu0
    %v11326 = vadd.f32 0.0, %v11325
    %v11327 = vpop.f32.mrb[0].mxu0
    %11328 = vmatprep.mubr.f32.mxu0 0.0
    %11329 = vmatmul.mubr.f32.gmra.mrb[0].mxu0 %v10691
    %v11330 = vpop.f32.mrb[0].mxu0
    %v11331 = vadd.f32 0.0, %v11330
    %v11332 = vpop.f32.mrb[0].mxu0
    %11333 = vmatprep.mubr.f32.mxu0 0.0
    %11334 = vmatmul.mubr.f32.gmra.mrb[0].mxu0 %v10694
    %v11335 = vpop.f32.mrb[0].mxu0
    %v11336 = vadd.f32 0.0, %v11335
    %v11337 = vpop.f32.mrb[0].mxu0
    %11338 = vmatprep.mubr.f32.mxu0 0.0
    %11339 = vmatmul.mubr.f32.gmra.mrb[0].mxu0 %v10697
    %v11340 = vpop.f32.mrb[0].mxu0
    %v11341 = vadd.f32 0.0, %v11340
    %v11342 = vpop.f32.mrb[0].mxu0
    %11343 = vmatprep.mubr.f32.mxu0 0.0
    %11344 = vmatmul.mubr.f32.gmra.mrb[0].mxu0 %v10700
    %v11345 = vpop.f32.mrb[0].mxu0
    %v11346 = vadd.f32 0.0, %v11345
    %v11347 = vpop.f32.mrb[0].mxu0
    %11348 = vmatprep.mubr.f32.mxu0 0.0
    %11349 = vmatmul.mubr.f32.gmra.mrb[0].mxu0 %v10703
    %v11350 = vpop.f32.mrb[0].mxu0
    %v11351 = vadd.f32 0.0, %v11350
    %v11352 = vpop.f32.mrb[0].mxu0
    %11353 = vmatprep.mubr.f32.mxu0 0.0
    %11354 = vmatmul.mubr.f32.gmra.mrb[0].mxu0 %v10706
    %v11355 = vpop.f32.mrb[0].mxu0
    %v11356 = vadd.f32 0.0, %v11355
    %v11357 = vpop.f32.mrb[0].mxu0
    %11358 = vmatprep.mubr.f32.mxu0 0.0
    %11359 = vmatmul.mubr.f32.gmra.mrb[0].mxu0 %v10709
    %v11360 = vpop.f32.mrb[0].mxu0
    %v11361 = vadd.f32 0.0, %v11360
    %v11362 = vpop.f32.mrb[0].mxu0
    %11363 = vmatprep.mubr.f32.mxu0 0.0
    %11364 = vmatmul.mubr.f32.gmra.mrb[0].mxu0 %v10712
    %v11365 = vpop.f32.mrb[0].mxu0
    %v11366 = vadd.f32 0.0, %v11365
    %v11367 = vpop.f32.mrb[0].mxu0
    %11368 = vmatprep.mubr.f32.mxu0 0.0
    %11369 = vmatmul.mubr.f32.gmra.mrb[0].mxu0 %v10715
    %v11370 = vpop.f32.mrb[0].mxu0
    %v11371 = vadd.f32 0.0, %v11370
    %v11372 = vpop.f32.mrb[0].mxu0
    %11373 = vmatprep.mubr.f32.mxu0 0.0
    %11374 = vmatmul.mubr.f32.gmra.mrb[0].mxu0 %v10718
    %v11375 = vpop.f32.mrb[0].mxu0
    %v11376 = vadd.f32 0.0, %v11375
    %v11377 = vpop.f32.mrb[0].mxu0
    %11378 = vmatprep.mubr.f32.mxu0 0.0
    %11379 = vmatmul.mubr.f32.gmra.mrb[0].mxu0 %v10721
    %v11380 = vpop.f32.mrb[0].mxu0
    %v11381 = vadd.f32 0.0, %v11380
    %v11382 = vpop.f32.mrb[0].mxu0
    %11383 = vmatprep.mubr.f32.mxu0 0.0
    %11384 = vmatmul.mubr.f32.gmra.mrb[0].mxu0 %v10724
    %v11385 = vpop.f32.mrb[0].mxu0
    %v11386 = vadd.f32 0.0, %v11385
    %v11387 = vpop.f32.mrb[0].mxu0
    %11388 = vmatprep.mubr.f32.mxu0 0.0
    %11389 = vmatmul.mubr.f32.gmra.mrb[0].mxu0 %v10727
    %v11390 = vpop.f32.mrb[0].mxu0
    %v11391 = vadd.f32 0.0, %v11390
    %v11392 = vpop.f32.mrb[0].mxu0
    %11393 = vmatprep.mubr.f32.mxu0 0.0
    %11394 = vmatmul.mubr.f32.gmra.mrb[0].mxu0 %v10730
    %v11395 = vpop.f32.mrb[0].mxu0
    %v11396 = vadd.f32 0.0, %v11395
    %v11397 = vpop.f32.mrb[0].mxu0
    %11398 = vmatprep.mubr.f32.mxu0 0.0
    %11399 = vmatmul.mubr.f32.gmra.mrb[0].mxu0 %v10733
    %v11400 = vpop.f32.mrb[0].mxu0
    %v11401 = vadd.f32 0.0, %v11400
    %v11402 = vpop.f32.mrb[0].mxu0
    %11403 = vmatprep.mubr.f32.mxu0 0.0
    %11404 = vmatmul.mubr.f32.gmra.mrb[0].mxu0 %v10736
    %v11405 = vpop.f32.mrb[0].mxu0
    %v11406 = vadd.f32 0.0, %v11405
    %v11407 = vpop.f32.mrb[0].mxu0
    %11408 = vmatprep.mubr.f32.mxu0 0.0
    %11409 = vmatmul.mubr.f32.gmra.mrb[0].mxu0 %v10739
    %v11410 = vpop.f32.mrb[0].mxu0
    %v11411 = vadd.f32 0.0, %v11410
    %v11412 = vpop.f32.mrb[0].mxu0
    %11413 = vmatprep.mubr.f32.mxu0 0.0
    %11414 = vmatmul.mubr.f32.gmra.mrb[0].mxu0 %v10742
    %v11415 = vpop.f32.mrb[0].mxu0
    %v11416 = vadd.f32 0.0, %v11415
    %v11417 = vpop.f32.mrb[0].mxu0
    %11418 = vmatprep.mubr.f32.mxu0 0.0
    %11419 = vmatmul.mubr.f32.gmra.mrb[0].mxu0 %v10745
    %v11420 = vpop.f32.mrb[0].mxu0
    %v11421 = vadd.f32 0.0, %v11420
    %v11422 = vpop.f32.mrb[0].mxu0
    %11423 = vmatprep.mubr.f32.mxu0 0.0
    %11424 = vmatmul.mubr.f32.gmra.mrb[0].mxu0 %v10748
    %v11425 = vpop.f32.mrb[0].mxu0
    %v11426 = vadd.f32 0.0, %v11425
    %v11427 = vpop.f32.mrb[0].mxu0
    %11428 = vmatprep.mubr.f32.mxu0 0.0
    %11429 = vmatmul.mubr.f32.gmra.mrb[0].mxu0 %v10751
    %v11430 = vpop.f32.mrb[0].mxu0
    %v11431 = vadd.f32 0.0, %v11430
    %v11432 = vpop.f32.mrb[0].mxu0
    %11433 = vmatprep.mubr.f32.mxu0 0.0
    %11434 = vmatmul.mubr.f32.gmra.mrb[0].mxu0 %v10754
    %v11435 = vpop.f32.mrb[0].mxu0
    %v11436 = vadd.f32 0.0, %v11435
    %v11437 = vpop.f32.mrb[0].mxu0
    %11438 = vmatprep.mubr.f32.mxu0 0.0
    %11439 = vmatmul.mubr.f32.gmra.mrb[0].mxu0 %v10757
    %v11440 = vpop.f32.mrb[0].mxu0
    %v11441 = vadd.f32 0.0, %v11440
    %v11442 = vpop.f32.mrb[0].mxu0
    %11443 = vmatprep.mubr.f32.mxu0 0.0
    %11444 = vmatmul.mubr.f32.gmra.mrb[0].mxu0 %v10760
    %v11445 = vpop.f32.mrb[0].mxu0
    %v11446 = vadd.f32 0.0, %v11445
    %v11447 = vpop.f32.mrb[0].mxu0
    %11448 = vmatprep.mubr.f32.mxu0 0.0
    %11449 = vmatmul.mubr.f32.gmra.mrb[0].mxu0 %v10763
    %v11450 = vpop.f32.mrb[0].mxu0
    %v11451 = vadd.f32 0.0, %v11450
    %v11452 = vpop.f32.mrb[0].mxu0
    %11453 = vmatprep.mubr.f32.mxu0 0.0
    %11454 = vmatmul.mubr.f32.gmra.mrb[0].mxu0 %v10766
    %v11455 = vpop.f32.mrb[0].mxu0
    %v11456 = vadd.f32 0.0, %v11455
    %v11457 = vpop.f32.mrb[0].mxu0
    %11458 = vmatprep.mubr.f32.mxu0 0.0
    %11459 = vmatmul.mubr.f32.gmra.mrb[0].mxu0 %v10769
    %v11460 = vpop.f32.mrb[0].mxu0
    %v11461 = vadd.f32 0.0, %v11460
    %v11462 = vpop.f32.mrb[0].mxu0
    %11463 = vmatprep.mubr.f32.mxu0 0.0
    %11464 = vmatmul.mubr.f32.gmra.mrb[0].mxu0 %v10772
    %v11465 = vpop.f32.mrb[0].mxu0
    %v11466 = vadd.f32 0.0, %v11465
    %v11467 = vpop.f32.mrb[0].mxu0
    %11468 = vmatprep.mubr.f32.mxu0 0.0
    %11469 = vmatmul.mubr.f32.gmra.mrb[0].mxu0 %v10775
    %v11470 = vpop.f32.mrb[0].mxu0
    %v11471 = vadd.f32 0.0, %v11470
    %v11472 = vpop.f32.mrb[0].mxu0
    %11473 = vmatprep.mubr.f32.mxu0 0.0
    %11474 = vmatmul.mubr.f32.gmra.mrb[0].mxu0 %v10778
    %v11475 = vpop.f32.mrb[0].mxu0
    %v11476 = vadd.f32 0.0, %v11475
    %v11477 = vpop.f32.mrb[0].mxu0
    %11478 = vmatprep.mubr.f32.mxu0 0.0
    %11479 = vmatmul.mubr.f32.gmra.mrb[0].mxu0 %v10781
    %v11480 = vpop.f32.mrb[0].mxu0
    %v11481 = vadd.f32 0.0, %v11480
    %v11482 = vpop.f32.mrb[0].mxu0
    %11483 = vmatprep.mubr.f32.mxu0 0.0
    %11484 = vmatmul.mubr.f32.gmra.mrb[0].mxu0 %v10784
    %v11485 = vpop.f32.mrb[0].mxu0
    %v11486 = vadd.f32 0.0, %v11485
    %v11487 = vpop.f32.mrb[0].mxu0
    %11488 = vmatprep.mubr.f32.mxu0 0.0
    %11489 = vmatmul.mubr.f32.gmra.mrb[0].mxu0 %v10787
    %v11490 = vpop.f32.mrb[0].mxu0
    %v11491 = vadd.f32 0.0, %v11490
    %v11492 = vpop.f32.mrb[0].mxu0
    %11493 = vdwg.mxu0
    %v11494 = vmax.f32 %v10856, 0.0
    %v11495 = vmax.f32 %v10861, 0.0
    %v11496 = vmax.f32 %v10866, 0.0
    %v11497 = vmax.f32 %v10871, 0.0
    %v11498 = vmax.f32 %v10876, 0.0
    %v11499 = vmax.f32 %v10881, 0.0
    %v11500 = vmax.f32 %v10886, 0.0
    %v11501 = vmax.f32 %v10891, 0.0
    %v11502 = vmax.f32 %v10896, 0.0
    %v11503 = vmax.f32 %v10901, 0.0
    %v11504 = vmax.f32 %v10906, 0.0
    %v11505 = vmax.f32 %v10911, 0.0
    %v11506 = vmax.f32 %v10916, 0.0
    %v11507 = vmax.f32 %v10921, 0.0
    %v11508 = vmax.f32 %v10926, 0.0
    %v11509 = vmax.f32 %v10931, 0.0
    %v11510 = vmax.f32 %v10936, 0.0
    %v11511 = vmax.f32 %v10941, 0.0
    %v11512 = vmax.f32 %v10946, 0.0
    %v11513 = vmax.f32 %v10951, 0.0
    %v11514 = vmax.f32 %v10956, 0.0
    %v11515 = vmax.f32 %v10961, 0.0
    %v11516 = vmax.f32 %v10966, 0.0
    %v11517 = vmax.f32 %v10971, 0.0
    %v11518 = vmax.f32 %v10976, 0.0
    %v11519 = vmax.f32 %v10981, 0.0
    %v11520 = vmax.f32 %v10986, 0.0
    %v11521 = vmax.f32 %v10991, 0.0
    %v11522 = vmax.f32 %v10996, 0.0
    %v11523 = vmax.f32 %v11001, 0.0
    %v11524 = vmax.f32 %v11006, 0.0
    %v11525 = vmax.f32 %v11011, 0.0
    %v11526 = vmax.f32 %v11016, 0.0
    %v11527 = vmax.f32 %v11021, 0.0
    %v11528 = vmax.f32 %v11026, 0.0
    %v11529 = vmax.f32 %v11031, 0.0
    %v11530 = vmax.f32 %v11036, 0.0
    %v11531 = vmax.f32 %v11041, 0.0
    %v11532 = vmax.f32 %v11046, 0.0
    %v11533 = vmax.f32 %v11051, 0.0
    %v11534 = vmax.f32 %v11056, 0.0
    %v11535 = vmax.f32 %v11061, 0.0
    %v11536 = vmax.f32 %v11066, 0.0
    %v11537 = vmax.f32 %v11071, 0.0
    %v11538 = vmax.f32 %v11076, 0.0
    %v11539 = vmax.f32 %v11081, 0.0
    %v11540 = vmax.f32 %v11086, 0.0
    %v11541 = vmax.f32 %v11091, 0.0
    %v11542 = vmax.f32 %v11096, 0.0
    %v11543 = vmax.f32 %v11101, 0.0
    %v11544 = vmax.f32 %v11106, 0.0
    %v11545 = vmax.f32 %v11111, 0.0
    %v11546 = vmax.f32 %v11116, 0.0
    %v11547 = vmax.f32 %v11121, 0.0
    %v11548 = vmax.f32 %v11126, 0.0
    %v11549 = vmax.f32 %v11131, 0.0
    %v11550 = vmax.f32 %v11136, 0.0
    %v11551 = vmax.f32 %v11141, 0.0
    %v11552 = vmax.f32 %v11146, 0.0
    %v11553 = vmax.f32 %v11151, 0.0
    %v11554 = vmax.f32 %v11156, 0.0
    %v11555 = vmax.f32 %v11161, 0.0
    %v11556 = vmax.f32 %v11166, 0.0
    %v11557 = vmax.f32 %v11171, 0.0
    %v11558 = vmax.f32 %v11176, 0.0
    %v11559 = vmax.f32 %v11181, 0.0
    %v11560 = vmax.f32 %v11186, 0.0
    %v11561 = vmax.f32 %v11191, 0.0
    %v11562 = vmax.f32 %v11196, 0.0
    %v11563 = vmax.f32 %v11201, 0.0
    %v11564 = vmax.f32 %v11206, 0.0
    %v11565 = vmax.f32 %v11211, 0.0
    %v11566 = vmax.f32 %v11216, 0.0
    %v11567 = vmax.f32 %v11221, 0.0
    %v11568 = vmax.f32 %v11226, 0.0
    %v11569 = vmax.f32 %v11231, 0.0
    %v11570 = vmax.f32 %v11236, 0.0
    %v11571 = vmax.f32 %v11241, 0.0
    %v11572 = vmax.f32 %v11246, 0.0
    %v11573 = vmax.f32 %v11251, 0.0
    %v11574 = vmax.f32 %v11256, 0.0
    %v11575 = vmax.f32 %v11261, 0.0
    %v11576 = vmax.f32 %v11266, 0.0
    %v11577 = vmax.f32 %v11271, 0.0
    %v11578 = vmax.f32 %v11276, 0.0
    %v11579 = vmax.f32 %v11281, 0.0
    %v11580 = vmax.f32 %v11286, 0.0
    %v11581 = vmax.f32 %v11291, 0.0
    %v11582 = vmax.f32 %v11296, 0.0
    %v11583 = vmax.f32 %v11301, 0.0
    %v11584 = vmax.f32 %v11306, 0.0
    %v11585 = vmax.f32 %v11311, 0.0
    %v11586 = vmax.f32 %v11316, 0.0
    %v11587 = vmax.f32 %v11321, 0.0
    %v11588 = vmax.f32 %v11326, 0.0
    %v11589 = vmax.f32 %v11331, 0.0
    %v11590 = vmax.f32 %v11336, 0.0
    %v11591 = vmax.f32 %v11341, 0.0
    %v11592 = vmax.f32 %v11346, 0.0
    %v11593 = vmax.f32 %v11351, 0.0
    %v11594 = vmax.f32 %v11356, 0.0
    %v11595 = vmax.f32 %v11361, 0.0
    %v11596 = vmax.f32 %v11366, 0.0
    %v11597 = vmax.f32 %v11371, 0.0
    %v11598 = vmax.f32 %v11376, 0.0
    %v11599 = vmax.f32 %v11381, 0.0
    %v11600 = vmax.f32 %v11386, 0.0
    %v11601 = vmax.f32 %v11391, 0.0
    %v11602 = vmax.f32 %v11396, 0.0
    %v11603 = vmax.f32 %v11401, 0.0
    %v11604 = vmax.f32 %v11406, 0.0
    %v11605 = vmax.f32 %v11411, 0.0
    %v11606 = vmax.f32 %v11416, 0.0
    %v11607 = vmax.f32 %v11421, 0.0
    %v11608 = vmax.f32 %v11426, 0.0
    %v11609 = vmax.f32 %v11431, 0.0
    %v11610 = vmax.f32 %v11436, 0.0
    %v11611 = vmax.f32 %v11441, 0.0
    %v11612 = vmax.f32 %v11446, 0.0
    %v11613 = vmax.f32 %v11451, 0.0
    %v11614 = vmax.f32 %v11456, 0.0
    %v11615 = vmax.f32 %v11461, 0.0
    %v11616 = vmax.f32 %v11466, 0.0
    %v11617 = vmax.f32 %v11471, 0.0
    %v11618 = vmax.f32 %v11476, 0.0
    %v11619 = vmax.f32 %v11481, 0.0
    %v11620 = vmax.f32 %v11486, 0.0
    %v11621 = vmax.f32 %v11491, 0.0
    %v11622 = vld [vmem:[#allocation2] sm:$0xff]
    %v11623 = vld [vmem:[#allocation2 + $0x8] sm:$0xff]
    %v11624 = vld [vmem:[#allocation2 + $0x10] sm:$0xff]
    %v11625 = vld [vmem:[#allocation2 + $0x18] sm:$0xff]
    %v11627 = vsel %vm10404, %v11494, 0
    %v11630 = vsel %vm10404, %v11495, 0
    %v11633 = vsel %vm10404, %v11496, 0
    %v11636 = vsel %vm10404, %v11497, 0
    %v11639 = vsel %vm10404, %v11498, 0
    %v11642 = vsel %vm10404, %v11499, 0
    %v11645 = vsel %vm10404, %v11500, 0
    %v11648 = vsel %vm10404, %v11501, 0
    %v11651 = vsel %vm10404, %v11502, 0
    %v11654 = vsel %vm10404, %v11503, 0
    %v11657 = vsel %vm10404, %v11504, 0
    %v11660 = vsel %vm10404, %v11505, 0
    %v11663 = vsel %vm10404, %v11506, 0
    %v11666 = vsel %vm10404, %v11507, 0
    %v11669 = vsel %vm10404, %v11508, 0
    %v11672 = vsel %vm10404, %v11509, 0
    %v11675 = vsel %vm10404, %v11510, 0
    %v11678 = vsel %vm10404, %v11511, 0
    %v11681 = vsel %vm10404, %v11512, 0
    %v11684 = vsel %vm10404, %v11513, 0
    %v11687 = vsel %vm10404, %v11514, 0
    %v11690 = vsel %vm10404, %v11515, 0
    %v11693 = vsel %vm10404, %v11516, 0
    %v11696 = vsel %vm10404, %v11517, 0
    %v11699 = vsel %vm10404, %v11518, 0
    %v11702 = vsel %vm10404, %v11519, 0
    %v11705 = vsel %vm10404, %v11520, 0
    %v11708 = vsel %vm10404, %v11521, 0
    %v11711 = vsel %vm10404, %v11522, 0
    %v11714 = vsel %vm10404, %v11523, 0
    %v11717 = vsel %vm10404, %v11524, 0
    %v11720 = vsel %vm10404, %v11525, 0
    %v11723 = vsel %vm10404, %v11526, 0
    %v11726 = vsel %vm10404, %v11527, 0
    %v11729 = vsel %vm10404, %v11528, 0
    %v11732 = vsel %vm10404, %v11529, 0
    %v11735 = vsel %vm10404, %v11530, 0
    %v11738 = vsel %vm10404, %v11531, 0
    %v11741 = vsel %vm10404, %v11532, 0
    %v11744 = vsel %vm10404, %v11533, 0
    %v11747 = vsel %vm10404, %v11534, 0
    %v11750 = vsel %vm10404, %v11535, 0
    %v11753 = vsel %vm10404, %v11536, 0
    %v11756 = vsel %vm10404, %v11537, 0
    %v11759 = vsel %vm10404, %v11538, 0
    %v11762 = vsel %vm10404, %v11539, 0
    %v11765 = vsel %vm10404, %v11540, 0
    %v11768 = vsel %vm10404, %v11541, 0
    %v11771 = vsel %vm10404, %v11542, 0
    %v11774 = vsel %vm10404, %v11543, 0
    %v11777 = vsel %vm10404, %v11544, 0
    %v11780 = vsel %vm10404, %v11545, 0
    %v11783 = vsel %vm10404, %v11546, 0
    %v11786 = vsel %vm10404, %v11547, 0
    %v11789 = vsel %vm10404, %v11548, 0
    %v11792 = vsel %vm10404, %v11549, 0
    %v11795 = vsel %vm10404, %v11550, 0
    %v11798 = vsel %vm10404, %v11551, 0
    %v11801 = vsel %vm10404, %v11552, 0
    %v11804 = vsel %vm10404, %v11553, 0
    %v11807 = vsel %vm10404, %v11554, 0
    %v11810 = vsel %vm10404, %v11555, 0
    %v11813 = vsel %vm10404, %v11556, 0
    %v11816 = vsel %vm10404, %v11557, 0
    %v11819 = vsel %vm10404, %v11558, 0
    %v11822 = vsel %vm10404, %v11559, 0
    %v11825 = vsel %vm10404, %v11560, 0
    %v11828 = vsel %vm10404, %v11561, 0
    %v11831 = vsel %vm10404, %v11562, 0
    %v11834 = vsel %vm10404, %v11563, 0
    %v11837 = vsel %vm10404, %v11564, 0
    %v11840 = vsel %vm10404, %v11565, 0
    %v11843 = vsel %vm10404, %v11566, 0
    %v11846 = vsel %vm10404, %v11567, 0
    %v11849 = vsel %vm10404, %v11568, 0
    %v11852 = vsel %vm10404, %v11569, 0
    %v11855 = vsel %vm10404, %v11570, 0
    %v11858 = vsel %vm10404, %v11571, 0
    %v11861 = vsel %vm10404, %v11572, 0
    %v11864 = vsel %vm10404, %v11573, 0
    %v11867 = vsel %vm10404, %v11574, 0
    %v11870 = vsel %vm10404, %v11575, 0
    %v11873 = vsel %vm10404, %v11576, 0
    %v11876 = vsel %vm10404, %v11577, 0
    %v11879 = vsel %vm10404, %v11578, 0
    %v11882 = vsel %vm10404, %v11579, 0
    %v11885 = vsel %vm10404, %v11580, 0
    %v11888 = vsel %vm10404, %v11581, 0
    %v11891 = vsel %vm10404, %v11582, 0
    %v11894 = vsel %vm10404, %v11583, 0
    %v11897 = vsel %vm10404, %v11584, 0
    %v11900 = vsel %vm10404, %v11585, 0
    %v11903 = vsel %vm10404, %v11586, 0
    %v11906 = vsel %vm10404, %v11587, 0
    %v11909 = vsel %vm10404, %v11588, 0
    %v11912 = vsel %vm10404, %v11589, 0
    %v11915 = vsel %vm10404, %v11590, 0
    %v11918 = vsel %vm10404, %v11591, 0
    %v11921 = vsel %vm10404, %v11592, 0
    %v11924 = vsel %vm10404, %v11593, 0
    %v11927 = vsel %vm10404, %v11594, 0
    %v11930 = vsel %vm10404, %v11595, 0
    %v11933 = vsel %vm10404, %v11596, 0
    %v11936 = vsel %vm10404, %v11597, 0
    %v11939 = vsel %vm10404, %v11598, 0
    %v11942 = vsel %vm10404, %v11599, 0
    %v11945 = vsel %vm10404, %v11600, 0
    %v11948 = vsel %vm10404, %v11601, 0
    %v11951 = vsel %vm10404, %v11602, 0
    %v11954 = vsel %vm10404, %v11603, 0
    %v11957 = vsel %vm10404, %v11604, 0
    %v11960 = vsel %vm10404, %v11605, 0
    %v11963 = vsel %vm10404, %v11606, 0
    %v11966 = vsel %vm10404, %v11607, 0
    %v11969 = vsel %vm10404, %v11608, 0
    %v11972 = vsel %vm10404, %v11609, 0
    %v11975 = vsel %vm10404, %v11610, 0
    %v11978 = vsel %vm10404, %v11611, 0
    %v11981 = vsel %vm10404, %v11612, 0
    %v11984 = vsel %vm10404, %v11613, 0
    %v11987 = vsel %vm10404, %v11614, 0
    %v11990 = vsel %vm10404, %v11615, 0
    %v11993 = vsel %vm10404, %v11616, 0
    %v11996 = vsel %vm10404, %v11617, 0
    %v11999 = vsel %vm10404, %v11618, 0
    %v12002 = vsel %vm10404, %v11619, 0
    %v12005 = vsel %vm10404, %v11620, 0
    %v12008 = vsel %vm10404, %v11621, 0
    %12010 = vmatprep.subr.mxu0 0.0
    %12011 = vmatpush1.msra.mxu0 %v11622
    %12012 = vmatprep.subr.mxu0 0.0
    %12013 = vmatpush1.msra.mxu0 %v11623
    %12014 = vmatprep.subr.mxu0 0.0
    %12015 = vmatpush1.msra.mxu0 %v11624
    %12016 = vmatprep.subr.mxu0 0.0
    %12017 = vmatpush1.msra.mxu0 %v11625
    %12018 = vmatprep.subr.mxu0 0.0
    %12019 = vmatpush1.msra.mxu0 0.0
    %12020 = vmatprep.subr.mxu0 0.0
    %12021 = vmatpush1.msra.mxu0 0.0
    %12022 = vmatprep.subr.mxu0 0.0
    %12023 = vmatpush1.msra.mxu0 0.0
    %12024 = vmatprep.subr.mxu0 0.0
    %12025 = vmatpush1.msra.mxu0 0.0
    %12026 = vmatprep.subr.mxu0 0.0
    %12027 = vmatpush1.msra.mxu0 0.0
    %12028 = vmatprep.subr.mxu0 0.0
    %12029 = vmatpush1.msra.mxu0 0.0
    %12030 = vmatprep.subr.mxu0 0.0
    %12031 = vmatpush1.msra.mxu0 0.0
    %12032 = vmatprep.subr.mxu0 0.0
    %12033 = vmatpush1.msra.mxu0 0.0
    %12034 = vmatprep.subr.mxu0 0.0
    %12035 = vmatpush1.msra.mxu0 0.0
    %12036 = vmatprep.subr.mxu0 0.0
    %12037 = vmatpush1.msra.mxu0 0.0
    %12038 = vmatprep.subr.mxu0 0.0
    %12039 = vmatpush1.msra.mxu0 0.0
    %12040 = vmatprep.subr.mxu0 0.0
    %12041 = vmatpush1.msra.mxu0 0.0
    %12042 = vmatprep.subr.mxu0 0.0
    %12043 = vmatpush1.msra.mxu0 0.0
    %12044 = vmatprep.subr.mxu0 0.0
    %12045 = vmatpush1.msra.mxu0 0.0
    %12046 = vmatprep.subr.mxu0 0.0
    %12047 = vmatpush1.msra.mxu0 0.0
    %12048 = vmatprep.subr.mxu0 0.0
    %12049 = vmatpush1.msra.mxu0 0.0
    %12050 = vmatprep.subr.mxu0 0.0
    %12051 = vmatpush1.msra.mxu0 0.0
    %12052 = vmatprep.subr.mxu0 0.0
    %12053 = vmatpush1.msra.mxu0 0.0
    %12054 = vmatprep.subr.mxu0 0.0
    %12055 = vmatpush1.msra.mxu0 0.0
    %12056 = vmatprep.subr.mxu0 0.0
    %12057 = vmatpush1.msra.mxu0 0.0
    %12058 = vmatprep.subr.mxu0 0.0
    %12059 = vmatpush1.msra.mxu0 0.0
    %12060 = vmatprep.subr.mxu0 0.0
    %12061 = vmatpush1.msra.mxu0 0.0
    %12062 = vmatprep.subr.mxu0 0.0
    %12063 = vmatpush1.msra.mxu0 0.0
    %12064 = vmatprep.subr.mxu0 0.0
    %12065 = vmatpush1.msra.mxu0 0.0
    %12066 = vmatprep.subr.mxu0 0.0
    %12067 = vmatpush1.msra.mxu0 0.0
    %12068 = vmatprep.subr.mxu0 0.0
    %12069 = vmatpush1.msra.mxu0 0.0
    %12070 = vmatprep.subr.mxu0 0.0
    %12071 = vmatpush1.msra.mxu0 0.0
    %12072 = vmatprep.subr.mxu0 0.0
    %12073 = vmatpush1.msra.mxu0 0.0
    %12074 = vmatprep.mubr.f32.mxu0 0.0
    %12075 = vmatmul.mubr.f32.gmra.mrb[0].mxu0 %v11627
    %v12076 = vpop.f32.mrb[0].mxu0
    %v12077 = vadd.f32 0.0, %v12076
    %v12078 = vpop.f32.mrb[0].mxu0
    %12079 = vmatprep.mubr.f32.mxu0 0.0
    %12080 = vmatmul.mubr.f32.gmra.mrb[0].mxu0 %v11630
    %v12081 = vpop.f32.mrb[0].mxu0
    %v12082 = vadd.f32 0.0, %v12081
    %v12083 = vpop.f32.mrb[0].mxu0
    %12084 = vmatprep.mubr.f32.mxu0 0.0
    %12085 = vmatmul.mubr.f32.gmra.mrb[0].mxu0 %v11633
    %v12086 = vpop.f32.mrb[0].mxu0
    %v12087 = vadd.f32 0.0, %v12086
    %v12088 = vpop.f32.mrb[0].mxu0
    %12089 = vmatprep.mubr.f32.mxu0 0.0
    %12090 = vmatmul.mubr.f32.gmra.mrb[0].mxu0 %v11636
    %v12091 = vpop.f32.mrb[0].mxu0
    %v12092 = vadd.f32 0.0, %v12091
    %v12093 = vpop.f32.mrb[0].mxu0
    %12094 = vmatprep.mubr.f32.mxu0 0.0
    %12095 = vmatmul.mubr.f32.gmra.mrb[0].mxu0 %v11639
    %v12096 = vpop.f32.mrb[0].mxu0
    %v12097 = vadd.f32 0.0, %v12096
    %v12098 = vpop.f32.mrb[0].mxu0
    %12099 = vmatprep.mubr.f32.mxu0 0.0
    %12100 = vmatmul.mubr.f32.gmra.mrb[0].mxu0 %v11642
    %v12101 = vpop.f32.mrb[0].mxu0
    %v12102 = vadd.f32 0.0, %v12101
    %v12103 = vpop.f32.mrb[0].mxu0
    %12104 = vmatprep.mubr.f32.mxu0 0.0
    %12105 = vmatmul.mubr.f32.gmra.mrb[0].mxu0 %v11645
    %v12106 = vpop.f32.mrb[0].mxu0
    %v12107 = vadd.f32 0.0, %v12106
    %v12108 = vpop.f32.mrb[0].mxu0
    %12109 = vmatprep.mubr.f32.mxu0 0.0
    %12110 = vmatmul.mubr.f32.gmra.mrb[0].mxu0 %v11648
    %v12111 = vpop.f32.mrb[0].mxu0
    %v12112 = vadd.f32 0.0, %v12111
    %v12113 = vpop.f32.mrb[0].mxu0
    %12114 = vmatprep.mubr.f32.mxu0 0.0
    %12115 = vmatmul.mubr.f32.gmra.mrb[0].mxu0 %v11651
    %v12116 = vpop.f32.mrb[0].mxu0
    %v12117 = vadd.f32 0.0, %v12116
    %v12118 = vpop.f32.mrb[0].mxu0
    %12119 = vmatprep.mubr.f32.mxu0 0.0
    %12120 = vmatmul.mubr.f32.gmra.mrb[0].mxu0 %v11654
    %v12121 = vpop.f32.mrb[0].mxu0
    %v12122 = vadd.f32 0.0, %v12121
    %v12123 = vpop.f32.mrb[0].mxu0
    %12124 = vmatprep.mubr.f32.mxu0 0.0
    %12125 = vmatmul.mubr.f32.gmra.mrb[0].mxu0 %v11657
    %v12126 = vpop.f32.mrb[0].mxu0
    %v12127 = vadd.f32 0.0, %v12126
    %v12128 = vpop.f32.mrb[0].mxu0
    %12129 = vmatprep.mubr.f32.mxu0 0.0
    %12130 = vmatmul.mubr.f32.gmra.mrb[0].mxu0 %v11660
    %v12131 = vpop.f32.mrb[0].mxu0
    %v12132 = vadd.f32 0.0, %v12131
    %v12133 = vpop.f32.mrb[0].mxu0
    %12134 = vmatprep.mubr.f32.mxu0 0.0
    %12135 = vmatmul.mubr.f32.gmra.mrb[0].mxu0 %v11663
    %v12136 = vpop.f32.mrb[0].mxu0
    %v12137 = vadd.f32 0.0, %v12136
    %v12138 = vpop.f32.mrb[0].mxu0
    %12139 = vmatprep.mubr.f32.mxu0 0.0
    %12140 = vmatmul.mubr.f32.gmra.mrb[0].mxu0 %v11666
    %v12141 = vpop.f32.mrb[0].mxu0
    %v12142 = vadd.f32 0.0, %v12141
    %v12143 = vpop.f32.mrb[0].mxu0
    %12144 = vmatprep.mubr.f32.mxu0 0.0
    %12145 = vmatmul.mubr.f32.gmra.mrb[0].mxu0 %v11669
    %v12146 = vpop.f32.mrb[0].mxu0
    %v12147 = vadd.f32 0.0, %v12146
    %v12148 = vpop.f32.mrb[0].mxu0
    %12149 = vmatprep.mubr.f32.mxu0 0.0
    %12150 = vmatmul.mubr.f32.gmra.mrb[0].mxu0 %v11672
    %v12151 = vpop.f32.mrb[0].mxu0
    %v12152 = vadd.f32 0.0, %v12151
    %v12153 = vpop.f32.mrb[0].mxu0
    %12154 = vmatprep.mubr.f32.mxu0 0.0
    %12155 = vmatmul.mubr.f32.gmra.mrb[0].mxu0 %v11675
    %v12156 = vpop.f32.mrb[0].mxu0
    %v12157 = vadd.f32 0.0, %v12156
    %v12158 = vpop.f32.mrb[0].mxu0
    %12159 = vmatprep.mubr.f32.mxu0 0.0
    %12160 = vmatmul.mubr.f32.gmra.mrb[0].mxu0 %v11678
    %v12161 = vpop.f32.mrb[0].mxu0
    %v12162 = vadd.f32 0.0, %v12161
    %v12163 = vpop.f32.mrb[0].mxu0
    %12164 = vmatprep.mubr.f32.mxu0 0.0
    %12165 = vmatmul.mubr.f32.gmra.mrb[0].mxu0 %v11681
    %v12166 = vpop.f32.mrb[0].mxu0
    %v12167 = vadd.f32 0.0, %v12166
    %v12168 = vpop.f32.mrb[0].mxu0
    %12169 = vmatprep.mubr.f32.mxu0 0.0
    %12170 = vmatmul.mubr.f32.gmra.mrb[0].mxu0 %v11684
    %v12171 = vpop.f32.mrb[0].mxu0
    %v12172 = vadd.f32 0.0, %v12171
    %v12173 = vpop.f32.mrb[0].mxu0
    %12174 = vmatprep.mubr.f32.mxu0 0.0
    %12175 = vmatmul.mubr.f32.gmra.mrb[0].mxu0 %v11687
    %v12176 = vpop.f32.mrb[0].mxu0
    %v12177 = vadd.f32 0.0, %v12176
    %v12178 = vpop.f32.mrb[0].mxu0
    %12179 = vmatprep.mubr.f32.mxu0 0.0
    %12180 = vmatmul.mubr.f32.gmra.mrb[0].mxu0 %v11690
    %v12181 = vpop.f32.mrb[0].mxu0
    %v12182 = vadd.f32 0.0, %v12181
    %v12183 = vpop.f32.mrb[0].mxu0
    %12184 = vmatprep.mubr.f32.mxu0 0.0
    %12185 = vmatmul.mubr.f32.gmra.mrb[0].mxu0 %v11693
    %v12186 = vpop.f32.mrb[0].mxu0
    %v12187 = vadd.f32 0.0, %v12186
    %v12188 = vpop.f32.mrb[0].mxu0
    %12189 = vmatprep.mubr.f32.mxu0 0.0
    %12190 = vmatmul.mubr.f32.gmra.mrb[0].mxu0 %v11696
    %v12191 = vpop.f32.mrb[0].mxu0
    %v12192 = vadd.f32 0.0, %v12191
    %v12193 = vpop.f32.mrb[0].mxu0
    %12194 = vmatprep.mubr.f32.mxu0 0.0
    %12195 = vmatmul.mubr.f32.gmra.mrb[0].mxu0 %v11699
    %v12196 = vpop.f32.mrb[0].mxu0
    %v12197 = vadd.f32 0.0, %v12196
    %v12198 = vpop.f32.mrb[0].mxu0
    %12199 = vmatprep.mubr.f32.mxu0 0.0
    %12200 = vmatmul.mubr.f32.gmra.mrb[0].mxu0 %v11702
    %v12201 = vpop.f32.mrb[0].mxu0
    %v12202 = vadd.f32 0.0, %v12201
    %v12203 = vpop.f32.mrb[0].mxu0
    %12204 = vmatprep.mubr.f32.mxu0 0.0
    %12205 = vmatmul.mubr.f32.gmra.mrb[0].mxu0 %v11705
    %v12206 = vpop.f32.mrb[0].mxu0
    %v12207 = vadd.f32 0.0, %v12206
    %v12208 = vpop.f32.mrb[0].mxu0
    %12209 = vmatprep.mubr.f32.mxu0 0.0
    %12210 = vmatmul.mubr.f32.gmra.mrb[0].mxu0 %v11708
    %v12211 = vpop.f32.mrb[0].mxu0
    %v12212 = vadd.f32 0.0, %v12211
    %v12213 = vpop.f32.mrb[0].mxu0
    %12214 = vmatprep.mubr.f32.mxu0 0.0
    %12215 = vmatmul.mubr.f32.gmra.mrb[0].mxu0 %v11711
    %v12216 = vpop.f32.mrb[0].mxu0
    %v12217 = vadd.f32 0.0, %v12216
    %v12218 = vpop.f32.mrb[0].mxu0
    %12219 = vmatprep.mubr.f32.mxu0 0.0
    %12220 = vmatmul.mubr.f32.gmra.mrb[0].mxu0 %v11714
    %v12221 = vpop.f32.mrb[0].mxu0
    %v12222 = vadd.f32 0.0, %v12221
    %v12223 = vpop.f32.mrb[0].mxu0
    %12224 = vmatprep.mubr.f32.mxu0 0.0
    %12225 = vmatmul.mubr.f32.gmra.mrb[0].mxu0 %v11717
    %v12226 = vpop.f32.mrb[0].mxu0
    %v12227 = vadd.f32 0.0, %v12226
    %v12228 = vpop.f32.mrb[0].mxu0
    %12229 = vmatprep.mubr.f32.mxu0 0.0
    %12230 = vmatmul.mubr.f32.gmra.mrb[0].mxu0 %v11720
    %v12231 = vpop.f32.mrb[0].mxu0
    %v12232 = vadd.f32 0.0, %v12231
    %v12233 = vpop.f32.mrb[0].mxu0
    %12234 = vmatprep.mubr.f32.mxu0 0.0
    %12235 = vmatmul.mubr.f32.gmra.mrb[0].mxu0 %v11723
    %v12236 = vpop.f32.mrb[0].mxu0
    %v12237 = vadd.f32 0.0, %v12236
    %v12238 = vpop.f32.mrb[0].mxu0
    %12239 = vmatprep.mubr.f32.mxu0 0.0
    %12240 = vmatmul.mubr.f32.gmra.mrb[0].mxu0 %v11726
    %v12241 = vpop.f32.mrb[0].mxu0
    %v12242 = vadd.f32 0.0, %v12241
    %v12243 = vpop.f32.mrb[0].mxu0
    %12244 = vmatprep.mubr.f32.mxu0 0.0
    %12245 = vmatmul.mubr.f32.gmra.mrb[0].mxu0 %v11729
    %v12246 = vpop.f32.mrb[0].mxu0
    %v12247 = vadd.f32 0.0, %v12246
    %v12248 = vpop.f32.mrb[0].mxu0
    %12249 = vmatprep.mubr.f32.mxu0 0.0
    %12250 = vmatmul.mubr.f32.gmra.mrb[0].mxu0 %v11732
    %v12251 = vpop.f32.mrb[0].mxu0
    %v12252 = vadd.f32 0.0, %v12251
    %v12253 = vpop.f32.mrb[0].mxu0
    %12254 = vmatprep.mubr.f32.mxu0 0.0
    %12255 = vmatmul.mubr.f32.gmra.mrb[0].mxu0 %v11735
    %v12256 = vpop.f32.mrb[0].mxu0
    %v12257 = vadd.f32 0.0, %v12256
    %v12258 = vpop.f32.mrb[0].mxu0
    %12259 = vmatprep.mubr.f32.mxu0 0.0
    %12260 = vmatmul.mubr.f32.gmra.mrb[0].mxu0 %v11738
    %v12261 = vpop.f32.mrb[0].mxu0
    %v12262 = vadd.f32 0.0, %v12261
    %v12263 = vpop.f32.mrb[0].mxu0
    %12264 = vmatprep.mubr.f32.mxu0 0.0
    %12265 = vmatmul.mubr.f32.gmra.mrb[0].mxu0 %v11741
    %v12266 = vpop.f32.mrb[0].mxu0
    %v12267 = vadd.f32 0.0, %v12266
    %v12268 = vpop.f32.mrb[0].mxu0
    %12269 = vmatprep.mubr.f32.mxu0 0.0
    %12270 = vmatmul.mubr.f32.gmra.mrb[0].mxu0 %v11744
    %v12271 = vpop.f32.mrb[0].mxu0
    %v12272 = vadd.f32 0.0, %v12271
    %v12273 = vpop.f32.mrb[0].mxu0
    %12274 = vmatprep.mubr.f32.mxu0 0.0
    %12275 = vmatmul.mubr.f32.gmra.mrb[0].mxu0 %v11747
    %v12276 = vpop.f32.mrb[0].mxu0
    %v12277 = vadd.f32 0.0, %v12276
    %v12278 = vpop.f32.mrb[0].mxu0
    %12279 = vmatprep.mubr.f32.mxu0 0.0
    %12280 = vmatmul.mubr.f32.gmra.mrb[0].mxu0 %v11750
    %v12281 = vpop.f32.mrb[0].mxu0
    %v12282 = vadd.f32 0.0, %v12281
    %v12283 = vpop.f32.mrb[0].mxu0
    %12284 = vmatprep.mubr.f32.mxu0 0.0
    %12285 = vmatmul.mubr.f32.gmra.mrb[0].mxu0 %v11753
    %v12286 = vpop.f32.mrb[0].mxu0
    %v12287 = vadd.f32 0.0, %v12286
    %v12288 = vpop.f32.mrb[0].mxu0
    %12289 = vmatprep.mubr.f32.mxu0 0.0
    %12290 = vmatmul.mubr.f32.gmra.mrb[0].mxu0 %v11756
    %v12291 = vpop.f32.mrb[0].mxu0
    %v12292 = vadd.f32 0.0, %v12291
    %v12293 = vpop.f32.mrb[0].mxu0
    %12294 = vmatprep.mubr.f32.mxu0 0.0
    %12295 = vmatmul.mubr.f32.gmra.mrb[0].mxu0 %v11759
    %v12296 = vpop.f32.mrb[0].mxu0
    %v12297 = vadd.f32 0.0, %v12296
    %v12298 = vpop.f32.mrb[0].mxu0
    %12299 = vmatprep.mubr.f32.mxu0 0.0
    %12300 = vmatmul.mubr.f32.gmra.mrb[0].mxu0 %v11762
    %v12301 = vpop.f32.mrb[0].mxu0
    %v12302 = vadd.f32 0.0, %v12301
    %v12303 = vpop.f32.mrb[0].mxu0
    %12304 = vmatprep.mubr.f32.mxu0 0.0
    %12305 = vmatmul.mubr.f32.gmra.mrb[0].mxu0 %v11765
    %v12306 = vpop.f32.mrb[0].mxu0
    %v12307 = vadd.f32 0.0, %v12306
    %v12308 = vpop.f32.mrb[0].mxu0
    %12309 = vmatprep.mubr.f32.mxu0 0.0
    %12310 = vmatmul.mubr.f32.gmra.mrb[0].mxu0 %v11768
    %v12311 = vpop.f32.mrb[0].mxu0
    %v12312 = vadd.f32 0.0, %v12311
    %v12313 = vpop.f32.mrb[0].mxu0
    %12314 = vmatprep.mubr.f32.mxu0 0.0
    %12315 = vmatmul.mubr.f32.gmra.mrb[0].mxu0 %v11771
    %v12316 = vpop.f32.mrb[0].mxu0
    %v12317 = vadd.f32 0.0, %v12316
    %v12318 = vpop.f32.mrb[0].mxu0
    %12319 = vmatprep.mubr.f32.mxu0 0.0
    %12320 = vmatmul.mubr.f32.gmra.mrb[0].mxu0 %v11774
    %v12321 = vpop.f32.mrb[0].mxu0
    %v12322 = vadd.f32 0.0, %v12321
    %v12323 = vpop.f32.mrb[0].mxu0
    %12324 = vmatprep.mubr.f32.mxu0 0.0
    %12325 = vmatmul.mubr.f32.gmra.mrb[0].mxu0 %v11777
    %v12326 = vpop.f32.mrb[0].mxu0
    %v12327 = vadd.f32 0.0, %v12326
    %v12328 = vpop.f32.mrb[0].mxu0
    %12329 = vmatprep.mubr.f32.mxu0 0.0
    %12330 = vmatmul.mubr.f32.gmra.mrb[0].mxu0 %v11780
    %v12331 = vpop.f32.mrb[0].mxu0
    %v12332 = vadd.f32 0.0, %v12331
    %v12333 = vpop.f32.mrb[0].mxu0
    %12334 = vmatprep.mubr.f32.mxu0 0.0
    %12335 = vmatmul.mubr.f32.gmra.mrb[0].mxu0 %v11783
    %v12336 = vpop.f32.mrb[0].mxu0
    %v12337 = vadd.f32 0.0, %v12336
    %v12338 = vpop.f32.mrb[0].mxu0
    %12339 = vmatprep.mubr.f32.mxu0 0.0
    %12340 = vmatmul.mubr.f32.gmra.mrb[0].mxu0 %v11786
    %v12341 = vpop.f32.mrb[0].mxu0
    %v12342 = vadd.f32 0.0, %v12341
    %v12343 = vpop.f32.mrb[0].mxu0
    %12344 = vmatprep.mubr.f32.mxu0 0.0
    %12345 = vmatmul.mubr.f32.gmra.mrb[0].mxu0 %v11789
    %v12346 = vpop.f32.mrb[0].mxu0
    %v12347 = vadd.f32 0.0, %v12346
    %v12348 = vpop.f32.mrb[0].mxu0
    %12349 = vmatprep.mubr.f32.mxu0 0.0
    %12350 = vmatmul.mubr.f32.gmra.mrb[0].mxu0 %v11792
    %v12351 = vpop.f32.mrb[0].mxu0
    %v12352 = vadd.f32 0.0, %v12351
    %v12353 = vpop.f32.mrb[0].mxu0
    %12354 = vmatprep.mubr.f32.mxu0 0.0
    %12355 = vmatmul.mubr.f32.gmra.mrb[0].mxu0 %v11795
    %v12356 = vpop.f32.mrb[0].mxu0
    %v12357 = vadd.f32 0.0, %v12356
    %v12358 = vpop.f32.mrb[0].mxu0
    %12359 = vmatprep.mubr.f32.mxu0 0.0
    %12360 = vmatmul.mubr.f32.gmra.mrb[0].mxu0 %v11798
    %v12361 = vpop.f32.mrb[0].mxu0
    %v12362 = vadd.f32 0.0, %v12361
    %v12363 = vpop.f32.mrb[0].mxu0
    %12364 = vmatprep.mubr.f32.mxu0 0.0
    %12365 = vmatmul.mubr.f32.gmra.mrb[0].mxu0 %v11801
    %v12366 = vpop.f32.mrb[0].mxu0
    %v12367 = vadd.f32 0.0, %v12366
    %v12368 = vpop.f32.mrb[0].mxu0
    %12369 = vmatprep.mubr.f32.mxu0 0.0
    %12370 = vmatmul.mubr.f32.gmra.mrb[0].mxu0 %v11804
    %v12371 = vpop.f32.mrb[0].mxu0
    %v12372 = vadd.f32 0.0, %v12371
    %v12373 = vpop.f32.mrb[0].mxu0
    %12374 = vmatprep.mubr.f32.mxu0 0.0
    %12375 = vmatmul.mubr.f32.gmra.mrb[0].mxu0 %v11807
    %v12376 = vpop.f32.mrb[0].mxu0
    %v12377 = vadd.f32 0.0, %v12376
    %v12378 = vpop.f32.mrb[0].mxu0
    %12379 = vmatprep.mubr.f32.mxu0 0.0
    %12380 = vmatmul.mubr.f32.gmra.mrb[0].mxu0 %v11810
    %v12381 = vpop.f32.mrb[0].mxu0
    %v12382 = vadd.f32 0.0, %v12381
    %v12383 = vpop.f32.mrb[0].mxu0
    %12384 = vmatprep.mubr.f32.mxu0 0.0
    %12385 = vmatmul.mubr.f32.gmra.mrb[0].mxu0 %v11813
    %v12386 = vpop.f32.mrb[0].mxu0
    %v12387 = vadd.f32 0.0, %v12386
    %v12388 = vpop.f32.mrb[0].mxu0
    %12389 = vmatprep.mubr.f32.mxu0 0.0
    %12390 = vmatmul.mubr.f32.gmra.mrb[0].mxu0 %v11816
    %v12391 = vpop.f32.mrb[0].mxu0
    %v12392 = vadd.f32 0.0, %v12391
    %v12393 = vpop.f32.mrb[0].mxu0
    %12394 = vmatprep.mubr.f32.mxu0 0.0
    %12395 = vmatmul.mubr.f32.gmra.mrb[0].mxu0 %v11819
    %v12396 = vpop.f32.mrb[0].mxu0
    %v12397 = vadd.f32 0.0, %v12396
    %v12398 = vpop.f32.mrb[0].mxu0
    %12399 = vmatprep.mubr.f32.mxu0 0.0
    %12400 = vmatmul.mubr.f32.gmra.mrb[0].mxu0 %v11822
    %v12401 = vpop.f32.mrb[0].mxu0
    %v12402 = vadd.f32 0.0, %v12401
    %v12403 = vpop.f32.mrb[0].mxu0
    %12404 = vmatprep.mubr.f32.mxu0 0.0
    %12405 = vmatmul.mubr.f32.gmra.mrb[0].mxu0 %v11825
    %v12406 = vpop.f32.mrb[0].mxu0
    %v12407 = vadd.f32 0.0, %v12406
    %v12408 = vpop.f32.mrb[0].mxu0
    %12409 = vmatprep.mubr.f32.mxu0 0.0
    %12410 = vmatmul.mubr.f32.gmra.mrb[0].mxu0 %v11828
    %v12411 = vpop.f32.mrb[0].mxu0
    %v12412 = vadd.f32 0.0, %v12411
    %v12413 = vpop.f32.mrb[0].mxu0
    %12414 = vmatprep.mubr.f32.mxu0 0.0
    %12415 = vmatmul.mubr.f32.gmra.mrb[0].mxu0 %v11831
    %v12416 = vpop.f32.mrb[0].mxu0
    %v12417 = vadd.f32 0.0, %v12416
    %v12418 = vpop.f32.mrb[0].mxu0
    %12419 = vmatprep.mubr.f32.mxu0 0.0
    %12420 = vmatmul.mubr.f32.gmra.mrb[0].mxu0 %v11834
    %v12421 = vpop.f32.mrb[0].mxu0
    %v12422 = vadd.f32 0.0, %v12421
    %v12423 = vpop.f32.mrb[0].mxu0
    %12424 = vmatprep.mubr.f32.mxu0 0.0
    %12425 = vmatmul.mubr.f32.gmra.mrb[0].mxu0 %v11837
    %v12426 = vpop.f32.mrb[0].mxu0
    %v12427 = vadd.f32 0.0, %v12426
    %v12428 = vpop.f32.mrb[0].mxu0
    %12429 = vmatprep.mubr.f32.mxu0 0.0
    %12430 = vmatmul.mubr.f32.gmra.mrb[0].mxu0 %v11840
    %v12431 = vpop.f32.mrb[0].mxu0
    %v12432 = vadd.f32 0.0, %v12431
    %v12433 = vpop.f32.mrb[0].mxu0
    %12434 = vmatprep.mubr.f32.mxu0 0.0
    %12435 = vmatmul.mubr.f32.gmra.mrb[0].mxu0 %v11843
    %v12436 = vpop.f32.mrb[0].mxu0
    %v12437 = vadd.f32 0.0, %v12436
    %v12438 = vpop.f32.mrb[0].mxu0
    %12439 = vmatprep.mubr.f32.mxu0 0.0
    %12440 = vmatmul.mubr.f32.gmra.mrb[0].mxu0 %v11846
    %v12441 = vpop.f32.mrb[0].mxu0
    %v12442 = vadd.f32 0.0, %v12441
    %v12443 = vpop.f32.mrb[0].mxu0
    %12444 = vmatprep.mubr.f32.mxu0 0.0
    %12445 = vmatmul.mubr.f32.gmra.mrb[0].mxu0 %v11849
    %v12446 = vpop.f32.mrb[0].mxu0
    %v12447 = vadd.f32 0.0, %v12446
    %v12448 = vpop.f32.mrb[0].mxu0
    %12449 = vmatprep.mubr.f32.mxu0 0.0
    %12450 = vmatmul.mubr.f32.gmra.mrb[0].mxu0 %v11852
    %v12451 = vpop.f32.mrb[0].mxu0
    %v12452 = vadd.f32 0.0, %v12451
    %v12453 = vpop.f32.mrb[0].mxu0
    %12454 = vmatprep.mubr.f32.mxu0 0.0
    %12455 = vmatmul.mubr.f32.gmra.mrb[0].mxu0 %v11855
    %v12456 = vpop.f32.mrb[0].mxu0
    %v12457 = vadd.f32 0.0, %v12456
    %v12458 = vpop.f32.mrb[0].mxu0
    %12459 = vmatprep.mubr.f32.mxu0 0.0
    %12460 = vmatmul.mubr.f32.gmra.mrb[0].mxu0 %v11858
    %v12461 = vpop.f32.mrb[0].mxu0
    %v12462 = vadd.f32 0.0, %v12461
    %v12463 = vpop.f32.mrb[0].mxu0
    %12464 = vmatprep.mubr.f32.mxu0 0.0
    %12465 = vmatmul.mubr.f32.gmra.mrb[0].mxu0 %v11861
    %v12466 = vpop.f32.mrb[0].mxu0
    %v12467 = vadd.f32 0.0, %v12466
    %v12468 = vpop.f32.mrb[0].mxu0
    %12469 = vmatprep.mubr.f32.mxu0 0.0
    %12470 = vmatmul.mubr.f32.gmra.mrb[0].mxu0 %v11864
    %v12471 = vpop.f32.mrb[0].mxu0
    %v12472 = vadd.f32 0.0, %v12471
    %v12473 = vpop.f32.mrb[0].mxu0
    %12474 = vmatprep.mubr.f32.mxu0 0.0
    %12475 = vmatmul.mubr.f32.gmra.mrb[0].mxu0 %v11867
    %v12476 = vpop.f32.mrb[0].mxu0
    %v12477 = vadd.f32 0.0, %v12476
    %v12478 = vpop.f32.mrb[0].mxu0
    %12479 = vmatprep.mubr.f32.mxu0 0.0
    %12480 = vmatmul.mubr.f32.gmra.mrb[0].mxu0 %v11870
    %v12481 = vpop.f32.mrb[0].mxu0
    %v12482 = vadd.f32 0.0, %v12481
    %v12483 = vpop.f32.mrb[0].mxu0
    %12484 = vmatprep.mubr.f32.mxu0 0.0
    %12485 = vmatmul.mubr.f32.gmra.mrb[0].mxu0 %v11873
    %v12486 = vpop.f32.mrb[0].mxu0
    %v12487 = vadd.f32 0.0, %v12486
    %v12488 = vpop.f32.mrb[0].mxu0
    %12489 = vmatprep.mubr.f32.mxu0 0.0
    %12490 = vmatmul.mubr.f32.gmra.mrb[0].mxu0 %v11876
    %v12491 = vpop.f32.mrb[0].mxu0
    %v12492 = vadd.f32 0.0, %v12491
    %v12493 = vpop.f32.mrb[0].mxu0
    %12494 = vmatprep.mubr.f32.mxu0 0.0
    %12495 = vmatmul.mubr.f32.gmra.mrb[0].mxu0 %v11879
    %v12496 = vpop.f32.mrb[0].mxu0
    %v12497 = vadd.f32 0.0, %v12496
    %v12498 = vpop.f32.mrb[0].mxu0
    %12499 = vmatprep.mubr.f32.mxu0 0.0
    %12500 = vmatmul.mubr.f32.gmra.mrb[0].mxu0 %v11882
    %v12501 = vpop.f32.mrb[0].mxu0
    %v12502 = vadd.f32 0.0, %v12501
    %v12503 = vpop.f32.mrb[0].mxu0
    %12504 = vmatprep.mubr.f32.mxu0 0.0
    %12505 = vmatmul.mubr.f32.gmra.mrb[0].mxu0 %v11885
    %v12506 = vpop.f32.mrb[0].mxu0
    %v12507 = vadd.f32 0.0, %v12506
    %v12508 = vpop.f32.mrb[0].mxu0
    %12509 = vmatprep.mubr.f32.mxu0 0.0
    %12510 = vmatmul.mubr.f32.gmra.mrb[0].mxu0 %v11888
    %v12511 = vpop.f32.mrb[0].mxu0
    %v12512 = vadd.f32 0.0, %v12511
    %v12513 = vpop.f32.mrb[0].mxu0
    %12514 = vmatprep.mubr.f32.mxu0 0.0
    %12515 = vmatmul.mubr.f32.gmra.mrb[0].mxu0 %v11891
    %v12516 = vpop.f32.mrb[0].mxu0
    %v12517 = vadd.f32 0.0, %v12516
    %v12518 = vpop.f32.mrb[0].mxu0
    %12519 = vmatprep.mubr.f32.mxu0 0.0
    %12520 = vmatmul.mubr.f32.gmra.mrb[0].mxu0 %v11894
    %v12521 = vpop.f32.mrb[0].mxu0
    %v12522 = vadd.f32 0.0, %v12521
    %v12523 = vpop.f32.mrb[0].mxu0
    %12524 = vmatprep.mubr.f32.mxu0 0.0
    %12525 = vmatmul.mubr.f32.gmra.mrb[0].mxu0 %v11897
    %v12526 = vpop.f32.mrb[0].mxu0
    %v12527 = vadd.f32 0.0, %v12526
    %v12528 = vpop.f32.mrb[0].mxu0
    %12529 = vmatprep.mubr.f32.mxu0 0.0
    %12530 = vmatmul.mubr.f32.gmra.mrb[0].mxu0 %v11900
    %v12531 = vpop.f32.mrb[0].mxu0
    %v12532 = vadd.f32 0.0, %v12531
    %v12533 = vpop.f32.mrb[0].mxu0
    %12534 = vmatprep.mubr.f32.mxu0 0.0
    %12535 = vmatmul.mubr.f32.gmra.mrb[0].mxu0 %v11903
    %v12536 = vpop.f32.mrb[0].mxu0
    %v12537 = vadd.f32 0.0, %v12536
    %v12538 = vpop.f32.mrb[0].mxu0
    %12539 = vmatprep.mubr.f32.mxu0 0.0
    %12540 = vmatmul.mubr.f32.gmra.mrb[0].mxu0 %v11906
    %v12541 = vpop.f32.mrb[0].mxu0
    %v12542 = vadd.f32 0.0, %v12541
    %v12543 = vpop.f32.mrb[0].mxu0
    %12544 = vmatprep.mubr.f32.mxu0 0.0
    %12545 = vmatmul.mubr.f32.gmra.mrb[0].mxu0 %v11909
    %v12546 = vpop.f32.mrb[0].mxu0
    %v12547 = vadd.f32 0.0, %v12546
    %v12548 = vpop.f32.mrb[0].mxu0
    %12549 = vmatprep.mubr.f32.mxu0 0.0
    %12550 = vmatmul.mubr.f32.gmra.mrb[0].mxu0 %v11912
    %v12551 = vpop.f32.mrb[0].mxu0
    %v12552 = vadd.f32 0.0, %v12551
    %v12553 = vpop.f32.mrb[0].mxu0
    %12554 = vmatprep.mubr.f32.mxu0 0.0
    %12555 = vmatmul.mubr.f32.gmra.mrb[0].mxu0 %v11915
    %v12556 = vpop.f32.mrb[0].mxu0
    %v12557 = vadd.f32 0.0, %v12556
    %v12558 = vpop.f32.mrb[0].mxu0
    %12559 = vmatprep.mubr.f32.mxu0 0.0
    %12560 = vmatmul.mubr.f32.gmra.mrb[0].mxu0 %v11918
    %v12561 = vpop.f32.mrb[0].mxu0
    %v12562 = vadd.f32 0.0, %v12561
    %v12563 = vpop.f32.mrb[0].mxu0
    %12564 = vmatprep.mubr.f32.mxu0 0.0
    %12565 = vmatmul.mubr.f32.gmra.mrb[0].mxu0 %v11921
    %v12566 = vpop.f32.mrb[0].mxu0
    %v12567 = vadd.f32 0.0, %v12566
    %v12568 = vpop.f32.mrb[0].mxu0
    %12569 = vmatprep.mubr.f32.mxu0 0.0
    %12570 = vmatmul.mubr.f32.gmra.mrb[0].mxu0 %v11924
    %v12571 = vpop.f32.mrb[0].mxu0
    %v12572 = vadd.f32 0.0, %v12571
    %v12573 = vpop.f32.mrb[0].mxu0
    %12574 = vmatprep.mubr.f32.mxu0 0.0
    %12575 = vmatmul.mubr.f32.gmra.mrb[0].mxu0 %v11927
    %v12576 = vpop.f32.mrb[0].mxu0
    %v12577 = vadd.f32 0.0, %v12576
    %v12578 = vpop.f32.mrb[0].mxu0
    %12579 = vmatprep.mubr.f32.mxu0 0.0
    %12580 = vmatmul.mubr.f32.gmra.mrb[0].mxu0 %v11930
    %v12581 = vpop.f32.mrb[0].mxu0
    %v12582 = vadd.f32 0.0, %v12581
    %v12583 = vpop.f32.mrb[0].mxu0
    %12584 = vmatprep.mubr.f32.mxu0 0.0
    %12585 = vmatmul.mubr.f32.gmra.mrb[0].mxu0 %v11933
    %v12586 = vpop.f32.mrb[0].mxu0
    %v12587 = vadd.f32 0.0, %v12586
    %v12588 = vpop.f32.mrb[0].mxu0
    %12589 = vmatprep.mubr.f32.mxu0 0.0
    %12590 = vmatmul.mubr.f32.gmra.mrb[0].mxu0 %v11936
    %v12591 = vpop.f32.mrb[0].mxu0
    %v12592 = vadd.f32 0.0, %v12591
    %v12593 = vpop.f32.mrb[0].mxu0
    %12594 = vmatprep.mubr.f32.mxu0 0.0
    %12595 = vmatmul.mubr.f32.gmra.mrb[0].mxu0 %v11939
    %v12596 = vpop.f32.mrb[0].mxu0
    %v12597 = vadd.f32 0.0, %v12596
    %v12598 = vpop.f32.mrb[0].mxu0
    %12599 = vmatprep.mubr.f32.mxu0 0.0
    %12600 = vmatmul.mubr.f32.gmra.mrb[0].mxu0 %v11942
    %v12601 = vpop.f32.mrb[0].mxu0
    %v12602 = vadd.f32 0.0, %v12601
    %v12603 = vpop.f32.mrb[0].mxu0
    %12604 = vmatprep.mubr.f32.mxu0 0.0
    %12605 = vmatmul.mubr.f32.gmra.mrb[0].mxu0 %v11945
    %v12606 = vpop.f32.mrb[0].mxu0
    %v12607 = vadd.f32 0.0, %v12606
    %v12608 = vpop.f32.mrb[0].mxu0
    %12609 = vmatprep.mubr.f32.mxu0 0.0
    %12610 = vmatmul.mubr.f32.gmra.mrb[0].mxu0 %v11948
    %v12611 = vpop.f32.mrb[0].mxu0
    %v12612 = vadd.f32 0.0, %v12611
    %v12613 = vpop.f32.mrb[0].mxu0
    %12614 = vmatprep.mubr.f32.mxu0 0.0
    %12615 = vmatmul.mubr.f32.gmra.mrb[0].mxu0 %v11951
    %v12616 = vpop.f32.mrb[0].mxu0
    %v12617 = vadd.f32 0.0, %v12616
    %v12618 = vpop.f32.mrb[0].mxu0
    %12619 = vmatprep.mubr.f32.mxu0 0.0
    %12620 = vmatmul.mubr.f32.gmra.mrb[0].mxu0 %v11954
    %v12621 = vpop.f32.mrb[0].mxu0
    %v12622 = vadd.f32 0.0, %v12621
    %v12623 = vpop.f32.mrb[0].mxu0
    %12624 = vmatprep.mubr.f32.mxu0 0.0
    %12625 = vmatmul.mubr.f32.gmra.mrb[0].mxu0 %v11957
    %v12626 = vpop.f32.mrb[0].mxu0
    %v12627 = vadd.f32 0.0, %v12626
    %v12628 = vpop.f32.mrb[0].mxu0
    %12629 = vmatprep.mubr.f32.mxu0 0.0
    %12630 = vmatmul.mubr.f32.gmra.mrb[0].mxu0 %v11960
    %v12631 = vpop.f32.mrb[0].mxu0
    %v12632 = vadd.f32 0.0, %v12631
    %v12633 = vpop.f32.mrb[0].mxu0
    %12634 = vmatprep.mubr.f32.mxu0 0.0
    %12635 = vmatmul.mubr.f32.gmra.mrb[0].mxu0 %v11963
    %v12636 = vpop.f32.mrb[0].mxu0
    %v12637 = vadd.f32 0.0, %v12636
    %v12638 = vpop.f32.mrb[0].mxu0
    %12639 = vmatprep.mubr.f32.mxu0 0.0
    %12640 = vmatmul.mubr.f32.gmra.mrb[0].mxu0 %v11966
    %v12641 = vpop.f32.mrb[0].mxu0
    %v12642 = vadd.f32 0.0, %v12641
    %v12643 = vpop.f32.mrb[0].mxu0
    %12644 = vmatprep.mubr.f32.mxu0 0.0
    %12645 = vmatmul.mubr.f32.gmra.mrb[0].mxu0 %v11969
    %v12646 = vpop.f32.mrb[0].mxu0
    %v12647 = vadd.f32 0.0, %v12646
    %v12648 = vpop.f32.mrb[0].mxu0
    %12649 = vmatprep.mubr.f32.mxu0 0.0
    %12650 = vmatmul.mubr.f32.gmra.mrb[0].mxu0 %v11972
    %v12651 = vpop.f32.mrb[0].mxu0
    %v12652 = vadd.f32 0.0, %v12651
    %v12653 = vpop.f32.mrb[0].mxu0
    %12654 = vmatprep.mubr.f32.mxu0 0.0
    %12655 = vmatmul.mubr.f32.gmra.mrb[0].mxu0 %v11975
    %v12656 = vpop.f32.mrb[0].mxu0
    %v12657 = vadd.f32 0.0, %v12656
    %v12658 = vpop.f32.mrb[0].mxu0
    %12659 = vmatprep.mubr.f32.mxu0 0.0
    %12660 = vmatmul.mubr.f32.gmra.mrb[0].mxu0 %v11978
    %v12661 = vpop.f32.mrb[0].mxu0
    %v12662 = vadd.f32 0.0, %v12661
    %v12663 = vpop.f32.mrb[0].mxu0
    %12664 = vmatprep.mubr.f32.mxu0 0.0
    %12665 = vmatmul.mubr.f32.gmra.mrb[0].mxu0 %v11981
    %v12666 = vpop.f32.mrb[0].mxu0
    %v12667 = vadd.f32 0.0, %v12666
    %v12668 = vpop.f32.mrb[0].mxu0
    %12669 = vmatprep.mubr.f32.mxu0 0.0
    %12670 = vmatmul.mubr.f32.gmra.mrb[0].mxu0 %v11984
    %v12671 = vpop.f32.mrb[0].mxu0
    %v12672 = vadd.f32 0.0, %v12671
    %v12673 = vpop.f32.mrb[0].mxu0
    %12674 = vmatprep.mubr.f32.mxu0 0.0
    %12675 = vmatmul.mubr.f32.gmra.mrb[0].mxu0 %v11987
    %v12676 = vpop.f32.mrb[0].mxu0
    %v12677 = vadd.f32 0.0, %v12676
    %v12678 = vpop.f32.mrb[0].mxu0
    %12679 = vmatprep.mubr.f32.mxu0 0.0
    %12680 = vmatmul.mubr.f32.gmra.mrb[0].mxu0 %v11990
    %v12681 = vpop.f32.mrb[0].mxu0
    %v12682 = vadd.f32 0.0, %v12681
    %v12683 = vpop.f32.mrb[0].mxu0
    %12684 = vmatprep.mubr.f32.mxu0 0.0
    %12685 = vmatmul.mubr.f32.gmra.mrb[0].mxu0 %v11993
    %v12686 = vpop.f32.mrb[0].mxu0
    %v12687 = vadd.f32 0.0, %v12686
    %v12688 = vpop.f32.mrb[0].mxu0
    %12689 = vmatprep.mubr.f32.mxu0 0.0
    %12690 = vmatmul.mubr.f32.gmra.mrb[0].mxu0 %v11996
    %v12691 = vpop.f32.mrb[0].mxu0
    %v12692 = vadd.f32 0.0, %v12691
    %v12693 = vpop.f32.mrb[0].mxu0
    %12694 = vmatprep.mubr.f32.mxu0 0.0
    %12695 = vmatmul.mubr.f32.gmra.mrb[0].mxu0 %v11999
    %v12696 = vpop.f32.mrb[0].mxu0
    %v12697 = vadd.f32 0.0, %v12696
    %v12698 = vpop.f32.mrb[0].mxu0
    %12699 = vmatprep.mubr.f32.mxu0 0.0
    %12700 = vmatmul.mubr.f32.gmra.mrb[0].mxu0 %v12002
    %v12701 = vpop.f32.mrb[0].mxu0
    %v12702 = vadd.f32 0.0, %v12701
    %v12703 = vpop.f32.mrb[0].mxu0
    %12704 = vmatprep.mubr.f32.mxu0 0.0
    %12705 = vmatmul.mubr.f32.gmra.mrb[0].mxu0 %v12005
    %v12706 = vpop.f32.mrb[0].mxu0
    %v12707 = vadd.f32 0.0, %v12706
    %v12708 = vpop.f32.mrb[0].mxu0
    %12709 = vmatprep.mubr.f32.mxu0 0.0
    %12710 = vmatmul.mubr.f32.gmra.mrb[0].mxu0 %v12008
    %v12711 = vpop.f32.mrb[0].mxu0
    %v12712 = vadd.f32 0.0, %v12711
    %v12713 = vpop.f32.mrb[0].mxu0
    %12714 = vdwg.mxu0
    %v12715 = vmax.f32 %v12077, 0.0
    %v12716 = vmax.f32 %v12082, 0.0
    %v12717 = vmax.f32 %v12087, 0.0
    %v12718 = vmax.f32 %v12092, 0.0
    %v12719 = vmax.f32 %v12097, 0.0
    %v12720 = vmax.f32 %v12102, 0.0
    %v12721 = vmax.f32 %v12107, 0.0
    %v12722 = vmax.f32 %v12112, 0.0
    %v12723 = vmax.f32 %v12117, 0.0
    %v12724 = vmax.f32 %v12122, 0.0
    %v12725 = vmax.f32 %v12127, 0.0
    %v12726 = vmax.f32 %v12132, 0.0
    %v12727 = vmax.f32 %v12137, 0.0
    %v12728 = vmax.f32 %v12142, 0.0
    %v12729 = vmax.f32 %v12147, 0.0
    %v12730 = vmax.f32 %v12152, 0.0
    %v12731 = vmax.f32 %v12157, 0.0
    %v12732 = vmax.f32 %v12162, 0.0
    %v12733 = vmax.f32 %v12167, 0.0
    %v12734 = vmax.f32 %v12172, 0.0
    %v12735 = vmax.f32 %v12177, 0.0
    %v12736 = vmax.f32 %v12182, 0.0
    %v12737 = vmax.f32 %v12187, 0.0
    %v12738 = vmax.f32 %v12192, 0.0
    %v12739 = vmax.f32 %v12197, 0.0
    %v12740 = vmax.f32 %v12202, 0.0
    %v12741 = vmax.f32 %v12207, 0.0
    %v12742 = vmax.f32 %v12212, 0.0
    %v12743 = vmax.f32 %v12217, 0.0
    %v12744 = vmax.f32 %v12222, 0.0
    %v12745 = vmax.f32 %v12227, 0.0
    %v12746 = vmax.f32 %v12232, 0.0
    %v12747 = vmax.f32 %v12237, 0.0
    %v12748 = vmax.f32 %v12242, 0.0
    %v12749 = vmax.f32 %v12247, 0.0
    %v12750 = vmax.f32 %v12252, 0.0
    %v12751 = vmax.f32 %v12257, 0.0
    %v12752 = vmax.f32 %v12262, 0.0
    %v12753 = vmax.f32 %v12267, 0.0
    %v12754 = vmax.f32 %v12272, 0.0
    %v12755 = vmax.f32 %v12277, 0.0
    %v12756 = vmax.f32 %v12282, 0.0
    %v12757 = vmax.f32 %v12287, 0.0
    %v12758 = vmax.f32 %v12292, 0.0
    %v12759 = vmax.f32 %v12297, 0.0
    %v12760 = vmax.f32 %v12302, 0.0
    %v12761 = vmax.f32 %v12307, 0.0
    %v12762 = vmax.f32 %v12312, 0.0
    %v12763 = vmax.f32 %v12317, 0.0
    %v12764 = vmax.f32 %v12322, 0.0
    %v12765 = vmax.f32 %v12327, 0.0
    %v12766 = vmax.f32 %v12332, 0.0
    %v12767 = vmax.f32 %v12337, 0.0
    %v12768 = vmax.f32 %v12342, 0.0
    %v12769 = vmax.f32 %v12347, 0.0
    %v12770 = vmax.f32 %v12352, 0.0
    %v12771 = vmax.f32 %v12357, 0.0
    %v12772 = vmax.f32 %v12362, 0.0
    %v12773 = vmax.f32 %v12367, 0.0
    %v12774 = vmax.f32 %v12372, 0.0
    %v12775 = vmax.f32 %v12377, 0.0
    %v12776 = vmax.f32 %v12382, 0.0
    %v12777 = vmax.f32 %v12387, 0.0
    %v12778 = vmax.f32 %v12392, 0.0
    %v12779 = vmax.f32 %v12397, 0.0
    %v12780 = vmax.f32 %v12402, 0.0
    %v12781 = vmax.f32 %v12407, 0.0
    %v12782 = vmax.f32 %v12412, 0.0
    %v12783 = vmax.f32 %v12417, 0.0
    %v12784 = vmax.f32 %v12422, 0.0
    %v12785 = vmax.f32 %v12427, 0.0
    %v12786 = vmax.f32 %v12432, 0.0
    %v12787 = vmax.f32 %v12437, 0.0
    %v12788 = vmax.f32 %v12442, 0.0
    %v12789 = vmax.f32 %v12447, 0.0
    %v12790 = vmax.f32 %v12452, 0.0
    %v12791 = vmax.f32 %v12457, 0.0
    %v12792 = vmax.f32 %v12462, 0.0
    %v12793 = vmax.f32 %v12467, 0.0
    %v12794 = vmax.f32 %v12472, 0.0
    %v12795 = vmax.f32 %v12477, 0.0
    %v12796 = vmax.f32 %v12482, 0.0
    %v12797 = vmax.f32 %v12487, 0.0
    %v12798 = vmax.f32 %v12492, 0.0
    %v12799 = vmax.f32 %v12497, 0.0
    %v12800 = vmax.f32 %v12502, 0.0
    %v12801 = vmax.f32 %v12507, 0.0
    %v12802 = vmax.f32 %v12512, 0.0
    %v12803 = vmax.f32 %v12517, 0.0
    %v12804 = vmax.f32 %v12522, 0.0
    %v12805 = vmax.f32 %v12527, 0.0
    %v12806 = vmax.f32 %v12532, 0.0
    %v12807 = vmax.f32 %v12537, 0.0
    %v12808 = vmax.f32 %v12542, 0.0
    %v12809 = vmax.f32 %v12547, 0.0
    %v12810 = vmax.f32 %v12552, 0.0
    %v12811 = vmax.f32 %v12557, 0.0
    %v12812 = vmax.f32 %v12562, 0.0
    %v12813 = vmax.f32 %v12567, 0.0
    %v12814 = vmax.f32 %v12572, 0.0
    %v12815 = vmax.f32 %v12577, 0.0
    %v12816 = vmax.f32 %v12582, 0.0
    %v12817 = vmax.f32 %v12587, 0.0
    %v12818 = vmax.f32 %v12592, 0.0
    %v12819 = vmax.f32 %v12597, 0.0
    %v12820 = vmax.f32 %v12602, 0.0
    %v12821 = vmax.f32 %v12607, 0.0
    %v12822 = vmax.f32 %v12612, 0.0
    %v12823 = vmax.f32 %v12617, 0.0
    %v12824 = vmax.f32 %v12622, 0.0
    %v12825 = vmax.f32 %v12627, 0.0
    %v12826 = vmax.f32 %v12632, 0.0
    %v12827 = vmax.f32 %v12637, 0.0
    %v12828 = vmax.f32 %v12642, 0.0
    %v12829 = vmax.f32 %v12647, 0.0
    %v12830 = vmax.f32 %v12652, 0.0
    %v12831 = vmax.f32 %v12657, 0.0
    %v12832 = vmax.f32 %v12662, 0.0
    %v12833 = vmax.f32 %v12667, 0.0
    %v12834 = vmax.f32 %v12672, 0.0
    %v12835 = vmax.f32 %v12677, 0.0
    %v12836 = vmax.f32 %v12682, 0.0
    %v12837 = vmax.f32 %v12687, 0.0
    %v12838 = vmax.f32 %v12692, 0.0
    %v12839 = vmax.f32 %v12697, 0.0
    %v12840 = vmax.f32 %v12702, 0.0
    %v12841 = vmax.f32 %v12707, 0.0
    %v12842 = vmax.f32 %v12712, 0.0
    %v12843 = vld [vmem:[%s3] sm:$0xff]
    %v12844 = vld [vmem:[%s3 + $0x8] sm:$0xff]
    %v12845 = vld [vmem:[%s3 + $0x10] sm:$0xff]
    %v12846 = vld [vmem:[%s3 + $0x18] sm:$0xff]
    %v12848 = vsel %vm10404, %v12715, 0
    %v12851 = vsel %vm10404, %v12716, 0
    %v12854 = vsel %vm10404, %v12717, 0
    %v12857 = vsel %vm10404, %v12718, 0
    %v12860 = vsel %vm10404, %v12719, 0
    %v12863 = vsel %vm10404, %v12720, 0
    %v12866 = vsel %vm10404, %v12721, 0
    %v12869 = vsel %vm10404, %v12722, 0
    %v12872 = vsel %vm10404, %v12723, 0
    %v12875 = vsel %vm10404, %v12724, 0
    %v12878 = vsel %vm10404, %v12725, 0
    %v12881 = vsel %vm10404, %v12726, 0
    %v12884 = vsel %vm10404, %v12727, 0
    %v12887 = vsel %vm10404, %v12728, 0
    %v12890 = vsel %vm10404, %v12729, 0
    %v12893 = vsel %vm10404, %v12730, 0
    %v12896 = vsel %vm10404, %v12731, 0
    %v12899 = vsel %vm10404, %v12732, 0
    %v12902 = vsel %vm10404, %v12733, 0
    %v12905 = vsel %vm10404, %v12734, 0
    %v12908 = vsel %vm10404, %v12735, 0
    %v12911 = vsel %vm10404, %v12736, 0
    %v12914 = vsel %vm10404, %v12737, 0
    %v12917 = vsel %vm10404, %v12738, 0
    %v12920 = vsel %vm10404, %v12739, 0
    %v12923 = vsel %vm10404, %v12740, 0
    %v12926 = vsel %vm10404, %v12741, 0
    %v12929 = vsel %vm10404, %v12742, 0
    %v12932 = vsel %vm10404, %v12743, 0
    %v12935 = vsel %vm10404, %v12744, 0
    %v12938 = vsel %vm10404, %v12745, 0
    %v12941 = vsel %vm10404, %v12746, 0
    %v12944 = vsel %vm10404, %v12747, 0
    %v12947 = vsel %vm10404, %v12748, 0
    %v12950 = vsel %vm10404, %v12749, 0
    %v12953 = vsel %vm10404, %v12750, 0
    %v12956 = vsel %vm10404, %v12751, 0
    %v12959 = vsel %vm10404, %v12752, 0
    %v12962 = vsel %vm10404, %v12753, 0
    %v12965 = vsel %vm10404, %v12754, 0
    %v12968 = vsel %vm10404, %v12755, 0
    %v12971 = vsel %vm10404, %v12756, 0
    %v12974 = vsel %vm10404, %v12757, 0
    %v12977 = vsel %vm10404, %v12758, 0
    %v12980 = vsel %vm10404, %v12759, 0
    %v12983 = vsel %vm10404, %v12760, 0
    %v12986 = vsel %vm10404, %v12761, 0
    %v12989 = vsel %vm10404, %v12762, 0
    %v12992 = vsel %vm10404, %v12763, 0
    %v12995 = vsel %vm10404, %v12764, 0
    %v12998 = vsel %vm10404, %v12765, 0
    %v13001 = vsel %vm10404, %v12766, 0
    %v13004 = vsel %vm10404, %v12767, 0
    %v13007 = vsel %vm10404, %v12768, 0
    %v13010 = vsel %vm10404, %v12769, 0
    %v13013 = vsel %vm10404, %v12770, 0
    %v13016 = vsel %vm10404, %v12771, 0
    %v13019 = vsel %vm10404, %v12772, 0
    %v13022 = vsel %vm10404, %v12773, 0
    %v13025 = vsel %vm10404, %v12774, 0
    %v13028 = vsel %vm10404, %v12775, 0
    %v13031 = vsel %vm10404, %v12776, 0
    %v13034 = vsel %vm10404, %v12777, 0
    %v13037 = vsel %vm10404, %v12778, 0
    %v13040 = vsel %vm10404, %v12779, 0
    %v13043 = vsel %vm10404, %v12780, 0
    %v13046 = vsel %vm10404, %v12781, 0
    %v13049 = vsel %vm10404, %v12782, 0
    %v13052 = vsel %vm10404, %v12783, 0
    %v13055 = vsel %vm10404, %v12784, 0
    %v13058 = vsel %vm10404, %v12785, 0
    %v13061 = vsel %vm10404, %v12786, 0
    %v13064 = vsel %vm10404, %v12787, 0
    %v13067 = vsel %vm10404, %v12788, 0
    %v13070 = vsel %vm10404, %v12789, 0
    %v13073 = vsel %vm10404, %v12790, 0
    %v13076 = vsel %vm10404, %v12791, 0
    %v13079 = vsel %vm10404, %v12792, 0
    %v13082 = vsel %vm10404, %v12793, 0
    %v13085 = vsel %vm10404, %v12794, 0
    %v13088 = vsel %vm10404, %v12795, 0
    %v13091 = vsel %vm10404, %v12796, 0
    %v13094 = vsel %vm10404, %v12797, 0
    %v13097 = vsel %vm10404, %v12798, 0
    %v13100 = vsel %vm10404, %v12799, 0
    %v13103 = vsel %vm10404, %v12800, 0
    %v13106 = vsel %vm10404, %v12801, 0
    %v13109 = vsel %vm10404, %v12802, 0
    %v13112 = vsel %vm10404, %v12803, 0
    %v13115 = vsel %vm10404, %v12804, 0
    %v13118 = vsel %vm10404, %v12805, 0
    %v13121 = vsel %vm10404, %v12806, 0
    %v13124 = vsel %vm10404, %v12807, 0
    %v13127 = vsel %vm10404, %v12808, 0
    %v13130 = vsel %vm10404, %v12809, 0
    %v13133 = vsel %vm10404, %v12810, 0
    %v13136 = vsel %vm10404, %v12811, 0
    %v13139 = vsel %vm10404, %v12812, 0
    %v13142 = vsel %vm10404, %v12813, 0
    %v13145 = vsel %vm10404, %v12814, 0
    %v13148 = vsel %vm10404, %v12815, 0
    %v13151 = vsel %vm10404, %v12816, 0
    %v13154 = vsel %vm10404, %v12817, 0
    %v13157 = vsel %vm10404, %v12818, 0
    %v13160 = vsel %vm10404, %v12819, 0
    %v13163 = vsel %vm10404, %v12820, 0
    %v13166 = vsel %vm10404, %v12821, 0
    %v13169 = vsel %vm10404, %v12822, 0
    %v13172 = vsel %vm10404, %v12823, 0
    %v13175 = vsel %vm10404, %v12824, 0
    %v13178 = vsel %vm10404, %v12825, 0
    %v13181 = vsel %vm10404, %v12826, 0
    %v13184 = vsel %vm10404, %v12827, 0
    %v13187 = vsel %vm10404, %v12828, 0
    %v13190 = vsel %vm10404, %v12829, 0
    %v13193 = vsel %vm10404, %v12830, 0
    %v13196 = vsel %vm10404, %v12831, 0
    %v13199 = vsel %vm10404, %v12832, 0
    %v13202 = vsel %vm10404, %v12833, 0
    %v13205 = vsel %vm10404, %v12834, 0
    %v13208 = vsel %vm10404, %v12835, 0
    %v13211 = vsel %vm10404, %v12836, 0
    %v13214 = vsel %vm10404, %v12837, 0
    %v13217 = vsel %vm10404, %v12838, 0
    %v13220 = vsel %vm10404, %v12839, 0
    %v13223 = vsel %vm10404, %v12840, 0
    %v13226 = vsel %vm10404, %v12841, 0
    %v13229 = vsel %vm10404, %v12842, 0
    %13231 = vmatprep.subr.mxu0 0.0
    %13232 = vmatpush1.msra.mxu0 %v12843
    %13233 = vmatprep.subr.mxu0 0.0
    %13234 = vmatpush1.msra.mxu0 %v12844
    %13235 = vmatprep.subr.mxu0 0.0
    %13236 = vmatpush1.msra.mxu0 %v12845
    %13237 = vmatprep.subr.mxu0 0.0
    %13238 = vmatpush1.msra.mxu0 %v12846
    %13239 = vmatprep.subr.mxu0 0.0
    %13240 = vmatpush1.msra.mxu0 0.0
    %13241 = vmatprep.subr.mxu0 0.0
    %13242 = vmatpush1.msra.mxu0 0.0
    %13243 = vmatprep.subr.mxu0 0.0
    %13244 = vmatpush1.msra.mxu0 0.0
    %13245 = vmatprep.subr.mxu0 0.0
    %13246 = vmatpush1.msra.mxu0 0.0
    %13247 = vmatprep.subr.mxu0 0.0
    %13248 = vmatpush1.msra.mxu0 0.0
    %13249 = vmatprep.subr.mxu0 0.0
    %13250 = vmatpush1.msra.mxu0 0.0
    %13251 = vmatprep.subr.mxu0 0.0
    %13252 = vmatpush1.msra.mxu0 0.0
    %13253 = vmatprep.subr.mxu0 0.0
    %13254 = vmatpush1.msra.mxu0 0.0
    %13255 = vmatprep.subr.mxu0 0.0
    %13256 = vmatpush1.msra.mxu0 0.0
    %13257 = vmatprep.subr.mxu0 0.0
    %13258 = vmatpush1.msra.mxu0 0.0
    %13259 = vmatprep.subr.mxu0 0.0
    %13260 = vmatpush1.msra.mxu0 0.0
    %13261 = vmatprep.subr.mxu0 0.0
    %13262 = vmatpush1.msra.mxu0 0.0
    %13263 = vmatprep.subr.mxu0 0.0
    %13264 = vmatpush1.msra.mxu0 0.0
    %13265 = vmatprep.subr.mxu0 0.0
    %13266 = vmatpush1.msra.mxu0 0.0
    %13267 = vmatprep.subr.mxu0 0.0
    %13268 = vmatpush1.msra.mxu0 0.0
    %13269 = vmatprep.subr.mxu0 0.0
    %13270 = vmatpush1.msra.mxu0 0.0
    %13271 = vmatprep.subr.mxu0 0.0
    %13272 = vmatpush1.msra.mxu0 0.0
    %13273 = vmatprep.subr.mxu0 0.0
    %13274 = vmatpush1.msra.mxu0 0.0
    %13275 = vmatprep.subr.mxu0 0.0
    %13276 = vmatpush1.msra.mxu0 0.0
    %13277 = vmatprep.subr.mxu0 0.0
    %13278 = vmatpush1.msra.mxu0 0.0
    %13279 = vmatprep.subr.mxu0 0.0
    %13280 = vmatpush1.msra.mxu0 0.0
    %13281 = vmatprep.subr.mxu0 0.0
    %13282 = vmatpush1.msra.mxu0 0.0
    %13283 = vmatprep.subr.mxu0 0.0
    %13284 = vmatpush1.msra.mxu0 0.0
    %13285 = vmatprep.subr.mxu0 0.0
    %13286 = vmatpush1.msra.mxu0 0.0
    %13287 = vmatprep.subr.mxu0 0.0
    %13288 = vmatpush1.msra.mxu0 0.0
    %13289 = vmatprep.subr.mxu0 0.0
    %13290 = vmatpush1.msra.mxu0 0.0
    %13291 = vmatprep.subr.mxu0 0.0
    %13292 = vmatpush1.msra.mxu0 0.0
    %13293 = vmatprep.subr.mxu0 0.0
    %13294 = vmatpush1.msra.mxu0 0.0
    %13295 = vmatprep.mubr.f32.mxu0 0.0
    %13296 = vmatmul.mubr.f32.gmra.mrb[0].mxu0 %v12848
    %v13297 = vpop.f32.mrb[0].mxu0
    %v13298 = vadd.f32 0.0, %v13297
    %v13299 = vpop.f32.mrb[0].mxu0
    %13300 = vmatprep.mubr.f32.mxu0 0.0
    %13301 = vmatmul.mubr.f32.gmra.mrb[0].mxu0 %v12851
    %v13302 = vpop.f32.mrb[0].mxu0
    %v13303 = vadd.f32 0.0, %v13302
    %v13304 = vpop.f32.mrb[0].mxu0
    %13305 = vmatprep.mubr.f32.mxu0 0.0
    %13306 = vmatmul.mubr.f32.gmra.mrb[0].mxu0 %v12854
    %v13307 = vpop.f32.mrb[0].mxu0
    %v13308 = vadd.f32 0.0, %v13307
    %v13309 = vpop.f32.mrb[0].mxu0
    %13310 = vmatprep.mubr.f32.mxu0 0.0
    %13311 = vmatmul.mubr.f32.gmra.mrb[0].mxu0 %v12857
    %v13312 = vpop.f32.mrb[0].mxu0
    %v13313 = vadd.f32 0.0, %v13312
    %v13314 = vpop.f32.mrb[0].mxu0
    %13315 = vmatprep.mubr.f32.mxu0 0.0
    %13316 = vmatmul.mubr.f32.gmra.mrb[0].mxu0 %v12860
    %v13317 = vpop.f32.mrb[0].mxu0
    %v13318 = vadd.f32 0.0, %v13317
    %v13319 = vpop.f32.mrb[0].mxu0
    %13320 = vmatprep.mubr.f32.mxu0 0.0
    %13321 = vmatmul.mubr.f32.gmra.mrb[0].mxu0 %v12863
    %v13322 = vpop.f32.mrb[0].mxu0
    %v13323 = vadd.f32 0.0, %v13322
    %v13324 = vpop.f32.mrb[0].mxu0
    %13325 = vmatprep.mubr.f32.mxu0 0.0
    %13326 = vmatmul.mubr.f32.gmra.mrb[0].mxu0 %v12866
    %v13327 = vpop.f32.mrb[0].mxu0
    %v13328 = vadd.f32 0.0, %v13327
    %v13329 = vpop.f32.mrb[0].mxu0
    %13330 = vmatprep.mubr.f32.mxu0 0.0
    %13331 = vmatmul.mubr.f32.gmra.mrb[0].mxu0 %v12869
    %v13332 = vpop.f32.mrb[0].mxu0
    %v13333 = vadd.f32 0.0, %v13332
    %v13334 = vpop.f32.mrb[0].mxu0
    %13335 = vmatprep.mubr.f32.mxu0 0.0
    %13336 = vmatmul.mubr.f32.gmra.mrb[0].mxu0 %v12872
    %v13337 = vpop.f32.mrb[0].mxu0
    %v13338 = vadd.f32 0.0, %v13337
    %v13339 = vpop.f32.mrb[0].mxu0
    %13340 = vmatprep.mubr.f32.mxu0 0.0
    %13341 = vmatmul.mubr.f32.gmra.mrb[0].mxu0 %v12875
    %v13342 = vpop.f32.mrb[0].mxu0
    %v13343 = vadd.f32 0.0, %v13342
    %v13344 = vpop.f32.mrb[0].mxu0
    %13345 = vmatprep.mubr.f32.mxu0 0.0
    %13346 = vmatmul.mubr.f32.gmra.mrb[0].mxu0 %v12878
    %v13347 = vpop.f32.mrb[0].mxu0
    %v13348 = vadd.f32 0.0, %v13347
    %v13349 = vpop.f32.mrb[0].mxu0
    %13350 = vmatprep.mubr.f32.mxu0 0.0
    %13351 = vmatmul.mubr.f32.gmra.mrb[0].mxu0 %v12881
    %v13352 = vpop.f32.mrb[0].mxu0
    %v13353 = vadd.f32 0.0, %v13352
    %v13354 = vpop.f32.mrb[0].mxu0
    %13355 = vmatprep.mubr.f32.mxu0 0.0
    %13356 = vmatmul.mubr.f32.gmra.mrb[0].mxu0 %v12884
    %v13357 = vpop.f32.mrb[0].mxu0
    %v13358 = vadd.f32 0.0, %v13357
    %v13359 = vpop.f32.mrb[0].mxu0
    %13360 = vmatprep.mubr.f32.mxu0 0.0
    %13361 = vmatmul.mubr.f32.gmra.mrb[0].mxu0 %v12887
    %v13362 = vpop.f32.mrb[0].mxu0
    %v13363 = vadd.f32 0.0, %v13362
    %v13364 = vpop.f32.mrb[0].mxu0
    %13365 = vmatprep.mubr.f32.mxu0 0.0
    %13366 = vmatmul.mubr.f32.gmra.mrb[0].mxu0 %v12890
    %v13367 = vpop.f32.mrb[0].mxu0
    %v13368 = vadd.f32 0.0, %v13367
    %v13369 = vpop.f32.mrb[0].mxu0
    %13370 = vmatprep.mubr.f32.mxu0 0.0
    %13371 = vmatmul.mubr.f32.gmra.mrb[0].mxu0 %v12893
    %v13372 = vpop.f32.mrb[0].mxu0
    %v13373 = vadd.f32 0.0, %v13372
    %v13374 = vpop.f32.mrb[0].mxu0
    %13375 = vmatprep.mubr.f32.mxu0 0.0
    %13376 = vmatmul.mubr.f32.gmra.mrb[0].mxu0 %v12896
    %v13377 = vpop.f32.mrb[0].mxu0
    %v13378 = vadd.f32 0.0, %v13377
    %v13379 = vpop.f32.mrb[0].mxu0
    %13380 = vmatprep.mubr.f32.mxu0 0.0
    %13381 = vmatmul.mubr.f32.gmra.mrb[0].mxu0 %v12899
    %v13382 = vpop.f32.mrb[0].mxu0
    %v13383 = vadd.f32 0.0, %v13382
    %v13384 = vpop.f32.mrb[0].mxu0
    %13385 = vmatprep.mubr.f32.mxu0 0.0
    %13386 = vmatmul.mubr.f32.gmra.mrb[0].mxu0 %v12902
    %v13387 = vpop.f32.mrb[0].mxu0
    %v13388 = vadd.f32 0.0, %v13387
    %v13389 = vpop.f32.mrb[0].mxu0
    %13390 = vmatprep.mubr.f32.mxu0 0.0
    %13391 = vmatmul.mubr.f32.gmra.mrb[0].mxu0 %v12905
    %v13392 = vpop.f32.mrb[0].mxu0
    %v13393 = vadd.f32 0.0, %v13392
    %v13394 = vpop.f32.mrb[0].mxu0
    %13395 = vmatprep.mubr.f32.mxu0 0.0
    %13396 = vmatmul.mubr.f32.gmra.mrb[0].mxu0 %v12908
    %v13397 = vpop.f32.mrb[0].mxu0
    %v13398 = vadd.f32 0.0, %v13397
    %v13399 = vpop.f32.mrb[0].mxu0
    %13400 = vmatprep.mubr.f32.mxu0 0.0
    %13401 = vmatmul.mubr.f32.gmra.mrb[0].mxu0 %v12911
    %v13402 = vpop.f32.mrb[0].mxu0
    %v13403 = vadd.f32 0.0, %v13402
    %v13404 = vpop.f32.mrb[0].mxu0
    %13405 = vmatprep.mubr.f32.mxu0 0.0
    %13406 = vmatmul.mubr.f32.gmra.mrb[0].mxu0 %v12914
    %v13407 = vpop.f32.mrb[0].mxu0
    %v13408 = vadd.f32 0.0, %v13407
    %v13409 = vpop.f32.mrb[0].mxu0
    %13410 = vmatprep.mubr.f32.mxu0 0.0
    %13411 = vmatmul.mubr.f32.gmra.mrb[0].mxu0 %v12917
    %v13412 = vpop.f32.mrb[0].mxu0
    %v13413 = vadd.f32 0.0, %v13412
    %v13414 = vpop.f32.mrb[0].mxu0
    %13415 = vmatprep.mubr.f32.mxu0 0.0
    %13416 = vmatmul.mubr.f32.gmra.mrb[0].mxu0 %v12920
    %v13417 = vpop.f32.mrb[0].mxu0
    %v13418 = vadd.f32 0.0, %v13417
    %v13419 = vpop.f32.mrb[0].mxu0
    %13420 = vmatprep.mubr.f32.mxu0 0.0
    %13421 = vmatmul.mubr.f32.gmra.mrb[0].mxu0 %v12923
    %v13422 = vpop.f32.mrb[0].mxu0
    %v13423 = vadd.f32 0.0, %v13422
    %v13424 = vpop.f32.mrb[0].mxu0
    %13425 = vmatprep.mubr.f32.mxu0 0.0
    %13426 = vmatmul.mubr.f32.gmra.mrb[0].mxu0 %v12926
    %v13427 = vpop.f32.mrb[0].mxu0
    %v13428 = vadd.f32 0.0, %v13427
    %v13429 = vpop.f32.mrb[0].mxu0
    %13430 = vmatprep.mubr.f32.mxu0 0.0
    %13431 = vmatmul.mubr.f32.gmra.mrb[0].mxu0 %v12929
    %v13432 = vpop.f32.mrb[0].mxu0
    %v13433 = vadd.f32 0.0, %v13432
    %v13434 = vpop.f32.mrb[0].mxu0
    %13435 = vmatprep.mubr.f32.mxu0 0.0
    %13436 = vmatmul.mubr.f32.gmra.mrb[0].mxu0 %v12932
    %v13437 = vpop.f32.mrb[0].mxu0
    %v13438 = vadd.f32 0.0, %v13437
    %v13439 = vpop.f32.mrb[0].mxu0
    %13440 = vmatprep.mubr.f32.mxu0 0.0
    %13441 = vmatmul.mubr.f32.gmra.mrb[0].mxu0 %v12935
    %v13442 = vpop.f32.mrb[0].mxu0
    %v13443 = vadd.f32 0.0, %v13442
    %v13444 = vpop.f32.mrb[0].mxu0
    %13445 = vmatprep.mubr.f32.mxu0 0.0
    %13446 = vmatmul.mubr.f32.gmra.mrb[0].mxu0 %v12938
    %v13447 = vpop.f32.mrb[0].mxu0
    %v13448 = vadd.f32 0.0, %v13447
    %v13449 = vpop.f32.mrb[0].mxu0
    %13450 = vmatprep.mubr.f32.mxu0 0.0
    %13451 = vmatmul.mubr.f32.gmra.mrb[0].mxu0 %v12941
    %v13452 = vpop.f32.mrb[0].mxu0
    %v13453 = vadd.f32 0.0, %v13452
    %v13454 = vpop.f32.mrb[0].mxu0
    %13455 = vmatprep.mubr.f32.mxu0 0.0
    %13456 = vmatmul.mubr.f32.gmra.mrb[0].mxu0 %v12944
    %v13457 = vpop.f32.mrb[0].mxu0
    %v13458 = vadd.f32 0.0, %v13457
    %v13459 = vpop.f32.mrb[0].mxu0
    %13460 = vmatprep.mubr.f32.mxu0 0.0
    %13461 = vmatmul.mubr.f32.gmra.mrb[0].mxu0 %v12947
    %v13462 = vpop.f32.mrb[0].mxu0
    %v13463 = vadd.f32 0.0, %v13462
    %v13464 = vpop.f32.mrb[0].mxu0
    %13465 = vmatprep.mubr.f32.mxu0 0.0
    %13466 = vmatmul.mubr.f32.gmra.mrb[0].mxu0 %v12950
    %v13467 = vpop.f32.mrb[0].mxu0
    %v13468 = vadd.f32 0.0, %v13467
    %v13469 = vpop.f32.mrb[0].mxu0
    %13470 = vmatprep.mubr.f32.mxu0 0.0
    %13471 = vmatmul.mubr.f32.gmra.mrb[0].mxu0 %v12953
    %v13472 = vpop.f32.mrb[0].mxu0
    %v13473 = vadd.f32 0.0, %v13472
    %v13474 = vpop.f32.mrb[0].mxu0
    %13475 = vmatprep.mubr.f32.mxu0 0.0
    %13476 = vmatmul.mubr.f32.gmra.mrb[0].mxu0 %v12956
    %v13477 = vpop.f32.mrb[0].mxu0
    %v13478 = vadd.f32 0.0, %v13477
    %v13479 = vpop.f32.mrb[0].mxu0
    %13480 = vmatprep.mubr.f32.mxu0 0.0
    %13481 = vmatmul.mubr.f32.gmra.mrb[0].mxu0 %v12959
    %v13482 = vpop.f32.mrb[0].mxu0
    %v13483 = vadd.f32 0.0, %v13482
    %v13484 = vpop.f32.mrb[0].mxu0
    %13485 = vmatprep.mubr.f32.mxu0 0.0
    %13486 = vmatmul.mubr.f32.gmra.mrb[0].mxu0 %v12962
    %v13487 = vpop.f32.mrb[0].mxu0
    %v13488 = vadd.f32 0.0, %v13487
    %v13489 = vpop.f32.mrb[0].mxu0
    %13490 = vmatprep.mubr.f32.mxu0 0.0
    %13491 = vmatmul.mubr.f32.gmra.mrb[0].mxu0 %v12965
    %v13492 = vpop.f32.mrb[0].mxu0
    %v13493 = vadd.f32 0.0, %v13492
    %v13494 = vpop.f32.mrb[0].mxu0
    %13495 = vmatprep.mubr.f32.mxu0 0.0
    %13496 = vmatmul.mubr.f32.gmra.mrb[0].mxu0 %v12968
    %v13497 = vpop.f32.mrb[0].mxu0
    %v13498 = vadd.f32 0.0, %v13497
    %v13499 = vpop.f32.mrb[0].mxu0
    %13500 = vmatprep.mubr.f32.mxu0 0.0
    %13501 = vmatmul.mubr.f32.gmra.mrb[0].mxu0 %v12971
    %v13502 = vpop.f32.mrb[0].mxu0
    %v13503 = vadd.f32 0.0, %v13502
    %v13504 = vpop.f32.mrb[0].mxu0
    %13505 = vmatprep.mubr.f32.mxu0 0.0
    %13506 = vmatmul.mubr.f32.gmra.mrb[0].mxu0 %v12974
    %v13507 = vpop.f32.mrb[0].mxu0
    %v13508 = vadd.f32 0.0, %v13507
    %v13509 = vpop.f32.mrb[0].mxu0
    %13510 = vmatprep.mubr.f32.mxu0 0.0
    %13511 = vmatmul.mubr.f32.gmra.mrb[0].mxu0 %v12977
    %v13512 = vpop.f32.mrb[0].mxu0
    %v13513 = vadd.f32 0.0, %v13512
    %v13514 = vpop.f32.mrb[0].mxu0
    %13515 = vmatprep.mubr.f32.mxu0 0.0
    %13516 = vmatmul.mubr.f32.gmra.mrb[0].mxu0 %v12980
    %v13517 = vpop.f32.mrb[0].mxu0
    %v13518 = vadd.f32 0.0, %v13517
    %v13519 = vpop.f32.mrb[0].mxu0
    %13520 = vmatprep.mubr.f32.mxu0 0.0
    %13521 = vmatmul.mubr.f32.gmra.mrb[0].mxu0 %v12983
    %v13522 = vpop.f32.mrb[0].mxu0
    %v13523 = vadd.f32 0.0, %v13522
    %v13524 = vpop.f32.mrb[0].mxu0
    %13525 = vmatprep.mubr.f32.mxu0 0.0
    %13526 = vmatmul.mubr.f32.gmra.mrb[0].mxu0 %v12986
    %v13527 = vpop.f32.mrb[0].mxu0
    %v13528 = vadd.f32 0.0, %v13527
    %v13529 = vpop.f32.mrb[0].mxu0
    %13530 = vmatprep.mubr.f32.mxu0 0.0
    %13531 = vmatmul.mubr.f32.gmra.mrb[0].mxu0 %v12989
    %v13532 = vpop.f32.mrb[0].mxu0
    %v13533 = vadd.f32 0.0, %v13532
    %v13534 = vpop.f32.mrb[0].mxu0
    %13535 = vmatprep.mubr.f32.mxu0 0.0
    %13536 = vmatmul.mubr.f32.gmra.mrb[0].mxu0 %v12992
    %v13537 = vpop.f32.mrb[0].mxu0
    %v13538 = vadd.f32 0.0, %v13537
    %v13539 = vpop.f32.mrb[0].mxu0
    %13540 = vmatprep.mubr.f32.mxu0 0.0
    %13541 = vmatmul.mubr.f32.gmra.mrb[0].mxu0 %v12995
    %v13542 = vpop.f32.mrb[0].mxu0
    %v13543 = vadd.f32 0.0, %v13542
    %v13544 = vpop.f32.mrb[0].mxu0
    %13545 = vmatprep.mubr.f32.mxu0 0.0
    %13546 = vmatmul.mubr.f32.gmra.mrb[0].mxu0 %v12998
    %v13547 = vpop.f32.mrb[0].mxu0
    %v13548 = vadd.f32 0.0, %v13547
    %v13549 = vpop.f32.mrb[0].mxu0
    %13550 = vmatprep.mubr.f32.mxu0 0.0
    %13551 = vmatmul.mubr.f32.gmra.mrb[0].mxu0 %v13001
    %v13552 = vpop.f32.mrb[0].mxu0
    %v13553 = vadd.f32 0.0, %v13552
    %v13554 = vpop.f32.mrb[0].mxu0
    %13555 = vmatprep.mubr.f32.mxu0 0.0
    %13556 = vmatmul.mubr.f32.gmra.mrb[0].mxu0 %v13004
    %v13557 = vpop.f32.mrb[0].mxu0
    %v13558 = vadd.f32 0.0, %v13557
    %v13559 = vpop.f32.mrb[0].mxu0
    %13560 = vmatprep.mubr.f32.mxu0 0.0
    %13561 = vmatmul.mubr.f32.gmra.mrb[0].mxu0 %v13007
    %v13562 = vpop.f32.mrb[0].mxu0
    %v13563 = vadd.f32 0.0, %v13562
    %v13564 = vpop.f32.mrb[0].mxu0
    %13565 = vmatprep.mubr.f32.mxu0 0.0
    %13566 = vmatmul.mubr.f32.gmra.mrb[0].mxu0 %v13010
    %v13567 = vpop.f32.mrb[0].mxu0
    %v13568 = vadd.f32 0.0, %v13567
    %v13569 = vpop.f32.mrb[0].mxu0
    %13570 = vmatprep.mubr.f32.mxu0 0.0
    %13571 = vmatmul.mubr.f32.gmra.mrb[0].mxu0 %v13013
    %v13572 = vpop.f32.mrb[0].mxu0
    %v13573 = vadd.f32 0.0, %v13572
    %v13574 = vpop.f32.mrb[0].mxu0
    %13575 = vmatprep.mubr.f32.mxu0 0.0
    %13576 = vmatmul.mubr.f32.gmra.mrb[0].mxu0 %v13016
    %v13577 = vpop.f32.mrb[0].mxu0
    %v13578 = vadd.f32 0.0, %v13577
    %v13579 = vpop.f32.mrb[0].mxu0
    %13580 = vmatprep.mubr.f32.mxu0 0.0
    %13581 = vmatmul.mubr.f32.gmra.mrb[0].mxu0 %v13019
    %v13582 = vpop.f32.mrb[0].mxu0
    %v13583 = vadd.f32 0.0, %v13582
    %v13584 = vpop.f32.mrb[0].mxu0
    %13585 = vmatprep.mubr.f32.mxu0 0.0
    %13586 = vmatmul.mubr.f32.gmra.mrb[0].mxu0 %v13022
    %v13587 = vpop.f32.mrb[0].mxu0
    %v13588 = vadd.f32 0.0, %v13587
    %v13589 = vpop.f32.mrb[0].mxu0
    %13590 = vmatprep.mubr.f32.mxu0 0.0
    %13591 = vmatmul.mubr.f32.gmra.mrb[0].mxu0 %v13025
    %v13592 = vpop.f32.mrb[0].mxu0
    %v13593 = vadd.f32 0.0, %v13592
    %v13594 = vpop.f32.mrb[0].mxu0
    %13595 = vmatprep.mubr.f32.mxu0 0.0
    %13596 = vmatmul.mubr.f32.gmra.mrb[0].mxu0 %v13028
    %v13597 = vpop.f32.mrb[0].mxu0
    %v13598 = vadd.f32 0.0, %v13597
    %v13599 = vpop.f32.mrb[0].mxu0
    %13600 = vmatprep.mubr.f32.mxu0 0.0
    %13601 = vmatmul.mubr.f32.gmra.mrb[0].mxu0 %v13031
    %v13602 = vpop.f32.mrb[0].mxu0
    %v13603 = vadd.f32 0.0, %v13602
    %v13604 = vpop.f32.mrb[0].mxu0
    %13605 = vmatprep.mubr.f32.mxu0 0.0
    %13606 = vmatmul.mubr.f32.gmra.mrb[0].mxu0 %v13034
    %v13607 = vpop.f32.mrb[0].mxu0
    %v13608 = vadd.f32 0.0, %v13607
    %v13609 = vpop.f32.mrb[0].mxu0
    %13610 = vmatprep.mubr.f32.mxu0 0.0
    %13611 = vmatmul.mubr.f32.gmra.mrb[0].mxu0 %v13037
    %v13612 = vpop.f32.mrb[0].mxu0
    %v13613 = vadd.f32 0.0, %v13612
    %v13614 = vpop.f32.mrb[0].mxu0
    %13615 = vmatprep.mubr.f32.mxu0 0.0
    %13616 = vmatmul.mubr.f32.gmra.mrb[0].mxu0 %v13040
    %v13617 = vpop.f32.mrb[0].mxu0
    %v13618 = vadd.f32 0.0, %v13617
    %v13619 = vpop.f32.mrb[0].mxu0
    %13620 = vmatprep.mubr.f32.mxu0 0.0
    %13621 = vmatmul.mubr.f32.gmra.mrb[0].mxu0 %v13043
    %v13622 = vpop.f32.mrb[0].mxu0
    %v13623 = vadd.f32 0.0, %v13622
    %v13624 = vpop.f32.mrb[0].mxu0
    %13625 = vmatprep.mubr.f32.mxu0 0.0
    %13626 = vmatmul.mubr.f32.gmra.mrb[0].mxu0 %v13046
    %v13627 = vpop.f32.mrb[0].mxu0
    %v13628 = vadd.f32 0.0, %v13627
    %v13629 = vpop.f32.mrb[0].mxu0
    %13630 = vmatprep.mubr.f32.mxu0 0.0
    %13631 = vmatmul.mubr.f32.gmra.mrb[0].mxu0 %v13049
    %v13632 = vpop.f32.mrb[0].mxu0
    %v13633 = vadd.f32 0.0, %v13632
    %v13634 = vpop.f32.mrb[0].mxu0
    %13635 = vmatprep.mubr.f32.mxu0 0.0
    %13636 = vmatmul.mubr.f32.gmra.mrb[0].mxu0 %v13052
    %v13637 = vpop.f32.mrb[0].mxu0
    %v13638 = vadd.f32 0.0, %v13637
    %v13639 = vpop.f32.mrb[0].mxu0
    %13640 = vmatprep.mubr.f32.mxu0 0.0
    %13641 = vmatmul.mubr.f32.gmra.mrb[0].mxu0 %v13055
    %v13642 = vpop.f32.mrb[0].mxu0
    %v13643 = vadd.f32 0.0, %v13642
    %v13644 = vpop.f32.mrb[0].mxu0
    %13645 = vmatprep.mubr.f32.mxu0 0.0
    %13646 = vmatmul.mubr.f32.gmra.mrb[0].mxu0 %v13058
    %v13647 = vpop.f32.mrb[0].mxu0
    %v13648 = vadd.f32 0.0, %v13647
    %v13649 = vpop.f32.mrb[0].mxu0
    %13650 = vmatprep.mubr.f32.mxu0 0.0
    %13651 = vmatmul.mubr.f32.gmra.mrb[0].mxu0 %v13061
    %v13652 = vpop.f32.mrb[0].mxu0
    %v13653 = vadd.f32 0.0, %v13652
    %v13654 = vpop.f32.mrb[0].mxu0
    %13655 = vmatprep.mubr.f32.mxu0 0.0
    %13656 = vmatmul.mubr.f32.gmra.mrb[0].mxu0 %v13064
    %v13657 = vpop.f32.mrb[0].mxu0
    %v13658 = vadd.f32 0.0, %v13657
    %v13659 = vpop.f32.mrb[0].mxu0
    %13660 = vmatprep.mubr.f32.mxu0 0.0
    %13661 = vmatmul.mubr.f32.gmra.mrb[0].mxu0 %v13067
    %v13662 = vpop.f32.mrb[0].mxu0
    %v13663 = vadd.f32 0.0, %v13662
    %v13664 = vpop.f32.mrb[0].mxu0
    %13665 = vmatprep.mubr.f32.mxu0 0.0
    %13666 = vmatmul.mubr.f32.gmra.mrb[0].mxu0 %v13070
    %v13667 = vpop.f32.mrb[0].mxu0
    %v13668 = vadd.f32 0.0, %v13667
    %v13669 = vpop.f32.mrb[0].mxu0
    %13670 = vmatprep.mubr.f32.mxu0 0.0
    %13671 = vmatmul.mubr.f32.gmra.mrb[0].mxu0 %v13073
    %v13672 = vpop.f32.mrb[0].mxu0
    %v13673 = vadd.f32 0.0, %v13672
    %v13674 = vpop.f32.mrb[0].mxu0
    %13675 = vmatprep.mubr.f32.mxu0 0.0
    %13676 = vmatmul.mubr.f32.gmra.mrb[0].mxu0 %v13076
    %v13677 = vpop.f32.mrb[0].mxu0
    %v13678 = vadd.f32 0.0, %v13677
    %v13679 = vpop.f32.mrb[0].mxu0
    %13680 = vmatprep.mubr.f32.mxu0 0.0
    %13681 = vmatmul.mubr.f32.gmra.mrb[0].mxu0 %v13079
    %v13682 = vpop.f32.mrb[0].mxu0
    %v13683 = vadd.f32 0.0, %v13682
    %v13684 = vpop.f32.mrb[0].mxu0
    %13685 = vmatprep.mubr.f32.mxu0 0.0
    %13686 = vmatmul.mubr.f32.gmra.mrb[0].mxu0 %v13082
    %v13687 = vpop.f32.mrb[0].mxu0
    %v13688 = vadd.f32 0.0, %v13687
    %v13689 = vpop.f32.mrb[0].mxu0
    %13690 = vmatprep.mubr.f32.mxu0 0.0
    %13691 = vmatmul.mubr.f32.gmra.mrb[0].mxu0 %v13085
    %v13692 = vpop.f32.mrb[0].mxu0
    %v13693 = vadd.f32 0.0, %v13692
    %v13694 = vpop.f32.mrb[0].mxu0
    %13695 = vmatprep.mubr.f32.mxu0 0.0
    %13696 = vmatmul.mubr.f32.gmra.mrb[0].mxu0 %v13088
    %v13697 = vpop.f32.mrb[0].mxu0
    %v13698 = vadd.f32 0.0, %v13697
    %v13699 = vpop.f32.mrb[0].mxu0
    %13700 = vmatprep.mubr.f32.mxu0 0.0
    %13701 = vmatmul.mubr.f32.gmra.mrb[0].mxu0 %v13091
    %v13702 = vpop.f32.mrb[0].mxu0
    %v13703 = vadd.f32 0.0, %v13702
    %v13704 = vpop.f32.mrb[0].mxu0
    %13705 = vmatprep.mubr.f32.mxu0 0.0
    %13706 = vmatmul.mubr.f32.gmra.mrb[0].mxu0 %v13094
    %v13707 = vpop.f32.mrb[0].mxu0
    %v13708 = vadd.f32 0.0, %v13707
    %v13709 = vpop.f32.mrb[0].mxu0
    %13710 = vmatprep.mubr.f32.mxu0 0.0
    %13711 = vmatmul.mubr.f32.gmra.mrb[0].mxu0 %v13097
    %v13712 = vpop.f32.mrb[0].mxu0
    %v13713 = vadd.f32 0.0, %v13712
    %v13714 = vpop.f32.mrb[0].mxu0
    %13715 = vmatprep.mubr.f32.mxu0 0.0
    %13716 = vmatmul.mubr.f32.gmra.mrb[0].mxu0 %v13100
    %v13717 = vpop.f32.mrb[0].mxu0
    %v13718 = vadd.f32 0.0, %v13717
    %v13719 = vpop.f32.mrb[0].mxu0
    %13720 = vmatprep.mubr.f32.mxu0 0.0
    %13721 = vmatmul.mubr.f32.gmra.mrb[0].mxu0 %v13103
    %v13722 = vpop.f32.mrb[0].mxu0
    %v13723 = vadd.f32 0.0, %v13722
    %v13724 = vpop.f32.mrb[0].mxu0
    %13725 = vmatprep.mubr.f32.mxu0 0.0
    %13726 = vmatmul.mubr.f32.gmra.mrb[0].mxu0 %v13106
    %v13727 = vpop.f32.mrb[0].mxu0
    %v13728 = vadd.f32 0.0, %v13727
    %v13729 = vpop.f32.mrb[0].mxu0
    %13730 = vmatprep.mubr.f32.mxu0 0.0
    %13731 = vmatmul.mubr.f32.gmra.mrb[0].mxu0 %v13109
    %v13732 = vpop.f32.mrb[0].mxu0
    %v13733 = vadd.f32 0.0, %v13732
    %v13734 = vpop.f32.mrb[0].mxu0
    %13735 = vmatprep.mubr.f32.mxu0 0.0
    %13736 = vmatmul.mubr.f32.gmra.mrb[0].mxu0 %v13112
    %v13737 = vpop.f32.mrb[0].mxu0
    %v13738 = vadd.f32 0.0, %v13737
    %v13739 = vpop.f32.mrb[0].mxu0
    %13740 = vmatprep.mubr.f32.mxu0 0.0
    %13741 = vmatmul.mubr.f32.gmra.mrb[0].mxu0 %v13115
    %v13742 = vpop.f32.mrb[0].mxu0
    %v13743 = vadd.f32 0.0, %v13742
    %v13744 = vpop.f32.mrb[0].mxu0
    %13745 = vmatprep.mubr.f32.mxu0 0.0
    %13746 = vmatmul.mubr.f32.gmra.mrb[0].mxu0 %v13118
    %v13747 = vpop.f32.mrb[0].mxu0
    %v13748 = vadd.f32 0.0, %v13747
    %v13749 = vpop.f32.mrb[0].mxu0
    %13750 = vmatprep.mubr.f32.mxu0 0.0
    %13751 = vmatmul.mubr.f32.gmra.mrb[0].mxu0 %v13121
    %v13752 = vpop.f32.mrb[0].mxu0
    %v13753 = vadd.f32 0.0, %v13752
    %v13754 = vpop.f32.mrb[0].mxu0
    %13755 = vmatprep.mubr.f32.mxu0 0.0
    %13756 = vmatmul.mubr.f32.gmra.mrb[0].mxu0 %v13124
    %v13757 = vpop.f32.mrb[0].mxu0
    %v13758 = vadd.f32 0.0, %v13757
    %v13759 = vpop.f32.mrb[0].mxu0
    %13760 = vmatprep.mubr.f32.mxu0 0.0
    %13761 = vmatmul.mubr.f32.gmra.mrb[0].mxu0 %v13127
    %v13762 = vpop.f32.mrb[0].mxu0
    %v13763 = vadd.f32 0.0, %v13762
    %v13764 = vpop.f32.mrb[0].mxu0
    %13765 = vmatprep.mubr.f32.mxu0 0.0
    %13766 = vmatmul.mubr.f32.gmra.mrb[0].mxu0 %v13130
    %v13767 = vpop.f32.mrb[0].mxu0
    %v13768 = vadd.f32 0.0, %v13767
    %v13769 = vpop.f32.mrb[0].mxu0
    %13770 = vmatprep.mubr.f32.mxu0 0.0
    %13771 = vmatmul.mubr.f32.gmra.mrb[0].mxu0 %v13133
    %v13772 = vpop.f32.mrb[0].mxu0
    %v13773 = vadd.f32 0.0, %v13772
    %v13774 = vpop.f32.mrb[0].mxu0
    %13775 = vmatprep.mubr.f32.mxu0 0.0
    %13776 = vmatmul.mubr.f32.gmra.mrb[0].mxu0 %v13136
    %v13777 = vpop.f32.mrb[0].mxu0
    %v13778 = vadd.f32 0.0, %v13777
    %v13779 = vpop.f32.mrb[0].mxu0
    %13780 = vmatprep.mubr.f32.mxu0 0.0
    %13781 = vmatmul.mubr.f32.gmra.mrb[0].mxu0 %v13139
    %v13782 = vpop.f32.mrb[0].mxu0
    %v13783 = vadd.f32 0.0, %v13782
    %v13784 = vpop.f32.mrb[0].mxu0
    %13785 = vmatprep.mubr.f32.mxu0 0.0
    %13786 = vmatmul.mubr.f32.gmra.mrb[0].mxu0 %v13142
    %v13787 = vpop.f32.mrb[0].mxu0
    %v13788 = vadd.f32 0.0, %v13787
    %v13789 = vpop.f32.mrb[0].mxu0
    %13790 = vmatprep.mubr.f32.mxu0 0.0
    %13791 = vmatmul.mubr.f32.gmra.mrb[0].mxu0 %v13145
    %v13792 = vpop.f32.mrb[0].mxu0
    %v13793 = vadd.f32 0.0, %v13792
    %v13794 = vpop.f32.mrb[0].mxu0
    %13795 = vmatprep.mubr.f32.mxu0 0.0
    %13796 = vmatmul.mubr.f32.gmra.mrb[0].mxu0 %v13148
    %v13797 = vpop.f32.mrb[0].mxu0
    %v13798 = vadd.f32 0.0, %v13797
    %v13799 = vpop.f32.mrb[0].mxu0
    %13800 = vmatprep.mubr.f32.mxu0 0.0
    %13801 = vmatmul.mubr.f32.gmra.mrb[0].mxu0 %v13151
    %v13802 = vpop.f32.mrb[0].mxu0
    %v13803 = vadd.f32 0.0, %v13802
    %v13804 = vpop.f32.mrb[0].mxu0
    %13805 = vmatprep.mubr.f32.mxu0 0.0
    %13806 = vmatmul.mubr.f32.gmra.mrb[0].mxu0 %v13154
    %v13807 = vpop.f32.mrb[0].mxu0
    %v13808 = vadd.f32 0.0, %v13807
    %v13809 = vpop.f32.mrb[0].mxu0
    %13810 = vmatprep.mubr.f32.mxu0 0.0
    %13811 = vmatmul.mubr.f32.gmra.mrb[0].mxu0 %v13157
    %v13812 = vpop.f32.mrb[0].mxu0
    %v13813 = vadd.f32 0.0, %v13812
    %v13814 = vpop.f32.mrb[0].mxu0
    %13815 = vmatprep.mubr.f32.mxu0 0.0
    %13816 = vmatmul.mubr.f32.gmra.mrb[0].mxu0 %v13160
    %v13817 = vpop.f32.mrb[0].mxu0
    %v13818 = vadd.f32 0.0, %v13817
    %v13819 = vpop.f32.mrb[0].mxu0
    %13820 = vmatprep.mubr.f32.mxu0 0.0
    %13821 = vmatmul.mubr.f32.gmra.mrb[0].mxu0 %v13163
    %v13822 = vpop.f32.mrb[0].mxu0
    %v13823 = vadd.f32 0.0, %v13822
    %v13824 = vpop.f32.mrb[0].mxu0
    %13825 = vmatprep.mubr.f32.mxu0 0.0
    %13826 = vmatmul.mubr.f32.gmra.mrb[0].mxu0 %v13166
    %v13827 = vpop.f32.mrb[0].mxu0
    %v13828 = vadd.f32 0.0, %v13827
    %v13829 = vpop.f32.mrb[0].mxu0
    %13830 = vmatprep.mubr.f32.mxu0 0.0
    %13831 = vmatmul.mubr.f32.gmra.mrb[0].mxu0 %v13169
    %v13832 = vpop.f32.mrb[0].mxu0
    %v13833 = vadd.f32 0.0, %v13832
    %v13834 = vpop.f32.mrb[0].mxu0
    %13835 = vmatprep.mubr.f32.mxu0 0.0
    %13836 = vmatmul.mubr.f32.gmra.mrb[0].mxu0 %v13172
    %v13837 = vpop.f32.mrb[0].mxu0
    %v13838 = vadd.f32 0.0, %v13837
    %v13839 = vpop.f32.mrb[0].mxu0
    %13840 = vmatprep.mubr.f32.mxu0 0.0
    %13841 = vmatmul.mubr.f32.gmra.mrb[0].mxu0 %v13175
    %v13842 = vpop.f32.mrb[0].mxu0
    %v13843 = vadd.f32 0.0, %v13842
    %v13844 = vpop.f32.mrb[0].mxu0
    %13845 = vmatprep.mubr.f32.mxu0 0.0
    %13846 = vmatmul.mubr.f32.gmra.mrb[0].mxu0 %v13178
    %v13847 = vpop.f32.mrb[0].mxu0
    %v13848 = vadd.f32 0.0, %v13847
    %v13849 = vpop.f32.mrb[0].mxu0
    %13850 = vmatprep.mubr.f32.mxu0 0.0
    %13851 = vmatmul.mubr.f32.gmra.mrb[0].mxu0 %v13181
    %v13852 = vpop.f32.mrb[0].mxu0
    %v13853 = vadd.f32 0.0, %v13852
    %v13854 = vpop.f32.mrb[0].mxu0
    %13855 = vmatprep.mubr.f32.mxu0 0.0
    %13856 = vmatmul.mubr.f32.gmra.mrb[0].mxu0 %v13184
    %v13857 = vpop.f32.mrb[0].mxu0
    %v13858 = vadd.f32 0.0, %v13857
    %v13859 = vpop.f32.mrb[0].mxu0
    %13860 = vmatprep.mubr.f32.mxu0 0.0
    %13861 = vmatmul.mubr.f32.gmra.mrb[0].mxu0 %v13187
    %v13862 = vpop.f32.mrb[0].mxu0
    %v13863 = vadd.f32 0.0, %v13862
    %v13864 = vpop.f32.mrb[0].mxu0
    %13865 = vmatprep.mubr.f32.mxu0 0.0
    %13866 = vmatmul.mubr.f32.gmra.mrb[0].mxu0 %v13190
    %v13867 = vpop.f32.mrb[0].mxu0
    %v13868 = vadd.f32 0.0, %v13867
    %v13869 = vpop.f32.mrb[0].mxu0
    %13870 = vmatprep.mubr.f32.mxu0 0.0
    %13871 = vmatmul.mubr.f32.gmra.mrb[0].mxu0 %v13193
    %v13872 = vpop.f32.mrb[0].mxu0
    %v13873 = vadd.f32 0.0, %v13872
    %v13874 = vpop.f32.mrb[0].mxu0
    %13875 = vmatprep.mubr.f32.mxu0 0.0
    %13876 = vmatmul.mubr.f32.gmra.mrb[0].mxu0 %v13196
    %v13877 = vpop.f32.mrb[0].mxu0
    %v13878 = vadd.f32 0.0, %v13877
    %v13879 = vpop.f32.mrb[0].mxu0
    %13880 = vmatprep.mubr.f32.mxu0 0.0
    %13881 = vmatmul.mubr.f32.gmra.mrb[0].mxu0 %v13199
    %v13882 = vpop.f32.mrb[0].mxu0
    %v13883 = vadd.f32 0.0, %v13882
    %v13884 = vpop.f32.mrb[0].mxu0
    %13885 = vmatprep.mubr.f32.mxu0 0.0
    %13886 = vmatmul.mubr.f32.gmra.mrb[0].mxu0 %v13202
    %v13887 = vpop.f32.mrb[0].mxu0
    %v13888 = vadd.f32 0.0, %v13887
    %v13889 = vpop.f32.mrb[0].mxu0
    %13890 = vmatprep.mubr.f32.mxu0 0.0
    %13891 = vmatmul.mubr.f32.gmra.mrb[0].mxu0 %v13205
    %v13892 = vpop.f32.mrb[0].mxu0
    %v13893 = vadd.f32 0.0, %v13892
    %v13894 = vpop.f32.mrb[0].mxu0
    %13895 = vmatprep.mubr.f32.mxu0 0.0
    %13896 = vmatmul.mubr.f32.gmra.mrb[0].mxu0 %v13208
    %v13897 = vpop.f32.mrb[0].mxu0
    %v13898 = vadd.f32 0.0, %v13897
    %v13899 = vpop.f32.mrb[0].mxu0
    %13900 = vmatprep.mubr.f32.mxu0 0.0
    %13901 = vmatmul.mubr.f32.gmra.mrb[0].mxu0 %v13211
    %v13902 = vpop.f32.mrb[0].mxu0
    %v13903 = vadd.f32 0.0, %v13902
    %v13904 = vpop.f32.mrb[0].mxu0
    %13905 = vmatprep.mubr.f32.mxu0 0.0
    %13906 = vmatmul.mubr.f32.gmra.mrb[0].mxu0 %v13214
    %v13907 = vpop.f32.mrb[0].mxu0
    %v13908 = vadd.f32 0.0, %v13907
    %v13909 = vpop.f32.mrb[0].mxu0
    %13910 = vmatprep.mubr.f32.mxu0 0.0
    %13911 = vmatmul.mubr.f32.gmra.mrb[0].mxu0 %v13217
    %v13912 = vpop.f32.mrb[0].mxu0
    %v13913 = vadd.f32 0.0, %v13912
    %v13914 = vpop.f32.mrb[0].mxu0
    %13915 = vmatprep.mubr.f32.mxu0 0.0
    %13916 = vmatmul.mubr.f32.gmra.mrb[0].mxu0 %v13220
    %v13917 = vpop.f32.mrb[0].mxu0
    %v13918 = vadd.f32 0.0, %v13917
    %v13919 = vpop.f32.mrb[0].mxu0
    %13920 = vmatprep.mubr.f32.mxu0 0.0
    %13921 = vmatmul.mubr.f32.gmra.mrb[0].mxu0 %v13223
    %v13922 = vpop.f32.mrb[0].mxu0
    %v13923 = vadd.f32 0.0, %v13922
    %v13924 = vpop.f32.mrb[0].mxu0
    %13925 = vmatprep.mubr.f32.mxu0 0.0
    %13926 = vmatmul.mubr.f32.gmra.mrb[0].mxu0 %v13226
    %v13927 = vpop.f32.mrb[0].mxu0
    %v13928 = vadd.f32 0.0, %v13927
    %v13929 = vpop.f32.mrb[0].mxu0
    %13930 = vmatprep.mubr.f32.mxu0 0.0
    %13931 = vmatmul.mubr.f32.gmra.mrb[0].mxu0 %v13229
    %v13932 = vpop.f32.mrb[0].mxu0
    %v13933 = vadd.f32 0.0, %v13932
    %v13934 = vpop.f32.mrb[0].mxu0
    %13935 = vdwg.mxu0
    %vm13936 = vcmask 31744
    %13937 = vst.msk [vmem:[%s4] sm:$0xff] %vm13936, %v13298
    %13938 = vst.msk [vmem:[%s4 + $0x8] sm:$0xff] %vm13936, %v13303
    %13939 = vst.msk [vmem:[%s4 + $0x10] sm:$0xff] %vm13936, %v13308
    %13940 = vst.msk [vmem:[%s4 + $0x18] sm:$0xff] %vm13936, %v13313
    %13941 = vst.msk [vmem:[%s4 + $0x20] sm:$0xff] %vm13936, %v13318
    %13942 = vst.msk [vmem:[%s4 + $0x28] sm:$0xff] %vm13936, %v13323
    %13943 = vst.msk [vmem:[%s4 + $0x30] sm:$0xff] %vm13936, %v13328
    %13944 = vst.msk [vmem:[%s4 + $0x38] sm:$0xff] %vm13936, %v13333
    %13945 = vst.msk [vmem:[%s4 + $0x40] sm:$0xff] %vm13936, %v13338
    %13946 = vst.msk [vmem:[%s4 + $0x48] sm:$0xff] %vm13936, %v13343
    %13947 = vst.msk [vmem:[%s4 + $0x50] sm:$0xff] %vm13936, %v13348
    %13948 = vst.msk [vmem:[%s4 + $0x58] sm:$0xff] %vm13936, %v13353
    %13949 = vst.msk [vmem:[%s4 + $0x60] sm:$0xff] %vm13936, %v13358
    %13950 = vst.msk [vmem:[%s4 + $0x68] sm:$0xff] %vm13936, %v13363
    %13951 = vst.msk [vmem:[%s4 + $0x70] sm:$0xff] %vm13936, %v13368
    %13952 = vst.msk [vmem:[%s4 + $0x78] sm:$0xff] %vm13936, %v13373
    %13953 = vst.msk [vmem:[%s4 + $0x80] sm:$0xff] %vm13936, %v13378
    %13954 = vst.msk [vmem:[%s4 + $0x88] sm:$0xff] %vm13936, %v13383
    %13955 = vst.msk [vmem:[%s4 + $0x90] sm:$0xff] %vm13936, %v13388
    %13956 = vst.msk [vmem:[%s4 + $0x98] sm:$0xff] %vm13936, %v13393
    %13957 = vst.msk [vmem:[%s4 + $0xa0] sm:$0xff] %vm13936, %v13398
    %13958 = vst.msk [vmem:[%s4 + $0xa8] sm:$0xff] %vm13936, %v13403
    %13959 = vst.msk [vmem:[%s4 + $0xb0] sm:$0xff] %vm13936, %v13408
    %13960 = vst.msk [vmem:[%s4 + $0xb8] sm:$0xff] %vm13936, %v13413
    %13961 = vst.msk [vmem:[%s4 + $0xc0] sm:$0xff] %vm13936, %v13418
    %13962 = vst.msk [vmem:[%s4 + $0xc8] sm:$0xff] %vm13936, %v13423
    %13963 = vst.msk [vmem:[%s4 + $0xd0] sm:$0xff] %vm13936, %v13428
    %13964 = vst.msk [vmem:[%s4 + $0xd8] sm:$0xff] %vm13936, %v13433
    %13965 = vst.msk [vmem:[%s4 + $0xe0] sm:$0xff] %vm13936, %v13438
    %13966 = vst.msk [vmem:[%s4 + $0xe8] sm:$0xff] %vm13936, %v13443
    %13967 = vst.msk [vmem:[%s4 + $0xf0] sm:$0xff] %vm13936, %v13448
    %13968 = vst.msk [vmem:[%s4 + $0xf8] sm:$0xff] %vm13936, %v13453
    %13969 = vst.msk [vmem:[%s4 + $0x100] sm:$0xff] %vm13936, %v13458
    %13970 = vst.msk [vmem:[%s4 + $0x108] sm:$0xff] %vm13936, %v13463
    %13971 = vst.msk [vmem:[%s4 + $0x110] sm:$0xff] %vm13936, %v13468
    %13972 = vst.msk [vmem:[%s4 + $0x118] sm:$0xff] %vm13936, %v13473
    %13973 = vst.msk [vmem:[%s4 + $0x120] sm:$0xff] %vm13936, %v13478
    %13974 = vst.msk [vmem:[%s4 + $0x128] sm:$0xff] %vm13936, %v13483
    %13975 = vst.msk [vmem:[%s4 + $0x130] sm:$0xff] %vm13936, %v13488
    %13976 = vst.msk [vmem:[%s4 + $0x138] sm:$0xff] %vm13936, %v13493
    %13977 = vst.msk [vmem:[%s4 + $0x140] sm:$0xff] %vm13936, %v13498
    %13978 = vst.msk [vmem:[%s4 + $0x148] sm:$0xff] %vm13936, %v13503
    %13979 = vst.msk [vmem:[%s4 + $0x150] sm:$0xff] %vm13936, %v13508
    %13980 = vst.msk [vmem:[%s4 + $0x158] sm:$0xff] %vm13936, %v13513
    %13981 = vst.msk [vmem:[%s4 + $0x160] sm:$0xff] %vm13936, %v13518
    %13982 = vst.msk [vmem:[%s4 + $0x168] sm:$0xff] %vm13936, %v13523
    %13983 = vst.msk [vmem:[%s4 + $0x170] sm:$0xff] %vm13936, %v13528
    %13984 = vst.msk [vmem:[%s4 + $0x178] sm:$0xff] %vm13936, %v13533
    %13985 = vst.msk [vmem:[%s4 + $0x180] sm:$0xff] %vm13936, %v13538
    %13986 = vst.msk [vmem:[%s4 + $0x188] sm:$0xff] %vm13936, %v13543
    %13987 = vst.msk [vmem:[%s4 + $0x190] sm:$0xff] %vm13936, %v13548
    %13988 = vst.msk [vmem:[%s4 + $0x198] sm:$0xff] %vm13936, %v13553
    %13989 = vst.msk [vmem:[%s4 + $0x1a0] sm:$0xff] %vm13936, %v13558
    %13990 = vst.msk [vmem:[%s4 + $0x1a8] sm:$0xff] %vm13936, %v13563
    %13991 = vst.msk [vmem:[%s4 + $0x1b0] sm:$0xff] %vm13936, %v13568
    %13992 = vst.msk [vmem:[%s4 + $0x1b8] sm:$0xff] %vm13936, %v13573
    %13993 = vst.msk [vmem:[%s4 + $0x1c0] sm:$0xff] %vm13936, %v13578
    %13994 = vst.msk [vmem:[%s4 + $0x1c8] sm:$0xff] %vm13936, %v13583
    %13995 = vst.msk [vmem:[%s4 + $0x1d0] sm:$0xff] %vm13936, %v13588
    %13996 = vst.msk [vmem:[%s4 + $0x1d8] sm:$0xff] %vm13936, %v13593
    %13997 = vst.msk [vmem:[%s4 + $0x1e0] sm:$0xff] %vm13936, %v13598
    %13998 = vst.msk [vmem:[%s4 + $0x1e8] sm:$0xff] %vm13936, %v13603
    %13999 = vst.msk [vmem:[%s4 + $0x1f0] sm:$0xff] %vm13936, %v13608
    %14000 = vst.msk [vmem:[%s4 + $0x1f8] sm:$0xff] %vm13936, %v13613
    %14001 = vst.msk [vmem:[%s4 + $0x200] sm:$0xff] %vm13936, %v13618
    %14002 = vst.msk [vmem:[%s4 + $0x208] sm:$0xff] %vm13936, %v13623
    %14003 = vst.msk [vmem:[%s4 + $0x210] sm:$0xff] %vm13936, %v13628
    %14004 = vst.msk [vmem:[%s4 + $0x218] sm:$0xff] %vm13936, %v13633
    %14005 = vst.msk [vmem:[%s4 + $0x220] sm:$0xff] %vm13936, %v13638
    %14006 = vst.msk [vmem:[%s4 + $0x228] sm:$0xff] %vm13936, %v13643
    %14007 = vst.msk [vmem:[%s4 + $0x230] sm:$0xff] %vm13936, %v13648
    %14008 = vst.msk [vmem:[%s4 + $0x238] sm:$0xff] %vm13936, %v13653
    %14009 = vst.msk [vmem:[%s4 + $0x240] sm:$0xff] %vm13936, %v13658
    %14010 = vst.msk [vmem:[%s4 + $0x248] sm:$0xff] %vm13936, %v13663
    %14011 = vst.msk [vmem:[%s4 + $0x250] sm:$0xff] %vm13936, %v13668
    %14012 = vst.msk [vmem:[%s4 + $0x258] sm:$0xff] %vm13936, %v13673
    %14013 = vst.msk [vmem:[%s4 + $0x260] sm:$0xff] %vm13936, %v13678
    %14014 = vst.msk [vmem:[%s4 + $0x268] sm:$0xff] %vm13936, %v13683
    %14015 = vst.msk [vmem:[%s4 + $0x270] sm:$0xff] %vm13936, %v13688
    %14016 = vst.msk [vmem:[%s4 + $0x278] sm:$0xff] %vm13936, %v13693
    %14017 = vst.msk [vmem:[%s4 + $0x280] sm:$0xff] %vm13936, %v13698
    %14018 = vst.msk [vmem:[%s4 + $0x288] sm:$0xff] %vm13936, %v13703
    %14019 = vst.msk [vmem:[%s4 + $0x290] sm:$0xff] %vm13936, %v13708
    %14020 = vst.msk [vmem:[%s4 + $0x298] sm:$0xff] %vm13936, %v13713
    %14021 = vst.msk [vmem:[%s4 + $0x2a0] sm:$0xff] %vm13936, %v13718
    %14022 = vst.msk [vmem:[%s4 + $0x2a8] sm:$0xff] %vm13936, %v13723
    %14023 = vst.msk [vmem:[%s4 + $0x2b0] sm:$0xff] %vm13936, %v13728
    %14024 = vst.msk [vmem:[%s4 + $0x2b8] sm:$0xff] %vm13936, %v13733
    %14025 = vst.msk [vmem:[%s4 + $0x2c0] sm:$0xff] %vm13936, %v13738
    %14026 = vst.msk [vmem:[%s4 + $0x2c8] sm:$0xff] %vm13936, %v13743
    %14027 = vst.msk [vmem:[%s4 + $0x2d0] sm:$0xff] %vm13936, %v13748
    %14028 = vst.msk [vmem:[%s4 + $0x2d8] sm:$0xff] %vm13936, %v13753
    %14029 = vst.msk [vmem:[%s4 + $0x2e0] sm:$0xff] %vm13936, %v13758
    %14030 = vst.msk [vmem:[%s4 + $0x2e8] sm:$0xff] %vm13936, %v13763
    %14031 = vst.msk [vmem:[%s4 + $0x2f0] sm:$0xff] %vm13936, %v13768
    %14032 = vst.msk [vmem:[%s4 + $0x2f8] sm:$0xff] %vm13936, %v13773
    %14033 = vst.msk [vmem:[%s4 + $0x300] sm:$0xff] %vm13936, %v13778
    %14034 = vst.msk [vmem:[%s4 + $0x308] sm:$0xff] %vm13936, %v13783
    %14035 = vst.msk [vmem:[%s4 + $0x310] sm:$0xff] %vm13936, %v13788
    %14036 = vst.msk [vmem:[%s4 + $0x318] sm:$0xff] %vm13936, %v13793
    %14037 = vst.msk [vmem:[%s4 + $0x320] sm:$0xff] %vm13936, %v13798
    %14038 = vst.msk [vmem:[%s4 + $0x328] sm:$0xff] %vm13936, %v13803
    %14039 = vst.msk [vmem:[%s4 + $0x330] sm:$0xff] %vm13936, %v13808
    %14040 = vst.msk [vmem:[%s4 + $0x338] sm:$0xff] %vm13936, %v13813
    %14041 = vst.msk [vmem:[%s4 + $0x340] sm:$0xff] %vm13936, %v13818
    %14042 = vst.msk [vmem:[%s4 + $0x348] sm:$0xff] %vm13936, %v13823
    %14043 = vst.msk [vmem:[%s4 + $0x350] sm:$0xff] %vm13936, %v13828
    %14044 = vst.msk [vmem:[%s4 + $0x358] sm:$0xff] %vm13936, %v13833
    %14045 = vst.msk [vmem:[%s4 + $0x360] sm:$0xff] %vm13936, %v13838
    %14046 = vst.msk [vmem:[%s4 + $0x368] sm:$0xff] %vm13936, %v13843
    %14047 = vst.msk [vmem:[%s4 + $0x370] sm:$0xff] %vm13936, %v13848
    %14048 = vst.msk [vmem:[%s4 + $0x378] sm:$0xff] %vm13936, %v13853
    %14049 = vst.msk [vmem:[%s4 + $0x380] sm:$0xff] %vm13936, %v13858
    %14050 = vst.msk [vmem:[%s4 + $0x388] sm:$0xff] %vm13936, %v13863
    %14051 = vst.msk [vmem:[%s4 + $0x390] sm:$0xff] %vm13936, %v13868
    %14052 = vst.msk [vmem:[%s4 + $0x398] sm:$0xff] %vm13936, %v13873
    %14053 = vst.msk [vmem:[%s4 + $0x3a0] sm:$0xff] %vm13936, %v13878
    %14054 = vst.msk [vmem:[%s4 + $0x3a8] sm:$0xff] %vm13936, %v13883
    %14055 = vst.msk [vmem:[%s4 + $0x3b0] sm:$0xff] %vm13936, %v13888
    %14056 = vst.msk [vmem:[%s4 + $0x3b8] sm:$0xff] %vm13936, %v13893
    %14057 = vst.msk [vmem:[%s4 + $0x3c0] sm:$0xff] %vm13936, %v13898
    %14058 = vst.msk [vmem:[%s4 + $0x3c8] sm:$0xff] %vm13936, %v13903
    %14059 = vst.msk [vmem:[%s4 + $0x3d0] sm:$0xff] %vm13936, %v13908
    %14060 = vst.msk [vmem:[%s4 + $0x3d8] sm:$0xff] %vm13936, %v13913
    %14061 = vst.msk [vmem:[%s4 + $0x3e0] sm:$0xff] %vm13936, %v13918
    %14062 = vst.msk [vmem:[%s4 + $0x3e8] sm:$0xff] %vm13936, %v13923
    %14063 = vst.msk [vmem:[%s4 + $0x3f0] sm:$0xff] %vm13936, %v13928
    %14064 = vst.msk [vmem:[%s4 + $0x3f8] sm:$0xff] %vm13936, %v13933
    // Predicated region
    $region22: #{hash_decoder_forward.1} parent=1 // pred_check
      _
    $region23: #{hash_decoder_forward.1} parent=1 // pred_check_branch
      %14066 = sbr.rel (0) target = $region25
    $region24: #{hash_decoder_forward.1} parent=1 // pred_region
      _
    $region25: #{hash_decoder_forward.1} parent=1 // pred_fallthru
      _
    // Predicated region
    $region26: #{hash_decoder_forward.1} parent=1 // pred_check
      _
    $region27: #{hash_decoder_forward.1} parent=1 // pred_check_branch
      %14068 = sbr.rel (0) target = $region29
    $region28: #{hash_decoder_forward.1} parent=1 // pred_region
      _
    $region29: #{hash_decoder_forward.1} parent=1 // pred_fallthru
      _
    %14069 = vsyncpa [#allocation3], 1

</llo_original>
